<compile_context>
chip_gen: v7x
topology: tpu7x:2x2x1
jax: 0.10.0
libtpu: 0.0.40
codegen_flags: <defaults>
</compile_context>

<pallas_src>
import functools

import jax
import jax.numpy as jnp
from jax import lax
from jax.experimental import pallas as pl
from jax.experimental.pallas import tpu as pltpu


def _round_up(x, m):
    return ((x + m - 1) // m) * m


# ---------------------------------------------------------------------------
# Fused Pallas kernel: whole ResBlock for one image per grid step.
# ---------------------------------------------------------------------------
def _resblock_kernel(x_ref, mask_ref, w1_ref, w2_ref, wds_ref,
                     b1_ref, b2_ref, bds_ref, o_ref, xs_ref, hs_ref, *, H, W):
    Wp = W + 2                     # padded row pitch
    Mq = H * Wp                    # rows of the flattened output slab
    cpad = w1_ref.shape[-1]        # lane-dense (multiple of 128) channel count
    mxu_dtype = w1_ref.dtype       # bf16 (perf path) or f32 (exact-check path)
    pad0 = (-(W + 3)) % 8          # extra top rows so the h store is 8-row aligned

    # Stage the zero-padded, row-flattened input image in unpacked f32 scratch:
    # the nine 3x3 tap slices below start at sublane-unaligned row offsets,
    # cheapest on the 32-bit path.  HBM traffic for x stays in bf16 and the MXU
    # still sees bf16 operands.
    xs_ref[...] = x_ref[0].astype(jnp.float32)

    def tap(src_ref, off):
        return src_ref[off:off + Mq, :].astype(mxu_dtype)

    # ---- conv3x3 #1 (BN scale folded into w1) + bias + ReLU ---------------
    acc = jnp.zeros((Mq, cpad), jnp.float32)
    for kh in range(3):
        for kw in range(3):
            acc = acc + jnp.dot(tap(xs_ref, kh * Wp + kw), w1_ref[kh * 3 + kw],
                                preferred_element_type=jnp.float32)
    # zero the two pad columns of every flattened row so the re-padded h used
    # by conv2 has correct zero borders
    h = jnp.maximum(acc + b1_ref[...], 0.0) * mask_ref[...]

    # ---- re-embed h into its own zero-padded flat layout (VMEM scratch) ----
    hs_ref[...] = jnp.zeros(hs_ref.shape, hs_ref.dtype)
    hs_ref[pad0 + W + 3:pad0 + W + 3 + Mq, :] = h

    # ---- conv3x3 #2 (BN scale folded into w2) + bias + ReLU ---------------
    acc2 = jnp.zeros((Mq, cpad), jnp.float32)
    for kh in range(3):
        for kw in range(3):
            acc2 = acc2 + jnp.dot(tap(hs_ref, pad0 + kh * Wp + kw),
                                  w2_ref[kh * 3 + kw],
                                  preferred_element_type=jnp.float32)
    y = jnp.maximum(acc2 + b2_ref[...], 0.0)

    # ---- identity branch: 1x1 conv (+ folded BN) on the unpadded interior --
    ident = jnp.dot(tap(xs_ref, W + 3), wds_ref[...],
                    preferred_element_type=jnp.float32) + bds_ref[...]

    # ---- residual add + final ReLU; lane-dense full-block store ------------
    o_ref[0] = jnp.maximum(y + ident, 0.0).astype(o_ref.dtype)


# ---------------------------------------------------------------------------
# Parameter folding / padding (offline, outside the kernel)
# ---------------------------------------------------------------------------
def fold_bn(gamma, beta, mean, var, conv_bias=None, eps=1e-5):
    """BN(y) = gamma*(y-mean)/sqrt(var+eps)+beta, with y = conv + conv_bias."""
    s = gamma / jnp.sqrt(var + eps)
    b = beta - s * mean
    if conv_bias is not None:
        b = b + s * conv_bias
    return s, b


def pack_params(raw, cin, cout, compute_dtype=jnp.bfloat16):
    """Fold BN scale into conv weights, pad Cout to a lane-dense multiple of 128."""
    cpad = _round_up(cout, 128)
    s_ds, b_ds = fold_bn(*raw["bn_ds"])                        # conv bias=False
    s1, b1 = fold_bn(*raw["bn1"], conv_bias=raw["b1_conv"])
    s2, b2 = fold_bn(*raw["bn2"], conv_bias=raw["b2_conv"])

    def pad_out(a):  # zero-pad last (output-channel) dim to cpad
        return jnp.pad(a, [(0, 0)] * (a.ndim - 1) + [(0, cpad - cout)])

    w1 = pad_out(raw["w1_hwio"] * s1).reshape(9, cin, cpad).astype(compute_dtype)
    w2 = jnp.pad(raw["w2_hwio"] * s2,
                 ((0, 0), (0, 0), (0, cpad - cout), (0, cpad - cout)))
    w2 = w2.reshape(9, cpad, cpad).astype(compute_dtype)
    wds = pad_out((raw["w_ds_hwio"] * s_ds).reshape(cin, cout)).astype(compute_dtype)

    return {
        "w1": w1, "w2": w2, "wds": wds,
        "b1": pad_out(b1.reshape(1, cout)).astype(jnp.float32),
        "b2": pad_out(b2.reshape(1, cout)).astype(jnp.float32),
        "bds": pad_out(b_ds.reshape(1, cout)).astype(jnp.float32),
        "cout": cout,
    }


# ---------------------------------------------------------------------------
# Wrapper
# ---------------------------------------------------------------------------
def resblock_forward(x_nchw, p):
    w1, w2, wds = p["w1"], p["w2"], p["wds"]
    b1, b2, bds = p["b1"], p["b2"], p["bds"]
    cdtype = w1.dtype
    N, Cin, H, W = x_nchw.shape
    cpad = w1.shape[-1]
    Wp = W + 2
    Mp = (H + 3) * Wp              # padded, flattened rows (+1 safety bottom row)
    Mq = H * Wp                    # output rows (pad columns sliced off below)
    pad0 = (-(W + 3)) % 8

    # NCHW -> NHWC, zero pad (1 top, 2 bottom, 1 left, 1 right), flatten rows.
    x = jnp.transpose(x_nchw, (0, 2, 3, 1))
    xp = jnp.pad(x, ((0, 0), (1, 2), (1, 1), (0, 0)))
    x_flat = xp.reshape(N, Mp, Cin).astype(cdtype)

    # 1.0 on real columns, 0.0 on the two pad columns of every flattened row.
    mask = jnp.tile((jnp.arange(Wp) < W).astype(jnp.float32), H).reshape(Mq, 1)

    kern = functools.partial(_resblock_kernel, H=H, W=W)
    out_flat = pl.pallas_call(
        kern,
        out_shape=jax.ShapeDtypeStruct((N, Mq, cpad), cdtype),
        grid=(N,),
        in_specs=[
            pl.BlockSpec((1, Mp, Cin), lambda n: (n, 0, 0)),     # x (per image)
            pl.BlockSpec((Mq, 1), lambda n: (0, 0)),             # column mask (resident)
            pl.BlockSpec((9, Cin, cpad), lambda n: (0, 0, 0)),   # w1 (resident)
            pl.BlockSpec((9, cpad, cpad), lambda n: (0, 0, 0)),  # w2 (resident)
            pl.BlockSpec((Cin, cpad), lambda n: (0, 0)),         # w_ds (resident)
            pl.BlockSpec((1, cpad), lambda n: (0, 0)),           # b1
            pl.BlockSpec((1, cpad), lambda n: (0, 0)),           # b2
            pl.BlockSpec((1, cpad), lambda n: (0, 0)),           # b_ds
        ],
        out_specs=pl.BlockSpec((1, Mq, cpad), lambda n: (n, 0, 0)),
        scratch_shapes=[
            pltpu.VMEM((Mp, Cin), jnp.float32),          # unpacked staged x
            pltpu.VMEM((pad0 + Mp, cpad), jnp.float32),  # zero-padded h
        ],
        compiler_params=pltpu.CompilerParams(
            dimension_semantics=("parallel",),           # v7x: batch across 2 TCs
            vmem_limit_bytes=32 * 1024 * 1024),
    )(x_flat, mask, w1, w2, wds, b1, b2, bds)

    out = out_flat.reshape(N, H, Wp, cpad)[:, :, :W, :p["cout"]]
    return jnp.transpose(out, (0, 3, 1, 2))              # NHWC -> NCHW


# ---------------------------------------------------------------------------
# Deterministic parameter init + pure-JAX reference
# ---------------------------------------------------------------------------
def init_raw_params(key, cin, cout):
    ks = jax.random.split(key, 8)

    def bn_params(k):
        k1, k2, k3, k4 = jax.random.split(k, 4)
        gamma = 1.0 + 0.1 * jax.random.normal(k1, (cout,), jnp.float32)
        beta = 0.1 * jax.random.normal(k2, (cout,), jnp.float32)
        mean = 0.1 * jax.random.normal(k3, (cout,), jnp.float32)
        var = jax.random.uniform(k4, (cout,), jnp.float32, minval=0.5, maxval=1.5)
        return gamma, beta, mean, var

    return {
        "w_ds_hwio": 0.1 * jax.random.normal(ks[0], (1, 1, cin, cout), jnp.float32),
        "w1_hwio": 0.1 * jax.random.normal(ks[1], (3, 3, cin, cout), jnp.float32),
        "b1_conv": 0.1 * jax.random.normal(ks[2], (cout,), jnp.float32),
        "w2_hwio": 0.1 * jax.random.normal(ks[3], (3, 3, cout, cout), jnp.float32),
        "b2_conv": 0.1 * jax.random.normal(ks[4], (cout,), jnp.float32),
        "bn_ds": bn_params(ks[5]),
        "bn1": bn_params(ks[6]),
        "bn2": bn_params(ks[7]),
    }


def resblock_reference(x_nchw, raw, eps=1e-5):
    """Pure-JAX reference (lax.conv, f32) in eval-mode BN."""
    x = jnp.transpose(x_nchw, (0, 2, 3, 1))
    dn = ("NHWC", "HWIO", "NHWC")

    def bn(y, params):
        gamma, beta, mean, var = params
        return gamma * (y - mean) / jnp.sqrt(var + eps) + beta

    ident = lax.conv_general_dilated(x, raw["w_ds_hwio"], (1, 1), "SAME",
                                     dimension_numbers=dn)
    ident = bn(ident, raw["bn_ds"])

    h = lax.conv_general_dilated(x, raw["w1_hwio"], (1, 1), "SAME",
                                 dimension_numbers=dn) + raw["b1_conv"]
    h = jax.nn.relu(bn(h, raw["bn1"]))

    o = lax.conv_general_dilated(h, raw["w2_hwio"], (1, 1), "SAME",
                                 dimension_numbers=dn) + raw["b2_conv"]
    o = jax.nn.relu(bn(o, raw["bn2"]))

    out = jax.nn.relu(o + ident)
    return jnp.transpose(out, (0, 3, 1, 2))


# ---------------------------------------------------------------------------
if __name__ == "__main__":
    key = jax.random.PRNGKey(0)
    k_x, k_p = jax.random.split(key)

    N, Cin, H, W, Cout = 2, 4, 16, 16, 8
    x = jax.random.normal(k_x, (N, Cin, H, W), jnp.float32)
    raw = init_raw_params(k_p, Cin, Cout)
    ref = resblock_reference(x, raw)

    # Exact-semantics check: f32 operand path of the same fused kernel.
    out_f32 = jax.block_until_ready(
        resblock_forward(x, pack_params(raw, Cin, Cout, jnp.float32)))
    assert out_f32.shape == (N, Cout, H, W)
    assert jnp.allclose(out_f32, ref, atol=1e-4, rtol=1e-4), "f32 mismatch vs reference"

    # Performance path: bf16 operands / weights / output, f32 accumulation.
    out_bf16 = jax.block_until_ready(
        resblock_forward(x, pack_params(raw, Cin, Cout, jnp.bfloat16)))
    assert out_bf16.shape == (N, Cout, H, W)
    assert jnp.allclose(out_bf16.astype(jnp.float32), ref, atol=1e-1, rtol=1e-1), \
        "bf16 mismatch vs reference"

    print("KERNEL_OK")
</pallas_src>

<mosaic_0001>
module attributes {stable_mosaic.version = 11 : i64} {
  func.func @_resblock_kernel(%arg0: i32, %arg1: memref<1x342x4xf32, #tpu.memory_space<vmem>>, %arg2: memref<288x1xf32, #tpu.memory_space<vmem>>, %arg3: memref<9x4x128xf32, #tpu.memory_space<vmem>>, %arg4: memref<9x128x128xf32, #tpu.memory_space<vmem>>, %arg5: memref<4x128xf32, #tpu.memory_space<vmem>>, %arg6: memref<1x128xf32, #tpu.memory_space<vmem>>, %arg7: memref<1x128xf32, #tpu.memory_space<vmem>>, %arg8: memref<1x128xf32, #tpu.memory_space<vmem>>, %arg9: memref<1x288x128xf32, #tpu.memory_space<vmem>>, %arg10: memref<342x4xf32, #tpu.memory_space<vmem>>, %arg11: memref<347x128xf32, #tpu.memory_space<vmem>>) attributes {dimension_semantics = [#tpu.dimension_semantics<parallel>], iteration_bounds = array<i64: 2>, scalar_prefetch = 0 : i64, scratch_operands = 2 : i64, tpu.core_type = #tpu.core_type<tc>, window_params = [{transform_indices = @transform_0, window_bounds = array<i64: 1, 342, 4>}, {pipeline_mode = #tpu.pipeline_mode<synchronous>, transform_indices = @transform_1, window_bounds = array<i64: 288, 1>}, {pipeline_mode = #tpu.pipeline_mode<synchronous>, transform_indices = @transform_2, window_bounds = array<i64: 9, 4, 128>}, {pipeline_mode = #tpu.pipeline_mode<synchronous>, transform_indices = @transform_3, window_bounds = array<i64: 9, 128, 128>}, {pipeline_mode = #tpu.pipeline_mode<synchronous>, transform_indices = @transform_4, window_bounds = array<i64: 4, 128>}, {pipeline_mode = #tpu.pipeline_mode<synchronous>, transform_indices = @transform_5, window_bounds = array<i64: 1, 128>}, {pipeline_mode = #tpu.pipeline_mode<synchronous>, transform_indices = @transform_6, window_bounds = array<i64: 1, 128>}, {pipeline_mode = #tpu.pipeline_mode<synchronous>, transform_indices = @transform_7, window_bounds = array<i64: 1, 128>}, {transform_indices = @transform_8, window_bounds = array<i64: 1, 288, 128>}]} {
    %c0 = arith.constant 0 : index
    %c0_0 = arith.constant 0 : index
    %c0_1 = arith.constant 0 : index
    %0 = vector.load %arg1[%c0, %c0_0, %c0_1] : memref<1x342x4xf32, #tpu.memory_space<vmem>>, vector<1x342x4xf32>
    %1 = vector.shape_cast %0 : vector<1x342x4xf32> to vector<342x4xf32>
    %c0_2 = arith.constant 0 : index
    %c0_3 = arith.constant 0 : index
    %2 = vector.load %arg10[%c0_2, %c0_3] : memref<342x4xf32, #tpu.memory_space<vmem>>, vector<342x4xf32>
    tpu.vector_store %arg10[%c0_2, %c0_3], %1 {strides = array<i32>} : memref<342x4xf32, #tpu.memory_space<vmem>>, vector<342x4xf32>,
    %cst = arith.constant 0.000000e+00 : f32
    %3 = vector.broadcast %cst : f32 to vector<288x128xf32>
    %c0_4 = arith.constant 0 : index
    %c0_5 = arith.constant 0 : index
    %4 = vector.load %arg10[%c0_4, %c0_5] : memref<342x4xf32, #tpu.memory_space<vmem>>, vector<288x4xf32>
    %c0_6 = arith.constant 0 : index
    %c0_7 = arith.constant 0 : index
    %c0_8 = arith.constant 0 : index
    %5 = vector.load %arg3[%c0_6, %c0_7, %c0_8] : memref<9x4x128xf32, #tpu.memory_space<vmem>>, vector<1x4x128xf32>
    %6 = vector.shape_cast %5 : vector<1x4x128xf32> to vector<4x128xf32>
    %cst_9 = arith.constant dense<0.000000e+00> : vector<288x128xf32>
    %7 = tpu.matmul %4, %6, %cst_9 {dimension_numbers = #tpu.dot_dimension_numbers<[1], [0], [0], [1], [0, 0, 1, 1], [], []>} : vector<288x4xf32>, vector<4x128xf32>, vector<288x128xf32> -> vector<288x128xf32>
    %8 = arith.addf %3, %7 : vector<288x128xf32>
    %c1 = arith.constant 1 : index
    %c0_10 = arith.constant 0 : index
    %9 = vector.load %arg10[%c1, %c0_10] : memref<342x4xf32, #tpu.memory_space<vmem>>, vector<288x4xf32>
    %c1_11 = arith.constant 1 : index
    %c0_12 = arith.constant 0 : index
    %c0_13 = arith.constant 0 : index
    %10 = vector.load %arg3[%c1_11, %c0_12, %c0_13] : memref<9x4x128xf32, #tpu.memory_space<vmem>>, vector<1x4x128xf32>
    %11 = vector.shape_cast %10 : vector<1x4x128xf32> to vector<4x128xf32>
    %cst_14 = arith.constant dense<0.000000e+00> : vector<288x128xf32>
    %12 = tpu.matmul %9, %11, %cst_14 {dimension_numbers = #tpu.dot_dimension_numbers<[1], [0], [0], [1], [0, 0, 1, 1], [], []>} : vector<288x4xf32>, vector<4x128xf32>, vector<288x128xf32> -> vector<288x128xf32>
    %13 = arith.addf %8, %12 : vector<288x128xf32>
    %c2 = arith.constant 2 : index
    %c0_15 = arith.constant 0 : index
    %14 = vector.load %arg10[%c2, %c0_15] : memref<342x4xf32, #tpu.memory_space<vmem>>, vector<288x4xf32>
    %c2_16 = arith.constant 2 : index
    %c0_17 = arith.constant 0 : index
    %c0_18 = arith.constant 0 : index
    %15 = vector.load %arg3[%c2_16, %c0_17, %c0_18] : memref<9x4x128xf32, #tpu.memory_space<vmem>>, vector<1x4x128xf32>
    %16 = vector.shape_cast %15 : vector<1x4x128xf32> to vector<4x128xf32>
    %cst_19 = arith.constant dense<0.000000e+00> : vector<288x128xf32>
    %17 = tpu.matmul %14, %16, %cst_19 {dimension_numbers = #tpu.dot_dimension_numbers<[1], [0], [0], [1], [0, 0, 1, 1], [], []>} : vector<288x4xf32>, vector<4x128xf32>, vector<288x128xf32> -> vector<288x128xf32>
    %18 = arith.addf %13, %17 : vector<288x128xf32>
    %c18 = arith.constant 18 : index
    %c0_20 = arith.constant 0 : index
    %19 = vector.load %arg10[%c18, %c0_20] : memref<342x4xf32, #tpu.memory_space<vmem>>, vector<288x4xf32>
    %c3 = arith.constant 3 : index
    %c0_21 = arith.constant 0 : index
    %c0_22 = arith.constant 0 : index
    %20 = vector.load %arg3[%c3, %c0_21, %c0_22] : memref<9x4x128xf32, #tpu.memory_space<vmem>>, vector<1x4x128xf32>
    %21 = vector.shape_cast %20 : vector<1x4x128xf32> to vector<4x128xf32>
    %cst_23 = arith.constant dense<0.000000e+00> : vector<288x128xf32>
    %22 = tpu.matmul %19, %21, %cst_23 {dimension_numbers = #tpu.dot_dimension_numbers<[1], [0], [0], [1], [0, 0, 1, 1], [], []>} : vector<288x4xf32>, vector<4x128xf32>, vector<288x128xf32> -> vector<288x128xf32>
    %23 = arith.addf %18, %22 : vector<288x128xf32>
    %c19 = arith.constant 19 : index
    %c0_24 = arith.constant 0 : index
    %24 = vector.load %arg10[%c19, %c0_24] : memref<342x4xf32, #tpu.memory_space<vmem>>, vector<288x4xf32>
    %c4 = arith.constant 4 : index
    %c0_25 = arith.constant 0 : index
    %c0_26 = arith.constant 0 : index
    %25 = vector.load %arg3[%c4, %c0_25, %c0_26] : memref<9x4x128xf32, #tpu.memory_space<vmem>>, vector<1x4x128xf32>
    %26 = vector.shape_cast %25 : vector<1x4x128xf32> to vector<4x128xf32>
    %cst_27 = arith.constant dense<0.000000e+00> : vector<288x128xf32>
    %27 = tpu.matmul %24, %26, %cst_27 {dimension_numbers = #tpu.dot_dimension_numbers<[1], [0], [0], [1], [0, 0, 1, 1], [], []>} : vector<288x4xf32>, vector<4x128xf32>, vector<288x128xf32> -> vector<288x128xf32>
    %28 = arith.addf %23, %27 : vector<288x128xf32>
    %c20 = arith.constant 20 : index
    %c0_28 = arith.constant 0 : index
    %29 = vector.load %arg10[%c20, %c0_28] : memref<342x4xf32, #tpu.memory_space<vmem>>, vector<288x4xf32>
    %c5 = arith.constant 5 : index
    %c0_29 = arith.constant 0 : index
    %c0_30 = arith.constant 0 : index
    %30 = vector.load %arg3[%c5, %c0_29, %c0_30] : memref<9x4x128xf32, #tpu.memory_space<vmem>>, vector<1x4x128xf32>
    %31 = vector.shape_cast %30 : vector<1x4x128xf32> to vector<4x128xf32>
    %cst_31 = arith.constant dense<0.000000e+00> : vector<288x128xf32>
    %32 = tpu.matmul %29, %31, %cst_31 {dimension_numbers = #tpu.dot_dimension_numbers<[1], [0], [0], [1], [0, 0, 1, 1], [], []>} : vector<288x4xf32>, vector<4x128xf32>, vector<288x128xf32> -> vector<288x128xf32>
    %33 = arith.addf %28, %32 : vector<288x128xf32>
    %c36 = arith.constant 36 : index
    %c0_32 = arith.constant 0 : index
    %34 = vector.load %arg10[%c36, %c0_32] : memref<342x4xf32, #tpu.memory_space<vmem>>, vector<288x4xf32>
    %c6 = arith.constant 6 : index
    %c0_33 = arith.constant 0 : index
    %c0_34 = arith.constant 0 : index
    %35 = vector.load %arg3[%c6, %c0_33, %c0_34] : memref<9x4x128xf32, #tpu.memory_space<vmem>>, vector<1x4x128xf32>
    %36 = vector.shape_cast %35 : vector<1x4x128xf32> to vector<4x128xf32>
    %cst_35 = arith.constant dense<0.000000e+00> : vector<288x128xf32>
    %37 = tpu.matmul %34, %36, %cst_35 {dimension_numbers = #tpu.dot_dimension_numbers<[1], [0], [0], [1], [0, 0, 1, 1], [], []>} : vector<288x4xf32>, vector<4x128xf32>, vector<288x128xf32> -> vector<288x128xf32>
    %38 = arith.addf %33, %37 : vector<288x128xf32>
    %c37 = arith.constant 37 : index
    %c0_36 = arith.constant 0 : index
    %39 = vector.load %arg10[%c37, %c0_36] : memref<342x4xf32, #tpu.memory_space<vmem>>, vector<288x4xf32>
    %c7 = arith.constant 7 : index
    %c0_37 = arith.constant 0 : index
    %c0_38 = arith.constant 0 : index
    %40 = vector.load %arg3[%c7, %c0_37, %c0_38] : memref<9x4x128xf32, #tpu.memory_space<vmem>>, vector<1x4x128xf32>
    %41 = vector.shape_cast %40 : vector<1x4x128xf32> to vector<4x128xf32>
    %cst_39 = arith.constant dense<0.000000e+00> : vector<288x128xf32>
    %42 = tpu.matmul %39, %41, %cst_39 {dimension_numbers = #tpu.dot_dimension_numbers<[1], [0], [0], [1], [0, 0, 1, 1], [], []>} : vector<288x4xf32>, vector<4x128xf32>, vector<288x128xf32> -> vector<288x128xf32>
    %43 = arith.addf %38, %42 : vector<288x128xf32>
    %c38 = arith.constant 38 : index
    %c0_40 = arith.constant 0 : index
    %44 = vector.load %arg10[%c38, %c0_40] : memref<342x4xf32, #tpu.memory_space<vmem>>, vector<288x4xf32>
    %c8 = arith.constant 8 : index
    %c0_41 = arith.constant 0 : index
    %c0_42 = arith.constant 0 : index
    %45 = vector.load %arg3[%c8, %c0_41, %c0_42] : memref<9x4x128xf32, #tpu.memory_space<vmem>>, vector<1x4x128xf32>
    %46 = vector.shape_cast %45 : vector<1x4x128xf32> to vector<4x128xf32>
    %cst_43 = arith.constant dense<0.000000e+00> : vector<288x128xf32>
    %47 = tpu.matmul %44, %46, %cst_43 {dimension_numbers = #tpu.dot_dimension_numbers<[1], [0], [0], [1], [0, 0, 1, 1], [], []>} : vector<288x4xf32>, vector<4x128xf32>, vector<288x128xf32> -> vector<288x128xf32>
    %48 = arith.addf %43, %47 : vector<288x128xf32>
    %c0_44 = arith.constant 0 : index
    %c0_45 = arith.constant 0 : index
    %49 = vector.load %arg6[%c0_44, %c0_45] : memref<1x128xf32, #tpu.memory_space<vmem>>, vector<1x128xf32>
    %50 = vector.broadcast %49 : vector<1x128xf32> to vector<288x128xf32>
    %51 = arith.addf %48, %50 : vector<288x128xf32>
    %cst_46 = arith.constant 0.000000e+00 : f32
    %52 = vector.broadcast %cst_46 : f32 to vector<288x128xf32>
    %53 = arith.maximumf %51, %52 : vector<288x128xf32>
    %c0_47 = arith.constant 0 : index
    %c0_48 = arith.constant 0 : index
    %54 = vector.load %arg2[%c0_47, %c0_48] : memref<288x1xf32, #tpu.memory_space<vmem>>, vector<288x1xf32>
    %55 = vector.broadcast %54 : vector<288x1xf32> to vector<288x128xf32>
    %56 = arith.mulf %53, %55 : vector<288x128xf32>
    %cst_49 = arith.constant 0.000000e+00 : f32
    %57 = vector.broadcast %cst_49 : f32 to vector<347x128xf32>
    %c0_50 = arith.constant 0 : index
    %c0_51 = arith.constant 0 : index
    %58 = vector.load %arg11[%c0_50, %c0_51] : memref<347x128xf32, #tpu.memory_space<vmem>>, vector<347x128xf32>
    tpu.vector_store %arg11[%c0_50, %c0_51], %57 {strides = array<i32>} : memref<347x128xf32, #tpu.memory_space<vmem>>, vector<347x128xf32>,
    %c24 = arith.constant 24 : index
    %c0_52 = arith.constant 0 : index
    %59 = vector.load %arg11[%c24, %c0_52] : memref<347x128xf32, #tpu.memory_space<vmem>>, vector<288x128xf32>
    tpu.vector_store %arg11[%c24, %c0_52], %56 {strides = array<i32>} : memref<347x128xf32, #tpu.memory_space<vmem>>, vector<288x128xf32>,
    %cst_53 = arith.constant 0.000000e+00 : f32
    %60 = vector.broadcast %cst_53 : f32 to vector<288x128xf32>
    %c5_54 = arith.constant 5 : index
    %c0_55 = arith.constant 0 : index
    %61 = vector.load %arg11[%c5_54, %c0_55] : memref<347x128xf32, #tpu.memory_space<vmem>>, vector<288x128xf32>
    %c0_56 = arith.constant 0 : index
    %c0_57 = arith.constant 0 : index
    %c0_58 = arith.constant 0 : index
    %62 = vector.load %arg4[%c0_56, %c0_57, %c0_58] : memref<9x128x128xf32, #tpu.memory_space<vmem>>, vector<1x128x128xf32>
    %63 = vector.shape_cast %62 : vector<1x128x128xf32> to vector<128x128xf32>
    %cst_59 = arith.constant dense<0.000000e+00> : vector<288x128xf32>
    %64 = tpu.matmul %61, %63, %cst_59 {dimension_numbers = #tpu.dot_dimension_numbers<[1], [0], [0], [1], [0, 0, 1, 1], [], []>} : vector<288x128xf32>, vector<128x128xf32>, vector<288x128xf32> -> vector<288x128xf32>
    %65 = arith.addf %60, %64 : vector<288x128xf32>
    %c6_60 = arith.constant 6 : index
    %c0_61 = arith.constant 0 : index
    %66 = vector.load %arg11[%c6_60, %c0_61] : memref<347x128xf32, #tpu.memory_space<vmem>>, vector<288x128xf32>
    %c1_62 = arith.constant 1 : index
    %c0_63 = arith.constant 0 : index
    %c0_64 = arith.constant 0 : index
    %67 = vector.load %arg4[%c1_62, %c0_63, %c0_64] : memref<9x128x128xf32, #tpu.memory_space<vmem>>, vector<1x128x128xf32>
    %68 = vector.shape_cast %67 : vector<1x128x128xf32> to vector<128x128xf32>
    %cst_65 = arith.constant dense<0.000000e+00> : vector<288x128xf32>
    %69 = tpu.matmul %66, %68, %cst_65 {dimension_numbers = #tpu.dot_dimension_numbers<[1], [0], [0], [1], [0, 0, 1, 1], [], []>} : vector<288x128xf32>, vector<128x128xf32>, vector<288x128xf32> -> vector<288x128xf32>
    %70 = arith.addf %65, %69 : vector<288x128xf32>
    %c7_66 = arith.constant 7 : index
    %c0_67 = arith.constant 0 : index
    %71 = vector.load %arg11[%c7_66, %c0_67] : memref<347x128xf32, #tpu.memory_space<vmem>>, vector<288x128xf32>
    %c2_68 = arith.constant 2 : index
    %c0_69 = arith.constant 0 : index
    %c0_70 = arith.constant 0 : index
    %72 = vector.load %arg4[%c2_68, %c0_69, %c0_70] : memref<9x128x128xf32, #tpu.memory_space<vmem>>, vector<1x128x128xf32>
    %73 = vector.shape_cast %72 : vector<1x128x128xf32> to vector<128x128xf32>
    %cst_71 = arith.constant dense<0.000000e+00> : vector<288x128xf32>
    %74 = tpu.matmul %71, %73, %cst_71 {dimension_numbers = #tpu.dot_dimension_numbers<[1], [0], [0], [1], [0, 0, 1, 1], [], []>} : vector<288x128xf32>, vector<128x128xf32>, vector<288x128xf32> -> vector<288x128xf32>
    %75 = arith.addf %70, %74 : vector<288x128xf32>
    %c23 = arith.constant 23 : index
    %c0_72 = arith.constant 0 : index
    %76 = vector.load %arg11[%c23, %c0_72] : memref<347x128xf32, #tpu.memory_space<vmem>>, vector<288x128xf32>
    %c3_73 = arith.constant 3 : index
    %c0_74 = arith.constant 0 : index
    %c0_75 = arith.constant 0 : index
    %77 = vector.load %arg4[%c3_73, %c0_74, %c0_75] : memref<9x128x128xf32, #tpu.memory_space<vmem>>, vector<1x128x128xf32>
    %78 = vector.shape_cast %77 : vector<1x128x128xf32> to vector<128x128xf32>
    %cst_76 = arith.constant dense<0.000000e+00> : vector<288x128xf32>
    %79 = tpu.matmul %76, %78, %cst_76 {dimension_numbers = #tpu.dot_dimension_numbers<[1], [0], [0], [1], [0, 0, 1, 1], [], []>} : vector<288x128xf32>, vector<128x128xf32>, vector<288x128xf32> -> vector<288x128xf32>
    %80 = arith.addf %75, %79 : vector<288x128xf32>
    %c24_77 = arith.constant 24 : index
    %c0_78 = arith.constant 0 : index
    %81 = vector.load %arg11[%c24_77, %c0_78] : memref<347x128xf32, #tpu.memory_space<vmem>>, vector<288x128xf32>
    %c4_79 = arith.constant 4 : index
    %c0_80 = arith.constant 0 : index
    %c0_81 = arith.constant 0 : index
    %82 = vector.load %arg4[%c4_79, %c0_80, %c0_81] : memref<9x128x128xf32, #tpu.memory_space<vmem>>, vector<1x128x128xf32>
    %83 = vector.shape_cast %82 : vector<1x128x128xf32> to vector<128x128xf32>
    %cst_82 = arith.constant dense<0.000000e+00> : vector<288x128xf32>
    %84 = tpu.matmul %81, %83, %cst_82 {dimension_numbers = #tpu.dot_dimension_numbers<[1], [0], [0], [1], [0, 0, 1, 1], [], []>} : vector<288x128xf32>, vector<128x128xf32>, vector<288x128xf32> -> vector<288x128xf32>
    %85 = arith.addf %80, %84 : vector<288x128xf32>
    %c25 = arith.constant 25 : index
    %c0_83 = arith.constant 0 : index
    %86 = vector.load %arg11[%c25, %c0_83] : memref<347x128xf32, #tpu.memory_space<vmem>>, vector<288x128xf32>
    %c5_84 = arith.constant 5 : index
    %c0_85 = arith.constant 0 : index
    %c0_86 = arith.constant 0 : index
    %87 = vector.load %arg4[%c5_84, %c0_85, %c0_86] : memref<9x128x128xf32, #tpu.memory_space<vmem>>, vector<1x128x128xf32>
    %88 = vector.shape_cast %87 : vector<1x128x128xf32> to vector<128x128xf32>
    %cst_87 = arith.constant dense<0.000000e+00> : vector<288x128xf32>
    %89 = tpu.matmul %86, %88, %cst_87 {dimension_numbers = #tpu.dot_dimension_numbers<[1], [0], [0], [1], [0, 0, 1, 1], [], []>} : vector<288x128xf32>, vector<128x128xf32>, vector<288x128xf32> -> vector<288x128xf32>
    %90 = arith.addf %85, %89 : vector<288x128xf32>
    %c41 = arith.constant 41 : index
    %c0_88 = arith.constant 0 : index
    %91 = vector.load %arg11[%c41, %c0_88] : memref<347x128xf32, #tpu.memory_space<vmem>>, vector<288x128xf32>
    %c6_89 = arith.constant 6 : index
    %c0_90 = arith.constant 0 : index
    %c0_91 = arith.constant 0 : index
    %92 = vector.load %arg4[%c6_89, %c0_90, %c0_91] : memref<9x128x128xf32, #tpu.memory_space<vmem>>, vector<1x128x128xf32>
    %93 = vector.shape_cast %92 : vector<1x128x128xf32> to vector<128x128xf32>
    %cst_92 = arith.constant dense<0.000000e+00> : vector<288x128xf32>
    %94 = tpu.matmul %91, %93, %cst_92 {dimension_numbers = #tpu.dot_dimension_numbers<[1], [0], [0], [1], [0, 0, 1, 1], [], []>} : vector<288x128xf32>, vector<128x128xf32>, vector<288x128xf32> -> vector<288x128xf32>
    %95 = arith.addf %90, %94 : vector<288x128xf32>
    %c42 = arith.constant 42 : index
    %c0_93 = arith.constant 0 : index
    %96 = vector.load %arg11[%c42, %c0_93] : memref<347x128xf32, #tpu.memory_space<vmem>>, vector<288x128xf32>
    %c7_94 = arith.constant 7 : index
    %c0_95 = arith.constant 0 : index
    %c0_96 = arith.constant 0 : index
    %97 = vector.load %arg4[%c7_94, %c0_95, %c0_96] : memref<9x128x128xf32, #tpu.memory_space<vmem>>, vector<1x128x128xf32>
    %98 = vector.shape_cast %97 : vector<1x128x128xf32> to vector<128x128xf32>
    %cst_97 = arith.constant dense<0.000000e+00> : vector<288x128xf32>
    %99 = tpu.matmul %96, %98, %cst_97 {dimension_numbers = #tpu.dot_dimension_numbers<[1], [0], [0], [1], [0, 0, 1, 1], [], []>} : vector<288x128xf32>, vector<128x128xf32>, vector<288x128xf32> -> vector<288x128xf32>
    %100 = arith.addf %95, %99 : vector<288x128xf32>
    %c43 = arith.constant 43 : index
    %c0_98 = arith.constant 0 : index
    %101 = vector.load %arg11[%c43, %c0_98] : memref<347x128xf32, #tpu.memory_space<vmem>>, vector<288x128xf32>
    %c8_99 = arith.constant 8 : index
    %c0_100 = arith.constant 0 : index
    %c0_101 = arith.constant 0 : index
    %102 = vector.load %arg4[%c8_99, %c0_100, %c0_101] : memref<9x128x128xf32, #tpu.memory_space<vmem>>, vector<1x128x128xf32>
    %103 = vector.shape_cast %102 : vector<1x128x128xf32> to vector<128x128xf32>
    %cst_102 = arith.constant dense<0.000000e+00> : vector<288x128xf32>
    %104 = tpu.matmul %101, %103, %cst_102 {dimension_numbers = #tpu.dot_dimension_numbers<[1], [0], [0], [1], [0, 0, 1, 1], [], []>} : vector<288x128xf32>, vector<128x128xf32>, vector<288x128xf32> -> vector<288x128xf32>
    %105 = arith.addf %100, %104 : vector<288x128xf32>
    %c0_103 = arith.constant 0 : index
    %c0_104 = arith.constant 0 : index
    %106 = vector.load %arg7[%c0_103, %c0_104] : memref<1x128xf32, #tpu.memory_space<vmem>>, vector<1x128xf32>
    %107 = vector.broadcast %106 : vector<1x128xf32> to vector<288x128xf32>
    %108 = arith.addf %105, %107 : vector<288x128xf32>
    %cst_105 = arith.constant 0.000000e+00 : f32
    %109 = vector.broadcast %cst_105 : f32 to vector<288x128xf32>
    %110 = arith.maximumf %108, %109 : vector<288x128xf32>
    %c19_106 = arith.constant 19 : index
    %c0_107 = arith.constant 0 : index
    %111 = vector.load %arg10[%c19_106, %c0_107] : memref<342x4xf32, #tpu.memory_space<vmem>>, vector<288x4xf32>
    %c0_108 = arith.constant 0 : index
    %c0_109 = arith.constant 0 : index
    %112 = vector.load %arg5[%c0_108, %c0_109] : memref<4x128xf32, #tpu.memory_space<vmem>>, vector<4x128xf32>
    %cst_110 = arith.constant dense<0.000000e+00> : vector<288x128xf32>
    %113 = tpu.matmul %111, %112, %cst_110 {dimension_numbers = #tpu.dot_dimension_numbers<[1], [0], [0], [1], [0, 0, 1, 1], [], []>} : vector<288x4xf32>, vector<4x128xf32>, vector<288x128xf32> -> vector<288x128xf32>
    %c0_111 = arith.constant 0 : index
    %c0_112 = arith.constant 0 : index
    %114 = vector.load %arg8[%c0_111, %c0_112] : memref<1x128xf32, #tpu.memory_space<vmem>>, vector<1x128xf32>
    %115 = vector.broadcast %114 : vector<1x128xf32> to vector<288x128xf32>
    %116 = arith.addf %113, %115 : vector<288x128xf32>
    %117 = arith.addf %110, %116 : vector<288x128xf32>
    %cst_113 = arith.constant 0.000000e+00 : f32
    %118 = vector.broadcast %cst_113 : f32 to vector<288x128xf32>
    %119 = arith.maximumf %117, %118 : vector<288x128xf32>
    %c0_114 = arith.constant 0 : index
    %c0_115 = arith.constant 0 : index
    %c0_116 = arith.constant 0 : index
    %120 = vector.load %arg9[%c0_114, %c0_115, %c0_116] : memref<1x288x128xf32, #tpu.memory_space<vmem>>, vector<1x288x128xf32>
    %121 = vector.shape_cast %120 : vector<1x288x128xf32> to vector<288x128xf32>
    %122 = vector.shape_cast %119 : vector<288x128xf32> to vector<1x288x128xf32>
    tpu.vector_store %arg9[%c0_114, %c0_115, %c0_116], %122 {strides = array<i32>} : memref<1x288x128xf32, #tpu.memory_space<vmem>>, vector<1x288x128xf32>,
    return
  }
  func.func @transform_0(%arg0: i32) -> (i32, i32, i32) {
    %c0_i32 = arith.constant 0 : i32
    %c0_i32_0 = arith.constant 0 : i32
    %c0_i32_1 = arith.constant 0 : i32
    return %arg0, %c0_i32, %c0_i32_0 : i32, i32, i32
  }
  func.func @transform_1(%arg0: i32) -> (i32, i32) {
    %c0_i32 = arith.constant 0 : i32
    %c0_i32_0 = arith.constant 0 : i32
    %c0_i32_1 = arith.constant 0 : i32
    return %c0_i32, %c0_i32_0 : i32, i32
  }
  func.func @transform_2(%arg0: i32) -> (i32, i32, i32) {
    %c0_i32 = arith.constant 0 : i32
    %c0_i32_0 = arith.constant 0 : i32
    %c0_i32_1 = arith.constant 0 : i32
    %c0_i32_2 = arith.constant 0 : i32
    return %c0_i32, %c0_i32_0, %c0_i32_1 : i32, i32, i32
  }
  func.func @transform_3(%arg0: i32) -> (i32, i32, i32) {
    %c0_i32 = arith.constant 0 : i32
    %c0_i32_0 = arith.constant 0 : i32
    %c0_i32_1 = arith.constant 0 : i32
    %c0_i32_2 = arith.constant 0 : i32
    return %c0_i32, %c0_i32_0, %c0_i32_1 : i32, i32, i32
  }
  func.func @transform_4(%arg0: i32) -> (i32, i32) {
    %c0_i32 = arith.constant 0 : i32
    %c0_i32_0 = arith.constant 0 : i32
    %c0_i32_1 = arith.constant 0 : i32
    return %c0_i32, %c0_i32_0 : i32, i32
  }
  func.func @transform_5(%arg0: i32) -> (i32, i32) {
    %c0_i32 = arith.constant 0 : i32
    %c0_i32_0 = arith.constant 0 : i32
    %c0_i32_1 = arith.constant 0 : i32
    return %c0_i32, %c0_i32_0 : i32, i32
  }
  func.func @transform_6(%arg0: i32) -> (i32, i32) {
    %c0_i32 = arith.constant 0 : i32
    %c0_i32_0 = arith.constant 0 : i32
    %c0_i32_1 = arith.constant 0 : i32
    return %c0_i32, %c0_i32_0 : i32, i32
  }
  func.func @transform_7(%arg0: i32) -> (i32, i32) {
    %c0_i32 = arith.constant 0 : i32
    %c0_i32_0 = arith.constant 0 : i32
    %c0_i32_1 = arith.constant 0 : i32
    return %c0_i32, %c0_i32_0 : i32, i32
  }
  func.func @transform_8(%arg0: i32) -> (i32, i32, i32) {
    %c0_i32 = arith.constant 0 : i32
    %c0_i32_0 = arith.constant 0 : i32
    %c0_i32_1 = arith.constant 0 : i32
    return %arg0, %c0_i32, %c0_i32_0 : i32, i32, i32
  }
}

</mosaic_0001>

<llo_original>
// kernel: tpu_custom_call.1
$region0: #{tpu_custom_call.1}
  #allocation0 [shape = 'u32[]', space=smem, size = 0x4, offset = 0x4, fixed_abs, tag = 'smem constant byte address 0x4 - core index']
  #allocation1 [shape = 'u32[144,128]{1,0:T(1,128)}', space=vmem, size = 0x12000, scoped, tag = 'internal scratch']
  #allocation2 [shape = 'f32[342,4]{1,0:T(8,128)}', space=vmem, size = 0x2b000, scoped, tag = 'scratch operand']
  #allocation3 [shape = 'f32[347,128]{1,0:T(8,128)}', space=vmem, size = 0x2c000, scoped, tag = 'scratch operand']
  %s0 = inlined_call_operand.vmem [shape: f32[2,342,4], index: 0, kind: input, shape index: {}]
  %s1 = inlined_call_operand.vmem [shape: f32[288,1], index: 1, kind: input, shape index: {}]
  %s2 = inlined_call_operand.vmem [shape: f32[9,4,128], index: 2, kind: input, shape index: {}]
  %s3 = inlined_call_operand.hbm [shape: f32[9,128,128], index: 3, kind: input, shape index: {}]
  %s4 = inlined_call_operand.vmem [shape: f32[4,128], index: 4, kind: input, shape index: {}]
  %s5 = inlined_call_operand.vmem [shape: f32[1,128], index: 5, kind: input, shape index: {}]
  %s6 = inlined_call_operand.vmem [shape: f32[1,128], index: 6, kind: input, shape index: {}]
  %s7 = inlined_call_operand.vmem [shape: f32[1,128], index: 7, kind: input, shape index: {}]
  %s8 = inlined_call_operand.hbm [shape: f32[2,288,128], index: 8, kind: output, shape index: {}]
  %s9 = sld [smem:[#allocation0]]
  $region69: #{tpu_custom_call.1} parent=0
    _
  %s11 = ssub.s32 1, %s9
  %s12 = scalar_select 0, %s11, %s9
  $region1: #{tpu_custom_call.1} parent=0
    #allocation4 [shape = 'u8[589824]{0}', space=vmem, size = 0x90000, scoped, tag = 'input window, operand 3, single buffered']
    #allocation5 [shape = 's32[2]{0}', space=sflag, size = 0x8, scoped, tag = 'scoped memory for tpu_custom_call.1']
    #allocation6 [shape = 's32[2]{0}', space=sflag, size = 0x8, scoped, tag = 'scoped memory for tpu_custom_call.1']
    #allocation7 [shape = 'u8[294912]{0}', space=vmem, size = 0x48000, scoped, tag = 'output window, operand 0']
    %13 = vsyncpa [#allocation5], 0
    %14 = vsyncpa [#allocation6], 0
    %s15 = scalar_lea.sflag [#allocation6], 1
    %16 = vsyncpa %s15, 0
    loop: start=0, step=1, limit=4
    $region2: #{tpu_custom_call.1} parent=1 // loop_pre_header
      _
    $region3: #{tpu_custom_call.1} parent=1 // loop_header
      %s18 = sphi 0, %s22
      %p19 = scmp.ge.s32.totalorder %s18, 4
      %s28 = sphi 0, %s30
      %s31 = sphi 0, %s28
      %s32 = sphi 0, %s31
      %s48 = sphi 0, %s32
      %s52 = sphi 0, %s52
      %s54 = sphi 0, %s52
      %s55 = sphi 0, %s54
      %s69 = sphi 0, %s55
      %s73 = sphi 0, %s73
      %s75 = sphi 0, %s73
      %s76 = sphi 0, %s75
      %s90 = sphi 0, %s76
      %s94 = sphi 0, %s94
      %s96 = sphi 0, %s94
      %s97 = sphi 0, %s96
      %s111 = sphi 0, %s97
      %s115 = sphi 0, %s115
      %s117 = sphi 0, %s115
      %s118 = sphi 0, %s117
      %s132 = sphi 0, %s118
      %s136 = sphi 0, %s136
      %s138 = sphi 0, %s136
      %s139 = sphi 0, %s138
      %s153 = sphi 0, %s139
      %s157 = sphi 0, %s157
      %s159 = sphi 0, %s157
      %s160 = sphi 0, %s159
      %s174 = sphi 0, %s160
      %s178 = sphi 0, %s178
      %s180 = sphi 0, %s178
      %s181 = sphi 0, %s180
      %s195 = sphi 0, %s181
      %s201 = sphi 0, %s203
      %s204 = sphi 0, %s201
      %s205 = sphi 0, %s204
      %s221 = sphi 0, %s205
    $region4: #{tpu_custom_call.1} parent=1 // loop_header_branch
      %21 = sbr.rel (%p19) target = $region8
    $region5: #{tpu_custom_call.1} parent=1 // loop_body
      %s23 = ssub.s32 %s18, 1
      %s24 = ssub.s32 %s18, 2
      %s25 = sadd.s32 %s18, 1
      %s26 = ssub.s32 %s18, %s25
      %p27 = scmp.eq.s32.totalorder %s26, 0
      %s29 = sadd.s32 %s28, 1
      %s30 = scalar_select %p27, %s28, %s29
      %p33 = pneg %p27
      %p34 = scmp.eq.s32.totalorder %s18, 1
      %p35 = por %p33, %p34
      %p36 = scmp.ne.s32.totalorder %s28, %s31
      %p37 = scmp.eq.s32.totalorder %s18, 0
      %p38 = por %p36, %p37
      %p39 = scmp.ne.s32.totalorder %s28, %s31
      %p40 = scmp.eq.s32.totalorder %s23, 1
      %p41 = por %p39, %p40
      %p42 = scmp.ne.s32.totalorder %s31, %s32
      %p43 = scmp.eq.s32.totalorder %s23, 0
      %p44 = por %p42, %p43
      %p45 = scmp.ne.s32.totalorder %s31, %s32
      %p46 = scmp.eq.s32.totalorder %s24, 1
      %p47 = por %p45, %p46
      %p49 = scmp.ne.s32.totalorder %s32, %s48
      %p50 = scmp.eq.s32.totalorder %s24, 0
      %p51 = por %p49, %p50
      %s53 = sadd.s32 %s52, 1
      %p56 = scmp.eq.s32.totalorder %s18, 1
      %p57 = scmp.ne.s32.totalorder %s52, %s54
      %p58 = scmp.eq.s32.totalorder %s18, 0
      %p59 = por %p57, %p58
      %p60 = scmp.ne.s32.totalorder %s52, %s54
      %p61 = scmp.eq.s32.totalorder %s23, 1
      %p62 = por %p60, %p61
      %p63 = scmp.ne.s32.totalorder %s54, %s55
      %p64 = scmp.eq.s32.totalorder %s23, 0
      %p65 = por %p63, %p64
      %p66 = scmp.ne.s32.totalorder %s54, %s55
      %p67 = scmp.eq.s32.totalorder %s24, 1
      %p68 = por %p66, %p67
      %p70 = scmp.ne.s32.totalorder %s55, %s69
      %p71 = scmp.eq.s32.totalorder %s24, 0
      %p72 = por %p70, %p71
      %s74 = sadd.s32 %s73, 1
      %p77 = scmp.eq.s32.totalorder %s18, 1
      %p78 = scmp.ne.s32.totalorder %s73, %s75
      %p79 = scmp.eq.s32.totalorder %s18, 0
      %p80 = por %p78, %p79
      %p81 = scmp.ne.s32.totalorder %s73, %s75
      %p82 = scmp.eq.s32.totalorder %s23, 1
      %p83 = por %p81, %p82
      %p84 = scmp.ne.s32.totalorder %s75, %s76
      %p85 = scmp.eq.s32.totalorder %s23, 0
      %p86 = por %p84, %p85
      %p87 = scmp.ne.s32.totalorder %s75, %s76
      %p88 = scmp.eq.s32.totalorder %s24, 1
      %p89 = por %p87, %p88
      %p91 = scmp.ne.s32.totalorder %s76, %s90
      %p92 = scmp.eq.s32.totalorder %s24, 0
      %p93 = por %p91, %p92
      %s95 = sadd.s32 %s94, 1
      %p98 = scmp.eq.s32.totalorder %s18, 1
      %p99 = scmp.ne.s32.totalorder %s94, %s96
      %p100 = scmp.eq.s32.totalorder %s18, 0
      %p101 = por %p99, %p100
      %p102 = scmp.ne.s32.totalorder %s94, %s96
      %p103 = scmp.eq.s32.totalorder %s23, 1
      %p104 = por %p102, %p103
      %p105 = scmp.ne.s32.totalorder %s96, %s97
      %p106 = scmp.eq.s32.totalorder %s23, 0
      %p107 = por %p105, %p106
      %p108 = scmp.ne.s32.totalorder %s96, %s97
      %p109 = scmp.eq.s32.totalorder %s24, 1
      %p110 = por %p108, %p109
      %p112 = scmp.ne.s32.totalorder %s97, %s111
      %p113 = scmp.eq.s32.totalorder %s24, 0
      %p114 = por %p112, %p113
      %s116 = sadd.s32 %s115, 1
      %p119 = scmp.eq.s32.totalorder %s18, 1
      %p120 = scmp.ne.s32.totalorder %s115, %s117
      %p121 = scmp.eq.s32.totalorder %s18, 0
      %p122 = por %p120, %p121
      %p123 = scmp.ne.s32.totalorder %s115, %s117
      %p124 = scmp.eq.s32.totalorder %s23, 1
      %p125 = por %p123, %p124
      %p126 = scmp.ne.s32.totalorder %s117, %s118
      %p127 = scmp.eq.s32.totalorder %s23, 0
      %p128 = por %p126, %p127
      %p129 = scmp.ne.s32.totalorder %s117, %s118
      %p130 = scmp.eq.s32.totalorder %s24, 1
      %p131 = por %p129, %p130
      %p133 = scmp.ne.s32.totalorder %s118, %s132
      %p134 = scmp.eq.s32.totalorder %s24, 0
      %p135 = por %p133, %p134
      %s137 = sadd.s32 %s136, 1
      %p140 = scmp.eq.s32.totalorder %s18, 1
      %p141 = scmp.ne.s32.totalorder %s136, %s138
      %p142 = scmp.eq.s32.totalorder %s18, 0
      %p143 = por %p141, %p142
      %p144 = scmp.ne.s32.totalorder %s136, %s138
      %p145 = scmp.eq.s32.totalorder %s23, 1
      %p146 = por %p144, %p145
      %p147 = scmp.ne.s32.totalorder %s138, %s139
      %p148 = scmp.eq.s32.totalorder %s23, 0
      %p149 = por %p147, %p148
      %p150 = scmp.ne.s32.totalorder %s138, %s139
      %p151 = scmp.eq.s32.totalorder %s24, 1
      %p152 = por %p150, %p151
      %p154 = scmp.ne.s32.totalorder %s139, %s153
      %p155 = scmp.eq.s32.totalorder %s24, 0
      %p156 = por %p154, %p155
      %s158 = sadd.s32 %s157, 1
      %p161 = scmp.eq.s32.totalorder %s18, 1
      %p162 = scmp.ne.s32.totalorder %s157, %s159
      %p163 = scmp.eq.s32.totalorder %s18, 0
      %p164 = por %p162, %p163
      %p165 = scmp.ne.s32.totalorder %s157, %s159
      %p166 = scmp.eq.s32.totalorder %s23, 1
      %p167 = por %p165, %p166
      %p168 = scmp.ne.s32.totalorder %s159, %s160
      %p169 = scmp.eq.s32.totalorder %s23, 0
      %p170 = por %p168, %p169
      %p171 = scmp.ne.s32.totalorder %s159, %s160
      %p172 = scmp.eq.s32.totalorder %s24, 1
      %p173 = por %p171, %p172
      %p175 = scmp.ne.s32.totalorder %s160, %s174
      %p176 = scmp.eq.s32.totalorder %s24, 0
      %p177 = por %p175, %p176
      %s179 = sadd.s32 %s178, 1
      %p182 = scmp.eq.s32.totalorder %s18, 1
      %p183 = scmp.ne.s32.totalorder %s178, %s180
      %p184 = scmp.eq.s32.totalorder %s18, 0
      %p185 = por %p183, %p184
      %p186 = scmp.ne.s32.totalorder %s178, %s180
      %p187 = scmp.eq.s32.totalorder %s23, 1
      %p188 = por %p186, %p187
      %p189 = scmp.ne.s32.totalorder %s180, %s181
      %p190 = scmp.eq.s32.totalorder %s23, 0
      %p191 = por %p189, %p190
      %p192 = scmp.ne.s32.totalorder %s180, %s181
      %p193 = scmp.eq.s32.totalorder %s24, 1
      %p194 = por %p192, %p193
      %p196 = scmp.ne.s32.totalorder %s181, %s195
      %p197 = scmp.eq.s32.totalorder %s24, 0
      %p198 = por %p196, %p197
      %s199 = ssub.s32 %s18, %s25
      %p200 = scmp.eq.s32.totalorder %s199, 0
      %s202 = sadd.s32 %s201, 1
      %s203 = scalar_select %p200, %s201, %s202
      %p206 = pneg %p200
      %p207 = scmp.eq.s32.totalorder %s18, 1
      %p208 = por %p206, %p207
      %p209 = scmp.ne.s32.totalorder %s201, %s204
      %p210 = scmp.eq.s32.totalorder %s18, 0
      %p211 = por %p209, %p210
      %p212 = scmp.ne.s32.totalorder %s201, %s204
      %p213 = scmp.eq.s32.totalorder %s23, 1
      %p214 = por %p212, %p213
      %p215 = scmp.ne.s32.totalorder %s204, %s205
      %p216 = scmp.eq.s32.totalorder %s23, 0
      %p217 = por %p215, %p216
      %p218 = scmp.ne.s32.totalorder %s204, %s205
      %p219 = scmp.eq.s32.totalorder %s24, 1
      %p220 = por %p218, %p219
      %p222 = scmp.ne.s32.totalorder %s205, %s221
      %p223 = scmp.eq.s32.totalorder %s24, 0
      %p224 = por %p222, %p223
      %p225 = scmp.le.s32.totalorder 1, %s18
      %p226 = scmp.lt.s32.totalorder %s18, 3
      %p227 = pnand %p225, %p226
      %p228 = pneg %p227
      // Predicated region
      $region9: #{tpu_custom_call.1} parent=5 // pred_check
        _
      $region10: #{tpu_custom_call.1} parent=5 // pred_check_branch
        %230 = sbr.rel (%p227) target = $region12
      $region11: #{tpu_custom_call.1} parent=5 // pred_region
        %s231 = ssub.s32 %s18, 1
        // Predicated region
        $region13: #{tpu_custom_call.1} parent=11 // pred_check
          %p232 = pneg %p65
        $region14: #{tpu_custom_call.1} parent=11 // pred_check_branch
          %234 = sbr.rel (%p232) target = $region16
        $region15: #{tpu_custom_call.1} parent=11 // pred_region
          _
        $region16: #{tpu_custom_call.1} parent=11 // pred_fallthru
          _
        // Predicated region
        $region17: #{tpu_custom_call.1} parent=11 // pred_check
          %p235 = pneg %p86
        $region18: #{tpu_custom_call.1} parent=11 // pred_check_branch
          %237 = sbr.rel (%p235) target = $region20
        $region19: #{tpu_custom_call.1} parent=11 // pred_region
          _
        $region20: #{tpu_custom_call.1} parent=11 // pred_fallthru
          _
        // Predicated region
        $region21: #{tpu_custom_call.1} parent=11 // pred_check
          %p238 = pneg %p107
        $region22: #{tpu_custom_call.1} parent=11 // pred_check_branch
          %240 = sbr.rel (%p238) target = $region24
        $region23: #{tpu_custom_call.1} parent=11 // pred_region
          %s242 = ssub.s32 18432, 18432
          %243 = vsyncadd [#allocation5], %s242
          %s244 = sshll.u32 [#allocation4], 4
          %s245 = int_to_ptr.vmem [resolvable:$true] %s244
          %250 = dma.hbm_to_vmem [thread:$0]  %s3, 18432, %s245, [#allocation5], 128, 128, 8
        $region24: #{tpu_custom_call.1} parent=11 // pred_fallthru
          _
        // Predicated region
        $region25: #{tpu_custom_call.1} parent=11 // pred_check
          %p251 = pneg %p128
        $region26: #{tpu_custom_call.1} parent=11 // pred_check_branch
          %253 = sbr.rel (%p251) target = $region28
        $region27: #{tpu_custom_call.1} parent=11 // pred_region
          _
        $region28: #{tpu_custom_call.1} parent=11 // pred_fallthru
          _
        // Predicated region
        $region29: #{tpu_custom_call.1} parent=11 // pred_check
          %p254 = pneg %p149
        $region30: #{tpu_custom_call.1} parent=11 // pred_check_branch
          %256 = sbr.rel (%p254) target = $region32
        $region31: #{tpu_custom_call.1} parent=11 // pred_region
          _
        $region32: #{tpu_custom_call.1} parent=11 // pred_fallthru
          _
        // Predicated region
        $region33: #{tpu_custom_call.1} parent=11 // pred_check
          %p257 = pneg %p170
        $region34: #{tpu_custom_call.1} parent=11 // pred_check_branch
          %259 = sbr.rel (%p257) target = $region36
        $region35: #{tpu_custom_call.1} parent=11 // pred_region
          _
        $region36: #{tpu_custom_call.1} parent=11 // pred_fallthru
          _
        // Predicated region
        $region37: #{tpu_custom_call.1} parent=11 // pred_check
          %p260 = pneg %p191
        $region38: #{tpu_custom_call.1} parent=11 // pred_check_branch
          %262 = sbr.rel (%p260) target = $region40
        $region39: #{tpu_custom_call.1} parent=11 // pred_region
          _
        $region40: #{tpu_custom_call.1} parent=11 // pred_fallthru
          _
      $region12: #{tpu_custom_call.1} parent=5 // pred_fallthru
        _
      %p263 = scmp.lt.s32.totalorder %s18, 2
      // Predicated region
      $region41: #{tpu_custom_call.1} parent=5 // pred_check
        %p264 = pneg %p263
      $region42: #{tpu_custom_call.1} parent=5 // pred_check_branch
        %266 = sbr.rel (%p264) target = $region44
      $region43: #{tpu_custom_call.1} parent=5 // pred_region
        // Predicated region
        $region45: #{tpu_custom_call.1} parent=43 // pred_check
          %p267 = pneg %p38
        $region46: #{tpu_custom_call.1} parent=43 // pred_check_branch
          %269 = sbr.rel (%p267) target = $region48
        $region47: #{tpu_custom_call.1} parent=43 // pred_region
          %p270 = scmp.lt.s32.totalorder %s18, 1
          %s271 = scalar_select %p270, %s18, 1
          %s272 = smul.addr %s271, 43
          %s273 = smul.addr %s272, 8
          %s274 = scalar_lea.vmem %s0, %s273
        $region48: #{tpu_custom_call.1} parent=43 // pred_fallthru
          _
      $region44: #{tpu_custom_call.1} parent=5 // pred_fallthru
        _
      %p275 = scmp.le.s32.totalorder 1, %s18
      %p276 = scmp.lt.s32.totalorder %s18, 3
      %p277 = pnand %p275, %p276
      %p278 = pneg %p277
      // Predicated region
      $region49: #{tpu_custom_call.1} parent=5 // pred_check
        _
      $region50: #{tpu_custom_call.1} parent=5 // pred_check_branch
        %280 = sbr.rel (%p277) target = $region52
      $region51: #{tpu_custom_call.1} parent=5 // pred_region
        %s281 = ssub.s32 %s18, 1
        // Predicated region
        $region53: #{tpu_custom_call.1} parent=51 // pred_check
          %p282 = pneg %p107
        $region54: #{tpu_custom_call.1} parent=51 // pred_check_branch
          %284 = sbr.rel (%p282) target = $region56
        $region55: #{tpu_custom_call.1} parent=51 // pred_region
          %285 = dma.done [#allocation5], 18432
        $region56: #{tpu_custom_call.1} parent=51 // pred_fallthru
          _
        %p286 = scmp.lt.s32.totalorder %s23, 1
        %s287 = scalar_select %p286, %s23, 1
        %s288 = smul.addr %s287, 43
        %s289 = smul.addr %s288, 8
        %s290 = scalar_lea.vmem %s0, %s289
        %p291 = pneg %p44
        %p292 = pneg %p41
        %p293 = pneg %p65
        %p294 = pneg %p62
        %p295 = pneg %p86
        %p296 = pneg %p83
        %p297 = pneg %p107
        %p298 = pneg %p104
        %p299 = pneg %p128
        %p300 = pneg %p125
        %p301 = pneg %p149
        %p302 = pneg %p146
        %p303 = pneg %p170
        %p304 = pneg %p167
        %p305 = pneg %p191
        %p306 = pneg %p188
        %p307 = pneg %p217
        %p308 = pneg %p214
        %s309 = sand.u32 %s204, 1
        %s310 = scalar_lea.sflag [#allocation6], %s309
        %s311 = sand.u32 %s204, 1
        %s312 = smul.addr %s311, 288
        %s313 = scalar_lea.vmem [#allocation7], %s312
        %p314 = scmp.lt.s32.totalorder %s23, 1
        %s315 = scalar_select %p314, %s23, 1
        %s316 = smul.addr %s315, 43
        %s317 = smul.addr %s316, 8
        %s318 = scalar_lea.vmem %s0, %s317
        %v319 = vld [vmem:[%s318] sm:$0xff]
        %v320 = vld [vmem:[%s318 + $0x8] sm:$0xff]
        %v321 = vld [vmem:[%s318 + $0x10] sm:$0xff]
        %v322 = vld [vmem:[%s318 + $0x18] sm:$0xff]
        %v323 = vld [vmem:[%s318 + $0x20] sm:$0xff]
        %v324 = vld [vmem:[%s318 + $0x28] sm:$0xff]
        %v325 = vld [vmem:[%s318 + $0x30] sm:$0xff]
        %v326 = vld [vmem:[%s318 + $0x38] sm:$0xff]
        %v327 = vld [vmem:[%s318 + $0x40] sm:$0xff]
        %v328 = vld [vmem:[%s318 + $0x48] sm:$0xff]
        %v329 = vld [vmem:[%s318 + $0x50] sm:$0xff]
        %v330 = vld [vmem:[%s318 + $0x58] sm:$0xff]
        %v331 = vld [vmem:[%s318 + $0x60] sm:$0xff]
        %v332 = vld [vmem:[%s318 + $0x68] sm:$0xff]
        %v333 = vld [vmem:[%s318 + $0x70] sm:$0xff]
        %v334 = vld [vmem:[%s318 + $0x78] sm:$0xff]
        %v335 = vld [vmem:[%s318 + $0x80] sm:$0xff]
        %v336 = vld [vmem:[%s318 + $0x88] sm:$0xff]
        %v337 = vld [vmem:[%s318 + $0x90] sm:$0xff]
        %v338 = vld [vmem:[%s318 + $0x98] sm:$0xff]
        %v339 = vld [vmem:[%s318 + $0xa0] sm:$0xff]
        %v340 = vld [vmem:[%s318 + $0xa8] sm:$0xff]
        %v341 = vld [vmem:[%s318 + $0xb0] sm:$0xff]
        %v342 = vld [vmem:[%s318 + $0xb8] sm:$0xff]
        %v343 = vld [vmem:[%s318 + $0xc0] sm:$0xff]
        %v344 = vld [vmem:[%s318 + $0xc8] sm:$0xff]
        %v345 = vld [vmem:[%s318 + $0xd0] sm:$0xff]
        %v346 = vld [vmem:[%s318 + $0xd8] sm:$0xff]
        %v347 = vld [vmem:[%s318 + $0xe0] sm:$0xff]
        %v348 = vld [vmem:[%s318 + $0xe8] sm:$0xff]
        %v349 = vld [vmem:[%s318 + $0xf0] sm:$0xff]
        %v350 = vld [vmem:[%s318 + $0xf8] sm:$0xff]
        %v351 = vld [vmem:[%s318 + $0x100] sm:$0xff]
        %v352 = vld [vmem:[%s318 + $0x108] sm:$0xff]
        %v353 = vld [vmem:[%s318 + $0x110] sm:$0xff]
        %v354 = vld [vmem:[%s318 + $0x118] sm:$0xff]
        %v355 = vld [vmem:[%s318 + $0x120] sm:$0xff]
        %v356 = vld [vmem:[%s318 + $0x128] sm:$0xff]
        %v357 = vld [vmem:[%s318 + $0x130] sm:$0xff]
        %v358 = vld [vmem:[%s318 + $0x138] sm:$0xff]
        %v359 = vld [vmem:[%s318 + $0x140] sm:$0xff]
        %v360 = vld [vmem:[%s318 + $0x148] sm:$0xff]
        %v361 = vld [vmem:[%s318 + $0x150] sm:$0x3f]
        %vm362 = vcmask 31744
        %363 = vst.msk [vmem:[#allocation2] sm:$0xff] %vm362, %v319
        %364 = vst.msk [vmem:[#allocation2 + $0x8] sm:$0xff] %vm362, %v320
        %365 = vst.msk [vmem:[#allocation2 + $0x10] sm:$0xff] %vm362, %v321
        %366 = vst.msk [vmem:[#allocation2 + $0x18] sm:$0xff] %vm362, %v322
        %367 = vst.msk [vmem:[#allocation2 + $0x20] sm:$0xff] %vm362, %v323
        %368 = vst.msk [vmem:[#allocation2 + $0x28] sm:$0xff] %vm362, %v324
        %369 = vst.msk [vmem:[#allocation2 + $0x30] sm:$0xff] %vm362, %v325
        %370 = vst.msk [vmem:[#allocation2 + $0x38] sm:$0xff] %vm362, %v326
        %371 = vst.msk [vmem:[#allocation2 + $0x40] sm:$0xff] %vm362, %v327
        %372 = vst.msk [vmem:[#allocation2 + $0x48] sm:$0xff] %vm362, %v328
        %373 = vst.msk [vmem:[#allocation2 + $0x50] sm:$0xff] %vm362, %v329
        %374 = vst.msk [vmem:[#allocation2 + $0x58] sm:$0xff] %vm362, %v330
        %375 = vst.msk [vmem:[#allocation2 + $0x60] sm:$0xff] %vm362, %v331
        %376 = vst.msk [vmem:[#allocation2 + $0x68] sm:$0xff] %vm362, %v332
        %377 = vst.msk [vmem:[#allocation2 + $0x70] sm:$0xff] %vm362, %v333
        %378 = vst.msk [vmem:[#allocation2 + $0x78] sm:$0xff] %vm362, %v334
        %379 = vst.msk [vmem:[#allocation2 + $0x80] sm:$0xff] %vm362, %v335
        %380 = vst.msk [vmem:[#allocation2 + $0x88] sm:$0xff] %vm362, %v336
        %381 = vst.msk [vmem:[#allocation2 + $0x90] sm:$0xff] %vm362, %v337
        %382 = vst.msk [vmem:[#allocation2 + $0x98] sm:$0xff] %vm362, %v338
        %383 = vst.msk [vmem:[#allocation2 + $0xa0] sm:$0xff] %vm362, %v339
        %384 = vst.msk [vmem:[#allocation2 + $0xa8] sm:$0xff] %vm362, %v340
        %385 = vst.msk [vmem:[#allocation2 + $0xb0] sm:$0xff] %vm362, %v341
        %386 = vst.msk [vmem:[#allocation2 + $0xb8] sm:$0xff] %vm362, %v342
        %387 = vst.msk [vmem:[#allocation2 + $0xc0] sm:$0xff] %vm362, %v343
        %388 = vst.msk [vmem:[#allocation2 + $0xc8] sm:$0xff] %vm362, %v344
        %389 = vst.msk [vmem:[#allocation2 + $0xd0] sm:$0xff] %vm362, %v345
        %390 = vst.msk [vmem:[#allocation2 + $0xd8] sm:$0xff] %vm362, %v346
        %391 = vst.msk [vmem:[#allocation2 + $0xe0] sm:$0xff] %vm362, %v347
        %392 = vst.msk [vmem:[#allocation2 + $0xe8] sm:$0xff] %vm362, %v348
        %393 = vst.msk [vmem:[#allocation2 + $0xf0] sm:$0xff] %vm362, %v349
        %394 = vst.msk [vmem:[#allocation2 + $0xf8] sm:$0xff] %vm362, %v350
        %395 = vst.msk [vmem:[#allocation2 + $0x100] sm:$0xff] %vm362, %v351
        %396 = vst.msk [vmem:[#allocation2 + $0x108] sm:$0xff] %vm362, %v352
        %397 = vst.msk [vmem:[#allocation2 + $0x110] sm:$0xff] %vm362, %v353
        %398 = vst.msk [vmem:[#allocation2 + $0x118] sm:$0xff] %vm362, %v354
        %399 = vst.msk [vmem:[#allocation2 + $0x120] sm:$0xff] %vm362, %v355
        %400 = vst.msk [vmem:[#allocation2 + $0x128] sm:$0xff] %vm362, %v356
        %401 = vst.msk [vmem:[#allocation2 + $0x130] sm:$0xff] %vm362, %v357
        %402 = vst.msk [vmem:[#allocation2 + $0x138] sm:$0xff] %vm362, %v358
        %403 = vst.msk [vmem:[#allocation2 + $0x140] sm:$0xff] %vm362, %v359
        %404 = vst.msk [vmem:[#allocation2 + $0x148] sm:$0xff] %vm362, %v360
        %vm405 = vcmask 29696
        %406 = vst.msk [vmem:[#allocation2 + $0x150] sm:$0x3f] %vm405, %v361
        %v407 = vld [vmem:[#allocation2] sm:$0xff]
        %v408 = vld [vmem:[#allocation2 + $0x8] sm:$0xff]
        %v409 = vld [vmem:[#allocation2 + $0x10] sm:$0xff]
        %v410 = vld [vmem:[#allocation2 + $0x18] sm:$0xff]
        %v411 = vld [vmem:[#allocation2 + $0x20] sm:$0xff]
        %v412 = vld [vmem:[#allocation2 + $0x28] sm:$0xff]
        %v413 = vld [vmem:[#allocation2 + $0x30] sm:$0xff]
        %v414 = vld [vmem:[#allocation2 + $0x38] sm:$0xff]
        %v415 = vld [vmem:[#allocation2 + $0x40] sm:$0xff]
        %v416 = vld [vmem:[#allocation2 + $0x48] sm:$0xff]
        %v417 = vld [vmem:[#allocation2 + $0x50] sm:$0xff]
        %v418 = vld [vmem:[#allocation2 + $0x58] sm:$0xff]
        %v419 = vld [vmem:[#allocation2 + $0x60] sm:$0xff]
        %v420 = vld [vmem:[#allocation2 + $0x68] sm:$0xff]
        %v421 = vld [vmem:[#allocation2 + $0x70] sm:$0xff]
        %v422 = vld [vmem:[#allocation2 + $0x78] sm:$0xff]
        %v423 = vld [vmem:[#allocation2 + $0x80] sm:$0xff]
        %v424 = vld [vmem:[#allocation2 + $0x88] sm:$0xff]
        %v425 = vld [vmem:[#allocation2 + $0x90] sm:$0xff]
        %v426 = vld [vmem:[#allocation2 + $0x98] sm:$0xff]
        %v427 = vld [vmem:[#allocation2 + $0xa0] sm:$0xff]
        %v428 = vld [vmem:[#allocation2 + $0xa8] sm:$0xff]
        %v429 = vld [vmem:[#allocation2 + $0xb0] sm:$0xff]
        %v430 = vld [vmem:[#allocation2 + $0xb8] sm:$0xff]
        %v431 = vld [vmem:[#allocation2 + $0xc0] sm:$0xff]
        %v432 = vld [vmem:[#allocation2 + $0xc8] sm:$0xff]
        %v433 = vld [vmem:[#allocation2 + $0xd0] sm:$0xff]
        %v434 = vld [vmem:[#allocation2 + $0xd8] sm:$0xff]
        %v435 = vld [vmem:[#allocation2 + $0xe0] sm:$0xff]
        %v436 = vld [vmem:[#allocation2 + $0xe8] sm:$0xff]
        %v437 = vld [vmem:[#allocation2 + $0xf0] sm:$0xff]
        %v438 = vld [vmem:[#allocation2 + $0xf8] sm:$0xff]
        %v439 = vld [vmem:[#allocation2 + $0x100] sm:$0xff]
        %v440 = vld [vmem:[#allocation2 + $0x108] sm:$0xff]
        %v441 = vld [vmem:[#allocation2 + $0x110] sm:$0xff]
        %v442 = vld [vmem:[#allocation2 + $0x118] sm:$0xff]
        %v443 = vld [vmem:[%s2] sm:$0xf]
        %v444 = vld [vmem:[#allocation2 + $0x1] sm:$0xff]
        %v445 = vld [vmem:[#allocation2 + $0x9] sm:$0xff]
        %v446 = vld [vmem:[#allocation2 + $0x11] sm:$0xff]
        %v447 = vld [vmem:[#allocation2 + $0x19] sm:$0xff]
        %v448 = vld [vmem:[#allocation2 + $0x21] sm:$0xff]
        %v449 = vld [vmem:[#allocation2 + $0x29] sm:$0xff]
        %v450 = vld [vmem:[#allocation2 + $0x31] sm:$0xff]
        %v451 = vld [vmem:[#allocation2 + $0x39] sm:$0xff]
        %v452 = vld [vmem:[#allocation2 + $0x41] sm:$0xff]
        %v453 = vld [vmem:[#allocation2 + $0x49] sm:$0xff]
        %v454 = vld [vmem:[#allocation2 + $0x51] sm:$0xff]
        %v455 = vld [vmem:[#allocation2 + $0x59] sm:$0xff]
        %v456 = vld [vmem:[#allocation2 + $0x61] sm:$0xff]
        %v457 = vld [vmem:[#allocation2 + $0x69] sm:$0xff]
        %v458 = vld [vmem:[#allocation2 + $0x71] sm:$0xff]
        %v459 = vld [vmem:[#allocation2 + $0x79] sm:$0xff]
        %v460 = vld [vmem:[#allocation2 + $0x81] sm:$0xff]
        %v461 = vld [vmem:[#allocation2 + $0x89] sm:$0xff]
        %v462 = vld [vmem:[#allocation2 + $0x91] sm:$0xff]
        %v463 = vld [vmem:[#allocation2 + $0x99] sm:$0xff]
        %v464 = vld [vmem:[#allocation2 + $0xa1] sm:$0xff]
        %v465 = vld [vmem:[#allocation2 + $0xa9] sm:$0xff]
        %v466 = vld [vmem:[#allocation2 + $0xb1] sm:$0xff]
        %v467 = vld [vmem:[#allocation2 + $0xb9] sm:$0xff]
        %v468 = vld [vmem:[#allocation2 + $0xc1] sm:$0xff]
        %v469 = vld [vmem:[#allocation2 + $0xc9] sm:$0xff]
        %v470 = vld [vmem:[#allocation2 + $0xd1] sm:$0xff]
        %v471 = vld [vmem:[#allocation2 + $0xd9] sm:$0xff]
        %v472 = vld [vmem:[#allocation2 + $0xe1] sm:$0xff]
        %v473 = vld [vmem:[#allocation2 + $0xe9] sm:$0xff]
        %v474 = vld [vmem:[#allocation2 + $0xf1] sm:$0xff]
        %v475 = vld [vmem:[#allocation2 + $0xf9] sm:$0xff]
        %v476 = vld [vmem:[#allocation2 + $0x101] sm:$0xff]
        %v477 = vld [vmem:[#allocation2 + $0x109] sm:$0xff]
        %v478 = vld [vmem:[#allocation2 + $0x111] sm:$0xff]
        %v479 = vld [vmem:[#allocation2 + $0x119] sm:$0xff]
        %s480 = scalar_lea.vmem %s2, 4
        %v481 = vld [vmem:[%s480] sm:$0xf]
        %v483 = vsel %vm362, %v444, 0
        %v486 = vsel %vm362, %v445, 0
        %v489 = vsel %vm362, %v446, 0
        %v492 = vsel %vm362, %v447, 0
        %v495 = vsel %vm362, %v448, 0
        %v498 = vsel %vm362, %v449, 0
        %v501 = vsel %vm362, %v450, 0
        %v504 = vsel %vm362, %v451, 0
        %v507 = vsel %vm362, %v452, 0
        %v510 = vsel %vm362, %v453, 0
        %v513 = vsel %vm362, %v454, 0
        %v516 = vsel %vm362, %v455, 0
        %v519 = vsel %vm362, %v456, 0
        %v522 = vsel %vm362, %v457, 0
        %v525 = vsel %vm362, %v458, 0
        %v528 = vsel %vm362, %v459, 0
        %v531 = vsel %vm362, %v460, 0
        %v534 = vsel %vm362, %v461, 0
        %v537 = vsel %vm362, %v462, 0
        %v540 = vsel %vm362, %v463, 0
        %v543 = vsel %vm362, %v464, 0
        %v546 = vsel %vm362, %v465, 0
        %v549 = vsel %vm362, %v466, 0
        %v552 = vsel %vm362, %v467, 0
        %v555 = vsel %vm362, %v468, 0
        %v558 = vsel %vm362, %v469, 0
        %v561 = vsel %vm362, %v470, 0
        %v564 = vsel %vm362, %v471, 0
        %v567 = vsel %vm362, %v472, 0
        %v570 = vsel %vm362, %v473, 0
        %v573 = vsel %vm362, %v474, 0
        %v576 = vsel %vm362, %v475, 0
        %v579 = vsel %vm362, %v476, 0
        %v582 = vsel %vm362, %v477, 0
        %v585 = vsel %vm362, %v478, 0
        %v588 = vsel %vm362, %v479, 0
        %vm590 = vcmask 1043456
        %v592 = vsel %vm590, %v481, 0
        %594 = vmatprep.subr.mxu0 0.0
        %595 = vmatpush1.msra.mxu0 %v592
        %596 = vmatprep.subr.mxu0 0.0
        %597 = vmatpush1.msra.mxu0 0.0
        %598 = vmatprep.subr.mxu0 0.0
        %599 = vmatpush1.msra.mxu0 0.0
        %600 = vmatprep.subr.mxu0 0.0
        %601 = vmatpush1.msra.mxu0 0.0
        %602 = vmatprep.subr.mxu0 0.0
        %603 = vmatpush1.msra.mxu0 0.0
        %604 = vmatprep.subr.mxu0 0.0
        %605 = vmatpush1.msra.mxu0 0.0
        %606 = vmatprep.subr.mxu0 0.0
        %607 = vmatpush1.msra.mxu0 0.0
        %608 = vmatprep.subr.mxu0 0.0
        %609 = vmatpush1.msra.mxu0 0.0
        %610 = vmatprep.subr.mxu0 0.0
        %611 = vmatpush1.msra.mxu0 0.0
        %612 = vmatprep.subr.mxu0 0.0
        %613 = vmatpush1.msra.mxu0 0.0
        %614 = vmatprep.subr.mxu0 0.0
        %615 = vmatpush1.msra.mxu0 0.0
        %616 = vmatprep.subr.mxu0 0.0
        %617 = vmatpush1.msra.mxu0 0.0
        %618 = vmatprep.subr.mxu0 0.0
        %619 = vmatpush1.msra.mxu0 0.0
        %620 = vmatprep.subr.mxu0 0.0
        %621 = vmatpush1.msra.mxu0 0.0
        %622 = vmatprep.subr.mxu0 0.0
        %623 = vmatpush1.msra.mxu0 0.0
        %624 = vmatprep.subr.mxu0 0.0
        %625 = vmatpush1.msra.mxu0 0.0
        %626 = vmatprep.subr.mxu0 0.0
        %627 = vmatpush1.msra.mxu0 0.0
        %628 = vmatprep.subr.mxu0 0.0
        %629 = vmatpush1.msra.mxu0 0.0
        %630 = vmatprep.subr.mxu0 0.0
        %631 = vmatpush1.msra.mxu0 0.0
        %632 = vmatprep.subr.mxu0 0.0
        %633 = vmatpush1.msra.mxu0 0.0
        %634 = vmatprep.subr.mxu0 0.0
        %635 = vmatpush1.msra.mxu0 0.0
        %636 = vmatprep.subr.mxu0 0.0
        %637 = vmatpush1.msra.mxu0 0.0
        %638 = vmatprep.subr.mxu0 0.0
        %639 = vmatpush1.msra.mxu0 0.0
        %640 = vmatprep.subr.mxu0 0.0
        %641 = vmatpush1.msra.mxu0 0.0
        %642 = vmatprep.subr.mxu0 0.0
        %643 = vmatpush1.msra.mxu0 0.0
        %644 = vmatprep.subr.mxu0 0.0
        %645 = vmatpush1.msra.mxu0 0.0
        %646 = vmatprep.subr.mxu0 0.0
        %647 = vmatpush1.msra.mxu0 0.0
        %648 = vmatprep.subr.mxu0 0.0
        %649 = vmatpush1.msra.mxu0 0.0
        %650 = vmatprep.subr.mxu0 0.0
        %651 = vmatpush1.msra.mxu0 0.0
        %652 = vmatprep.subr.mxu0 0.0
        %653 = vmatpush1.msra.mxu0 0.0
        %654 = vmatprep.subr.mxu0 0.0
        %655 = vmatpush1.msra.mxu0 0.0
        %656 = vmatprep.subr.mxu0 0.0
        %657 = vmatpush1.msra.mxu0 0.0
        %658 = vmatprep.mubr.f32.mxu0 0.0
        %659 = vmatmul.mubr.f32.gmra.mrb[0].mxu0 %v483
        %v660 = vpop.f32.mrb[0].mxu0
        %v661 = vadd.f32 0.0, %v660
        %v662 = vpop.f32.mrb[0].mxu0
        %663 = vmatprep.mubr.f32.mxu0 0.0
        %664 = vmatmul.mubr.f32.gmra.mrb[0].mxu0 %v486
        %v665 = vpop.f32.mrb[0].mxu0
        %v666 = vadd.f32 0.0, %v665
        %v667 = vpop.f32.mrb[0].mxu0
        %668 = vmatprep.mubr.f32.mxu0 0.0
        %669 = vmatmul.mubr.f32.gmra.mrb[0].mxu0 %v489
        %v670 = vpop.f32.mrb[0].mxu0
        %v671 = vadd.f32 0.0, %v670
        %v672 = vpop.f32.mrb[0].mxu0
        %673 = vmatprep.mubr.f32.mxu0 0.0
        %674 = vmatmul.mubr.f32.gmra.mrb[0].mxu0 %v492
        %v675 = vpop.f32.mrb[0].mxu0
        %v676 = vadd.f32 0.0, %v675
        %v677 = vpop.f32.mrb[0].mxu0
        %678 = vmatprep.mubr.f32.mxu0 0.0
        %679 = vmatmul.mubr.f32.gmra.mrb[0].mxu0 %v495
        %v680 = vpop.f32.mrb[0].mxu0
        %v681 = vadd.f32 0.0, %v680
        %v682 = vpop.f32.mrb[0].mxu0
        %683 = vmatprep.mubr.f32.mxu0 0.0
        %684 = vmatmul.mubr.f32.gmra.mrb[0].mxu0 %v498
        %v685 = vpop.f32.mrb[0].mxu0
        %v686 = vadd.f32 0.0, %v685
        %v687 = vpop.f32.mrb[0].mxu0
        %688 = vmatprep.mubr.f32.mxu0 0.0
        %689 = vmatmul.mubr.f32.gmra.mrb[0].mxu0 %v501
        %v690 = vpop.f32.mrb[0].mxu0
        %v691 = vadd.f32 0.0, %v690
        %v692 = vpop.f32.mrb[0].mxu0
        %693 = vmatprep.mubr.f32.mxu0 0.0
        %694 = vmatmul.mubr.f32.gmra.mrb[0].mxu0 %v504
        %v695 = vpop.f32.mrb[0].mxu0
        %v696 = vadd.f32 0.0, %v695
        %v697 = vpop.f32.mrb[0].mxu0
        %698 = vmatprep.mubr.f32.mxu0 0.0
        %699 = vmatmul.mubr.f32.gmra.mrb[0].mxu0 %v507
        %v700 = vpop.f32.mrb[0].mxu0
        %v701 = vadd.f32 0.0, %v700
        %v702 = vpop.f32.mrb[0].mxu0
        %703 = vmatprep.mubr.f32.mxu0 0.0
        %704 = vmatmul.mubr.f32.gmra.mrb[0].mxu0 %v510
        %v705 = vpop.f32.mrb[0].mxu0
        %v706 = vadd.f32 0.0, %v705
        %v707 = vpop.f32.mrb[0].mxu0
        %708 = vmatprep.mubr.f32.mxu0 0.0
        %709 = vmatmul.mubr.f32.gmra.mrb[0].mxu0 %v513
        %v710 = vpop.f32.mrb[0].mxu0
        %v711 = vadd.f32 0.0, %v710
        %v712 = vpop.f32.mrb[0].mxu0
        %713 = vmatprep.mubr.f32.mxu0 0.0
        %714 = vmatmul.mubr.f32.gmra.mrb[0].mxu0 %v516
        %v715 = vpop.f32.mrb[0].mxu0
        %v716 = vadd.f32 0.0, %v715
        %v717 = vpop.f32.mrb[0].mxu0
        %718 = vmatprep.mubr.f32.mxu0 0.0
        %719 = vmatmul.mubr.f32.gmra.mrb[0].mxu0 %v519
        %v720 = vpop.f32.mrb[0].mxu0
        %v721 = vadd.f32 0.0, %v720
        %v722 = vpop.f32.mrb[0].mxu0
        %723 = vmatprep.mubr.f32.mxu0 0.0
        %724 = vmatmul.mubr.f32.gmra.mrb[0].mxu0 %v522
        %v725 = vpop.f32.mrb[0].mxu0
        %v726 = vadd.f32 0.0, %v725
        %v727 = vpop.f32.mrb[0].mxu0
        %728 = vmatprep.mubr.f32.mxu0 0.0
        %729 = vmatmul.mubr.f32.gmra.mrb[0].mxu0 %v525
        %v730 = vpop.f32.mrb[0].mxu0
        %v731 = vadd.f32 0.0, %v730
        %v732 = vpop.f32.mrb[0].mxu0
        %733 = vmatprep.mubr.f32.mxu0 0.0
        %734 = vmatmul.mubr.f32.gmra.mrb[0].mxu0 %v528
        %v735 = vpop.f32.mrb[0].mxu0
        %v736 = vadd.f32 0.0, %v735
        %v737 = vpop.f32.mrb[0].mxu0
        %738 = vmatprep.mubr.f32.mxu0 0.0
        %739 = vmatmul.mubr.f32.gmra.mrb[0].mxu0 %v531
        %v740 = vpop.f32.mrb[0].mxu0
        %v741 = vadd.f32 0.0, %v740
        %v742 = vpop.f32.mrb[0].mxu0
        %743 = vmatprep.mubr.f32.mxu0 0.0
        %744 = vmatmul.mubr.f32.gmra.mrb[0].mxu0 %v534
        %v745 = vpop.f32.mrb[0].mxu0
        %v746 = vadd.f32 0.0, %v745
        %v747 = vpop.f32.mrb[0].mxu0
        %748 = vmatprep.mubr.f32.mxu0 0.0
        %749 = vmatmul.mubr.f32.gmra.mrb[0].mxu0 %v537
        %v750 = vpop.f32.mrb[0].mxu0
        %v751 = vadd.f32 0.0, %v750
        %v752 = vpop.f32.mrb[0].mxu0
        %753 = vmatprep.mubr.f32.mxu0 0.0
        %754 = vmatmul.mubr.f32.gmra.mrb[0].mxu0 %v540
        %v755 = vpop.f32.mrb[0].mxu0
        %v756 = vadd.f32 0.0, %v755
        %v757 = vpop.f32.mrb[0].mxu0
        %758 = vmatprep.mubr.f32.mxu0 0.0
        %759 = vmatmul.mubr.f32.gmra.mrb[0].mxu0 %v543
        %v760 = vpop.f32.mrb[0].mxu0
        %v761 = vadd.f32 0.0, %v760
        %v762 = vpop.f32.mrb[0].mxu0
        %763 = vmatprep.mubr.f32.mxu0 0.0
        %764 = vmatmul.mubr.f32.gmra.mrb[0].mxu0 %v546
        %v765 = vpop.f32.mrb[0].mxu0
        %v766 = vadd.f32 0.0, %v765
        %v767 = vpop.f32.mrb[0].mxu0
        %768 = vmatprep.mubr.f32.mxu0 0.0
        %769 = vmatmul.mubr.f32.gmra.mrb[0].mxu0 %v549
        %v770 = vpop.f32.mrb[0].mxu0
        %v771 = vadd.f32 0.0, %v770
        %v772 = vpop.f32.mrb[0].mxu0
        %773 = vmatprep.mubr.f32.mxu0 0.0
        %774 = vmatmul.mubr.f32.gmra.mrb[0].mxu0 %v552
        %v775 = vpop.f32.mrb[0].mxu0
        %v776 = vadd.f32 0.0, %v775
        %v777 = vpop.f32.mrb[0].mxu0
        %778 = vmatprep.mubr.f32.mxu0 0.0
        %779 = vmatmul.mubr.f32.gmra.mrb[0].mxu0 %v555
        %v780 = vpop.f32.mrb[0].mxu0
        %v781 = vadd.f32 0.0, %v780
        %v782 = vpop.f32.mrb[0].mxu0
        %783 = vmatprep.mubr.f32.mxu0 0.0
        %784 = vmatmul.mubr.f32.gmra.mrb[0].mxu0 %v558
        %v785 = vpop.f32.mrb[0].mxu0
        %v786 = vadd.f32 0.0, %v785
        %v787 = vpop.f32.mrb[0].mxu0
        %788 = vmatprep.mubr.f32.mxu0 0.0
        %789 = vmatmul.mubr.f32.gmra.mrb[0].mxu0 %v561
        %v790 = vpop.f32.mrb[0].mxu0
        %v791 = vadd.f32 0.0, %v790
        %v792 = vpop.f32.mrb[0].mxu0
        %793 = vmatprep.mubr.f32.mxu0 0.0
        %794 = vmatmul.mubr.f32.gmra.mrb[0].mxu0 %v564
        %v795 = vpop.f32.mrb[0].mxu0
        %v796 = vadd.f32 0.0, %v795
        %v797 = vpop.f32.mrb[0].mxu0
        %798 = vmatprep.mubr.f32.mxu0 0.0
        %799 = vmatmul.mubr.f32.gmra.mrb[0].mxu0 %v567
        %v800 = vpop.f32.mrb[0].mxu0
        %v801 = vadd.f32 0.0, %v800
        %v802 = vpop.f32.mrb[0].mxu0
        %803 = vmatprep.mubr.f32.mxu0 0.0
        %804 = vmatmul.mubr.f32.gmra.mrb[0].mxu0 %v570
        %v805 = vpop.f32.mrb[0].mxu0
        %v806 = vadd.f32 0.0, %v805
        %v807 = vpop.f32.mrb[0].mxu0
        %808 = vmatprep.mubr.f32.mxu0 0.0
        %809 = vmatmul.mubr.f32.gmra.mrb[0].mxu0 %v573
        %v810 = vpop.f32.mrb[0].mxu0
        %v811 = vadd.f32 0.0, %v810
        %v812 = vpop.f32.mrb[0].mxu0
        %813 = vmatprep.mubr.f32.mxu0 0.0
        %814 = vmatmul.mubr.f32.gmra.mrb[0].mxu0 %v576
        %v815 = vpop.f32.mrb[0].mxu0
        %v816 = vadd.f32 0.0, %v815
        %v817 = vpop.f32.mrb[0].mxu0
        %818 = vmatprep.mubr.f32.mxu0 0.0
        %819 = vmatmul.mubr.f32.gmra.mrb[0].mxu0 %v579
        %v820 = vpop.f32.mrb[0].mxu0
        %v821 = vadd.f32 0.0, %v820
        %v822 = vpop.f32.mrb[0].mxu0
        %823 = vmatprep.mubr.f32.mxu0 0.0
        %824 = vmatmul.mubr.f32.gmra.mrb[0].mxu0 %v582
        %v825 = vpop.f32.mrb[0].mxu0
        %v826 = vadd.f32 0.0, %v825
        %v827 = vpop.f32.mrb[0].mxu0
        %828 = vmatprep.mubr.f32.mxu0 0.0
        %829 = vmatmul.mubr.f32.gmra.mrb[0].mxu0 %v585
        %v830 = vpop.f32.mrb[0].mxu0
        %v831 = vadd.f32 0.0, %v830
        %v832 = vpop.f32.mrb[0].mxu0
        %833 = vmatprep.mubr.f32.mxu0 0.0
        %834 = vmatmul.mubr.f32.gmra.mrb[0].mxu0 %v588
        %v835 = vpop.f32.mrb[0].mxu0
        %v836 = vadd.f32 0.0, %v835
        %v837 = vpop.f32.mrb[0].mxu0
        %838 = vdwg.mxu0
        %v840 = vsel %vm362, %v407, 0
        %v843 = vsel %vm362, %v408, 0
        %v846 = vsel %vm362, %v409, 0
        %v849 = vsel %vm362, %v410, 0
        %v852 = vsel %vm362, %v411, 0
        %v855 = vsel %vm362, %v412, 0
        %v858 = vsel %vm362, %v413, 0
        %v861 = vsel %vm362, %v414, 0
        %v864 = vsel %vm362, %v415, 0
        %v867 = vsel %vm362, %v416, 0
        %v870 = vsel %vm362, %v417, 0
        %v873 = vsel %vm362, %v418, 0
        %v876 = vsel %vm362, %v419, 0
        %v879 = vsel %vm362, %v420, 0
        %v882 = vsel %vm362, %v421, 0
        %v885 = vsel %vm362, %v422, 0
        %v888 = vsel %vm362, %v423, 0
        %v891 = vsel %vm362, %v424, 0
        %v894 = vsel %vm362, %v425, 0
        %v897 = vsel %vm362, %v426, 0
        %v900 = vsel %vm362, %v427, 0
        %v903 = vsel %vm362, %v428, 0
        %v906 = vsel %vm362, %v429, 0
        %v909 = vsel %vm362, %v430, 0
        %v912 = vsel %vm362, %v431, 0
        %v915 = vsel %vm362, %v432, 0
        %v918 = vsel %vm362, %v433, 0
        %v921 = vsel %vm362, %v434, 0
        %v924 = vsel %vm362, %v435, 0
        %v927 = vsel %vm362, %v436, 0
        %v930 = vsel %vm362, %v437, 0
        %v933 = vsel %vm362, %v438, 0
        %v936 = vsel %vm362, %v439, 0
        %v939 = vsel %vm362, %v440, 0
        %v942 = vsel %vm362, %v441, 0
        %v945 = vsel %vm362, %v442, 0
        %v948 = vsel %vm590, %v443, 0
        %950 = vmatprep.subr.mxu0 0.0
        %951 = vmatpush1.msra.mxu0 %v948
        %952 = vmatprep.subr.mxu0 0.0
        %953 = vmatpush1.msra.mxu0 0.0
        %954 = vmatprep.subr.mxu0 0.0
        %955 = vmatpush1.msra.mxu0 0.0
        %956 = vmatprep.subr.mxu0 0.0
        %957 = vmatpush1.msra.mxu0 0.0
        %958 = vmatprep.subr.mxu0 0.0
        %959 = vmatpush1.msra.mxu0 0.0
        %960 = vmatprep.subr.mxu0 0.0
        %961 = vmatpush1.msra.mxu0 0.0
        %962 = vmatprep.subr.mxu0 0.0
        %963 = vmatpush1.msra.mxu0 0.0
        %964 = vmatprep.subr.mxu0 0.0
        %965 = vmatpush1.msra.mxu0 0.0
        %966 = vmatprep.subr.mxu0 0.0
        %967 = vmatpush1.msra.mxu0 0.0
        %968 = vmatprep.subr.mxu0 0.0
        %969 = vmatpush1.msra.mxu0 0.0
        %970 = vmatprep.subr.mxu0 0.0
        %971 = vmatpush1.msra.mxu0 0.0
        %972 = vmatprep.subr.mxu0 0.0
        %973 = vmatpush1.msra.mxu0 0.0
        %974 = vmatprep.subr.mxu0 0.0
        %975 = vmatpush1.msra.mxu0 0.0
        %976 = vmatprep.subr.mxu0 0.0
        %977 = vmatpush1.msra.mxu0 0.0
        %978 = vmatprep.subr.mxu0 0.0
        %979 = vmatpush1.msra.mxu0 0.0
        %980 = vmatprep.subr.mxu0 0.0
        %981 = vmatpush1.msra.mxu0 0.0
        %982 = vmatprep.subr.mxu0 0.0
        %983 = vmatpush1.msra.mxu0 0.0
        %984 = vmatprep.subr.mxu0 0.0
        %985 = vmatpush1.msra.mxu0 0.0
        %986 = vmatprep.subr.mxu0 0.0
        %987 = vmatpush1.msra.mxu0 0.0
        %988 = vmatprep.subr.mxu0 0.0
        %989 = vmatpush1.msra.mxu0 0.0
        %990 = vmatprep.subr.mxu0 0.0
        %991 = vmatpush1.msra.mxu0 0.0
        %992 = vmatprep.subr.mxu0 0.0
        %993 = vmatpush1.msra.mxu0 0.0
        %994 = vmatprep.subr.mxu0 0.0
        %995 = vmatpush1.msra.mxu0 0.0
        %996 = vmatprep.subr.mxu0 0.0
        %997 = vmatpush1.msra.mxu0 0.0
        %998 = vmatprep.subr.mxu0 0.0
        %999 = vmatpush1.msra.mxu0 0.0
        %1000 = vmatprep.subr.mxu0 0.0
        %1001 = vmatpush1.msra.mxu0 0.0
        %1002 = vmatprep.subr.mxu0 0.0
        %1003 = vmatpush1.msra.mxu0 0.0
        %1004 = vmatprep.subr.mxu0 0.0
        %1005 = vmatpush1.msra.mxu0 0.0
        %1006 = vmatprep.subr.mxu0 0.0
        %1007 = vmatpush1.msra.mxu0 0.0
        %1008 = vmatprep.subr.mxu0 0.0
        %1009 = vmatpush1.msra.mxu0 0.0
        %1010 = vmatprep.subr.mxu0 0.0
        %1011 = vmatpush1.msra.mxu0 0.0
        %1012 = vmatprep.subr.mxu0 0.0
        %1013 = vmatpush1.msra.mxu0 0.0
        %1014 = vmatprep.mubr.f32.mxu0 0.0
        %1015 = vmatmul.mubr.f32.gmra.mrb[0].mxu0 %v840
        %v1016 = vpop.f32.mrb[0].mxu0
        %v1017 = vadd.f32 %v661, %v1016
        %v1018 = vpop.f32.mrb[0].mxu0
        %1019 = vmatprep.mubr.f32.mxu0 0.0
        %1020 = vmatmul.mubr.f32.gmra.mrb[0].mxu0 %v843
        %v1021 = vpop.f32.mrb[0].mxu0
        %v1022 = vadd.f32 %v666, %v1021
        %v1023 = vpop.f32.mrb[0].mxu0
        %1024 = vmatprep.mubr.f32.mxu0 0.0
        %1025 = vmatmul.mubr.f32.gmra.mrb[0].mxu0 %v846
        %v1026 = vpop.f32.mrb[0].mxu0
        %v1027 = vadd.f32 %v671, %v1026
        %v1028 = vpop.f32.mrb[0].mxu0
        %1029 = vmatprep.mubr.f32.mxu0 0.0
        %1030 = vmatmul.mubr.f32.gmra.mrb[0].mxu0 %v849
        %v1031 = vpop.f32.mrb[0].mxu0
        %v1032 = vadd.f32 %v676, %v1031
        %v1033 = vpop.f32.mrb[0].mxu0
        %1034 = vmatprep.mubr.f32.mxu0 0.0
        %1035 = vmatmul.mubr.f32.gmra.mrb[0].mxu0 %v852
        %v1036 = vpop.f32.mrb[0].mxu0
        %v1037 = vadd.f32 %v681, %v1036
        %v1038 = vpop.f32.mrb[0].mxu0
        %1039 = vmatprep.mubr.f32.mxu0 0.0
        %1040 = vmatmul.mubr.f32.gmra.mrb[0].mxu0 %v855
        %v1041 = vpop.f32.mrb[0].mxu0
        %v1042 = vadd.f32 %v686, %v1041
        %v1043 = vpop.f32.mrb[0].mxu0
        %1044 = vmatprep.mubr.f32.mxu0 0.0
        %1045 = vmatmul.mubr.f32.gmra.mrb[0].mxu0 %v858
        %v1046 = vpop.f32.mrb[0].mxu0
        %v1047 = vadd.f32 %v691, %v1046
        %v1048 = vpop.f32.mrb[0].mxu0
        %1049 = vmatprep.mubr.f32.mxu0 0.0
        %1050 = vmatmul.mubr.f32.gmra.mrb[0].mxu0 %v861
        %v1051 = vpop.f32.mrb[0].mxu0
        %v1052 = vadd.f32 %v696, %v1051
        %v1053 = vpop.f32.mrb[0].mxu0
        %1054 = vmatprep.mubr.f32.mxu0 0.0
        %1055 = vmatmul.mubr.f32.gmra.mrb[0].mxu0 %v864
        %v1056 = vpop.f32.mrb[0].mxu0
        %v1057 = vadd.f32 %v701, %v1056
        %v1058 = vpop.f32.mrb[0].mxu0
        %1059 = vmatprep.mubr.f32.mxu0 0.0
        %1060 = vmatmul.mubr.f32.gmra.mrb[0].mxu0 %v867
        %v1061 = vpop.f32.mrb[0].mxu0
        %v1062 = vadd.f32 %v706, %v1061
        %v1063 = vpop.f32.mrb[0].mxu0
        %1064 = vmatprep.mubr.f32.mxu0 0.0
        %1065 = vmatmul.mubr.f32.gmra.mrb[0].mxu0 %v870
        %v1066 = vpop.f32.mrb[0].mxu0
        %v1067 = vadd.f32 %v711, %v1066
        %v1068 = vpop.f32.mrb[0].mxu0
        %1069 = vmatprep.mubr.f32.mxu0 0.0
        %1070 = vmatmul.mubr.f32.gmra.mrb[0].mxu0 %v873
        %v1071 = vpop.f32.mrb[0].mxu0
        %v1072 = vadd.f32 %v716, %v1071
        %v1073 = vpop.f32.mrb[0].mxu0
        %1074 = vmatprep.mubr.f32.mxu0 0.0
        %1075 = vmatmul.mubr.f32.gmra.mrb[0].mxu0 %v876
        %v1076 = vpop.f32.mrb[0].mxu0
        %v1077 = vadd.f32 %v721, %v1076
        %v1078 = vpop.f32.mrb[0].mxu0
        %1079 = vmatprep.mubr.f32.mxu0 0.0
        %1080 = vmatmul.mubr.f32.gmra.mrb[0].mxu0 %v879
        %v1081 = vpop.f32.mrb[0].mxu0
        %v1082 = vadd.f32 %v726, %v1081
        %v1083 = vpop.f32.mrb[0].mxu0
        %1084 = vmatprep.mubr.f32.mxu0 0.0
        %1085 = vmatmul.mubr.f32.gmra.mrb[0].mxu0 %v882
        %v1086 = vpop.f32.mrb[0].mxu0
        %v1087 = vadd.f32 %v731, %v1086
        %v1088 = vpop.f32.mrb[0].mxu0
        %1089 = vmatprep.mubr.f32.mxu0 0.0
        %1090 = vmatmul.mubr.f32.gmra.mrb[0].mxu0 %v885
        %v1091 = vpop.f32.mrb[0].mxu0
        %v1092 = vadd.f32 %v736, %v1091
        %v1093 = vpop.f32.mrb[0].mxu0
        %1094 = vmatprep.mubr.f32.mxu0 0.0
        %1095 = vmatmul.mubr.f32.gmra.mrb[0].mxu0 %v888
        %v1096 = vpop.f32.mrb[0].mxu0
        %v1097 = vadd.f32 %v741, %v1096
        %v1098 = vpop.f32.mrb[0].mxu0
        %1099 = vmatprep.mubr.f32.mxu0 0.0
        %1100 = vmatmul.mubr.f32.gmra.mrb[0].mxu0 %v891
        %v1101 = vpop.f32.mrb[0].mxu0
        %v1102 = vadd.f32 %v746, %v1101
        %v1103 = vpop.f32.mrb[0].mxu0
        %1104 = vmatprep.mubr.f32.mxu0 0.0
        %1105 = vmatmul.mubr.f32.gmra.mrb[0].mxu0 %v894
        %v1106 = vpop.f32.mrb[0].mxu0
        %v1107 = vadd.f32 %v751, %v1106
        %v1108 = vpop.f32.mrb[0].mxu0
        %1109 = vmatprep.mubr.f32.mxu0 0.0
        %1110 = vmatmul.mubr.f32.gmra.mrb[0].mxu0 %v897
        %v1111 = vpop.f32.mrb[0].mxu0
        %v1112 = vadd.f32 %v756, %v1111
        %v1113 = vpop.f32.mrb[0].mxu0
        %1114 = vmatprep.mubr.f32.mxu0 0.0
        %1115 = vmatmul.mubr.f32.gmra.mrb[0].mxu0 %v900
        %v1116 = vpop.f32.mrb[0].mxu0
        %v1117 = vadd.f32 %v761, %v1116
        %v1118 = vpop.f32.mrb[0].mxu0
        %1119 = vmatprep.mubr.f32.mxu0 0.0
        %1120 = vmatmul.mubr.f32.gmra.mrb[0].mxu0 %v903
        %v1121 = vpop.f32.mrb[0].mxu0
        %v1122 = vadd.f32 %v766, %v1121
        %v1123 = vpop.f32.mrb[0].mxu0
        %1124 = vmatprep.mubr.f32.mxu0 0.0
        %1125 = vmatmul.mubr.f32.gmra.mrb[0].mxu0 %v906
        %v1126 = vpop.f32.mrb[0].mxu0
        %v1127 = vadd.f32 %v771, %v1126
        %v1128 = vpop.f32.mrb[0].mxu0
        %1129 = vmatprep.mubr.f32.mxu0 0.0
        %1130 = vmatmul.mubr.f32.gmra.mrb[0].mxu0 %v909
        %v1131 = vpop.f32.mrb[0].mxu0
        %v1132 = vadd.f32 %v776, %v1131
        %v1133 = vpop.f32.mrb[0].mxu0
        %1134 = vmatprep.mubr.f32.mxu0 0.0
        %1135 = vmatmul.mubr.f32.gmra.mrb[0].mxu0 %v912
        %v1136 = vpop.f32.mrb[0].mxu0
        %v1137 = vadd.f32 %v781, %v1136
        %v1138 = vpop.f32.mrb[0].mxu0
        %1139 = vmatprep.mubr.f32.mxu0 0.0
        %1140 = vmatmul.mubr.f32.gmra.mrb[0].mxu0 %v915
        %v1141 = vpop.f32.mrb[0].mxu0
        %v1142 = vadd.f32 %v786, %v1141
        %v1143 = vpop.f32.mrb[0].mxu0
        %1144 = vmatprep.mubr.f32.mxu0 0.0
        %1145 = vmatmul.mubr.f32.gmra.mrb[0].mxu0 %v918
        %v1146 = vpop.f32.mrb[0].mxu0
        %v1147 = vadd.f32 %v791, %v1146
        %v1148 = vpop.f32.mrb[0].mxu0
        %1149 = vmatprep.mubr.f32.mxu0 0.0
        %1150 = vmatmul.mubr.f32.gmra.mrb[0].mxu0 %v921
        %v1151 = vpop.f32.mrb[0].mxu0
        %v1152 = vadd.f32 %v796, %v1151
        %v1153 = vpop.f32.mrb[0].mxu0
        %1154 = vmatprep.mubr.f32.mxu0 0.0
        %1155 = vmatmul.mubr.f32.gmra.mrb[0].mxu0 %v924
        %v1156 = vpop.f32.mrb[0].mxu0
        %v1157 = vadd.f32 %v801, %v1156
        %v1158 = vpop.f32.mrb[0].mxu0
        %1159 = vmatprep.mubr.f32.mxu0 0.0
        %1160 = vmatmul.mubr.f32.gmra.mrb[0].mxu0 %v927
        %v1161 = vpop.f32.mrb[0].mxu0
        %v1162 = vadd.f32 %v806, %v1161
        %v1163 = vpop.f32.mrb[0].mxu0
        %1164 = vmatprep.mubr.f32.mxu0 0.0
        %1165 = vmatmul.mubr.f32.gmra.mrb[0].mxu0 %v930
        %v1166 = vpop.f32.mrb[0].mxu0
        %v1167 = vadd.f32 %v811, %v1166
        %v1168 = vpop.f32.mrb[0].mxu0
        %1169 = vmatprep.mubr.f32.mxu0 0.0
        %1170 = vmatmul.mubr.f32.gmra.mrb[0].mxu0 %v933
        %v1171 = vpop.f32.mrb[0].mxu0
        %v1172 = vadd.f32 %v816, %v1171
        %v1173 = vpop.f32.mrb[0].mxu0
        %1174 = vmatprep.mubr.f32.mxu0 0.0
        %1175 = vmatmul.mubr.f32.gmra.mrb[0].mxu0 %v936
        %v1176 = vpop.f32.mrb[0].mxu0
        %v1177 = vadd.f32 %v821, %v1176
        %v1178 = vpop.f32.mrb[0].mxu0
        %1179 = vmatprep.mubr.f32.mxu0 0.0
        %1180 = vmatmul.mubr.f32.gmra.mrb[0].mxu0 %v939
        %v1181 = vpop.f32.mrb[0].mxu0
        %v1182 = vadd.f32 %v826, %v1181
        %v1183 = vpop.f32.mrb[0].mxu0
        %1184 = vmatprep.mubr.f32.mxu0 0.0
        %1185 = vmatmul.mubr.f32.gmra.mrb[0].mxu0 %v942
        %v1186 = vpop.f32.mrb[0].mxu0
        %v1187 = vadd.f32 %v831, %v1186
        %v1188 = vpop.f32.mrb[0].mxu0
        %1189 = vmatprep.mubr.f32.mxu0 0.0
        %1190 = vmatmul.mubr.f32.gmra.mrb[0].mxu0 %v945
        %v1191 = vpop.f32.mrb[0].mxu0
        %v1192 = vadd.f32 %v836, %v1191
        %v1193 = vpop.f32.mrb[0].mxu0
        %1194 = vdwg.mxu0
        %v1195 = vld [vmem:[#allocation2 + $0x2] sm:$0xff]
        %v1196 = vld [vmem:[#allocation2 + $0xa] sm:$0xff]
        %v1197 = vld [vmem:[#allocation2 + $0x12] sm:$0xff]
        %v1198 = vld [vmem:[#allocation2 + $0x1a] sm:$0xff]
        %v1199 = vld [vmem:[#allocation2 + $0x22] sm:$0xff]
        %v1200 = vld [vmem:[#allocation2 + $0x2a] sm:$0xff]
        %v1201 = vld [vmem:[#allocation2 + $0x32] sm:$0xff]
        %v1202 = vld [vmem:[#allocation2 + $0x3a] sm:$0xff]
        %v1203 = vld [vmem:[#allocation2 + $0x42] sm:$0xff]
        %v1204 = vld [vmem:[#allocation2 + $0x4a] sm:$0xff]
        %v1205 = vld [vmem:[#allocation2 + $0x52] sm:$0xff]
        %v1206 = vld [vmem:[#allocation2 + $0x5a] sm:$0xff]
        %v1207 = vld [vmem:[#allocation2 + $0x62] sm:$0xff]
        %v1208 = vld [vmem:[#allocation2 + $0x6a] sm:$0xff]
        %v1209 = vld [vmem:[#allocation2 + $0x72] sm:$0xff]
        %v1210 = vld [vmem:[#allocation2 + $0x7a] sm:$0xff]
        %v1211 = vld [vmem:[#allocation2 + $0x82] sm:$0xff]
        %v1212 = vld [vmem:[#allocation2 + $0x8a] sm:$0xff]
        %v1213 = vld [vmem:[#allocation2 + $0x92] sm:$0xff]
        %v1214 = vld [vmem:[#allocation2 + $0x9a] sm:$0xff]
        %v1215 = vld [vmem:[#allocation2 + $0xa2] sm:$0xff]
        %v1216 = vld [vmem:[#allocation2 + $0xaa] sm:$0xff]
        %v1217 = vld [vmem:[#allocation2 + $0xb2] sm:$0xff]
        %v1218 = vld [vmem:[#allocation2 + $0xba] sm:$0xff]
        %v1219 = vld [vmem:[#allocation2 + $0xc2] sm:$0xff]
        %v1220 = vld [vmem:[#allocation2 + $0xca] sm:$0xff]
        %v1221 = vld [vmem:[#allocation2 + $0xd2] sm:$0xff]
        %v1222 = vld [vmem:[#allocation2 + $0xda] sm:$0xff]
        %v1223 = vld [vmem:[#allocation2 + $0xe2] sm:$0xff]
        %v1224 = vld [vmem:[#allocation2 + $0xea] sm:$0xff]
        %v1225 = vld [vmem:[#allocation2 + $0xf2] sm:$0xff]
        %v1226 = vld [vmem:[#allocation2 + $0xfa] sm:$0xff]
        %v1227 = vld [vmem:[#allocation2 + $0x102] sm:$0xff]
        %v1228 = vld [vmem:[#allocation2 + $0x10a] sm:$0xff]
        %v1229 = vld [vmem:[#allocation2 + $0x112] sm:$0xff]
        %v1230 = vld [vmem:[#allocation2 + $0x11a] sm:$0xff]
        %s1231 = scalar_lea.vmem %s2, 8
        %v1232 = vld [vmem:[%s1231] sm:$0xf]
        %v1234 = vsel %vm362, %v1195, 0
        %v1237 = vsel %vm362, %v1196, 0
        %v1240 = vsel %vm362, %v1197, 0
        %v1243 = vsel %vm362, %v1198, 0
        %v1246 = vsel %vm362, %v1199, 0
        %v1249 = vsel %vm362, %v1200, 0
        %v1252 = vsel %vm362, %v1201, 0
        %v1255 = vsel %vm362, %v1202, 0
        %v1258 = vsel %vm362, %v1203, 0
        %v1261 = vsel %vm362, %v1204, 0
        %v1264 = vsel %vm362, %v1205, 0
        %v1267 = vsel %vm362, %v1206, 0
        %v1270 = vsel %vm362, %v1207, 0
        %v1273 = vsel %vm362, %v1208, 0
        %v1276 = vsel %vm362, %v1209, 0
        %v1279 = vsel %vm362, %v1210, 0
        %v1282 = vsel %vm362, %v1211, 0
        %v1285 = vsel %vm362, %v1212, 0
        %v1288 = vsel %vm362, %v1213, 0
        %v1291 = vsel %vm362, %v1214, 0
        %v1294 = vsel %vm362, %v1215, 0
        %v1297 = vsel %vm362, %v1216, 0
        %v1300 = vsel %vm362, %v1217, 0
        %v1303 = vsel %vm362, %v1218, 0
        %v1306 = vsel %vm362, %v1219, 0
        %v1309 = vsel %vm362, %v1220, 0
        %v1312 = vsel %vm362, %v1221, 0
        %v1315 = vsel %vm362, %v1222, 0
        %v1318 = vsel %vm362, %v1223, 0
        %v1321 = vsel %vm362, %v1224, 0
        %v1324 = vsel %vm362, %v1225, 0
        %v1327 = vsel %vm362, %v1226, 0
        %v1330 = vsel %vm362, %v1227, 0
        %v1333 = vsel %vm362, %v1228, 0
        %v1336 = vsel %vm362, %v1229, 0
        %v1339 = vsel %vm362, %v1230, 0
        %v1342 = vsel %vm590, %v1232, 0
        %1344 = vmatprep.subr.mxu0 0.0
        %1345 = vmatpush1.msra.mxu0 %v1342
        %1346 = vmatprep.subr.mxu0 0.0
        %1347 = vmatpush1.msra.mxu0 0.0
        %1348 = vmatprep.subr.mxu0 0.0
        %1349 = vmatpush1.msra.mxu0 0.0
        %1350 = vmatprep.subr.mxu0 0.0
        %1351 = vmatpush1.msra.mxu0 0.0
        %1352 = vmatprep.subr.mxu0 0.0
        %1353 = vmatpush1.msra.mxu0 0.0
        %1354 = vmatprep.subr.mxu0 0.0
        %1355 = vmatpush1.msra.mxu0 0.0
        %1356 = vmatprep.subr.mxu0 0.0
        %1357 = vmatpush1.msra.mxu0 0.0
        %1358 = vmatprep.subr.mxu0 0.0
        %1359 = vmatpush1.msra.mxu0 0.0
        %1360 = vmatprep.subr.mxu0 0.0
        %1361 = vmatpush1.msra.mxu0 0.0
        %1362 = vmatprep.subr.mxu0 0.0
        %1363 = vmatpush1.msra.mxu0 0.0
        %1364 = vmatprep.subr.mxu0 0.0
        %1365 = vmatpush1.msra.mxu0 0.0
        %1366 = vmatprep.subr.mxu0 0.0
        %1367 = vmatpush1.msra.mxu0 0.0
        %1368 = vmatprep.subr.mxu0 0.0
        %1369 = vmatpush1.msra.mxu0 0.0
        %1370 = vmatprep.subr.mxu0 0.0
        %1371 = vmatpush1.msra.mxu0 0.0
        %1372 = vmatprep.subr.mxu0 0.0
        %1373 = vmatpush1.msra.mxu0 0.0
        %1374 = vmatprep.subr.mxu0 0.0
        %1375 = vmatpush1.msra.mxu0 0.0
        %1376 = vmatprep.subr.mxu0 0.0
        %1377 = vmatpush1.msra.mxu0 0.0
        %1378 = vmatprep.subr.mxu0 0.0
        %1379 = vmatpush1.msra.mxu0 0.0
        %1380 = vmatprep.subr.mxu0 0.0
        %1381 = vmatpush1.msra.mxu0 0.0
        %1382 = vmatprep.subr.mxu0 0.0
        %1383 = vmatpush1.msra.mxu0 0.0
        %1384 = vmatprep.subr.mxu0 0.0
        %1385 = vmatpush1.msra.mxu0 0.0
        %1386 = vmatprep.subr.mxu0 0.0
        %1387 = vmatpush1.msra.mxu0 0.0
        %1388 = vmatprep.subr.mxu0 0.0
        %1389 = vmatpush1.msra.mxu0 0.0
        %1390 = vmatprep.subr.mxu0 0.0
        %1391 = vmatpush1.msra.mxu0 0.0
        %1392 = vmatprep.subr.mxu0 0.0
        %1393 = vmatpush1.msra.mxu0 0.0
        %1394 = vmatprep.subr.mxu0 0.0
        %1395 = vmatpush1.msra.mxu0 0.0
        %1396 = vmatprep.subr.mxu0 0.0
        %1397 = vmatpush1.msra.mxu0 0.0
        %1398 = vmatprep.subr.mxu0 0.0
        %1399 = vmatpush1.msra.mxu0 0.0
        %1400 = vmatprep.subr.mxu0 0.0
        %1401 = vmatpush1.msra.mxu0 0.0
        %1402 = vmatprep.subr.mxu0 0.0
        %1403 = vmatpush1.msra.mxu0 0.0
        %1404 = vmatprep.subr.mxu0 0.0
        %1405 = vmatpush1.msra.mxu0 0.0
        %1406 = vmatprep.subr.mxu0 0.0
        %1407 = vmatpush1.msra.mxu0 0.0
        %1408 = vmatprep.mubr.f32.mxu0 0.0
        %1409 = vmatmul.mubr.f32.gmra.mrb[0].mxu0 %v1234
        %v1410 = vpop.f32.mrb[0].mxu0
        %v1411 = vadd.f32 0.0, %v1410
        %v1412 = vpop.f32.mrb[0].mxu0
        %1413 = vmatprep.mubr.f32.mxu0 0.0
        %1414 = vmatmul.mubr.f32.gmra.mrb[0].mxu0 %v1237
        %v1415 = vpop.f32.mrb[0].mxu0
        %v1416 = vadd.f32 0.0, %v1415
        %v1417 = vpop.f32.mrb[0].mxu0
        %1418 = vmatprep.mubr.f32.mxu0 0.0
        %1419 = vmatmul.mubr.f32.gmra.mrb[0].mxu0 %v1240
        %v1420 = vpop.f32.mrb[0].mxu0
        %v1421 = vadd.f32 0.0, %v1420
        %v1422 = vpop.f32.mrb[0].mxu0
        %1423 = vmatprep.mubr.f32.mxu0 0.0
        %1424 = vmatmul.mubr.f32.gmra.mrb[0].mxu0 %v1243
        %v1425 = vpop.f32.mrb[0].mxu0
        %v1426 = vadd.f32 0.0, %v1425
        %v1427 = vpop.f32.mrb[0].mxu0
        %1428 = vmatprep.mubr.f32.mxu0 0.0
        %1429 = vmatmul.mubr.f32.gmra.mrb[0].mxu0 %v1246
        %v1430 = vpop.f32.mrb[0].mxu0
        %v1431 = vadd.f32 0.0, %v1430
        %v1432 = vpop.f32.mrb[0].mxu0
        %1433 = vmatprep.mubr.f32.mxu0 0.0
        %1434 = vmatmul.mubr.f32.gmra.mrb[0].mxu0 %v1249
        %v1435 = vpop.f32.mrb[0].mxu0
        %v1436 = vadd.f32 0.0, %v1435
        %v1437 = vpop.f32.mrb[0].mxu0
        %1438 = vmatprep.mubr.f32.mxu0 0.0
        %1439 = vmatmul.mubr.f32.gmra.mrb[0].mxu0 %v1252
        %v1440 = vpop.f32.mrb[0].mxu0
        %v1441 = vadd.f32 0.0, %v1440
        %v1442 = vpop.f32.mrb[0].mxu0
        %1443 = vmatprep.mubr.f32.mxu0 0.0
        %1444 = vmatmul.mubr.f32.gmra.mrb[0].mxu0 %v1255
        %v1445 = vpop.f32.mrb[0].mxu0
        %v1446 = vadd.f32 0.0, %v1445
        %v1447 = vpop.f32.mrb[0].mxu0
        %1448 = vmatprep.mubr.f32.mxu0 0.0
        %1449 = vmatmul.mubr.f32.gmra.mrb[0].mxu0 %v1258
        %v1450 = vpop.f32.mrb[0].mxu0
        %v1451 = vadd.f32 0.0, %v1450
        %v1452 = vpop.f32.mrb[0].mxu0
        %1453 = vmatprep.mubr.f32.mxu0 0.0
        %1454 = vmatmul.mubr.f32.gmra.mrb[0].mxu0 %v1261
        %v1455 = vpop.f32.mrb[0].mxu0
        %v1456 = vadd.f32 0.0, %v1455
        %v1457 = vpop.f32.mrb[0].mxu0
        %1458 = vmatprep.mubr.f32.mxu0 0.0
        %1459 = vmatmul.mubr.f32.gmra.mrb[0].mxu0 %v1264
        %v1460 = vpop.f32.mrb[0].mxu0
        %v1461 = vadd.f32 0.0, %v1460
        %v1462 = vpop.f32.mrb[0].mxu0
        %1463 = vmatprep.mubr.f32.mxu0 0.0
        %1464 = vmatmul.mubr.f32.gmra.mrb[0].mxu0 %v1267
        %v1465 = vpop.f32.mrb[0].mxu0
        %v1466 = vadd.f32 0.0, %v1465
        %v1467 = vpop.f32.mrb[0].mxu0
        %1468 = vmatprep.mubr.f32.mxu0 0.0
        %1469 = vmatmul.mubr.f32.gmra.mrb[0].mxu0 %v1270
        %v1470 = vpop.f32.mrb[0].mxu0
        %v1471 = vadd.f32 0.0, %v1470
        %v1472 = vpop.f32.mrb[0].mxu0
        %1473 = vmatprep.mubr.f32.mxu0 0.0
        %1474 = vmatmul.mubr.f32.gmra.mrb[0].mxu0 %v1273
        %v1475 = vpop.f32.mrb[0].mxu0
        %v1476 = vadd.f32 0.0, %v1475
        %v1477 = vpop.f32.mrb[0].mxu0
        %1478 = vmatprep.mubr.f32.mxu0 0.0
        %1479 = vmatmul.mubr.f32.gmra.mrb[0].mxu0 %v1276
        %v1480 = vpop.f32.mrb[0].mxu0
        %v1481 = vadd.f32 0.0, %v1480
        %v1482 = vpop.f32.mrb[0].mxu0
        %1483 = vmatprep.mubr.f32.mxu0 0.0
        %1484 = vmatmul.mubr.f32.gmra.mrb[0].mxu0 %v1279
        %v1485 = vpop.f32.mrb[0].mxu0
        %v1486 = vadd.f32 0.0, %v1485
        %v1487 = vpop.f32.mrb[0].mxu0
        %1488 = vmatprep.mubr.f32.mxu0 0.0
        %1489 = vmatmul.mubr.f32.gmra.mrb[0].mxu0 %v1282
        %v1490 = vpop.f32.mrb[0].mxu0
        %v1491 = vadd.f32 0.0, %v1490
        %v1492 = vpop.f32.mrb[0].mxu0
        %1493 = vmatprep.mubr.f32.mxu0 0.0
        %1494 = vmatmul.mubr.f32.gmra.mrb[0].mxu0 %v1285
        %v1495 = vpop.f32.mrb[0].mxu0
        %v1496 = vadd.f32 0.0, %v1495
        %v1497 = vpop.f32.mrb[0].mxu0
        %1498 = vmatprep.mubr.f32.mxu0 0.0
        %1499 = vmatmul.mubr.f32.gmra.mrb[0].mxu0 %v1288
        %v1500 = vpop.f32.mrb[0].mxu0
        %v1501 = vadd.f32 0.0, %v1500
        %v1502 = vpop.f32.mrb[0].mxu0
        %1503 = vmatprep.mubr.f32.mxu0 0.0
        %1504 = vmatmul.mubr.f32.gmra.mrb[0].mxu0 %v1291
        %v1505 = vpop.f32.mrb[0].mxu0
        %v1506 = vadd.f32 0.0, %v1505
        %v1507 = vpop.f32.mrb[0].mxu0
        %1508 = vmatprep.mubr.f32.mxu0 0.0
        %1509 = vmatmul.mubr.f32.gmra.mrb[0].mxu0 %v1294
        %v1510 = vpop.f32.mrb[0].mxu0
        %v1511 = vadd.f32 0.0, %v1510
        %v1512 = vpop.f32.mrb[0].mxu0
        %1513 = vmatprep.mubr.f32.mxu0 0.0
        %1514 = vmatmul.mubr.f32.gmra.mrb[0].mxu0 %v1297
        %v1515 = vpop.f32.mrb[0].mxu0
        %v1516 = vadd.f32 0.0, %v1515
        %v1517 = vpop.f32.mrb[0].mxu0
        %1518 = vmatprep.mubr.f32.mxu0 0.0
        %1519 = vmatmul.mubr.f32.gmra.mrb[0].mxu0 %v1300
        %v1520 = vpop.f32.mrb[0].mxu0
        %v1521 = vadd.f32 0.0, %v1520
        %v1522 = vpop.f32.mrb[0].mxu0
        %1523 = vmatprep.mubr.f32.mxu0 0.0
        %1524 = vmatmul.mubr.f32.gmra.mrb[0].mxu0 %v1303
        %v1525 = vpop.f32.mrb[0].mxu0
        %v1526 = vadd.f32 0.0, %v1525
        %v1527 = vpop.f32.mrb[0].mxu0
        %1528 = vmatprep.mubr.f32.mxu0 0.0
        %1529 = vmatmul.mubr.f32.gmra.mrb[0].mxu0 %v1306
        %v1530 = vpop.f32.mrb[0].mxu0
        %v1531 = vadd.f32 0.0, %v1530
        %v1532 = vpop.f32.mrb[0].mxu0
        %1533 = vmatprep.mubr.f32.mxu0 0.0
        %1534 = vmatmul.mubr.f32.gmra.mrb[0].mxu0 %v1309
        %v1535 = vpop.f32.mrb[0].mxu0
        %v1536 = vadd.f32 0.0, %v1535
        %v1537 = vpop.f32.mrb[0].mxu0
        %1538 = vmatprep.mubr.f32.mxu0 0.0
        %1539 = vmatmul.mubr.f32.gmra.mrb[0].mxu0 %v1312
        %v1540 = vpop.f32.mrb[0].mxu0
        %v1541 = vadd.f32 0.0, %v1540
        %v1542 = vpop.f32.mrb[0].mxu0
        %1543 = vmatprep.mubr.f32.mxu0 0.0
        %1544 = vmatmul.mubr.f32.gmra.mrb[0].mxu0 %v1315
        %v1545 = vpop.f32.mrb[0].mxu0
        %v1546 = vadd.f32 0.0, %v1545
        %v1547 = vpop.f32.mrb[0].mxu0
        %1548 = vmatprep.mubr.f32.mxu0 0.0
        %1549 = vmatmul.mubr.f32.gmra.mrb[0].mxu0 %v1318
        %v1550 = vpop.f32.mrb[0].mxu0
        %v1551 = vadd.f32 0.0, %v1550
        %v1552 = vpop.f32.mrb[0].mxu0
        %1553 = vmatprep.mubr.f32.mxu0 0.0
        %1554 = vmatmul.mubr.f32.gmra.mrb[0].mxu0 %v1321
        %v1555 = vpop.f32.mrb[0].mxu0
        %v1556 = vadd.f32 0.0, %v1555
        %v1557 = vpop.f32.mrb[0].mxu0
        %1558 = vmatprep.mubr.f32.mxu0 0.0
        %1559 = vmatmul.mubr.f32.gmra.mrb[0].mxu0 %v1324
        %v1560 = vpop.f32.mrb[0].mxu0
        %v1561 = vadd.f32 0.0, %v1560
        %v1562 = vpop.f32.mrb[0].mxu0
        %1563 = vmatprep.mubr.f32.mxu0 0.0
        %1564 = vmatmul.mubr.f32.gmra.mrb[0].mxu0 %v1327
        %v1565 = vpop.f32.mrb[0].mxu0
        %v1566 = vadd.f32 0.0, %v1565
        %v1567 = vpop.f32.mrb[0].mxu0
        %1568 = vmatprep.mubr.f32.mxu0 0.0
        %1569 = vmatmul.mubr.f32.gmra.mrb[0].mxu0 %v1330
        %v1570 = vpop.f32.mrb[0].mxu0
        %v1571 = vadd.f32 0.0, %v1570
        %v1572 = vpop.f32.mrb[0].mxu0
        %1573 = vmatprep.mubr.f32.mxu0 0.0
        %1574 = vmatmul.mubr.f32.gmra.mrb[0].mxu0 %v1333
        %v1575 = vpop.f32.mrb[0].mxu0
        %v1576 = vadd.f32 0.0, %v1575
        %v1577 = vpop.f32.mrb[0].mxu0
        %1578 = vmatprep.mubr.f32.mxu0 0.0
        %1579 = vmatmul.mubr.f32.gmra.mrb[0].mxu0 %v1336
        %v1580 = vpop.f32.mrb[0].mxu0
        %v1581 = vadd.f32 0.0, %v1580
        %v1582 = vpop.f32.mrb[0].mxu0
        %1583 = vmatprep.mubr.f32.mxu0 0.0
        %1584 = vmatmul.mubr.f32.gmra.mrb[0].mxu0 %v1339
        %v1585 = vpop.f32.mrb[0].mxu0
        %v1586 = vadd.f32 0.0, %v1585
        %v1587 = vpop.f32.mrb[0].mxu0
        %1588 = vdwg.mxu0
        %v1589 = vadd.f32 %v1017, %v1411
        %v1590 = vadd.f32 %v1022, %v1416
        %v1591 = vadd.f32 %v1027, %v1421
        %v1592 = vadd.f32 %v1032, %v1426
        %v1593 = vadd.f32 %v1037, %v1431
        %v1594 = vadd.f32 %v1042, %v1436
        %v1595 = vadd.f32 %v1047, %v1441
        %v1596 = vadd.f32 %v1052, %v1446
        %v1597 = vadd.f32 %v1057, %v1451
        %v1598 = vadd.f32 %v1062, %v1456
        %v1599 = vadd.f32 %v1067, %v1461
        %v1600 = vadd.f32 %v1072, %v1466
        %v1601 = vadd.f32 %v1077, %v1471
        %v1602 = vadd.f32 %v1082, %v1476
        %v1603 = vadd.f32 %v1087, %v1481
        %v1604 = vadd.f32 %v1092, %v1486
        %v1605 = vadd.f32 %v1097, %v1491
        %v1606 = vadd.f32 %v1102, %v1496
        %v1607 = vadd.f32 %v1107, %v1501
        %v1608 = vadd.f32 %v1112, %v1506
        %v1609 = vadd.f32 %v1117, %v1511
        %v1610 = vadd.f32 %v1122, %v1516
        %v1611 = vadd.f32 %v1127, %v1521
        %v1612 = vadd.f32 %v1132, %v1526
        %v1613 = vadd.f32 %v1137, %v1531
        %v1614 = vadd.f32 %v1142, %v1536
        %v1615 = vadd.f32 %v1147, %v1541
        %v1616 = vadd.f32 %v1152, %v1546
        %v1617 = vadd.f32 %v1157, %v1551
        %v1618 = vadd.f32 %v1162, %v1556
        %v1619 = vadd.f32 %v1167, %v1561
        %v1620 = vadd.f32 %v1172, %v1566
        %v1621 = vadd.f32 %v1177, %v1571
        %v1622 = vadd.f32 %v1182, %v1576
        %v1623 = vadd.f32 %v1187, %v1581
        %v1624 = vadd.f32 %v1192, %v1586
        %v1625 = vld [vmem:[#allocation2 + $0x12] sm:$0xff]
        %v1626 = vld [vmem:[#allocation2 + $0x1a] sm:$0xff]
        %v1627 = vld [vmem:[#allocation2 + $0x22] sm:$0xff]
        %v1628 = vld [vmem:[#allocation2 + $0x2a] sm:$0xff]
        %v1629 = vld [vmem:[#allocation2 + $0x32] sm:$0xff]
        %v1630 = vld [vmem:[#allocation2 + $0x3a] sm:$0xff]
        %v1631 = vld [vmem:[#allocation2 + $0x42] sm:$0xff]
        %v1632 = vld [vmem:[#allocation2 + $0x4a] sm:$0xff]
        %v1633 = vld [vmem:[#allocation2 + $0x52] sm:$0xff]
        %v1634 = vld [vmem:[#allocation2 + $0x5a] sm:$0xff]
        %v1635 = vld [vmem:[#allocation2 + $0x62] sm:$0xff]
        %v1636 = vld [vmem:[#allocation2 + $0x6a] sm:$0xff]
        %v1637 = vld [vmem:[#allocation2 + $0x72] sm:$0xff]
        %v1638 = vld [vmem:[#allocation2 + $0x7a] sm:$0xff]
        %v1639 = vld [vmem:[#allocation2 + $0x82] sm:$0xff]
        %v1640 = vld [vmem:[#allocation2 + $0x8a] sm:$0xff]
        %v1641 = vld [vmem:[#allocation2 + $0x92] sm:$0xff]
        %v1642 = vld [vmem:[#allocation2 + $0x9a] sm:$0xff]
        %v1643 = vld [vmem:[#allocation2 + $0xa2] sm:$0xff]
        %v1644 = vld [vmem:[#allocation2 + $0xaa] sm:$0xff]
        %v1645 = vld [vmem:[#allocation2 + $0xb2] sm:$0xff]
        %v1646 = vld [vmem:[#allocation2 + $0xba] sm:$0xff]
        %v1647 = vld [vmem:[#allocation2 + $0xc2] sm:$0xff]
        %v1648 = vld [vmem:[#allocation2 + $0xca] sm:$0xff]
        %v1649 = vld [vmem:[#allocation2 + $0xd2] sm:$0xff]
        %v1650 = vld [vmem:[#allocation2 + $0xda] sm:$0xff]
        %v1651 = vld [vmem:[#allocation2 + $0xe2] sm:$0xff]
        %v1652 = vld [vmem:[#allocation2 + $0xea] sm:$0xff]
        %v1653 = vld [vmem:[#allocation2 + $0xf2] sm:$0xff]
        %v1654 = vld [vmem:[#allocation2 + $0xfa] sm:$0xff]
        %v1655 = vld [vmem:[#allocation2 + $0x102] sm:$0xff]
        %v1656 = vld [vmem:[#allocation2 + $0x10a] sm:$0xff]
        %v1657 = vld [vmem:[#allocation2 + $0x112] sm:$0xff]
        %v1658 = vld [vmem:[#allocation2 + $0x11a] sm:$0xff]
        %v1659 = vld [vmem:[#allocation2 + $0x122] sm:$0xff]
        %v1660 = vld [vmem:[#allocation2 + $0x12a] sm:$0xff]
        %s1661 = scalar_lea.vmem %s2, 12
        %v1662 = vld [vmem:[%s1661] sm:$0xf]
        %v1664 = vsel %vm362, %v1625, 0
        %v1667 = vsel %vm362, %v1626, 0
        %v1670 = vsel %vm362, %v1627, 0
        %v1673 = vsel %vm362, %v1628, 0
        %v1676 = vsel %vm362, %v1629, 0
        %v1679 = vsel %vm362, %v1630, 0
        %v1682 = vsel %vm362, %v1631, 0
        %v1685 = vsel %vm362, %v1632, 0
        %v1688 = vsel %vm362, %v1633, 0
        %v1691 = vsel %vm362, %v1634, 0
        %v1694 = vsel %vm362, %v1635, 0
        %v1697 = vsel %vm362, %v1636, 0
        %v1700 = vsel %vm362, %v1637, 0
        %v1703 = vsel %vm362, %v1638, 0
        %v1706 = vsel %vm362, %v1639, 0
        %v1709 = vsel %vm362, %v1640, 0
        %v1712 = vsel %vm362, %v1641, 0
        %v1715 = vsel %vm362, %v1642, 0
        %v1718 = vsel %vm362, %v1643, 0
        %v1721 = vsel %vm362, %v1644, 0
        %v1724 = vsel %vm362, %v1645, 0
        %v1727 = vsel %vm362, %v1646, 0
        %v1730 = vsel %vm362, %v1647, 0
        %v1733 = vsel %vm362, %v1648, 0
        %v1736 = vsel %vm362, %v1649, 0
        %v1739 = vsel %vm362, %v1650, 0
        %v1742 = vsel %vm362, %v1651, 0
        %v1745 = vsel %vm362, %v1652, 0
        %v1748 = vsel %vm362, %v1653, 0
        %v1751 = vsel %vm362, %v1654, 0
        %v1754 = vsel %vm362, %v1655, 0
        %v1757 = vsel %vm362, %v1656, 0
        %v1760 = vsel %vm362, %v1657, 0
        %v1763 = vsel %vm362, %v1658, 0
        %v1766 = vsel %vm362, %v1659, 0
        %v1769 = vsel %vm362, %v1660, 0
        %v1772 = vsel %vm590, %v1662, 0
        %1774 = vmatprep.subr.mxu0 0.0
        %1775 = vmatpush1.msra.mxu0 %v1772
        %1776 = vmatprep.subr.mxu0 0.0
        %1777 = vmatpush1.msra.mxu0 0.0
        %1778 = vmatprep.subr.mxu0 0.0
        %1779 = vmatpush1.msra.mxu0 0.0
        %1780 = vmatprep.subr.mxu0 0.0
        %1781 = vmatpush1.msra.mxu0 0.0
        %1782 = vmatprep.subr.mxu0 0.0
        %1783 = vmatpush1.msra.mxu0 0.0
        %1784 = vmatprep.subr.mxu0 0.0
        %1785 = vmatpush1.msra.mxu0 0.0
        %1786 = vmatprep.subr.mxu0 0.0
        %1787 = vmatpush1.msra.mxu0 0.0
        %1788 = vmatprep.subr.mxu0 0.0
        %1789 = vmatpush1.msra.mxu0 0.0
        %1790 = vmatprep.subr.mxu0 0.0
        %1791 = vmatpush1.msra.mxu0 0.0
        %1792 = vmatprep.subr.mxu0 0.0
        %1793 = vmatpush1.msra.mxu0 0.0
        %1794 = vmatprep.subr.mxu0 0.0
        %1795 = vmatpush1.msra.mxu0 0.0
        %1796 = vmatprep.subr.mxu0 0.0
        %1797 = vmatpush1.msra.mxu0 0.0
        %1798 = vmatprep.subr.mxu0 0.0
        %1799 = vmatpush1.msra.mxu0 0.0
        %1800 = vmatprep.subr.mxu0 0.0
        %1801 = vmatpush1.msra.mxu0 0.0
        %1802 = vmatprep.subr.mxu0 0.0
        %1803 = vmatpush1.msra.mxu0 0.0
        %1804 = vmatprep.subr.mxu0 0.0
        %1805 = vmatpush1.msra.mxu0 0.0
        %1806 = vmatprep.subr.mxu0 0.0
        %1807 = vmatpush1.msra.mxu0 0.0
        %1808 = vmatprep.subr.mxu0 0.0
        %1809 = vmatpush1.msra.mxu0 0.0
        %1810 = vmatprep.subr.mxu0 0.0
        %1811 = vmatpush1.msra.mxu0 0.0
        %1812 = vmatprep.subr.mxu0 0.0
        %1813 = vmatpush1.msra.mxu0 0.0
        %1814 = vmatprep.subr.mxu0 0.0
        %1815 = vmatpush1.msra.mxu0 0.0
        %1816 = vmatprep.subr.mxu0 0.0
        %1817 = vmatpush1.msra.mxu0 0.0
        %1818 = vmatprep.subr.mxu0 0.0
        %1819 = vmatpush1.msra.mxu0 0.0
        %1820 = vmatprep.subr.mxu0 0.0
        %1821 = vmatpush1.msra.mxu0 0.0
        %1822 = vmatprep.subr.mxu0 0.0
        %1823 = vmatpush1.msra.mxu0 0.0
        %1824 = vmatprep.subr.mxu0 0.0
        %1825 = vmatpush1.msra.mxu0 0.0
        %1826 = vmatprep.subr.mxu0 0.0
        %1827 = vmatpush1.msra.mxu0 0.0
        %1828 = vmatprep.subr.mxu0 0.0
        %1829 = vmatpush1.msra.mxu0 0.0
        %1830 = vmatprep.subr.mxu0 0.0
        %1831 = vmatpush1.msra.mxu0 0.0
        %1832 = vmatprep.subr.mxu0 0.0
        %1833 = vmatpush1.msra.mxu0 0.0
        %1834 = vmatprep.subr.mxu0 0.0
        %1835 = vmatpush1.msra.mxu0 0.0
        %1836 = vmatprep.subr.mxu0 0.0
        %1837 = vmatpush1.msra.mxu0 0.0
        %1838 = vmatprep.mubr.f32.mxu0 0.0
        %1839 = vmatmul.mubr.f32.gmra.mrb[0].mxu0 %v1664
        %v1840 = vpop.f32.mrb[0].mxu0
        %v1841 = vadd.f32 0.0, %v1840
        %v1842 = vpop.f32.mrb[0].mxu0
        %1843 = vmatprep.mubr.f32.mxu0 0.0
        %1844 = vmatmul.mubr.f32.gmra.mrb[0].mxu0 %v1667
        %v1845 = vpop.f32.mrb[0].mxu0
        %v1846 = vadd.f32 0.0, %v1845
        %v1847 = vpop.f32.mrb[0].mxu0
        %1848 = vmatprep.mubr.f32.mxu0 0.0
        %1849 = vmatmul.mubr.f32.gmra.mrb[0].mxu0 %v1670
        %v1850 = vpop.f32.mrb[0].mxu0
        %v1851 = vadd.f32 0.0, %v1850
        %v1852 = vpop.f32.mrb[0].mxu0
        %1853 = vmatprep.mubr.f32.mxu0 0.0
        %1854 = vmatmul.mubr.f32.gmra.mrb[0].mxu0 %v1673
        %v1855 = vpop.f32.mrb[0].mxu0
        %v1856 = vadd.f32 0.0, %v1855
        %v1857 = vpop.f32.mrb[0].mxu0
        %1858 = vmatprep.mubr.f32.mxu0 0.0
        %1859 = vmatmul.mubr.f32.gmra.mrb[0].mxu0 %v1676
        %v1860 = vpop.f32.mrb[0].mxu0
        %v1861 = vadd.f32 0.0, %v1860
        %v1862 = vpop.f32.mrb[0].mxu0
        %1863 = vmatprep.mubr.f32.mxu0 0.0
        %1864 = vmatmul.mubr.f32.gmra.mrb[0].mxu0 %v1679
        %v1865 = vpop.f32.mrb[0].mxu0
        %v1866 = vadd.f32 0.0, %v1865
        %v1867 = vpop.f32.mrb[0].mxu0
        %1868 = vmatprep.mubr.f32.mxu0 0.0
        %1869 = vmatmul.mubr.f32.gmra.mrb[0].mxu0 %v1682
        %v1870 = vpop.f32.mrb[0].mxu0
        %v1871 = vadd.f32 0.0, %v1870
        %v1872 = vpop.f32.mrb[0].mxu0
        %1873 = vmatprep.mubr.f32.mxu0 0.0
        %1874 = vmatmul.mubr.f32.gmra.mrb[0].mxu0 %v1685
        %v1875 = vpop.f32.mrb[0].mxu0
        %v1876 = vadd.f32 0.0, %v1875
        %v1877 = vpop.f32.mrb[0].mxu0
        %1878 = vmatprep.mubr.f32.mxu0 0.0
        %1879 = vmatmul.mubr.f32.gmra.mrb[0].mxu0 %v1688
        %v1880 = vpop.f32.mrb[0].mxu0
        %v1881 = vadd.f32 0.0, %v1880
        %v1882 = vpop.f32.mrb[0].mxu0
        %1883 = vmatprep.mubr.f32.mxu0 0.0
        %1884 = vmatmul.mubr.f32.gmra.mrb[0].mxu0 %v1691
        %v1885 = vpop.f32.mrb[0].mxu0
        %v1886 = vadd.f32 0.0, %v1885
        %v1887 = vpop.f32.mrb[0].mxu0
        %1888 = vmatprep.mubr.f32.mxu0 0.0
        %1889 = vmatmul.mubr.f32.gmra.mrb[0].mxu0 %v1694
        %v1890 = vpop.f32.mrb[0].mxu0
        %v1891 = vadd.f32 0.0, %v1890
        %v1892 = vpop.f32.mrb[0].mxu0
        %1893 = vmatprep.mubr.f32.mxu0 0.0
        %1894 = vmatmul.mubr.f32.gmra.mrb[0].mxu0 %v1697
        %v1895 = vpop.f32.mrb[0].mxu0
        %v1896 = vadd.f32 0.0, %v1895
        %v1897 = vpop.f32.mrb[0].mxu0
        %1898 = vmatprep.mubr.f32.mxu0 0.0
        %1899 = vmatmul.mubr.f32.gmra.mrb[0].mxu0 %v1700
        %v1900 = vpop.f32.mrb[0].mxu0
        %v1901 = vadd.f32 0.0, %v1900
        %v1902 = vpop.f32.mrb[0].mxu0
        %1903 = vmatprep.mubr.f32.mxu0 0.0
        %1904 = vmatmul.mubr.f32.gmra.mrb[0].mxu0 %v1703
        %v1905 = vpop.f32.mrb[0].mxu0
        %v1906 = vadd.f32 0.0, %v1905
        %v1907 = vpop.f32.mrb[0].mxu0
        %1908 = vmatprep.mubr.f32.mxu0 0.0
        %1909 = vmatmul.mubr.f32.gmra.mrb[0].mxu0 %v1706
        %v1910 = vpop.f32.mrb[0].mxu0
        %v1911 = vadd.f32 0.0, %v1910
        %v1912 = vpop.f32.mrb[0].mxu0
        %1913 = vmatprep.mubr.f32.mxu0 0.0
        %1914 = vmatmul.mubr.f32.gmra.mrb[0].mxu0 %v1709
        %v1915 = vpop.f32.mrb[0].mxu0
        %v1916 = vadd.f32 0.0, %v1915
        %v1917 = vpop.f32.mrb[0].mxu0
        %1918 = vmatprep.mubr.f32.mxu0 0.0
        %1919 = vmatmul.mubr.f32.gmra.mrb[0].mxu0 %v1712
        %v1920 = vpop.f32.mrb[0].mxu0
        %v1921 = vadd.f32 0.0, %v1920
        %v1922 = vpop.f32.mrb[0].mxu0
        %1923 = vmatprep.mubr.f32.mxu0 0.0
        %1924 = vmatmul.mubr.f32.gmra.mrb[0].mxu0 %v1715
        %v1925 = vpop.f32.mrb[0].mxu0
        %v1926 = vadd.f32 0.0, %v1925
        %v1927 = vpop.f32.mrb[0].mxu0
        %1928 = vmatprep.mubr.f32.mxu0 0.0
        %1929 = vmatmul.mubr.f32.gmra.mrb[0].mxu0 %v1718
        %v1930 = vpop.f32.mrb[0].mxu0
        %v1931 = vadd.f32 0.0, %v1930
        %v1932 = vpop.f32.mrb[0].mxu0
        %1933 = vmatprep.mubr.f32.mxu0 0.0
        %1934 = vmatmul.mubr.f32.gmra.mrb[0].mxu0 %v1721
        %v1935 = vpop.f32.mrb[0].mxu0
        %v1936 = vadd.f32 0.0, %v1935
        %v1937 = vpop.f32.mrb[0].mxu0
        %1938 = vmatprep.mubr.f32.mxu0 0.0
        %1939 = vmatmul.mubr.f32.gmra.mrb[0].mxu0 %v1724
        %v1940 = vpop.f32.mrb[0].mxu0
        %v1941 = vadd.f32 0.0, %v1940
        %v1942 = vpop.f32.mrb[0].mxu0
        %1943 = vmatprep.mubr.f32.mxu0 0.0
        %1944 = vmatmul.mubr.f32.gmra.mrb[0].mxu0 %v1727
        %v1945 = vpop.f32.mrb[0].mxu0
        %v1946 = vadd.f32 0.0, %v1945
        %v1947 = vpop.f32.mrb[0].mxu0
        %1948 = vmatprep.mubr.f32.mxu0 0.0
        %1949 = vmatmul.mubr.f32.gmra.mrb[0].mxu0 %v1730
        %v1950 = vpop.f32.mrb[0].mxu0
        %v1951 = vadd.f32 0.0, %v1950
        %v1952 = vpop.f32.mrb[0].mxu0
        %1953 = vmatprep.mubr.f32.mxu0 0.0
        %1954 = vmatmul.mubr.f32.gmra.mrb[0].mxu0 %v1733
        %v1955 = vpop.f32.mrb[0].mxu0
        %v1956 = vadd.f32 0.0, %v1955
        %v1957 = vpop.f32.mrb[0].mxu0
        %1958 = vmatprep.mubr.f32.mxu0 0.0
        %1959 = vmatmul.mubr.f32.gmra.mrb[0].mxu0 %v1736
        %v1960 = vpop.f32.mrb[0].mxu0
        %v1961 = vadd.f32 0.0, %v1960
        %v1962 = vpop.f32.mrb[0].mxu0
        %1963 = vmatprep.mubr.f32.mxu0 0.0
        %1964 = vmatmul.mubr.f32.gmra.mrb[0].mxu0 %v1739
        %v1965 = vpop.f32.mrb[0].mxu0
        %v1966 = vadd.f32 0.0, %v1965
        %v1967 = vpop.f32.mrb[0].mxu0
        %1968 = vmatprep.mubr.f32.mxu0 0.0
        %1969 = vmatmul.mubr.f32.gmra.mrb[0].mxu0 %v1742
        %v1970 = vpop.f32.mrb[0].mxu0
        %v1971 = vadd.f32 0.0, %v1970
        %v1972 = vpop.f32.mrb[0].mxu0
        %1973 = vmatprep.mubr.f32.mxu0 0.0
        %1974 = vmatmul.mubr.f32.gmra.mrb[0].mxu0 %v1745
        %v1975 = vpop.f32.mrb[0].mxu0
        %v1976 = vadd.f32 0.0, %v1975
        %v1977 = vpop.f32.mrb[0].mxu0
        %1978 = vmatprep.mubr.f32.mxu0 0.0
        %1979 = vmatmul.mubr.f32.gmra.mrb[0].mxu0 %v1748
        %v1980 = vpop.f32.mrb[0].mxu0
        %v1981 = vadd.f32 0.0, %v1980
        %v1982 = vpop.f32.mrb[0].mxu0
        %1983 = vmatprep.mubr.f32.mxu0 0.0
        %1984 = vmatmul.mubr.f32.gmra.mrb[0].mxu0 %v1751
        %v1985 = vpop.f32.mrb[0].mxu0
        %v1986 = vadd.f32 0.0, %v1985
        %v1987 = vpop.f32.mrb[0].mxu0
        %1988 = vmatprep.mubr.f32.mxu0 0.0
        %1989 = vmatmul.mubr.f32.gmra.mrb[0].mxu0 %v1754
        %v1990 = vpop.f32.mrb[0].mxu0
        %v1991 = vadd.f32 0.0, %v1990
        %v1992 = vpop.f32.mrb[0].mxu0
        %1993 = vmatprep.mubr.f32.mxu0 0.0
        %1994 = vmatmul.mubr.f32.gmra.mrb[0].mxu0 %v1757
        %v1995 = vpop.f32.mrb[0].mxu0
        %v1996 = vadd.f32 0.0, %v1995
        %v1997 = vpop.f32.mrb[0].mxu0
        %1998 = vmatprep.mubr.f32.mxu0 0.0
        %1999 = vmatmul.mubr.f32.gmra.mrb[0].mxu0 %v1760
        %v2000 = vpop.f32.mrb[0].mxu0
        %v2001 = vadd.f32 0.0, %v2000
        %v2002 = vpop.f32.mrb[0].mxu0
        %2003 = vmatprep.mubr.f32.mxu0 0.0
        %2004 = vmatmul.mubr.f32.gmra.mrb[0].mxu0 %v1763
        %v2005 = vpop.f32.mrb[0].mxu0
        %v2006 = vadd.f32 0.0, %v2005
        %v2007 = vpop.f32.mrb[0].mxu0
        %2008 = vmatprep.mubr.f32.mxu0 0.0
        %2009 = vmatmul.mubr.f32.gmra.mrb[0].mxu0 %v1766
        %v2010 = vpop.f32.mrb[0].mxu0
        %v2011 = vadd.f32 0.0, %v2010
        %v2012 = vpop.f32.mrb[0].mxu0
        %2013 = vmatprep.mubr.f32.mxu0 0.0
        %2014 = vmatmul.mubr.f32.gmra.mrb[0].mxu0 %v1769
        %v2015 = vpop.f32.mrb[0].mxu0
        %v2016 = vadd.f32 0.0, %v2015
        %v2017 = vpop.f32.mrb[0].mxu0
        %2018 = vdwg.mxu0
        %v2019 = vadd.f32 %v1589, %v1841
        %v2020 = vadd.f32 %v1590, %v1846
        %v2021 = vadd.f32 %v1591, %v1851
        %v2022 = vadd.f32 %v1592, %v1856
        %v2023 = vadd.f32 %v1593, %v1861
        %v2024 = vadd.f32 %v1594, %v1866
        %v2025 = vadd.f32 %v1595, %v1871
        %v2026 = vadd.f32 %v1596, %v1876
        %v2027 = vadd.f32 %v1597, %v1881
        %v2028 = vadd.f32 %v1598, %v1886
        %v2029 = vadd.f32 %v1599, %v1891
        %v2030 = vadd.f32 %v1600, %v1896
        %v2031 = vadd.f32 %v1601, %v1901
        %v2032 = vadd.f32 %v1602, %v1906
        %v2033 = vadd.f32 %v1603, %v1911
        %v2034 = vadd.f32 %v1604, %v1916
        %v2035 = vadd.f32 %v1605, %v1921
        %v2036 = vadd.f32 %v1606, %v1926
        %v2037 = vadd.f32 %v1607, %v1931
        %v2038 = vadd.f32 %v1608, %v1936
        %v2039 = vadd.f32 %v1609, %v1941
        %v2040 = vadd.f32 %v1610, %v1946
        %v2041 = vadd.f32 %v1611, %v1951
        %v2042 = vadd.f32 %v1612, %v1956
        %v2043 = vadd.f32 %v1613, %v1961
        %v2044 = vadd.f32 %v1614, %v1966
        %v2045 = vadd.f32 %v1615, %v1971
        %v2046 = vadd.f32 %v1616, %v1976
        %v2047 = vadd.f32 %v1617, %v1981
        %v2048 = vadd.f32 %v1618, %v1986
        %v2049 = vadd.f32 %v1619, %v1991
        %v2050 = vadd.f32 %v1620, %v1996
        %v2051 = vadd.f32 %v1621, %v2001
        %v2052 = vadd.f32 %v1622, %v2006
        %v2053 = vadd.f32 %v1623, %v2011
        %v2054 = vadd.f32 %v1624, %v2016
        %v2055 = vld [vmem:[#allocation2 + $0x13] sm:$0xff]
        %v2056 = vld [vmem:[#allocation2 + $0x1b] sm:$0xff]
        %v2057 = vld [vmem:[#allocation2 + $0x23] sm:$0xff]
        %v2058 = vld [vmem:[#allocation2 + $0x2b] sm:$0xff]
        %v2059 = vld [vmem:[#allocation2 + $0x33] sm:$0xff]
        %v2060 = vld [vmem:[#allocation2 + $0x3b] sm:$0xff]
        %v2061 = vld [vmem:[#allocation2 + $0x43] sm:$0xff]
        %v2062 = vld [vmem:[#allocation2 + $0x4b] sm:$0xff]
        %v2063 = vld [vmem:[#allocation2 + $0x53] sm:$0xff]
        %v2064 = vld [vmem:[#allocation2 + $0x5b] sm:$0xff]
        %v2065 = vld [vmem:[#allocation2 + $0x63] sm:$0xff]
        %v2066 = vld [vmem:[#allocation2 + $0x6b] sm:$0xff]
        %v2067 = vld [vmem:[#allocation2 + $0x73] sm:$0xff]
        %v2068 = vld [vmem:[#allocation2 + $0x7b] sm:$0xff]
        %v2069 = vld [vmem:[#allocation2 + $0x83] sm:$0xff]
        %v2070 = vld [vmem:[#allocation2 + $0x8b] sm:$0xff]
        %v2071 = vld [vmem:[#allocation2 + $0x93] sm:$0xff]
        %v2072 = vld [vmem:[#allocation2 + $0x9b] sm:$0xff]
        %v2073 = vld [vmem:[#allocation2 + $0xa3] sm:$0xff]
        %v2074 = vld [vmem:[#allocation2 + $0xab] sm:$0xff]
        %v2075 = vld [vmem:[#allocation2 + $0xb3] sm:$0xff]
        %v2076 = vld [vmem:[#allocation2 + $0xbb] sm:$0xff]
        %v2077 = vld [vmem:[#allocation2 + $0xc3] sm:$0xff]
        %v2078 = vld [vmem:[#allocation2 + $0xcb] sm:$0xff]
        %v2079 = vld [vmem:[#allocation2 + $0xd3] sm:$0xff]
        %v2080 = vld [vmem:[#allocation2 + $0xdb] sm:$0xff]
        %v2081 = vld [vmem:[#allocation2 + $0xe3] sm:$0xff]
        %v2082 = vld [vmem:[#allocation2 + $0xeb] sm:$0xff]
        %v2083 = vld [vmem:[#allocation2 + $0xf3] sm:$0xff]
        %v2084 = vld [vmem:[#allocation2 + $0xfb] sm:$0xff]
        %v2085 = vld [vmem:[#allocation2 + $0x103] sm:$0xff]
        %v2086 = vld [vmem:[#allocation2 + $0x10b] sm:$0xff]
        %v2087 = vld [vmem:[#allocation2 + $0x113] sm:$0xff]
        %v2088 = vld [vmem:[#allocation2 + $0x11b] sm:$0xff]
        %v2089 = vld [vmem:[#allocation2 + $0x123] sm:$0xff]
        %v2090 = vld [vmem:[#allocation2 + $0x12b] sm:$0xff]
        %s2091 = scalar_lea.vmem %s2, 16
        %v2092 = vld [vmem:[%s2091] sm:$0xf]
        %v2094 = vsel %vm362, %v2055, 0
        %v2097 = vsel %vm362, %v2056, 0
        %v2100 = vsel %vm362, %v2057, 0
        %v2103 = vsel %vm362, %v2058, 0
        %v2106 = vsel %vm362, %v2059, 0
        %v2109 = vsel %vm362, %v2060, 0
        %v2112 = vsel %vm362, %v2061, 0
        %v2115 = vsel %vm362, %v2062, 0
        %v2118 = vsel %vm362, %v2063, 0
        %v2121 = vsel %vm362, %v2064, 0
        %v2124 = vsel %vm362, %v2065, 0
        %v2127 = vsel %vm362, %v2066, 0
        %v2130 = vsel %vm362, %v2067, 0
        %v2133 = vsel %vm362, %v2068, 0
        %v2136 = vsel %vm362, %v2069, 0
        %v2139 = vsel %vm362, %v2070, 0
        %v2142 = vsel %vm362, %v2071, 0
        %v2145 = vsel %vm362, %v2072, 0
        %v2148 = vsel %vm362, %v2073, 0
        %v2151 = vsel %vm362, %v2074, 0
        %v2154 = vsel %vm362, %v2075, 0
        %v2157 = vsel %vm362, %v2076, 0
        %v2160 = vsel %vm362, %v2077, 0
        %v2163 = vsel %vm362, %v2078, 0
        %v2166 = vsel %vm362, %v2079, 0
        %v2169 = vsel %vm362, %v2080, 0
        %v2172 = vsel %vm362, %v2081, 0
        %v2175 = vsel %vm362, %v2082, 0
        %v2178 = vsel %vm362, %v2083, 0
        %v2181 = vsel %vm362, %v2084, 0
        %v2184 = vsel %vm362, %v2085, 0
        %v2187 = vsel %vm362, %v2086, 0
        %v2190 = vsel %vm362, %v2087, 0
        %v2193 = vsel %vm362, %v2088, 0
        %v2196 = vsel %vm362, %v2089, 0
        %v2199 = vsel %vm362, %v2090, 0
        %v2202 = vsel %vm590, %v2092, 0
        %2204 = vmatprep.subr.mxu0 0.0
        %2205 = vmatpush1.msra.mxu0 %v2202
        %2206 = vmatprep.subr.mxu0 0.0
        %2207 = vmatpush1.msra.mxu0 0.0
        %2208 = vmatprep.subr.mxu0 0.0
        %2209 = vmatpush1.msra.mxu0 0.0
        %2210 = vmatprep.subr.mxu0 0.0
        %2211 = vmatpush1.msra.mxu0 0.0
        %2212 = vmatprep.subr.mxu0 0.0
        %2213 = vmatpush1.msra.mxu0 0.0
        %2214 = vmatprep.subr.mxu0 0.0
        %2215 = vmatpush1.msra.mxu0 0.0
        %2216 = vmatprep.subr.mxu0 0.0
        %2217 = vmatpush1.msra.mxu0 0.0
        %2218 = vmatprep.subr.mxu0 0.0
        %2219 = vmatpush1.msra.mxu0 0.0
        %2220 = vmatprep.subr.mxu0 0.0
        %2221 = vmatpush1.msra.mxu0 0.0
        %2222 = vmatprep.subr.mxu0 0.0
        %2223 = vmatpush1.msra.mxu0 0.0
        %2224 = vmatprep.subr.mxu0 0.0
        %2225 = vmatpush1.msra.mxu0 0.0
        %2226 = vmatprep.subr.mxu0 0.0
        %2227 = vmatpush1.msra.mxu0 0.0
        %2228 = vmatprep.subr.mxu0 0.0
        %2229 = vmatpush1.msra.mxu0 0.0
        %2230 = vmatprep.subr.mxu0 0.0
        %2231 = vmatpush1.msra.mxu0 0.0
        %2232 = vmatprep.subr.mxu0 0.0
        %2233 = vmatpush1.msra.mxu0 0.0
        %2234 = vmatprep.subr.mxu0 0.0
        %2235 = vmatpush1.msra.mxu0 0.0
        %2236 = vmatprep.subr.mxu0 0.0
        %2237 = vmatpush1.msra.mxu0 0.0
        %2238 = vmatprep.subr.mxu0 0.0
        %2239 = vmatpush1.msra.mxu0 0.0
        %2240 = vmatprep.subr.mxu0 0.0
        %2241 = vmatpush1.msra.mxu0 0.0
        %2242 = vmatprep.subr.mxu0 0.0
        %2243 = vmatpush1.msra.mxu0 0.0
        %2244 = vmatprep.subr.mxu0 0.0
        %2245 = vmatpush1.msra.mxu0 0.0
        %2246 = vmatprep.subr.mxu0 0.0
        %2247 = vmatpush1.msra.mxu0 0.0
        %2248 = vmatprep.subr.mxu0 0.0
        %2249 = vmatpush1.msra.mxu0 0.0
        %2250 = vmatprep.subr.mxu0 0.0
        %2251 = vmatpush1.msra.mxu0 0.0
        %2252 = vmatprep.subr.mxu0 0.0
        %2253 = vmatpush1.msra.mxu0 0.0
        %2254 = vmatprep.subr.mxu0 0.0
        %2255 = vmatpush1.msra.mxu0 0.0
        %2256 = vmatprep.subr.mxu0 0.0
        %2257 = vmatpush1.msra.mxu0 0.0
        %2258 = vmatprep.subr.mxu0 0.0
        %2259 = vmatpush1.msra.mxu0 0.0
        %2260 = vmatprep.subr.mxu0 0.0
        %2261 = vmatpush1.msra.mxu0 0.0
        %2262 = vmatprep.subr.mxu0 0.0
        %2263 = vmatpush1.msra.mxu0 0.0
        %2264 = vmatprep.subr.mxu0 0.0
        %2265 = vmatpush1.msra.mxu0 0.0
        %2266 = vmatprep.subr.mxu0 0.0
        %2267 = vmatpush1.msra.mxu0 0.0
        %2268 = vmatprep.mubr.f32.mxu0 0.0
        %2269 = vmatmul.mubr.f32.gmra.mrb[0].mxu0 %v2094
        %v2270 = vpop.f32.mrb[0].mxu0
        %v2271 = vadd.f32 0.0, %v2270
        %v2272 = vpop.f32.mrb[0].mxu0
        %2273 = vmatprep.mubr.f32.mxu0 0.0
        %2274 = vmatmul.mubr.f32.gmra.mrb[0].mxu0 %v2097
        %v2275 = vpop.f32.mrb[0].mxu0
        %v2276 = vadd.f32 0.0, %v2275
        %v2277 = vpop.f32.mrb[0].mxu0
        %2278 = vmatprep.mubr.f32.mxu0 0.0
        %2279 = vmatmul.mubr.f32.gmra.mrb[0].mxu0 %v2100
        %v2280 = vpop.f32.mrb[0].mxu0
        %v2281 = vadd.f32 0.0, %v2280
        %v2282 = vpop.f32.mrb[0].mxu0
        %2283 = vmatprep.mubr.f32.mxu0 0.0
        %2284 = vmatmul.mubr.f32.gmra.mrb[0].mxu0 %v2103
        %v2285 = vpop.f32.mrb[0].mxu0
        %v2286 = vadd.f32 0.0, %v2285
        %v2287 = vpop.f32.mrb[0].mxu0
        %2288 = vmatprep.mubr.f32.mxu0 0.0
        %2289 = vmatmul.mubr.f32.gmra.mrb[0].mxu0 %v2106
        %v2290 = vpop.f32.mrb[0].mxu0
        %v2291 = vadd.f32 0.0, %v2290
        %v2292 = vpop.f32.mrb[0].mxu0
        %2293 = vmatprep.mubr.f32.mxu0 0.0
        %2294 = vmatmul.mubr.f32.gmra.mrb[0].mxu0 %v2109
        %v2295 = vpop.f32.mrb[0].mxu0
        %v2296 = vadd.f32 0.0, %v2295
        %v2297 = vpop.f32.mrb[0].mxu0
        %2298 = vmatprep.mubr.f32.mxu0 0.0
        %2299 = vmatmul.mubr.f32.gmra.mrb[0].mxu0 %v2112
        %v2300 = vpop.f32.mrb[0].mxu0
        %v2301 = vadd.f32 0.0, %v2300
        %v2302 = vpop.f32.mrb[0].mxu0
        %2303 = vmatprep.mubr.f32.mxu0 0.0
        %2304 = vmatmul.mubr.f32.gmra.mrb[0].mxu0 %v2115
        %v2305 = vpop.f32.mrb[0].mxu0
        %v2306 = vadd.f32 0.0, %v2305
        %v2307 = vpop.f32.mrb[0].mxu0
        %2308 = vmatprep.mubr.f32.mxu0 0.0
        %2309 = vmatmul.mubr.f32.gmra.mrb[0].mxu0 %v2118
        %v2310 = vpop.f32.mrb[0].mxu0
        %v2311 = vadd.f32 0.0, %v2310
        %v2312 = vpop.f32.mrb[0].mxu0
        %2313 = vmatprep.mubr.f32.mxu0 0.0
        %2314 = vmatmul.mubr.f32.gmra.mrb[0].mxu0 %v2121
        %v2315 = vpop.f32.mrb[0].mxu0
        %v2316 = vadd.f32 0.0, %v2315
        %v2317 = vpop.f32.mrb[0].mxu0
        %2318 = vmatprep.mubr.f32.mxu0 0.0
        %2319 = vmatmul.mubr.f32.gmra.mrb[0].mxu0 %v2124
        %v2320 = vpop.f32.mrb[0].mxu0
        %v2321 = vadd.f32 0.0, %v2320
        %v2322 = vpop.f32.mrb[0].mxu0
        %2323 = vmatprep.mubr.f32.mxu0 0.0
        %2324 = vmatmul.mubr.f32.gmra.mrb[0].mxu0 %v2127
        %v2325 = vpop.f32.mrb[0].mxu0
        %v2326 = vadd.f32 0.0, %v2325
        %v2327 = vpop.f32.mrb[0].mxu0
        %2328 = vmatprep.mubr.f32.mxu0 0.0
        %2329 = vmatmul.mubr.f32.gmra.mrb[0].mxu0 %v2130
        %v2330 = vpop.f32.mrb[0].mxu0
        %v2331 = vadd.f32 0.0, %v2330
        %v2332 = vpop.f32.mrb[0].mxu0
        %2333 = vmatprep.mubr.f32.mxu0 0.0
        %2334 = vmatmul.mubr.f32.gmra.mrb[0].mxu0 %v2133
        %v2335 = vpop.f32.mrb[0].mxu0
        %v2336 = vadd.f32 0.0, %v2335
        %v2337 = vpop.f32.mrb[0].mxu0
        %2338 = vmatprep.mubr.f32.mxu0 0.0
        %2339 = vmatmul.mubr.f32.gmra.mrb[0].mxu0 %v2136
        %v2340 = vpop.f32.mrb[0].mxu0
        %v2341 = vadd.f32 0.0, %v2340
        %v2342 = vpop.f32.mrb[0].mxu0
        %2343 = vmatprep.mubr.f32.mxu0 0.0
        %2344 = vmatmul.mubr.f32.gmra.mrb[0].mxu0 %v2139
        %v2345 = vpop.f32.mrb[0].mxu0
        %v2346 = vadd.f32 0.0, %v2345
        %v2347 = vpop.f32.mrb[0].mxu0
        %2348 = vmatprep.mubr.f32.mxu0 0.0
        %2349 = vmatmul.mubr.f32.gmra.mrb[0].mxu0 %v2142
        %v2350 = vpop.f32.mrb[0].mxu0
        %v2351 = vadd.f32 0.0, %v2350
        %v2352 = vpop.f32.mrb[0].mxu0
        %2353 = vmatprep.mubr.f32.mxu0 0.0
        %2354 = vmatmul.mubr.f32.gmra.mrb[0].mxu0 %v2145
        %v2355 = vpop.f32.mrb[0].mxu0
        %v2356 = vadd.f32 0.0, %v2355
        %v2357 = vpop.f32.mrb[0].mxu0
        %2358 = vmatprep.mubr.f32.mxu0 0.0
        %2359 = vmatmul.mubr.f32.gmra.mrb[0].mxu0 %v2148
        %v2360 = vpop.f32.mrb[0].mxu0
        %v2361 = vadd.f32 0.0, %v2360
        %v2362 = vpop.f32.mrb[0].mxu0
        %2363 = vmatprep.mubr.f32.mxu0 0.0
        %2364 = vmatmul.mubr.f32.gmra.mrb[0].mxu0 %v2151
        %v2365 = vpop.f32.mrb[0].mxu0
        %v2366 = vadd.f32 0.0, %v2365
        %v2367 = vpop.f32.mrb[0].mxu0
        %2368 = vmatprep.mubr.f32.mxu0 0.0
        %2369 = vmatmul.mubr.f32.gmra.mrb[0].mxu0 %v2154
        %v2370 = vpop.f32.mrb[0].mxu0
        %v2371 = vadd.f32 0.0, %v2370
        %v2372 = vpop.f32.mrb[0].mxu0
        %2373 = vmatprep.mubr.f32.mxu0 0.0
        %2374 = vmatmul.mubr.f32.gmra.mrb[0].mxu0 %v2157
        %v2375 = vpop.f32.mrb[0].mxu0
        %v2376 = vadd.f32 0.0, %v2375
        %v2377 = vpop.f32.mrb[0].mxu0
        %2378 = vmatprep.mubr.f32.mxu0 0.0
        %2379 = vmatmul.mubr.f32.gmra.mrb[0].mxu0 %v2160
        %v2380 = vpop.f32.mrb[0].mxu0
        %v2381 = vadd.f32 0.0, %v2380
        %v2382 = vpop.f32.mrb[0].mxu0
        %2383 = vmatprep.mubr.f32.mxu0 0.0
        %2384 = vmatmul.mubr.f32.gmra.mrb[0].mxu0 %v2163
        %v2385 = vpop.f32.mrb[0].mxu0
        %v2386 = vadd.f32 0.0, %v2385
        %v2387 = vpop.f32.mrb[0].mxu0
        %2388 = vmatprep.mubr.f32.mxu0 0.0
        %2389 = vmatmul.mubr.f32.gmra.mrb[0].mxu0 %v2166
        %v2390 = vpop.f32.mrb[0].mxu0
        %v2391 = vadd.f32 0.0, %v2390
        %v2392 = vpop.f32.mrb[0].mxu0
        %2393 = vmatprep.mubr.f32.mxu0 0.0
        %2394 = vmatmul.mubr.f32.gmra.mrb[0].mxu0 %v2169
        %v2395 = vpop.f32.mrb[0].mxu0
        %v2396 = vadd.f32 0.0, %v2395
        %v2397 = vpop.f32.mrb[0].mxu0
        %2398 = vmatprep.mubr.f32.mxu0 0.0
        %2399 = vmatmul.mubr.f32.gmra.mrb[0].mxu0 %v2172
        %v2400 = vpop.f32.mrb[0].mxu0
        %v2401 = vadd.f32 0.0, %v2400
        %v2402 = vpop.f32.mrb[0].mxu0
        %2403 = vmatprep.mubr.f32.mxu0 0.0
        %2404 = vmatmul.mubr.f32.gmra.mrb[0].mxu0 %v2175
        %v2405 = vpop.f32.mrb[0].mxu0
        %v2406 = vadd.f32 0.0, %v2405
        %v2407 = vpop.f32.mrb[0].mxu0
        %2408 = vmatprep.mubr.f32.mxu0 0.0
        %2409 = vmatmul.mubr.f32.gmra.mrb[0].mxu0 %v2178
        %v2410 = vpop.f32.mrb[0].mxu0
        %v2411 = vadd.f32 0.0, %v2410
        %v2412 = vpop.f32.mrb[0].mxu0
        %2413 = vmatprep.mubr.f32.mxu0 0.0
        %2414 = vmatmul.mubr.f32.gmra.mrb[0].mxu0 %v2181
        %v2415 = vpop.f32.mrb[0].mxu0
        %v2416 = vadd.f32 0.0, %v2415
        %v2417 = vpop.f32.mrb[0].mxu0
        %2418 = vmatprep.mubr.f32.mxu0 0.0
        %2419 = vmatmul.mubr.f32.gmra.mrb[0].mxu0 %v2184
        %v2420 = vpop.f32.mrb[0].mxu0
        %v2421 = vadd.f32 0.0, %v2420
        %v2422 = vpop.f32.mrb[0].mxu0
        %2423 = vmatprep.mubr.f32.mxu0 0.0
        %2424 = vmatmul.mubr.f32.gmra.mrb[0].mxu0 %v2187
        %v2425 = vpop.f32.mrb[0].mxu0
        %v2426 = vadd.f32 0.0, %v2425
        %v2427 = vpop.f32.mrb[0].mxu0
        %2428 = vmatprep.mubr.f32.mxu0 0.0
        %2429 = vmatmul.mubr.f32.gmra.mrb[0].mxu0 %v2190
        %v2430 = vpop.f32.mrb[0].mxu0
        %v2431 = vadd.f32 0.0, %v2430
        %v2432 = vpop.f32.mrb[0].mxu0
        %2433 = vmatprep.mubr.f32.mxu0 0.0
        %2434 = vmatmul.mubr.f32.gmra.mrb[0].mxu0 %v2193
        %v2435 = vpop.f32.mrb[0].mxu0
        %v2436 = vadd.f32 0.0, %v2435
        %v2437 = vpop.f32.mrb[0].mxu0
        %2438 = vmatprep.mubr.f32.mxu0 0.0
        %2439 = vmatmul.mubr.f32.gmra.mrb[0].mxu0 %v2196
        %v2440 = vpop.f32.mrb[0].mxu0
        %v2441 = vadd.f32 0.0, %v2440
        %v2442 = vpop.f32.mrb[0].mxu0
        %2443 = vmatprep.mubr.f32.mxu0 0.0
        %2444 = vmatmul.mubr.f32.gmra.mrb[0].mxu0 %v2199
        %v2445 = vpop.f32.mrb[0].mxu0
        %v2446 = vadd.f32 0.0, %v2445
        %v2447 = vpop.f32.mrb[0].mxu0
        %2448 = vdwg.mxu0
        %v2449 = vadd.f32 %v2019, %v2271
        %v2450 = vadd.f32 %v2020, %v2276
        %v2451 = vadd.f32 %v2021, %v2281
        %v2452 = vadd.f32 %v2022, %v2286
        %v2453 = vadd.f32 %v2023, %v2291
        %v2454 = vadd.f32 %v2024, %v2296
        %v2455 = vadd.f32 %v2025, %v2301
        %v2456 = vadd.f32 %v2026, %v2306
        %v2457 = vadd.f32 %v2027, %v2311
        %v2458 = vadd.f32 %v2028, %v2316
        %v2459 = vadd.f32 %v2029, %v2321
        %v2460 = vadd.f32 %v2030, %v2326
        %v2461 = vadd.f32 %v2031, %v2331
        %v2462 = vadd.f32 %v2032, %v2336
        %v2463 = vadd.f32 %v2033, %v2341
        %v2464 = vadd.f32 %v2034, %v2346
        %v2465 = vadd.f32 %v2035, %v2351
        %v2466 = vadd.f32 %v2036, %v2356
        %v2467 = vadd.f32 %v2037, %v2361
        %v2468 = vadd.f32 %v2038, %v2366
        %v2469 = vadd.f32 %v2039, %v2371
        %v2470 = vadd.f32 %v2040, %v2376
        %v2471 = vadd.f32 %v2041, %v2381
        %v2472 = vadd.f32 %v2042, %v2386
        %v2473 = vadd.f32 %v2043, %v2391
        %v2474 = vadd.f32 %v2044, %v2396
        %v2475 = vadd.f32 %v2045, %v2401
        %v2476 = vadd.f32 %v2046, %v2406
        %v2477 = vadd.f32 %v2047, %v2411
        %v2478 = vadd.f32 %v2048, %v2416
        %v2479 = vadd.f32 %v2049, %v2421
        %v2480 = vadd.f32 %v2050, %v2426
        %v2481 = vadd.f32 %v2051, %v2431
        %v2482 = vadd.f32 %v2052, %v2436
        %v2483 = vadd.f32 %v2053, %v2441
        %v2484 = vadd.f32 %v2054, %v2446
        %v2485 = vld [vmem:[#allocation2 + $0x14] sm:$0xff]
        %v2486 = vld [vmem:[#allocation2 + $0x1c] sm:$0xff]
        %v2487 = vld [vmem:[#allocation2 + $0x24] sm:$0xff]
        %v2488 = vld [vmem:[#allocation2 + $0x2c] sm:$0xff]
        %v2489 = vld [vmem:[#allocation2 + $0x34] sm:$0xff]
        %v2490 = vld [vmem:[#allocation2 + $0x3c] sm:$0xff]
        %v2491 = vld [vmem:[#allocation2 + $0x44] sm:$0xff]
        %v2492 = vld [vmem:[#allocation2 + $0x4c] sm:$0xff]
        %v2493 = vld [vmem:[#allocation2 + $0x54] sm:$0xff]
        %v2494 = vld [vmem:[#allocation2 + $0x5c] sm:$0xff]
        %v2495 = vld [vmem:[#allocation2 + $0x64] sm:$0xff]
        %v2496 = vld [vmem:[#allocation2 + $0x6c] sm:$0xff]
        %v2497 = vld [vmem:[#allocation2 + $0x74] sm:$0xff]
        %v2498 = vld [vmem:[#allocation2 + $0x7c] sm:$0xff]
        %v2499 = vld [vmem:[#allocation2 + $0x84] sm:$0xff]
        %v2500 = vld [vmem:[#allocation2 + $0x8c] sm:$0xff]
        %v2501 = vld [vmem:[#allocation2 + $0x94] sm:$0xff]
        %v2502 = vld [vmem:[#allocation2 + $0x9c] sm:$0xff]
        %v2503 = vld [vmem:[#allocation2 + $0xa4] sm:$0xff]
        %v2504 = vld [vmem:[#allocation2 + $0xac] sm:$0xff]
        %v2505 = vld [vmem:[#allocation2 + $0xb4] sm:$0xff]
        %v2506 = vld [vmem:[#allocation2 + $0xbc] sm:$0xff]
        %v2507 = vld [vmem:[#allocation2 + $0xc4] sm:$0xff]
        %v2508 = vld [vmem:[#allocation2 + $0xcc] sm:$0xff]
        %v2509 = vld [vmem:[#allocation2 + $0xd4] sm:$0xff]
        %v2510 = vld [vmem:[#allocation2 + $0xdc] sm:$0xff]
        %v2511 = vld [vmem:[#allocation2 + $0xe4] sm:$0xff]
        %v2512 = vld [vmem:[#allocation2 + $0xec] sm:$0xff]
        %v2513 = vld [vmem:[#allocation2 + $0xf4] sm:$0xff]
        %v2514 = vld [vmem:[#allocation2 + $0xfc] sm:$0xff]
        %v2515 = vld [vmem:[#allocation2 + $0x104] sm:$0xff]
        %v2516 = vld [vmem:[#allocation2 + $0x10c] sm:$0xff]
        %v2517 = vld [vmem:[#allocation2 + $0x114] sm:$0xff]
        %v2518 = vld [vmem:[#allocation2 + $0x11c] sm:$0xff]
        %v2519 = vld [vmem:[#allocation2 + $0x124] sm:$0xff]
        %v2520 = vld [vmem:[#allocation2 + $0x12c] sm:$0xff]
        %s2521 = scalar_lea.vmem %s2, 20
        %v2522 = vld [vmem:[%s2521] sm:$0xf]
        %v2524 = vsel %vm362, %v2485, 0
        %v2527 = vsel %vm362, %v2486, 0
        %v2530 = vsel %vm362, %v2487, 0
        %v2533 = vsel %vm362, %v2488, 0
        %v2536 = vsel %vm362, %v2489, 0
        %v2539 = vsel %vm362, %v2490, 0
        %v2542 = vsel %vm362, %v2491, 0
        %v2545 = vsel %vm362, %v2492, 0
        %v2548 = vsel %vm362, %v2493, 0
        %v2551 = vsel %vm362, %v2494, 0
        %v2554 = vsel %vm362, %v2495, 0
        %v2557 = vsel %vm362, %v2496, 0
        %v2560 = vsel %vm362, %v2497, 0
        %v2563 = vsel %vm362, %v2498, 0
        %v2566 = vsel %vm362, %v2499, 0
        %v2569 = vsel %vm362, %v2500, 0
        %v2572 = vsel %vm362, %v2501, 0
        %v2575 = vsel %vm362, %v2502, 0
        %v2578 = vsel %vm362, %v2503, 0
        %v2581 = vsel %vm362, %v2504, 0
        %v2584 = vsel %vm362, %v2505, 0
        %v2587 = vsel %vm362, %v2506, 0
        %v2590 = vsel %vm362, %v2507, 0
        %v2593 = vsel %vm362, %v2508, 0
        %v2596 = vsel %vm362, %v2509, 0
        %v2599 = vsel %vm362, %v2510, 0
        %v2602 = vsel %vm362, %v2511, 0
        %v2605 = vsel %vm362, %v2512, 0
        %v2608 = vsel %vm362, %v2513, 0
        %v2611 = vsel %vm362, %v2514, 0
        %v2614 = vsel %vm362, %v2515, 0
        %v2617 = vsel %vm362, %v2516, 0
        %v2620 = vsel %vm362, %v2517, 0
        %v2623 = vsel %vm362, %v2518, 0
        %v2626 = vsel %vm362, %v2519, 0
        %v2629 = vsel %vm362, %v2520, 0
        %v2632 = vsel %vm590, %v2522, 0
        %2634 = vmatprep.subr.mxu0 0.0
        %2635 = vmatpush1.msra.mxu0 %v2632
        %2636 = vmatprep.subr.mxu0 0.0
        %2637 = vmatpush1.msra.mxu0 0.0
        %2638 = vmatprep.subr.mxu0 0.0
        %2639 = vmatpush1.msra.mxu0 0.0
        %2640 = vmatprep.subr.mxu0 0.0
        %2641 = vmatpush1.msra.mxu0 0.0
        %2642 = vmatprep.subr.mxu0 0.0
        %2643 = vmatpush1.msra.mxu0 0.0
        %2644 = vmatprep.subr.mxu0 0.0
        %2645 = vmatpush1.msra.mxu0 0.0
        %2646 = vmatprep.subr.mxu0 0.0
        %2647 = vmatpush1.msra.mxu0 0.0
        %2648 = vmatprep.subr.mxu0 0.0
        %2649 = vmatpush1.msra.mxu0 0.0
        %2650 = vmatprep.subr.mxu0 0.0
        %2651 = vmatpush1.msra.mxu0 0.0
        %2652 = vmatprep.subr.mxu0 0.0
        %2653 = vmatpush1.msra.mxu0 0.0
        %2654 = vmatprep.subr.mxu0 0.0
        %2655 = vmatpush1.msra.mxu0 0.0
        %2656 = vmatprep.subr.mxu0 0.0
        %2657 = vmatpush1.msra.mxu0 0.0
        %2658 = vmatprep.subr.mxu0 0.0
        %2659 = vmatpush1.msra.mxu0 0.0
        %2660 = vmatprep.subr.mxu0 0.0
        %2661 = vmatpush1.msra.mxu0 0.0
        %2662 = vmatprep.subr.mxu0 0.0
        %2663 = vmatpush1.msra.mxu0 0.0
        %2664 = vmatprep.subr.mxu0 0.0
        %2665 = vmatpush1.msra.mxu0 0.0
        %2666 = vmatprep.subr.mxu0 0.0
        %2667 = vmatpush1.msra.mxu0 0.0
        %2668 = vmatprep.subr.mxu0 0.0
        %2669 = vmatpush1.msra.mxu0 0.0
        %2670 = vmatprep.subr.mxu0 0.0
        %2671 = vmatpush1.msra.mxu0 0.0
        %2672 = vmatprep.subr.mxu0 0.0
        %2673 = vmatpush1.msra.mxu0 0.0
        %2674 = vmatprep.subr.mxu0 0.0
        %2675 = vmatpush1.msra.mxu0 0.0
        %2676 = vmatprep.subr.mxu0 0.0
        %2677 = vmatpush1.msra.mxu0 0.0
        %2678 = vmatprep.subr.mxu0 0.0
        %2679 = vmatpush1.msra.mxu0 0.0
        %2680 = vmatprep.subr.mxu0 0.0
        %2681 = vmatpush1.msra.mxu0 0.0
        %2682 = vmatprep.subr.mxu0 0.0
        %2683 = vmatpush1.msra.mxu0 0.0
        %2684 = vmatprep.subr.mxu0 0.0
        %2685 = vmatpush1.msra.mxu0 0.0
        %2686 = vmatprep.subr.mxu0 0.0
        %2687 = vmatpush1.msra.mxu0 0.0
        %2688 = vmatprep.subr.mxu0 0.0
        %2689 = vmatpush1.msra.mxu0 0.0
        %2690 = vmatprep.subr.mxu0 0.0
        %2691 = vmatpush1.msra.mxu0 0.0
        %2692 = vmatprep.subr.mxu0 0.0
        %2693 = vmatpush1.msra.mxu0 0.0
        %2694 = vmatprep.subr.mxu0 0.0
        %2695 = vmatpush1.msra.mxu0 0.0
        %2696 = vmatprep.subr.mxu0 0.0
        %2697 = vmatpush1.msra.mxu0 0.0
        %2698 = vmatprep.mubr.f32.mxu0 0.0
        %2699 = vmatmul.mubr.f32.gmra.mrb[0].mxu0 %v2524
        %v2700 = vpop.f32.mrb[0].mxu0
        %v2701 = vadd.f32 0.0, %v2700
        %v2702 = vpop.f32.mrb[0].mxu0
        %2703 = vmatprep.mubr.f32.mxu0 0.0
        %2704 = vmatmul.mubr.f32.gmra.mrb[0].mxu0 %v2527
        %v2705 = vpop.f32.mrb[0].mxu0
        %v2706 = vadd.f32 0.0, %v2705
        %v2707 = vpop.f32.mrb[0].mxu0
        %2708 = vmatprep.mubr.f32.mxu0 0.0
        %2709 = vmatmul.mubr.f32.gmra.mrb[0].mxu0 %v2530
        %v2710 = vpop.f32.mrb[0].mxu0
        %v2711 = vadd.f32 0.0, %v2710
        %v2712 = vpop.f32.mrb[0].mxu0
        %2713 = vmatprep.mubr.f32.mxu0 0.0
        %2714 = vmatmul.mubr.f32.gmra.mrb[0].mxu0 %v2533
        %v2715 = vpop.f32.mrb[0].mxu0
        %v2716 = vadd.f32 0.0, %v2715
        %v2717 = vpop.f32.mrb[0].mxu0
        %2718 = vmatprep.mubr.f32.mxu0 0.0
        %2719 = vmatmul.mubr.f32.gmra.mrb[0].mxu0 %v2536
        %v2720 = vpop.f32.mrb[0].mxu0
        %v2721 = vadd.f32 0.0, %v2720
        %v2722 = vpop.f32.mrb[0].mxu0
        %2723 = vmatprep.mubr.f32.mxu0 0.0
        %2724 = vmatmul.mubr.f32.gmra.mrb[0].mxu0 %v2539
        %v2725 = vpop.f32.mrb[0].mxu0
        %v2726 = vadd.f32 0.0, %v2725
        %v2727 = vpop.f32.mrb[0].mxu0
        %2728 = vmatprep.mubr.f32.mxu0 0.0
        %2729 = vmatmul.mubr.f32.gmra.mrb[0].mxu0 %v2542
        %v2730 = vpop.f32.mrb[0].mxu0
        %v2731 = vadd.f32 0.0, %v2730
        %v2732 = vpop.f32.mrb[0].mxu0
        %2733 = vmatprep.mubr.f32.mxu0 0.0
        %2734 = vmatmul.mubr.f32.gmra.mrb[0].mxu0 %v2545
        %v2735 = vpop.f32.mrb[0].mxu0
        %v2736 = vadd.f32 0.0, %v2735
        %v2737 = vpop.f32.mrb[0].mxu0
        %2738 = vmatprep.mubr.f32.mxu0 0.0
        %2739 = vmatmul.mubr.f32.gmra.mrb[0].mxu0 %v2548
        %v2740 = vpop.f32.mrb[0].mxu0
        %v2741 = vadd.f32 0.0, %v2740
        %v2742 = vpop.f32.mrb[0].mxu0
        %2743 = vmatprep.mubr.f32.mxu0 0.0
        %2744 = vmatmul.mubr.f32.gmra.mrb[0].mxu0 %v2551
        %v2745 = vpop.f32.mrb[0].mxu0
        %v2746 = vadd.f32 0.0, %v2745
        %v2747 = vpop.f32.mrb[0].mxu0
        %2748 = vmatprep.mubr.f32.mxu0 0.0
        %2749 = vmatmul.mubr.f32.gmra.mrb[0].mxu0 %v2554
        %v2750 = vpop.f32.mrb[0].mxu0
        %v2751 = vadd.f32 0.0, %v2750
        %v2752 = vpop.f32.mrb[0].mxu0
        %2753 = vmatprep.mubr.f32.mxu0 0.0
        %2754 = vmatmul.mubr.f32.gmra.mrb[0].mxu0 %v2557
        %v2755 = vpop.f32.mrb[0].mxu0
        %v2756 = vadd.f32 0.0, %v2755
        %v2757 = vpop.f32.mrb[0].mxu0
        %2758 = vmatprep.mubr.f32.mxu0 0.0
        %2759 = vmatmul.mubr.f32.gmra.mrb[0].mxu0 %v2560
        %v2760 = vpop.f32.mrb[0].mxu0
        %v2761 = vadd.f32 0.0, %v2760
        %v2762 = vpop.f32.mrb[0].mxu0
        %2763 = vmatprep.mubr.f32.mxu0 0.0
        %2764 = vmatmul.mubr.f32.gmra.mrb[0].mxu0 %v2563
        %v2765 = vpop.f32.mrb[0].mxu0
        %v2766 = vadd.f32 0.0, %v2765
        %v2767 = vpop.f32.mrb[0].mxu0
        %2768 = vmatprep.mubr.f32.mxu0 0.0
        %2769 = vmatmul.mubr.f32.gmra.mrb[0].mxu0 %v2566
        %v2770 = vpop.f32.mrb[0].mxu0
        %v2771 = vadd.f32 0.0, %v2770
        %v2772 = vpop.f32.mrb[0].mxu0
        %2773 = vmatprep.mubr.f32.mxu0 0.0
        %2774 = vmatmul.mubr.f32.gmra.mrb[0].mxu0 %v2569
        %v2775 = vpop.f32.mrb[0].mxu0
        %v2776 = vadd.f32 0.0, %v2775
        %v2777 = vpop.f32.mrb[0].mxu0
        %2778 = vmatprep.mubr.f32.mxu0 0.0
        %2779 = vmatmul.mubr.f32.gmra.mrb[0].mxu0 %v2572
        %v2780 = vpop.f32.mrb[0].mxu0
        %v2781 = vadd.f32 0.0, %v2780
        %v2782 = vpop.f32.mrb[0].mxu0
        %2783 = vmatprep.mubr.f32.mxu0 0.0
        %2784 = vmatmul.mubr.f32.gmra.mrb[0].mxu0 %v2575
        %v2785 = vpop.f32.mrb[0].mxu0
        %v2786 = vadd.f32 0.0, %v2785
        %v2787 = vpop.f32.mrb[0].mxu0
        %2788 = vmatprep.mubr.f32.mxu0 0.0
        %2789 = vmatmul.mubr.f32.gmra.mrb[0].mxu0 %v2578
        %v2790 = vpop.f32.mrb[0].mxu0
        %v2791 = vadd.f32 0.0, %v2790
        %v2792 = vpop.f32.mrb[0].mxu0
        %2793 = vmatprep.mubr.f32.mxu0 0.0
        %2794 = vmatmul.mubr.f32.gmra.mrb[0].mxu0 %v2581
        %v2795 = vpop.f32.mrb[0].mxu0
        %v2796 = vadd.f32 0.0, %v2795
        %v2797 = vpop.f32.mrb[0].mxu0
        %2798 = vmatprep.mubr.f32.mxu0 0.0
        %2799 = vmatmul.mubr.f32.gmra.mrb[0].mxu0 %v2584
        %v2800 = vpop.f32.mrb[0].mxu0
        %v2801 = vadd.f32 0.0, %v2800
        %v2802 = vpop.f32.mrb[0].mxu0
        %2803 = vmatprep.mubr.f32.mxu0 0.0
        %2804 = vmatmul.mubr.f32.gmra.mrb[0].mxu0 %v2587
        %v2805 = vpop.f32.mrb[0].mxu0
        %v2806 = vadd.f32 0.0, %v2805
        %v2807 = vpop.f32.mrb[0].mxu0
        %2808 = vmatprep.mubr.f32.mxu0 0.0
        %2809 = vmatmul.mubr.f32.gmra.mrb[0].mxu0 %v2590
        %v2810 = vpop.f32.mrb[0].mxu0
        %v2811 = vadd.f32 0.0, %v2810
        %v2812 = vpop.f32.mrb[0].mxu0
        %2813 = vmatprep.mubr.f32.mxu0 0.0
        %2814 = vmatmul.mubr.f32.gmra.mrb[0].mxu0 %v2593
        %v2815 = vpop.f32.mrb[0].mxu0
        %v2816 = vadd.f32 0.0, %v2815
        %v2817 = vpop.f32.mrb[0].mxu0
        %2818 = vmatprep.mubr.f32.mxu0 0.0
        %2819 = vmatmul.mubr.f32.gmra.mrb[0].mxu0 %v2596
        %v2820 = vpop.f32.mrb[0].mxu0
        %v2821 = vadd.f32 0.0, %v2820
        %v2822 = vpop.f32.mrb[0].mxu0
        %2823 = vmatprep.mubr.f32.mxu0 0.0
        %2824 = vmatmul.mubr.f32.gmra.mrb[0].mxu0 %v2599
        %v2825 = vpop.f32.mrb[0].mxu0
        %v2826 = vadd.f32 0.0, %v2825
        %v2827 = vpop.f32.mrb[0].mxu0
        %2828 = vmatprep.mubr.f32.mxu0 0.0
        %2829 = vmatmul.mubr.f32.gmra.mrb[0].mxu0 %v2602
        %v2830 = vpop.f32.mrb[0].mxu0
        %v2831 = vadd.f32 0.0, %v2830
        %v2832 = vpop.f32.mrb[0].mxu0
        %2833 = vmatprep.mubr.f32.mxu0 0.0
        %2834 = vmatmul.mubr.f32.gmra.mrb[0].mxu0 %v2605
        %v2835 = vpop.f32.mrb[0].mxu0
        %v2836 = vadd.f32 0.0, %v2835
        %v2837 = vpop.f32.mrb[0].mxu0
        %2838 = vmatprep.mubr.f32.mxu0 0.0
        %2839 = vmatmul.mubr.f32.gmra.mrb[0].mxu0 %v2608
        %v2840 = vpop.f32.mrb[0].mxu0
        %v2841 = vadd.f32 0.0, %v2840
        %v2842 = vpop.f32.mrb[0].mxu0
        %2843 = vmatprep.mubr.f32.mxu0 0.0
        %2844 = vmatmul.mubr.f32.gmra.mrb[0].mxu0 %v2611
        %v2845 = vpop.f32.mrb[0].mxu0
        %v2846 = vadd.f32 0.0, %v2845
        %v2847 = vpop.f32.mrb[0].mxu0
        %2848 = vmatprep.mubr.f32.mxu0 0.0
        %2849 = vmatmul.mubr.f32.gmra.mrb[0].mxu0 %v2614
        %v2850 = vpop.f32.mrb[0].mxu0
        %v2851 = vadd.f32 0.0, %v2850
        %v2852 = vpop.f32.mrb[0].mxu0
        %2853 = vmatprep.mubr.f32.mxu0 0.0
        %2854 = vmatmul.mubr.f32.gmra.mrb[0].mxu0 %v2617
        %v2855 = vpop.f32.mrb[0].mxu0
        %v2856 = vadd.f32 0.0, %v2855
        %v2857 = vpop.f32.mrb[0].mxu0
        %2858 = vmatprep.mubr.f32.mxu0 0.0
        %2859 = vmatmul.mubr.f32.gmra.mrb[0].mxu0 %v2620
        %v2860 = vpop.f32.mrb[0].mxu0
        %v2861 = vadd.f32 0.0, %v2860
        %v2862 = vpop.f32.mrb[0].mxu0
        %2863 = vmatprep.mubr.f32.mxu0 0.0
        %2864 = vmatmul.mubr.f32.gmra.mrb[0].mxu0 %v2623
        %v2865 = vpop.f32.mrb[0].mxu0
        %v2866 = vadd.f32 0.0, %v2865
        %v2867 = vpop.f32.mrb[0].mxu0
        %2868 = vmatprep.mubr.f32.mxu0 0.0
        %2869 = vmatmul.mubr.f32.gmra.mrb[0].mxu0 %v2626
        %v2870 = vpop.f32.mrb[0].mxu0
        %v2871 = vadd.f32 0.0, %v2870
        %v2872 = vpop.f32.mrb[0].mxu0
        %2873 = vmatprep.mubr.f32.mxu0 0.0
        %2874 = vmatmul.mubr.f32.gmra.mrb[0].mxu0 %v2629
        %v2875 = vpop.f32.mrb[0].mxu0
        %v2876 = vadd.f32 0.0, %v2875
        %v2877 = vpop.f32.mrb[0].mxu0
        %2878 = vdwg.mxu0
        %v2879 = vadd.f32 %v2449, %v2701
        %v2880 = vadd.f32 %v2450, %v2706
        %v2881 = vadd.f32 %v2451, %v2711
        %v2882 = vadd.f32 %v2452, %v2716
        %v2883 = vadd.f32 %v2453, %v2721
        %v2884 = vadd.f32 %v2454, %v2726
        %v2885 = vadd.f32 %v2455, %v2731
        %v2886 = vadd.f32 %v2456, %v2736
        %v2887 = vadd.f32 %v2457, %v2741
        %v2888 = vadd.f32 %v2458, %v2746
        %v2889 = vadd.f32 %v2459, %v2751
        %v2890 = vadd.f32 %v2460, %v2756
        %v2891 = vadd.f32 %v2461, %v2761
        %v2892 = vadd.f32 %v2462, %v2766
        %v2893 = vadd.f32 %v2463, %v2771
        %v2894 = vadd.f32 %v2464, %v2776
        %v2895 = vadd.f32 %v2465, %v2781
        %v2896 = vadd.f32 %v2466, %v2786
        %v2897 = vadd.f32 %v2467, %v2791
        %v2898 = vadd.f32 %v2468, %v2796
        %v2899 = vadd.f32 %v2469, %v2801
        %v2900 = vadd.f32 %v2470, %v2806
        %v2901 = vadd.f32 %v2471, %v2811
        %v2902 = vadd.f32 %v2472, %v2816
        %v2903 = vadd.f32 %v2473, %v2821
        %v2904 = vadd.f32 %v2474, %v2826
        %v2905 = vadd.f32 %v2475, %v2831
        %v2906 = vadd.f32 %v2476, %v2836
        %v2907 = vadd.f32 %v2477, %v2841
        %v2908 = vadd.f32 %v2478, %v2846
        %v2909 = vadd.f32 %v2479, %v2851
        %v2910 = vadd.f32 %v2480, %v2856
        %v2911 = vadd.f32 %v2481, %v2861
        %v2912 = vadd.f32 %v2482, %v2866
        %v2913 = vadd.f32 %v2483, %v2871
        %v2914 = vadd.f32 %v2484, %v2876
        %v2915 = vld [vmem:[#allocation2 + $0x24] sm:$0xff]
        %v2916 = vld [vmem:[#allocation2 + $0x2c] sm:$0xff]
        %v2917 = vld [vmem:[#allocation2 + $0x34] sm:$0xff]
        %v2918 = vld [vmem:[#allocation2 + $0x3c] sm:$0xff]
        %v2919 = vld [vmem:[#allocation2 + $0x44] sm:$0xff]
        %v2920 = vld [vmem:[#allocation2 + $0x4c] sm:$0xff]
        %v2921 = vld [vmem:[#allocation2 + $0x54] sm:$0xff]
        %v2922 = vld [vmem:[#allocation2 + $0x5c] sm:$0xff]
        %v2923 = vld [vmem:[#allocation2 + $0x64] sm:$0xff]
        %v2924 = vld [vmem:[#allocation2 + $0x6c] sm:$0xff]
        %v2925 = vld [vmem:[#allocation2 + $0x74] sm:$0xff]
        %v2926 = vld [vmem:[#allocation2 + $0x7c] sm:$0xff]
        %v2927 = vld [vmem:[#allocation2 + $0x84] sm:$0xff]
        %v2928 = vld [vmem:[#allocation2 + $0x8c] sm:$0xff]
        %v2929 = vld [vmem:[#allocation2 + $0x94] sm:$0xff]
        %v2930 = vld [vmem:[#allocation2 + $0x9c] sm:$0xff]
        %v2931 = vld [vmem:[#allocation2 + $0xa4] sm:$0xff]
        %v2932 = vld [vmem:[#allocation2 + $0xac] sm:$0xff]
        %v2933 = vld [vmem:[#allocation2 + $0xb4] sm:$0xff]
        %v2934 = vld [vmem:[#allocation2 + $0xbc] sm:$0xff]
        %v2935 = vld [vmem:[#allocation2 + $0xc4] sm:$0xff]
        %v2936 = vld [vmem:[#allocation2 + $0xcc] sm:$0xff]
        %v2937 = vld [vmem:[#allocation2 + $0xd4] sm:$0xff]
        %v2938 = vld [vmem:[#allocation2 + $0xdc] sm:$0xff]
        %v2939 = vld [vmem:[#allocation2 + $0xe4] sm:$0xff]
        %v2940 = vld [vmem:[#allocation2 + $0xec] sm:$0xff]
        %v2941 = vld [vmem:[#allocation2 + $0xf4] sm:$0xff]
        %v2942 = vld [vmem:[#allocation2 + $0xfc] sm:$0xff]
        %v2943 = vld [vmem:[#allocation2 + $0x104] sm:$0xff]
        %v2944 = vld [vmem:[#allocation2 + $0x10c] sm:$0xff]
        %v2945 = vld [vmem:[#allocation2 + $0x114] sm:$0xff]
        %v2946 = vld [vmem:[#allocation2 + $0x11c] sm:$0xff]
        %v2947 = vld [vmem:[#allocation2 + $0x124] sm:$0xff]
        %v2948 = vld [vmem:[#allocation2 + $0x12c] sm:$0xff]
        %v2949 = vld [vmem:[#allocation2 + $0x134] sm:$0xff]
        %v2950 = vld [vmem:[#allocation2 + $0x13c] sm:$0xff]
        %s2951 = scalar_lea.vmem %s2, 24
        %v2952 = vld [vmem:[%s2951] sm:$0xf]
        %v2954 = vsel %vm362, %v2915, 0
        %v2957 = vsel %vm362, %v2916, 0
        %v2960 = vsel %vm362, %v2917, 0
        %v2963 = vsel %vm362, %v2918, 0
        %v2966 = vsel %vm362, %v2919, 0
        %v2969 = vsel %vm362, %v2920, 0
        %v2972 = vsel %vm362, %v2921, 0
        %v2975 = vsel %vm362, %v2922, 0
        %v2978 = vsel %vm362, %v2923, 0
        %v2981 = vsel %vm362, %v2924, 0
        %v2984 = vsel %vm362, %v2925, 0
        %v2987 = vsel %vm362, %v2926, 0
        %v2990 = vsel %vm362, %v2927, 0
        %v2993 = vsel %vm362, %v2928, 0
        %v2996 = vsel %vm362, %v2929, 0
        %v2999 = vsel %vm362, %v2930, 0
        %v3002 = vsel %vm362, %v2931, 0
        %v3005 = vsel %vm362, %v2932, 0
        %v3008 = vsel %vm362, %v2933, 0
        %v3011 = vsel %vm362, %v2934, 0
        %v3014 = vsel %vm362, %v2935, 0
        %v3017 = vsel %vm362, %v2936, 0
        %v3020 = vsel %vm362, %v2937, 0
        %v3023 = vsel %vm362, %v2938, 0
        %v3026 = vsel %vm362, %v2939, 0
        %v3029 = vsel %vm362, %v2940, 0
        %v3032 = vsel %vm362, %v2941, 0
        %v3035 = vsel %vm362, %v2942, 0
        %v3038 = vsel %vm362, %v2943, 0
        %v3041 = vsel %vm362, %v2944, 0
        %v3044 = vsel %vm362, %v2945, 0
        %v3047 = vsel %vm362, %v2946, 0
        %v3050 = vsel %vm362, %v2947, 0
        %v3053 = vsel %vm362, %v2948, 0
        %v3056 = vsel %vm362, %v2949, 0
        %v3059 = vsel %vm362, %v2950, 0
        %v3062 = vsel %vm590, %v2952, 0
        %3064 = vmatprep.subr.mxu0 0.0
        %3065 = vmatpush1.msra.mxu0 %v3062
        %3066 = vmatprep.subr.mxu0 0.0
        %3067 = vmatpush1.msra.mxu0 0.0
        %3068 = vmatprep.subr.mxu0 0.0
        %3069 = vmatpush1.msra.mxu0 0.0
        %3070 = vmatprep.subr.mxu0 0.0
        %3071 = vmatpush1.msra.mxu0 0.0
        %3072 = vmatprep.subr.mxu0 0.0
        %3073 = vmatpush1.msra.mxu0 0.0
        %3074 = vmatprep.subr.mxu0 0.0
        %3075 = vmatpush1.msra.mxu0 0.0
        %3076 = vmatprep.subr.mxu0 0.0
        %3077 = vmatpush1.msra.mxu0 0.0
        %3078 = vmatprep.subr.mxu0 0.0
        %3079 = vmatpush1.msra.mxu0 0.0
        %3080 = vmatprep.subr.mxu0 0.0
        %3081 = vmatpush1.msra.mxu0 0.0
        %3082 = vmatprep.subr.mxu0 0.0
        %3083 = vmatpush1.msra.mxu0 0.0
        %3084 = vmatprep.subr.mxu0 0.0
        %3085 = vmatpush1.msra.mxu0 0.0
        %3086 = vmatprep.subr.mxu0 0.0
        %3087 = vmatpush1.msra.mxu0 0.0
        %3088 = vmatprep.subr.mxu0 0.0
        %3089 = vmatpush1.msra.mxu0 0.0
        %3090 = vmatprep.subr.mxu0 0.0
        %3091 = vmatpush1.msra.mxu0 0.0
        %3092 = vmatprep.subr.mxu0 0.0
        %3093 = vmatpush1.msra.mxu0 0.0
        %3094 = vmatprep.subr.mxu0 0.0
        %3095 = vmatpush1.msra.mxu0 0.0
        %3096 = vmatprep.subr.mxu0 0.0
        %3097 = vmatpush1.msra.mxu0 0.0
        %3098 = vmatprep.subr.mxu0 0.0
        %3099 = vmatpush1.msra.mxu0 0.0
        %3100 = vmatprep.subr.mxu0 0.0
        %3101 = vmatpush1.msra.mxu0 0.0
        %3102 = vmatprep.subr.mxu0 0.0
        %3103 = vmatpush1.msra.mxu0 0.0
        %3104 = vmatprep.subr.mxu0 0.0
        %3105 = vmatpush1.msra.mxu0 0.0
        %3106 = vmatprep.subr.mxu0 0.0
        %3107 = vmatpush1.msra.mxu0 0.0
        %3108 = vmatprep.subr.mxu0 0.0
        %3109 = vmatpush1.msra.mxu0 0.0
        %3110 = vmatprep.subr.mxu0 0.0
        %3111 = vmatpush1.msra.mxu0 0.0
        %3112 = vmatprep.subr.mxu0 0.0
        %3113 = vmatpush1.msra.mxu0 0.0
        %3114 = vmatprep.subr.mxu0 0.0
        %3115 = vmatpush1.msra.mxu0 0.0
        %3116 = vmatprep.subr.mxu0 0.0
        %3117 = vmatpush1.msra.mxu0 0.0
        %3118 = vmatprep.subr.mxu0 0.0
        %3119 = vmatpush1.msra.mxu0 0.0
        %3120 = vmatprep.subr.mxu0 0.0
        %3121 = vmatpush1.msra.mxu0 0.0
        %3122 = vmatprep.subr.mxu0 0.0
        %3123 = vmatpush1.msra.mxu0 0.0
        %3124 = vmatprep.subr.mxu0 0.0
        %3125 = vmatpush1.msra.mxu0 0.0
        %3126 = vmatprep.subr.mxu0 0.0
        %3127 = vmatpush1.msra.mxu0 0.0
        %3128 = vmatprep.mubr.f32.mxu0 0.0
        %3129 = vmatmul.mubr.f32.gmra.mrb[0].mxu0 %v2954
        %v3130 = vpop.f32.mrb[0].mxu0
        %v3131 = vadd.f32 0.0, %v3130
        %v3132 = vpop.f32.mrb[0].mxu0
        %3133 = vmatprep.mubr.f32.mxu0 0.0
        %3134 = vmatmul.mubr.f32.gmra.mrb[0].mxu0 %v2957
        %v3135 = vpop.f32.mrb[0].mxu0
        %v3136 = vadd.f32 0.0, %v3135
        %v3137 = vpop.f32.mrb[0].mxu0
        %3138 = vmatprep.mubr.f32.mxu0 0.0
        %3139 = vmatmul.mubr.f32.gmra.mrb[0].mxu0 %v2960
        %v3140 = vpop.f32.mrb[0].mxu0
        %v3141 = vadd.f32 0.0, %v3140
        %v3142 = vpop.f32.mrb[0].mxu0
        %3143 = vmatprep.mubr.f32.mxu0 0.0
        %3144 = vmatmul.mubr.f32.gmra.mrb[0].mxu0 %v2963
        %v3145 = vpop.f32.mrb[0].mxu0
        %v3146 = vadd.f32 0.0, %v3145
        %v3147 = vpop.f32.mrb[0].mxu0
        %3148 = vmatprep.mubr.f32.mxu0 0.0
        %3149 = vmatmul.mubr.f32.gmra.mrb[0].mxu0 %v2966
        %v3150 = vpop.f32.mrb[0].mxu0
        %v3151 = vadd.f32 0.0, %v3150
        %v3152 = vpop.f32.mrb[0].mxu0
        %3153 = vmatprep.mubr.f32.mxu0 0.0
        %3154 = vmatmul.mubr.f32.gmra.mrb[0].mxu0 %v2969
        %v3155 = vpop.f32.mrb[0].mxu0
        %v3156 = vadd.f32 0.0, %v3155
        %v3157 = vpop.f32.mrb[0].mxu0
        %3158 = vmatprep.mubr.f32.mxu0 0.0
        %3159 = vmatmul.mubr.f32.gmra.mrb[0].mxu0 %v2972
        %v3160 = vpop.f32.mrb[0].mxu0
        %v3161 = vadd.f32 0.0, %v3160
        %v3162 = vpop.f32.mrb[0].mxu0
        %3163 = vmatprep.mubr.f32.mxu0 0.0
        %3164 = vmatmul.mubr.f32.gmra.mrb[0].mxu0 %v2975
        %v3165 = vpop.f32.mrb[0].mxu0
        %v3166 = vadd.f32 0.0, %v3165
        %v3167 = vpop.f32.mrb[0].mxu0
        %3168 = vmatprep.mubr.f32.mxu0 0.0
        %3169 = vmatmul.mubr.f32.gmra.mrb[0].mxu0 %v2978
        %v3170 = vpop.f32.mrb[0].mxu0
        %v3171 = vadd.f32 0.0, %v3170
        %v3172 = vpop.f32.mrb[0].mxu0
        %3173 = vmatprep.mubr.f32.mxu0 0.0
        %3174 = vmatmul.mubr.f32.gmra.mrb[0].mxu0 %v2981
        %v3175 = vpop.f32.mrb[0].mxu0
        %v3176 = vadd.f32 0.0, %v3175
        %v3177 = vpop.f32.mrb[0].mxu0
        %3178 = vmatprep.mubr.f32.mxu0 0.0
        %3179 = vmatmul.mubr.f32.gmra.mrb[0].mxu0 %v2984
        %v3180 = vpop.f32.mrb[0].mxu0
        %v3181 = vadd.f32 0.0, %v3180
        %v3182 = vpop.f32.mrb[0].mxu0
        %3183 = vmatprep.mubr.f32.mxu0 0.0
        %3184 = vmatmul.mubr.f32.gmra.mrb[0].mxu0 %v2987
        %v3185 = vpop.f32.mrb[0].mxu0
        %v3186 = vadd.f32 0.0, %v3185
        %v3187 = vpop.f32.mrb[0].mxu0
        %3188 = vmatprep.mubr.f32.mxu0 0.0
        %3189 = vmatmul.mubr.f32.gmra.mrb[0].mxu0 %v2990
        %v3190 = vpop.f32.mrb[0].mxu0
        %v3191 = vadd.f32 0.0, %v3190
        %v3192 = vpop.f32.mrb[0].mxu0
        %3193 = vmatprep.mubr.f32.mxu0 0.0
        %3194 = vmatmul.mubr.f32.gmra.mrb[0].mxu0 %v2993
        %v3195 = vpop.f32.mrb[0].mxu0
        %v3196 = vadd.f32 0.0, %v3195
        %v3197 = vpop.f32.mrb[0].mxu0
        %3198 = vmatprep.mubr.f32.mxu0 0.0
        %3199 = vmatmul.mubr.f32.gmra.mrb[0].mxu0 %v2996
        %v3200 = vpop.f32.mrb[0].mxu0
        %v3201 = vadd.f32 0.0, %v3200
        %v3202 = vpop.f32.mrb[0].mxu0
        %3203 = vmatprep.mubr.f32.mxu0 0.0
        %3204 = vmatmul.mubr.f32.gmra.mrb[0].mxu0 %v2999
        %v3205 = vpop.f32.mrb[0].mxu0
        %v3206 = vadd.f32 0.0, %v3205
        %v3207 = vpop.f32.mrb[0].mxu0
        %3208 = vmatprep.mubr.f32.mxu0 0.0
        %3209 = vmatmul.mubr.f32.gmra.mrb[0].mxu0 %v3002
        %v3210 = vpop.f32.mrb[0].mxu0
        %v3211 = vadd.f32 0.0, %v3210
        %v3212 = vpop.f32.mrb[0].mxu0
        %3213 = vmatprep.mubr.f32.mxu0 0.0
        %3214 = vmatmul.mubr.f32.gmra.mrb[0].mxu0 %v3005
        %v3215 = vpop.f32.mrb[0].mxu0
        %v3216 = vadd.f32 0.0, %v3215
        %v3217 = vpop.f32.mrb[0].mxu0
        %3218 = vmatprep.mubr.f32.mxu0 0.0
        %3219 = vmatmul.mubr.f32.gmra.mrb[0].mxu0 %v3008
        %v3220 = vpop.f32.mrb[0].mxu0
        %v3221 = vadd.f32 0.0, %v3220
        %v3222 = vpop.f32.mrb[0].mxu0
        %3223 = vmatprep.mubr.f32.mxu0 0.0
        %3224 = vmatmul.mubr.f32.gmra.mrb[0].mxu0 %v3011
        %v3225 = vpop.f32.mrb[0].mxu0
        %v3226 = vadd.f32 0.0, %v3225
        %v3227 = vpop.f32.mrb[0].mxu0
        %3228 = vmatprep.mubr.f32.mxu0 0.0
        %3229 = vmatmul.mubr.f32.gmra.mrb[0].mxu0 %v3014
        %v3230 = vpop.f32.mrb[0].mxu0
        %v3231 = vadd.f32 0.0, %v3230
        %v3232 = vpop.f32.mrb[0].mxu0
        %3233 = vmatprep.mubr.f32.mxu0 0.0
        %3234 = vmatmul.mubr.f32.gmra.mrb[0].mxu0 %v3017
        %v3235 = vpop.f32.mrb[0].mxu0
        %v3236 = vadd.f32 0.0, %v3235
        %v3237 = vpop.f32.mrb[0].mxu0
        %3238 = vmatprep.mubr.f32.mxu0 0.0
        %3239 = vmatmul.mubr.f32.gmra.mrb[0].mxu0 %v3020
        %v3240 = vpop.f32.mrb[0].mxu0
        %v3241 = vadd.f32 0.0, %v3240
        %v3242 = vpop.f32.mrb[0].mxu0
        %3243 = vmatprep.mubr.f32.mxu0 0.0
        %3244 = vmatmul.mubr.f32.gmra.mrb[0].mxu0 %v3023
        %v3245 = vpop.f32.mrb[0].mxu0
        %v3246 = vadd.f32 0.0, %v3245
        %v3247 = vpop.f32.mrb[0].mxu0
        %3248 = vmatprep.mubr.f32.mxu0 0.0
        %3249 = vmatmul.mubr.f32.gmra.mrb[0].mxu0 %v3026
        %v3250 = vpop.f32.mrb[0].mxu0
        %v3251 = vadd.f32 0.0, %v3250
        %v3252 = vpop.f32.mrb[0].mxu0
        %3253 = vmatprep.mubr.f32.mxu0 0.0
        %3254 = vmatmul.mubr.f32.gmra.mrb[0].mxu0 %v3029
        %v3255 = vpop.f32.mrb[0].mxu0
        %v3256 = vadd.f32 0.0, %v3255
        %v3257 = vpop.f32.mrb[0].mxu0
        %3258 = vmatprep.mubr.f32.mxu0 0.0
        %3259 = vmatmul.mubr.f32.gmra.mrb[0].mxu0 %v3032
        %v3260 = vpop.f32.mrb[0].mxu0
        %v3261 = vadd.f32 0.0, %v3260
        %v3262 = vpop.f32.mrb[0].mxu0
        %3263 = vmatprep.mubr.f32.mxu0 0.0
        %3264 = vmatmul.mubr.f32.gmra.mrb[0].mxu0 %v3035
        %v3265 = vpop.f32.mrb[0].mxu0
        %v3266 = vadd.f32 0.0, %v3265
        %v3267 = vpop.f32.mrb[0].mxu0
        %3268 = vmatprep.mubr.f32.mxu0 0.0
        %3269 = vmatmul.mubr.f32.gmra.mrb[0].mxu0 %v3038
        %v3270 = vpop.f32.mrb[0].mxu0
        %v3271 = vadd.f32 0.0, %v3270
        %v3272 = vpop.f32.mrb[0].mxu0
        %3273 = vmatprep.mubr.f32.mxu0 0.0
        %3274 = vmatmul.mubr.f32.gmra.mrb[0].mxu0 %v3041
        %v3275 = vpop.f32.mrb[0].mxu0
        %v3276 = vadd.f32 0.0, %v3275
        %v3277 = vpop.f32.mrb[0].mxu0
        %3278 = vmatprep.mubr.f32.mxu0 0.0
        %3279 = vmatmul.mubr.f32.gmra.mrb[0].mxu0 %v3044
        %v3280 = vpop.f32.mrb[0].mxu0
        %v3281 = vadd.f32 0.0, %v3280
        %v3282 = vpop.f32.mrb[0].mxu0
        %3283 = vmatprep.mubr.f32.mxu0 0.0
        %3284 = vmatmul.mubr.f32.gmra.mrb[0].mxu0 %v3047
        %v3285 = vpop.f32.mrb[0].mxu0
        %v3286 = vadd.f32 0.0, %v3285
        %v3287 = vpop.f32.mrb[0].mxu0
        %3288 = vmatprep.mubr.f32.mxu0 0.0
        %3289 = vmatmul.mubr.f32.gmra.mrb[0].mxu0 %v3050
        %v3290 = vpop.f32.mrb[0].mxu0
        %v3291 = vadd.f32 0.0, %v3290
        %v3292 = vpop.f32.mrb[0].mxu0
        %3293 = vmatprep.mubr.f32.mxu0 0.0
        %3294 = vmatmul.mubr.f32.gmra.mrb[0].mxu0 %v3053
        %v3295 = vpop.f32.mrb[0].mxu0
        %v3296 = vadd.f32 0.0, %v3295
        %v3297 = vpop.f32.mrb[0].mxu0
        %3298 = vmatprep.mubr.f32.mxu0 0.0
        %3299 = vmatmul.mubr.f32.gmra.mrb[0].mxu0 %v3056
        %v3300 = vpop.f32.mrb[0].mxu0
        %v3301 = vadd.f32 0.0, %v3300
        %v3302 = vpop.f32.mrb[0].mxu0
        %3303 = vmatprep.mubr.f32.mxu0 0.0
        %3304 = vmatmul.mubr.f32.gmra.mrb[0].mxu0 %v3059
        %v3305 = vpop.f32.mrb[0].mxu0
        %v3306 = vadd.f32 0.0, %v3305
        %v3307 = vpop.f32.mrb[0].mxu0
        %3308 = vdwg.mxu0
        %v3309 = vadd.f32 %v2879, %v3131
        %v3310 = vadd.f32 %v2880, %v3136
        %v3311 = vadd.f32 %v2881, %v3141
        %v3312 = vadd.f32 %v2882, %v3146
        %v3313 = vadd.f32 %v2883, %v3151
        %v3314 = vadd.f32 %v2884, %v3156
        %v3315 = vadd.f32 %v2885, %v3161
        %v3316 = vadd.f32 %v2886, %v3166
        %v3317 = vadd.f32 %v2887, %v3171
        %v3318 = vadd.f32 %v2888, %v3176
        %v3319 = vadd.f32 %v2889, %v3181
        %v3320 = vadd.f32 %v2890, %v3186
        %v3321 = vadd.f32 %v2891, %v3191
        %v3322 = vadd.f32 %v2892, %v3196
        %v3323 = vadd.f32 %v2893, %v3201
        %v3324 = vadd.f32 %v2894, %v3206
        %v3325 = vadd.f32 %v2895, %v3211
        %v3326 = vadd.f32 %v2896, %v3216
        %v3327 = vadd.f32 %v2897, %v3221
        %v3328 = vadd.f32 %v2898, %v3226
        %v3329 = vadd.f32 %v2899, %v3231
        %v3330 = vadd.f32 %v2900, %v3236
        %v3331 = vadd.f32 %v2901, %v3241
        %v3332 = vadd.f32 %v2902, %v3246
        %v3333 = vadd.f32 %v2903, %v3251
        %v3334 = vadd.f32 %v2904, %v3256
        %v3335 = vadd.f32 %v2905, %v3261
        %v3336 = vadd.f32 %v2906, %v3266
        %v3337 = vadd.f32 %v2907, %v3271
        %v3338 = vadd.f32 %v2908, %v3276
        %v3339 = vadd.f32 %v2909, %v3281
        %v3340 = vadd.f32 %v2910, %v3286
        %v3341 = vadd.f32 %v2911, %v3291
        %v3342 = vadd.f32 %v2912, %v3296
        %v3343 = vadd.f32 %v2913, %v3301
        %v3344 = vadd.f32 %v2914, %v3306
        %v3345 = vld [vmem:[#allocation2 + $0x25] sm:$0xff]
        %v3346 = vld [vmem:[#allocation2 + $0x2d] sm:$0xff]
        %v3347 = vld [vmem:[#allocation2 + $0x35] sm:$0xff]
        %v3348 = vld [vmem:[#allocation2 + $0x3d] sm:$0xff]
        %v3349 = vld [vmem:[#allocation2 + $0x45] sm:$0xff]
        %v3350 = vld [vmem:[#allocation2 + $0x4d] sm:$0xff]
        %v3351 = vld [vmem:[#allocation2 + $0x55] sm:$0xff]
        %v3352 = vld [vmem:[#allocation2 + $0x5d] sm:$0xff]
        %v3353 = vld [vmem:[#allocation2 + $0x65] sm:$0xff]
        %v3354 = vld [vmem:[#allocation2 + $0x6d] sm:$0xff]
        %v3355 = vld [vmem:[#allocation2 + $0x75] sm:$0xff]
        %v3356 = vld [vmem:[#allocation2 + $0x7d] sm:$0xff]
        %v3357 = vld [vmem:[#allocation2 + $0x85] sm:$0xff]
        %v3358 = vld [vmem:[#allocation2 + $0x8d] sm:$0xff]
        %v3359 = vld [vmem:[#allocation2 + $0x95] sm:$0xff]
        %v3360 = vld [vmem:[#allocation2 + $0x9d] sm:$0xff]
        %v3361 = vld [vmem:[#allocation2 + $0xa5] sm:$0xff]
        %v3362 = vld [vmem:[#allocation2 + $0xad] sm:$0xff]
        %v3363 = vld [vmem:[#allocation2 + $0xb5] sm:$0xff]
        %v3364 = vld [vmem:[#allocation2 + $0xbd] sm:$0xff]
        %v3365 = vld [vmem:[#allocation2 + $0xc5] sm:$0xff]
        %v3366 = vld [vmem:[#allocation2 + $0xcd] sm:$0xff]
        %v3367 = vld [vmem:[#allocation2 + $0xd5] sm:$0xff]
        %v3368 = vld [vmem:[#allocation2 + $0xdd] sm:$0xff]
        %v3369 = vld [vmem:[#allocation2 + $0xe5] sm:$0xff]
        %v3370 = vld [vmem:[#allocation2 + $0xed] sm:$0xff]
        %v3371 = vld [vmem:[#allocation2 + $0xf5] sm:$0xff]
        %v3372 = vld [vmem:[#allocation2 + $0xfd] sm:$0xff]
        %v3373 = vld [vmem:[#allocation2 + $0x105] sm:$0xff]
        %v3374 = vld [vmem:[#allocation2 + $0x10d] sm:$0xff]
        %v3375 = vld [vmem:[#allocation2 + $0x115] sm:$0xff]
        %v3376 = vld [vmem:[#allocation2 + $0x11d] sm:$0xff]
        %v3377 = vld [vmem:[#allocation2 + $0x125] sm:$0xff]
        %v3378 = vld [vmem:[#allocation2 + $0x12d] sm:$0xff]
        %v3379 = vld [vmem:[#allocation2 + $0x135] sm:$0xff]
        %v3380 = vld [vmem:[#allocation2 + $0x13d] sm:$0xff]
        %s3381 = scalar_lea.vmem %s2, 28
        %v3382 = vld [vmem:[%s3381] sm:$0xf]
        %v3384 = vsel %vm362, %v3345, 0
        %v3387 = vsel %vm362, %v3346, 0
        %v3390 = vsel %vm362, %v3347, 0
        %v3393 = vsel %vm362, %v3348, 0
        %v3396 = vsel %vm362, %v3349, 0
        %v3399 = vsel %vm362, %v3350, 0
        %v3402 = vsel %vm362, %v3351, 0
        %v3405 = vsel %vm362, %v3352, 0
        %v3408 = vsel %vm362, %v3353, 0
        %v3411 = vsel %vm362, %v3354, 0
        %v3414 = vsel %vm362, %v3355, 0
        %v3417 = vsel %vm362, %v3356, 0
        %v3420 = vsel %vm362, %v3357, 0
        %v3423 = vsel %vm362, %v3358, 0
        %v3426 = vsel %vm362, %v3359, 0
        %v3429 = vsel %vm362, %v3360, 0
        %v3432 = vsel %vm362, %v3361, 0
        %v3435 = vsel %vm362, %v3362, 0
        %v3438 = vsel %vm362, %v3363, 0
        %v3441 = vsel %vm362, %v3364, 0
        %v3444 = vsel %vm362, %v3365, 0
        %v3447 = vsel %vm362, %v3366, 0
        %v3450 = vsel %vm362, %v3367, 0
        %v3453 = vsel %vm362, %v3368, 0
        %v3456 = vsel %vm362, %v3369, 0
        %v3459 = vsel %vm362, %v3370, 0
        %v3462 = vsel %vm362, %v3371, 0
        %v3465 = vsel %vm362, %v3372, 0
        %v3468 = vsel %vm362, %v3373, 0
        %v3471 = vsel %vm362, %v3374, 0
        %v3474 = vsel %vm362, %v3375, 0
        %v3477 = vsel %vm362, %v3376, 0
        %v3480 = vsel %vm362, %v3377, 0
        %v3483 = vsel %vm362, %v3378, 0
        %v3486 = vsel %vm362, %v3379, 0
        %v3489 = vsel %vm362, %v3380, 0
        %v3492 = vsel %vm590, %v3382, 0
        %3494 = vmatprep.subr.mxu0 0.0
        %3495 = vmatpush1.msra.mxu0 %v3492
        %3496 = vmatprep.subr.mxu0 0.0
        %3497 = vmatpush1.msra.mxu0 0.0
        %3498 = vmatprep.subr.mxu0 0.0
        %3499 = vmatpush1.msra.mxu0 0.0
        %3500 = vmatprep.subr.mxu0 0.0
        %3501 = vmatpush1.msra.mxu0 0.0
        %3502 = vmatprep.subr.mxu0 0.0
        %3503 = vmatpush1.msra.mxu0 0.0
        %3504 = vmatprep.subr.mxu0 0.0
        %3505 = vmatpush1.msra.mxu0 0.0
        %3506 = vmatprep.subr.mxu0 0.0
        %3507 = vmatpush1.msra.mxu0 0.0
        %3508 = vmatprep.subr.mxu0 0.0
        %3509 = vmatpush1.msra.mxu0 0.0
        %3510 = vmatprep.subr.mxu0 0.0
        %3511 = vmatpush1.msra.mxu0 0.0
        %3512 = vmatprep.subr.mxu0 0.0
        %3513 = vmatpush1.msra.mxu0 0.0
        %3514 = vmatprep.subr.mxu0 0.0
        %3515 = vmatpush1.msra.mxu0 0.0
        %3516 = vmatprep.subr.mxu0 0.0
        %3517 = vmatpush1.msra.mxu0 0.0
        %3518 = vmatprep.subr.mxu0 0.0
        %3519 = vmatpush1.msra.mxu0 0.0
        %3520 = vmatprep.subr.mxu0 0.0
        %3521 = vmatpush1.msra.mxu0 0.0
        %3522 = vmatprep.subr.mxu0 0.0
        %3523 = vmatpush1.msra.mxu0 0.0
        %3524 = vmatprep.subr.mxu0 0.0
        %3525 = vmatpush1.msra.mxu0 0.0
        %3526 = vmatprep.subr.mxu0 0.0
        %3527 = vmatpush1.msra.mxu0 0.0
        %3528 = vmatprep.subr.mxu0 0.0
        %3529 = vmatpush1.msra.mxu0 0.0
        %3530 = vmatprep.subr.mxu0 0.0
        %3531 = vmatpush1.msra.mxu0 0.0
        %3532 = vmatprep.subr.mxu0 0.0
        %3533 = vmatpush1.msra.mxu0 0.0
        %3534 = vmatprep.subr.mxu0 0.0
        %3535 = vmatpush1.msra.mxu0 0.0
        %3536 = vmatprep.subr.mxu0 0.0
        %3537 = vmatpush1.msra.mxu0 0.0
        %3538 = vmatprep.subr.mxu0 0.0
        %3539 = vmatpush1.msra.mxu0 0.0
        %3540 = vmatprep.subr.mxu0 0.0
        %3541 = vmatpush1.msra.mxu0 0.0
        %3542 = vmatprep.subr.mxu0 0.0
        %3543 = vmatpush1.msra.mxu0 0.0
        %3544 = vmatprep.subr.mxu0 0.0
        %3545 = vmatpush1.msra.mxu0 0.0
        %3546 = vmatprep.subr.mxu0 0.0
        %3547 = vmatpush1.msra.mxu0 0.0
        %3548 = vmatprep.subr.mxu0 0.0
        %3549 = vmatpush1.msra.mxu0 0.0
        %3550 = vmatprep.subr.mxu0 0.0
        %3551 = vmatpush1.msra.mxu0 0.0
        %3552 = vmatprep.subr.mxu0 0.0
        %3553 = vmatpush1.msra.mxu0 0.0
        %3554 = vmatprep.subr.mxu0 0.0
        %3555 = vmatpush1.msra.mxu0 0.0
        %3556 = vmatprep.subr.mxu0 0.0
        %3557 = vmatpush1.msra.mxu0 0.0
        %3558 = vmatprep.mubr.f32.mxu0 0.0
        %3559 = vmatmul.mubr.f32.gmra.mrb[0].mxu0 %v3384
        %v3560 = vpop.f32.mrb[0].mxu0
        %v3561 = vadd.f32 0.0, %v3560
        %v3562 = vpop.f32.mrb[0].mxu0
        %3563 = vmatprep.mubr.f32.mxu0 0.0
        %3564 = vmatmul.mubr.f32.gmra.mrb[0].mxu0 %v3387
        %v3565 = vpop.f32.mrb[0].mxu0
        %v3566 = vadd.f32 0.0, %v3565
        %v3567 = vpop.f32.mrb[0].mxu0
        %3568 = vmatprep.mubr.f32.mxu0 0.0
        %3569 = vmatmul.mubr.f32.gmra.mrb[0].mxu0 %v3390
        %v3570 = vpop.f32.mrb[0].mxu0
        %v3571 = vadd.f32 0.0, %v3570
        %v3572 = vpop.f32.mrb[0].mxu0
        %3573 = vmatprep.mubr.f32.mxu0 0.0
        %3574 = vmatmul.mubr.f32.gmra.mrb[0].mxu0 %v3393
        %v3575 = vpop.f32.mrb[0].mxu0
        %v3576 = vadd.f32 0.0, %v3575
        %v3577 = vpop.f32.mrb[0].mxu0
        %3578 = vmatprep.mubr.f32.mxu0 0.0
        %3579 = vmatmul.mubr.f32.gmra.mrb[0].mxu0 %v3396
        %v3580 = vpop.f32.mrb[0].mxu0
        %v3581 = vadd.f32 0.0, %v3580
        %v3582 = vpop.f32.mrb[0].mxu0
        %3583 = vmatprep.mubr.f32.mxu0 0.0
        %3584 = vmatmul.mubr.f32.gmra.mrb[0].mxu0 %v3399
        %v3585 = vpop.f32.mrb[0].mxu0
        %v3586 = vadd.f32 0.0, %v3585
        %v3587 = vpop.f32.mrb[0].mxu0
        %3588 = vmatprep.mubr.f32.mxu0 0.0
        %3589 = vmatmul.mubr.f32.gmra.mrb[0].mxu0 %v3402
        %v3590 = vpop.f32.mrb[0].mxu0
        %v3591 = vadd.f32 0.0, %v3590
        %v3592 = vpop.f32.mrb[0].mxu0
        %3593 = vmatprep.mubr.f32.mxu0 0.0
        %3594 = vmatmul.mubr.f32.gmra.mrb[0].mxu0 %v3405
        %v3595 = vpop.f32.mrb[0].mxu0
        %v3596 = vadd.f32 0.0, %v3595
        %v3597 = vpop.f32.mrb[0].mxu0
        %3598 = vmatprep.mubr.f32.mxu0 0.0
        %3599 = vmatmul.mubr.f32.gmra.mrb[0].mxu0 %v3408
        %v3600 = vpop.f32.mrb[0].mxu0
        %v3601 = vadd.f32 0.0, %v3600
        %v3602 = vpop.f32.mrb[0].mxu0
        %3603 = vmatprep.mubr.f32.mxu0 0.0
        %3604 = vmatmul.mubr.f32.gmra.mrb[0].mxu0 %v3411
        %v3605 = vpop.f32.mrb[0].mxu0
        %v3606 = vadd.f32 0.0, %v3605
        %v3607 = vpop.f32.mrb[0].mxu0
        %3608 = vmatprep.mubr.f32.mxu0 0.0
        %3609 = vmatmul.mubr.f32.gmra.mrb[0].mxu0 %v3414
        %v3610 = vpop.f32.mrb[0].mxu0
        %v3611 = vadd.f32 0.0, %v3610
        %v3612 = vpop.f32.mrb[0].mxu0
        %3613 = vmatprep.mubr.f32.mxu0 0.0
        %3614 = vmatmul.mubr.f32.gmra.mrb[0].mxu0 %v3417
        %v3615 = vpop.f32.mrb[0].mxu0
        %v3616 = vadd.f32 0.0, %v3615
        %v3617 = vpop.f32.mrb[0].mxu0
        %3618 = vmatprep.mubr.f32.mxu0 0.0
        %3619 = vmatmul.mubr.f32.gmra.mrb[0].mxu0 %v3420
        %v3620 = vpop.f32.mrb[0].mxu0
        %v3621 = vadd.f32 0.0, %v3620
        %v3622 = vpop.f32.mrb[0].mxu0
        %3623 = vmatprep.mubr.f32.mxu0 0.0
        %3624 = vmatmul.mubr.f32.gmra.mrb[0].mxu0 %v3423
        %v3625 = vpop.f32.mrb[0].mxu0
        %v3626 = vadd.f32 0.0, %v3625
        %v3627 = vpop.f32.mrb[0].mxu0
        %3628 = vmatprep.mubr.f32.mxu0 0.0
        %3629 = vmatmul.mubr.f32.gmra.mrb[0].mxu0 %v3426
        %v3630 = vpop.f32.mrb[0].mxu0
        %v3631 = vadd.f32 0.0, %v3630
        %v3632 = vpop.f32.mrb[0].mxu0
        %3633 = vmatprep.mubr.f32.mxu0 0.0
        %3634 = vmatmul.mubr.f32.gmra.mrb[0].mxu0 %v3429
        %v3635 = vpop.f32.mrb[0].mxu0
        %v3636 = vadd.f32 0.0, %v3635
        %v3637 = vpop.f32.mrb[0].mxu0
        %3638 = vmatprep.mubr.f32.mxu0 0.0
        %3639 = vmatmul.mubr.f32.gmra.mrb[0].mxu0 %v3432
        %v3640 = vpop.f32.mrb[0].mxu0
        %v3641 = vadd.f32 0.0, %v3640
        %v3642 = vpop.f32.mrb[0].mxu0
        %3643 = vmatprep.mubr.f32.mxu0 0.0
        %3644 = vmatmul.mubr.f32.gmra.mrb[0].mxu0 %v3435
        %v3645 = vpop.f32.mrb[0].mxu0
        %v3646 = vadd.f32 0.0, %v3645
        %v3647 = vpop.f32.mrb[0].mxu0
        %3648 = vmatprep.mubr.f32.mxu0 0.0
        %3649 = vmatmul.mubr.f32.gmra.mrb[0].mxu0 %v3438
        %v3650 = vpop.f32.mrb[0].mxu0
        %v3651 = vadd.f32 0.0, %v3650
        %v3652 = vpop.f32.mrb[0].mxu0
        %3653 = vmatprep.mubr.f32.mxu0 0.0
        %3654 = vmatmul.mubr.f32.gmra.mrb[0].mxu0 %v3441
        %v3655 = vpop.f32.mrb[0].mxu0
        %v3656 = vadd.f32 0.0, %v3655
        %v3657 = vpop.f32.mrb[0].mxu0
        %3658 = vmatprep.mubr.f32.mxu0 0.0
        %3659 = vmatmul.mubr.f32.gmra.mrb[0].mxu0 %v3444
        %v3660 = vpop.f32.mrb[0].mxu0
        %v3661 = vadd.f32 0.0, %v3660
        %v3662 = vpop.f32.mrb[0].mxu0
        %3663 = vmatprep.mubr.f32.mxu0 0.0
        %3664 = vmatmul.mubr.f32.gmra.mrb[0].mxu0 %v3447
        %v3665 = vpop.f32.mrb[0].mxu0
        %v3666 = vadd.f32 0.0, %v3665
        %v3667 = vpop.f32.mrb[0].mxu0
        %3668 = vmatprep.mubr.f32.mxu0 0.0
        %3669 = vmatmul.mubr.f32.gmra.mrb[0].mxu0 %v3450
        %v3670 = vpop.f32.mrb[0].mxu0
        %v3671 = vadd.f32 0.0, %v3670
        %v3672 = vpop.f32.mrb[0].mxu0
        %3673 = vmatprep.mubr.f32.mxu0 0.0
        %3674 = vmatmul.mubr.f32.gmra.mrb[0].mxu0 %v3453
        %v3675 = vpop.f32.mrb[0].mxu0
        %v3676 = vadd.f32 0.0, %v3675
        %v3677 = vpop.f32.mrb[0].mxu0
        %3678 = vmatprep.mubr.f32.mxu0 0.0
        %3679 = vmatmul.mubr.f32.gmra.mrb[0].mxu0 %v3456
        %v3680 = vpop.f32.mrb[0].mxu0
        %v3681 = vadd.f32 0.0, %v3680
        %v3682 = vpop.f32.mrb[0].mxu0
        %3683 = vmatprep.mubr.f32.mxu0 0.0
        %3684 = vmatmul.mubr.f32.gmra.mrb[0].mxu0 %v3459
        %v3685 = vpop.f32.mrb[0].mxu0
        %v3686 = vadd.f32 0.0, %v3685
        %v3687 = vpop.f32.mrb[0].mxu0
        %3688 = vmatprep.mubr.f32.mxu0 0.0
        %3689 = vmatmul.mubr.f32.gmra.mrb[0].mxu0 %v3462
        %v3690 = vpop.f32.mrb[0].mxu0
        %v3691 = vadd.f32 0.0, %v3690
        %v3692 = vpop.f32.mrb[0].mxu0
        %3693 = vmatprep.mubr.f32.mxu0 0.0
        %3694 = vmatmul.mubr.f32.gmra.mrb[0].mxu0 %v3465
        %v3695 = vpop.f32.mrb[0].mxu0
        %v3696 = vadd.f32 0.0, %v3695
        %v3697 = vpop.f32.mrb[0].mxu0
        %3698 = vmatprep.mubr.f32.mxu0 0.0
        %3699 = vmatmul.mubr.f32.gmra.mrb[0].mxu0 %v3468
        %v3700 = vpop.f32.mrb[0].mxu0
        %v3701 = vadd.f32 0.0, %v3700
        %v3702 = vpop.f32.mrb[0].mxu0
        %3703 = vmatprep.mubr.f32.mxu0 0.0
        %3704 = vmatmul.mubr.f32.gmra.mrb[0].mxu0 %v3471
        %v3705 = vpop.f32.mrb[0].mxu0
        %v3706 = vadd.f32 0.0, %v3705
        %v3707 = vpop.f32.mrb[0].mxu0
        %3708 = vmatprep.mubr.f32.mxu0 0.0
        %3709 = vmatmul.mubr.f32.gmra.mrb[0].mxu0 %v3474
        %v3710 = vpop.f32.mrb[0].mxu0
        %v3711 = vadd.f32 0.0, %v3710
        %v3712 = vpop.f32.mrb[0].mxu0
        %3713 = vmatprep.mubr.f32.mxu0 0.0
        %3714 = vmatmul.mubr.f32.gmra.mrb[0].mxu0 %v3477
        %v3715 = vpop.f32.mrb[0].mxu0
        %v3716 = vadd.f32 0.0, %v3715
        %v3717 = vpop.f32.mrb[0].mxu0
        %3718 = vmatprep.mubr.f32.mxu0 0.0
        %3719 = vmatmul.mubr.f32.gmra.mrb[0].mxu0 %v3480
        %v3720 = vpop.f32.mrb[0].mxu0
        %v3721 = vadd.f32 0.0, %v3720
        %v3722 = vpop.f32.mrb[0].mxu0
        %3723 = vmatprep.mubr.f32.mxu0 0.0
        %3724 = vmatmul.mubr.f32.gmra.mrb[0].mxu0 %v3483
        %v3725 = vpop.f32.mrb[0].mxu0
        %v3726 = vadd.f32 0.0, %v3725
        %v3727 = vpop.f32.mrb[0].mxu0
        %3728 = vmatprep.mubr.f32.mxu0 0.0
        %3729 = vmatmul.mubr.f32.gmra.mrb[0].mxu0 %v3486
        %v3730 = vpop.f32.mrb[0].mxu0
        %v3731 = vadd.f32 0.0, %v3730
        %v3732 = vpop.f32.mrb[0].mxu0
        %3733 = vmatprep.mubr.f32.mxu0 0.0
        %3734 = vmatmul.mubr.f32.gmra.mrb[0].mxu0 %v3489
        %v3735 = vpop.f32.mrb[0].mxu0
        %v3736 = vadd.f32 0.0, %v3735
        %v3737 = vpop.f32.mrb[0].mxu0
        %3738 = vdwg.mxu0
        %v3739 = vadd.f32 %v3309, %v3561
        %v3740 = vadd.f32 %v3310, %v3566
        %v3741 = vadd.f32 %v3311, %v3571
        %v3742 = vadd.f32 %v3312, %v3576
        %v3743 = vadd.f32 %v3313, %v3581
        %v3744 = vadd.f32 %v3314, %v3586
        %v3745 = vadd.f32 %v3315, %v3591
        %v3746 = vadd.f32 %v3316, %v3596
        %v3747 = vadd.f32 %v3317, %v3601
        %v3748 = vadd.f32 %v3318, %v3606
        %v3749 = vadd.f32 %v3319, %v3611
        %v3750 = vadd.f32 %v3320, %v3616
        %v3751 = vadd.f32 %v3321, %v3621
        %v3752 = vadd.f32 %v3322, %v3626
        %v3753 = vadd.f32 %v3323, %v3631
        %v3754 = vadd.f32 %v3324, %v3636
        %v3755 = vadd.f32 %v3325, %v3641
        %v3756 = vadd.f32 %v3326, %v3646
        %v3757 = vadd.f32 %v3327, %v3651
        %v3758 = vadd.f32 %v3328, %v3656
        %v3759 = vadd.f32 %v3329, %v3661
        %v3760 = vadd.f32 %v3330, %v3666
        %v3761 = vadd.f32 %v3331, %v3671
        %v3762 = vadd.f32 %v3332, %v3676
        %v3763 = vadd.f32 %v3333, %v3681
        %v3764 = vadd.f32 %v3334, %v3686
        %v3765 = vadd.f32 %v3335, %v3691
        %v3766 = vadd.f32 %v3336, %v3696
        %v3767 = vadd.f32 %v3337, %v3701
        %v3768 = vadd.f32 %v3338, %v3706
        %v3769 = vadd.f32 %v3339, %v3711
        %v3770 = vadd.f32 %v3340, %v3716
        %v3771 = vadd.f32 %v3341, %v3721
        %v3772 = vadd.f32 %v3342, %v3726
        %v3773 = vadd.f32 %v3343, %v3731
        %v3774 = vadd.f32 %v3344, %v3736
        %v3775 = vld [vmem:[#allocation2 + $0x26] sm:$0xff]
        %v3776 = vld [vmem:[#allocation2 + $0x2e] sm:$0xff]
        %v3777 = vld [vmem:[#allocation2 + $0x36] sm:$0xff]
        %v3778 = vld [vmem:[#allocation2 + $0x3e] sm:$0xff]
        %v3779 = vld [vmem:[#allocation2 + $0x46] sm:$0xff]
        %v3780 = vld [vmem:[#allocation2 + $0x4e] sm:$0xff]
        %v3781 = vld [vmem:[#allocation2 + $0x56] sm:$0xff]
        %v3782 = vld [vmem:[#allocation2 + $0x5e] sm:$0xff]
        %v3783 = vld [vmem:[#allocation2 + $0x66] sm:$0xff]
        %v3784 = vld [vmem:[#allocation2 + $0x6e] sm:$0xff]
        %v3785 = vld [vmem:[#allocation2 + $0x76] sm:$0xff]
        %v3786 = vld [vmem:[#allocation2 + $0x7e] sm:$0xff]
        %v3787 = vld [vmem:[#allocation2 + $0x86] sm:$0xff]
        %v3788 = vld [vmem:[#allocation2 + $0x8e] sm:$0xff]
        %v3789 = vld [vmem:[#allocation2 + $0x96] sm:$0xff]
        %v3790 = vld [vmem:[#allocation2 + $0x9e] sm:$0xff]
        %v3791 = vld [vmem:[#allocation2 + $0xa6] sm:$0xff]
        %v3792 = vld [vmem:[#allocation2 + $0xae] sm:$0xff]
        %v3793 = vld [vmem:[#allocation2 + $0xb6] sm:$0xff]
        %v3794 = vld [vmem:[#allocation2 + $0xbe] sm:$0xff]
        %v3795 = vld [vmem:[#allocation2 + $0xc6] sm:$0xff]
        %v3796 = vld [vmem:[#allocation2 + $0xce] sm:$0xff]
        %v3797 = vld [vmem:[#allocation2 + $0xd6] sm:$0xff]
        %v3798 = vld [vmem:[#allocation2 + $0xde] sm:$0xff]
        %v3799 = vld [vmem:[#allocation2 + $0xe6] sm:$0xff]
        %v3800 = vld [vmem:[#allocation2 + $0xee] sm:$0xff]
        %v3801 = vld [vmem:[#allocation2 + $0xf6] sm:$0xff]
        %v3802 = vld [vmem:[#allocation2 + $0xfe] sm:$0xff]
        %v3803 = vld [vmem:[#allocation2 + $0x106] sm:$0xff]
        %v3804 = vld [vmem:[#allocation2 + $0x10e] sm:$0xff]
        %v3805 = vld [vmem:[#allocation2 + $0x116] sm:$0xff]
        %v3806 = vld [vmem:[#allocation2 + $0x11e] sm:$0xff]
        %v3807 = vld [vmem:[#allocation2 + $0x126] sm:$0xff]
        %v3808 = vld [vmem:[#allocation2 + $0x12e] sm:$0xff]
        %v3809 = vld [vmem:[#allocation2 + $0x136] sm:$0xff]
        %v3810 = vld [vmem:[#allocation2 + $0x13e] sm:$0xff]
        %s3811 = scalar_lea.vmem %s2, 32
        %v3812 = vld [vmem:[%s3811] sm:$0xf]
        %v3814 = vsel %vm362, %v3775, 0
        %v3817 = vsel %vm362, %v3776, 0
        %v3820 = vsel %vm362, %v3777, 0
        %v3823 = vsel %vm362, %v3778, 0
        %v3826 = vsel %vm362, %v3779, 0
        %v3829 = vsel %vm362, %v3780, 0
        %v3832 = vsel %vm362, %v3781, 0
        %v3835 = vsel %vm362, %v3782, 0
        %v3838 = vsel %vm362, %v3783, 0
        %v3841 = vsel %vm362, %v3784, 0
        %v3844 = vsel %vm362, %v3785, 0
        %v3847 = vsel %vm362, %v3786, 0
        %v3850 = vsel %vm362, %v3787, 0
        %v3853 = vsel %vm362, %v3788, 0
        %v3856 = vsel %vm362, %v3789, 0
        %v3859 = vsel %vm362, %v3790, 0
        %v3862 = vsel %vm362, %v3791, 0
        %v3865 = vsel %vm362, %v3792, 0
        %v3868 = vsel %vm362, %v3793, 0
        %v3871 = vsel %vm362, %v3794, 0
        %v3874 = vsel %vm362, %v3795, 0
        %v3877 = vsel %vm362, %v3796, 0
        %v3880 = vsel %vm362, %v3797, 0
        %v3883 = vsel %vm362, %v3798, 0
        %v3886 = vsel %vm362, %v3799, 0
        %v3889 = vsel %vm362, %v3800, 0
        %v3892 = vsel %vm362, %v3801, 0
        %v3895 = vsel %vm362, %v3802, 0
        %v3898 = vsel %vm362, %v3803, 0
        %v3901 = vsel %vm362, %v3804, 0
        %v3904 = vsel %vm362, %v3805, 0
        %v3907 = vsel %vm362, %v3806, 0
        %v3910 = vsel %vm362, %v3807, 0
        %v3913 = vsel %vm362, %v3808, 0
        %v3916 = vsel %vm362, %v3809, 0
        %v3919 = vsel %vm362, %v3810, 0
        %v3922 = vsel %vm590, %v3812, 0
        %3924 = vmatprep.subr.mxu0 0.0
        %3925 = vmatpush1.msra.mxu0 %v3922
        %3926 = vmatprep.subr.mxu0 0.0
        %3927 = vmatpush1.msra.mxu0 0.0
        %3928 = vmatprep.subr.mxu0 0.0
        %3929 = vmatpush1.msra.mxu0 0.0
        %3930 = vmatprep.subr.mxu0 0.0
        %3931 = vmatpush1.msra.mxu0 0.0
        %3932 = vmatprep.subr.mxu0 0.0
        %3933 = vmatpush1.msra.mxu0 0.0
        %3934 = vmatprep.subr.mxu0 0.0
        %3935 = vmatpush1.msra.mxu0 0.0
        %3936 = vmatprep.subr.mxu0 0.0
        %3937 = vmatpush1.msra.mxu0 0.0
        %3938 = vmatprep.subr.mxu0 0.0
        %3939 = vmatpush1.msra.mxu0 0.0
        %3940 = vmatprep.subr.mxu0 0.0
        %3941 = vmatpush1.msra.mxu0 0.0
        %3942 = vmatprep.subr.mxu0 0.0
        %3943 = vmatpush1.msra.mxu0 0.0
        %3944 = vmatprep.subr.mxu0 0.0
        %3945 = vmatpush1.msra.mxu0 0.0
        %3946 = vmatprep.subr.mxu0 0.0
        %3947 = vmatpush1.msra.mxu0 0.0
        %3948 = vmatprep.subr.mxu0 0.0
        %3949 = vmatpush1.msra.mxu0 0.0
        %3950 = vmatprep.subr.mxu0 0.0
        %3951 = vmatpush1.msra.mxu0 0.0
        %3952 = vmatprep.subr.mxu0 0.0
        %3953 = vmatpush1.msra.mxu0 0.0
        %3954 = vmatprep.subr.mxu0 0.0
        %3955 = vmatpush1.msra.mxu0 0.0
        %3956 = vmatprep.subr.mxu0 0.0
        %3957 = vmatpush1.msra.mxu0 0.0
        %3958 = vmatprep.subr.mxu0 0.0
        %3959 = vmatpush1.msra.mxu0 0.0
        %3960 = vmatprep.subr.mxu0 0.0
        %3961 = vmatpush1.msra.mxu0 0.0
        %3962 = vmatprep.subr.mxu0 0.0
        %3963 = vmatpush1.msra.mxu0 0.0
        %3964 = vmatprep.subr.mxu0 0.0
        %3965 = vmatpush1.msra.mxu0 0.0
        %3966 = vmatprep.subr.mxu0 0.0
        %3967 = vmatpush1.msra.mxu0 0.0
        %3968 = vmatprep.subr.mxu0 0.0
        %3969 = vmatpush1.msra.mxu0 0.0
        %3970 = vmatprep.subr.mxu0 0.0
        %3971 = vmatpush1.msra.mxu0 0.0
        %3972 = vmatprep.subr.mxu0 0.0
        %3973 = vmatpush1.msra.mxu0 0.0
        %3974 = vmatprep.subr.mxu0 0.0
        %3975 = vmatpush1.msra.mxu0 0.0
        %3976 = vmatprep.subr.mxu0 0.0
        %3977 = vmatpush1.msra.mxu0 0.0
        %3978 = vmatprep.subr.mxu0 0.0
        %3979 = vmatpush1.msra.mxu0 0.0
        %3980 = vmatprep.subr.mxu0 0.0
        %3981 = vmatpush1.msra.mxu0 0.0
        %3982 = vmatprep.subr.mxu0 0.0
        %3983 = vmatpush1.msra.mxu0 0.0
        %3984 = vmatprep.subr.mxu0 0.0
        %3985 = vmatpush1.msra.mxu0 0.0
        %3986 = vmatprep.subr.mxu0 0.0
        %3987 = vmatpush1.msra.mxu0 0.0
        %3988 = vmatprep.mubr.f32.mxu0 0.0
        %3989 = vmatmul.mubr.f32.gmra.mrb[0].mxu0 %v3814
        %v3990 = vpop.f32.mrb[0].mxu0
        %v3991 = vadd.f32 0.0, %v3990
        %v3992 = vpop.f32.mrb[0].mxu0
        %3993 = vmatprep.mubr.f32.mxu0 0.0
        %3994 = vmatmul.mubr.f32.gmra.mrb[0].mxu0 %v3817
        %v3995 = vpop.f32.mrb[0].mxu0
        %v3996 = vadd.f32 0.0, %v3995
        %v3997 = vpop.f32.mrb[0].mxu0
        %3998 = vmatprep.mubr.f32.mxu0 0.0
        %3999 = vmatmul.mubr.f32.gmra.mrb[0].mxu0 %v3820
        %v4000 = vpop.f32.mrb[0].mxu0
        %v4001 = vadd.f32 0.0, %v4000
        %v4002 = vpop.f32.mrb[0].mxu0
        %4003 = vmatprep.mubr.f32.mxu0 0.0
        %4004 = vmatmul.mubr.f32.gmra.mrb[0].mxu0 %v3823
        %v4005 = vpop.f32.mrb[0].mxu0
        %v4006 = vadd.f32 0.0, %v4005
        %v4007 = vpop.f32.mrb[0].mxu0
        %4008 = vmatprep.mubr.f32.mxu0 0.0
        %4009 = vmatmul.mubr.f32.gmra.mrb[0].mxu0 %v3826
        %v4010 = vpop.f32.mrb[0].mxu0
        %v4011 = vadd.f32 0.0, %v4010
        %v4012 = vpop.f32.mrb[0].mxu0
        %4013 = vmatprep.mubr.f32.mxu0 0.0
        %4014 = vmatmul.mubr.f32.gmra.mrb[0].mxu0 %v3829
        %v4015 = vpop.f32.mrb[0].mxu0
        %v4016 = vadd.f32 0.0, %v4015
        %v4017 = vpop.f32.mrb[0].mxu0
        %4018 = vmatprep.mubr.f32.mxu0 0.0
        %4019 = vmatmul.mubr.f32.gmra.mrb[0].mxu0 %v3832
        %v4020 = vpop.f32.mrb[0].mxu0
        %v4021 = vadd.f32 0.0, %v4020
        %v4022 = vpop.f32.mrb[0].mxu0
        %4023 = vmatprep.mubr.f32.mxu0 0.0
        %4024 = vmatmul.mubr.f32.gmra.mrb[0].mxu0 %v3835
        %v4025 = vpop.f32.mrb[0].mxu0
        %v4026 = vadd.f32 0.0, %v4025
        %v4027 = vpop.f32.mrb[0].mxu0
        %4028 = vmatprep.mubr.f32.mxu0 0.0
        %4029 = vmatmul.mubr.f32.gmra.mrb[0].mxu0 %v3838
        %v4030 = vpop.f32.mrb[0].mxu0
        %v4031 = vadd.f32 0.0, %v4030
        %v4032 = vpop.f32.mrb[0].mxu0
        %4033 = vmatprep.mubr.f32.mxu0 0.0
        %4034 = vmatmul.mubr.f32.gmra.mrb[0].mxu0 %v3841
        %v4035 = vpop.f32.mrb[0].mxu0
        %v4036 = vadd.f32 0.0, %v4035
        %v4037 = vpop.f32.mrb[0].mxu0
        %4038 = vmatprep.mubr.f32.mxu0 0.0
        %4039 = vmatmul.mubr.f32.gmra.mrb[0].mxu0 %v3844
        %v4040 = vpop.f32.mrb[0].mxu0
        %v4041 = vadd.f32 0.0, %v4040
        %v4042 = vpop.f32.mrb[0].mxu0
        %4043 = vmatprep.mubr.f32.mxu0 0.0
        %4044 = vmatmul.mubr.f32.gmra.mrb[0].mxu0 %v3847
        %v4045 = vpop.f32.mrb[0].mxu0
        %v4046 = vadd.f32 0.0, %v4045
        %v4047 = vpop.f32.mrb[0].mxu0
        %4048 = vmatprep.mubr.f32.mxu0 0.0
        %4049 = vmatmul.mubr.f32.gmra.mrb[0].mxu0 %v3850
        %v4050 = vpop.f32.mrb[0].mxu0
        %v4051 = vadd.f32 0.0, %v4050
        %v4052 = vpop.f32.mrb[0].mxu0
        %4053 = vmatprep.mubr.f32.mxu0 0.0
        %4054 = vmatmul.mubr.f32.gmra.mrb[0].mxu0 %v3853
        %v4055 = vpop.f32.mrb[0].mxu0
        %v4056 = vadd.f32 0.0, %v4055
        %v4057 = vpop.f32.mrb[0].mxu0
        %4058 = vmatprep.mubr.f32.mxu0 0.0
        %4059 = vmatmul.mubr.f32.gmra.mrb[0].mxu0 %v3856
        %v4060 = vpop.f32.mrb[0].mxu0
        %v4061 = vadd.f32 0.0, %v4060
        %v4062 = vpop.f32.mrb[0].mxu0
        %4063 = vmatprep.mubr.f32.mxu0 0.0
        %4064 = vmatmul.mubr.f32.gmra.mrb[0].mxu0 %v3859
        %v4065 = vpop.f32.mrb[0].mxu0
        %v4066 = vadd.f32 0.0, %v4065
        %v4067 = vpop.f32.mrb[0].mxu0
        %4068 = vmatprep.mubr.f32.mxu0 0.0
        %4069 = vmatmul.mubr.f32.gmra.mrb[0].mxu0 %v3862
        %v4070 = vpop.f32.mrb[0].mxu0
        %v4071 = vadd.f32 0.0, %v4070
        %v4072 = vpop.f32.mrb[0].mxu0
        %4073 = vmatprep.mubr.f32.mxu0 0.0
        %4074 = vmatmul.mubr.f32.gmra.mrb[0].mxu0 %v3865
        %v4075 = vpop.f32.mrb[0].mxu0
        %v4076 = vadd.f32 0.0, %v4075
        %v4077 = vpop.f32.mrb[0].mxu0
        %4078 = vmatprep.mubr.f32.mxu0 0.0
        %4079 = vmatmul.mubr.f32.gmra.mrb[0].mxu0 %v3868
        %v4080 = vpop.f32.mrb[0].mxu0
        %v4081 = vadd.f32 0.0, %v4080
        %v4082 = vpop.f32.mrb[0].mxu0
        %4083 = vmatprep.mubr.f32.mxu0 0.0
        %4084 = vmatmul.mubr.f32.gmra.mrb[0].mxu0 %v3871
        %v4085 = vpop.f32.mrb[0].mxu0
        %v4086 = vadd.f32 0.0, %v4085
        %v4087 = vpop.f32.mrb[0].mxu0
        %4088 = vmatprep.mubr.f32.mxu0 0.0
        %4089 = vmatmul.mubr.f32.gmra.mrb[0].mxu0 %v3874
        %v4090 = vpop.f32.mrb[0].mxu0
        %v4091 = vadd.f32 0.0, %v4090
        %v4092 = vpop.f32.mrb[0].mxu0
        %4093 = vmatprep.mubr.f32.mxu0 0.0
        %4094 = vmatmul.mubr.f32.gmra.mrb[0].mxu0 %v3877
        %v4095 = vpop.f32.mrb[0].mxu0
        %v4096 = vadd.f32 0.0, %v4095
        %v4097 = vpop.f32.mrb[0].mxu0
        %4098 = vmatprep.mubr.f32.mxu0 0.0
        %4099 = vmatmul.mubr.f32.gmra.mrb[0].mxu0 %v3880
        %v4100 = vpop.f32.mrb[0].mxu0
        %v4101 = vadd.f32 0.0, %v4100
        %v4102 = vpop.f32.mrb[0].mxu0
        %4103 = vmatprep.mubr.f32.mxu0 0.0
        %4104 = vmatmul.mubr.f32.gmra.mrb[0].mxu0 %v3883
        %v4105 = vpop.f32.mrb[0].mxu0
        %v4106 = vadd.f32 0.0, %v4105
        %v4107 = vpop.f32.mrb[0].mxu0
        %4108 = vmatprep.mubr.f32.mxu0 0.0
        %4109 = vmatmul.mubr.f32.gmra.mrb[0].mxu0 %v3886
        %v4110 = vpop.f32.mrb[0].mxu0
        %v4111 = vadd.f32 0.0, %v4110
        %v4112 = vpop.f32.mrb[0].mxu0
        %4113 = vmatprep.mubr.f32.mxu0 0.0
        %4114 = vmatmul.mubr.f32.gmra.mrb[0].mxu0 %v3889
        %v4115 = vpop.f32.mrb[0].mxu0
        %v4116 = vadd.f32 0.0, %v4115
        %v4117 = vpop.f32.mrb[0].mxu0
        %4118 = vmatprep.mubr.f32.mxu0 0.0
        %4119 = vmatmul.mubr.f32.gmra.mrb[0].mxu0 %v3892
        %v4120 = vpop.f32.mrb[0].mxu0
        %v4121 = vadd.f32 0.0, %v4120
        %v4122 = vpop.f32.mrb[0].mxu0
        %4123 = vmatprep.mubr.f32.mxu0 0.0
        %4124 = vmatmul.mubr.f32.gmra.mrb[0].mxu0 %v3895
        %v4125 = vpop.f32.mrb[0].mxu0
        %v4126 = vadd.f32 0.0, %v4125
        %v4127 = vpop.f32.mrb[0].mxu0
        %4128 = vmatprep.mubr.f32.mxu0 0.0
        %4129 = vmatmul.mubr.f32.gmra.mrb[0].mxu0 %v3898
        %v4130 = vpop.f32.mrb[0].mxu0
        %v4131 = vadd.f32 0.0, %v4130
        %v4132 = vpop.f32.mrb[0].mxu0
        %4133 = vmatprep.mubr.f32.mxu0 0.0
        %4134 = vmatmul.mubr.f32.gmra.mrb[0].mxu0 %v3901
        %v4135 = vpop.f32.mrb[0].mxu0
        %v4136 = vadd.f32 0.0, %v4135
        %v4137 = vpop.f32.mrb[0].mxu0
        %4138 = vmatprep.mubr.f32.mxu0 0.0
        %4139 = vmatmul.mubr.f32.gmra.mrb[0].mxu0 %v3904
        %v4140 = vpop.f32.mrb[0].mxu0
        %v4141 = vadd.f32 0.0, %v4140
        %v4142 = vpop.f32.mrb[0].mxu0
        %4143 = vmatprep.mubr.f32.mxu0 0.0
        %4144 = vmatmul.mubr.f32.gmra.mrb[0].mxu0 %v3907
        %v4145 = vpop.f32.mrb[0].mxu0
        %v4146 = vadd.f32 0.0, %v4145
        %v4147 = vpop.f32.mrb[0].mxu0
        %4148 = vmatprep.mubr.f32.mxu0 0.0
        %4149 = vmatmul.mubr.f32.gmra.mrb[0].mxu0 %v3910
        %v4150 = vpop.f32.mrb[0].mxu0
        %v4151 = vadd.f32 0.0, %v4150
        %v4152 = vpop.f32.mrb[0].mxu0
        %4153 = vmatprep.mubr.f32.mxu0 0.0
        %4154 = vmatmul.mubr.f32.gmra.mrb[0].mxu0 %v3913
        %v4155 = vpop.f32.mrb[0].mxu0
        %v4156 = vadd.f32 0.0, %v4155
        %v4157 = vpop.f32.mrb[0].mxu0
        %4158 = vmatprep.mubr.f32.mxu0 0.0
        %4159 = vmatmul.mubr.f32.gmra.mrb[0].mxu0 %v3916
        %v4160 = vpop.f32.mrb[0].mxu0
        %v4161 = vadd.f32 0.0, %v4160
        %v4162 = vpop.f32.mrb[0].mxu0
        %4163 = vmatprep.mubr.f32.mxu0 0.0
        %4164 = vmatmul.mubr.f32.gmra.mrb[0].mxu0 %v3919
        %v4165 = vpop.f32.mrb[0].mxu0
        %v4166 = vadd.f32 0.0, %v4165
        %v4167 = vpop.f32.mrb[0].mxu0
        %4168 = vdwg.mxu0
        %v4169 = vadd.f32 %v3739, %v3991
        %v4170 = vadd.f32 %v3740, %v3996
        %v4171 = vadd.f32 %v3741, %v4001
        %v4172 = vadd.f32 %v3742, %v4006
        %v4173 = vadd.f32 %v3743, %v4011
        %v4174 = vadd.f32 %v3744, %v4016
        %v4175 = vadd.f32 %v3745, %v4021
        %v4176 = vadd.f32 %v3746, %v4026
        %v4177 = vadd.f32 %v3747, %v4031
        %v4178 = vadd.f32 %v3748, %v4036
        %v4179 = vadd.f32 %v3749, %v4041
        %v4180 = vadd.f32 %v3750, %v4046
        %v4181 = vadd.f32 %v3751, %v4051
        %v4182 = vadd.f32 %v3752, %v4056
        %v4183 = vadd.f32 %v3753, %v4061
        %v4184 = vadd.f32 %v3754, %v4066
        %v4185 = vadd.f32 %v3755, %v4071
        %v4186 = vadd.f32 %v3756, %v4076
        %v4187 = vadd.f32 %v3757, %v4081
        %v4188 = vadd.f32 %v3758, %v4086
        %v4189 = vadd.f32 %v3759, %v4091
        %v4190 = vadd.f32 %v3760, %v4096
        %v4191 = vadd.f32 %v3761, %v4101
        %v4192 = vadd.f32 %v3762, %v4106
        %v4193 = vadd.f32 %v3763, %v4111
        %v4194 = vadd.f32 %v3764, %v4116
        %v4195 = vadd.f32 %v3765, %v4121
        %v4196 = vadd.f32 %v3766, %v4126
        %v4197 = vadd.f32 %v3767, %v4131
        %v4198 = vadd.f32 %v3768, %v4136
        %v4199 = vadd.f32 %v3769, %v4141
        %v4200 = vadd.f32 %v3770, %v4146
        %v4201 = vadd.f32 %v3771, %v4151
        %v4202 = vadd.f32 %v3772, %v4156
        %v4203 = vadd.f32 %v3773, %v4161
        %v4204 = vadd.f32 %v3774, %v4166
        %v4205 = vld [vmem:[%s5] sm:$0x1]
        %v4207 = vlaneseq
        %v4208 = vshrl.u32 %v4207, 7
        %v4209 = vsub.s32 0, %v4208
        %v4210 = vrot.slane %v4205, %v4209
        %v4212 = vadd.f32 %v4169, %v4210
        %v4213 = vadd.f32 %v4170, %v4210
        %v4214 = vadd.f32 %v4171, %v4210
        %v4215 = vadd.f32 %v4172, %v4210
        %v4216 = vadd.f32 %v4173, %v4210
        %v4217 = vadd.f32 %v4174, %v4210
        %v4218 = vadd.f32 %v4175, %v4210
        %v4219 = vadd.f32 %v4176, %v4210
        %v4220 = vadd.f32 %v4177, %v4210
        %v4221 = vadd.f32 %v4178, %v4210
        %v4222 = vadd.f32 %v4179, %v4210
        %v4223 = vadd.f32 %v4180, %v4210
        %v4224 = vadd.f32 %v4181, %v4210
        %v4225 = vadd.f32 %v4182, %v4210
        %v4226 = vadd.f32 %v4183, %v4210
        %v4227 = vadd.f32 %v4184, %v4210
        %v4228 = vadd.f32 %v4185, %v4210
        %v4229 = vadd.f32 %v4186, %v4210
        %v4230 = vadd.f32 %v4187, %v4210
        %v4231 = vadd.f32 %v4188, %v4210
        %v4232 = vadd.f32 %v4189, %v4210
        %v4233 = vadd.f32 %v4190, %v4210
        %v4234 = vadd.f32 %v4191, %v4210
        %v4235 = vadd.f32 %v4192, %v4210
        %v4236 = vadd.f32 %v4193, %v4210
        %v4237 = vadd.f32 %v4194, %v4210
        %v4238 = vadd.f32 %v4195, %v4210
        %v4239 = vadd.f32 %v4196, %v4210
        %v4240 = vadd.f32 %v4197, %v4210
        %v4241 = vadd.f32 %v4198, %v4210
        %v4242 = vadd.f32 %v4199, %v4210
        %v4243 = vadd.f32 %v4200, %v4210
        %v4244 = vadd.f32 %v4201, %v4210
        %v4245 = vadd.f32 %v4202, %v4210
        %v4246 = vadd.f32 %v4203, %v4210
        %v4247 = vadd.f32 %v4204, %v4210
        %v4248 = vmax.f32 %v4212, 0.0
        %v4249 = vmax.f32 %v4213, 0.0
        %v4250 = vmax.f32 %v4214, 0.0
        %v4251 = vmax.f32 %v4215, 0.0
        %v4252 = vmax.f32 %v4216, 0.0
        %v4253 = vmax.f32 %v4217, 0.0
        %v4254 = vmax.f32 %v4218, 0.0
        %v4255 = vmax.f32 %v4219, 0.0
        %v4256 = vmax.f32 %v4220, 0.0
        %v4257 = vmax.f32 %v4221, 0.0
        %v4258 = vmax.f32 %v4222, 0.0
        %v4259 = vmax.f32 %v4223, 0.0
        %v4260 = vmax.f32 %v4224, 0.0
        %v4261 = vmax.f32 %v4225, 0.0
        %v4262 = vmax.f32 %v4226, 0.0
        %v4263 = vmax.f32 %v4227, 0.0
        %v4264 = vmax.f32 %v4228, 0.0
        %v4265 = vmax.f32 %v4229, 0.0
        %v4266 = vmax.f32 %v4230, 0.0
        %v4267 = vmax.f32 %v4231, 0.0
        %v4268 = vmax.f32 %v4232, 0.0
        %v4269 = vmax.f32 %v4233, 0.0
        %v4270 = vmax.f32 %v4234, 0.0
        %v4271 = vmax.f32 %v4235, 0.0
        %v4272 = vmax.f32 %v4236, 0.0
        %v4273 = vmax.f32 %v4237, 0.0
        %v4274 = vmax.f32 %v4238, 0.0
        %v4275 = vmax.f32 %v4239, 0.0
        %v4276 = vmax.f32 %v4240, 0.0
        %v4277 = vmax.f32 %v4241, 0.0
        %v4278 = vmax.f32 %v4242, 0.0
        %v4279 = vmax.f32 %v4243, 0.0
        %v4280 = vmax.f32 %v4244, 0.0
        %v4281 = vmax.f32 %v4245, 0.0
        %v4282 = vmax.f32 %v4246, 0.0
        %v4283 = vmax.f32 %v4247, 0.0
        %v4284 = vld [vmem:[%s1] sm:$0xff]
        %v4285 = vld [vmem:[%s1 + $0x8] sm:$0xff]
        %v4286 = vld [vmem:[%s1 + $0x10] sm:$0xff]
        %v4287 = vld [vmem:[%s1 + $0x18] sm:$0xff]
        %v4288 = vld [vmem:[%s1 + $0x20] sm:$0xff]
        %v4289 = vld [vmem:[%s1 + $0x28] sm:$0xff]
        %v4290 = vld [vmem:[%s1 + $0x30] sm:$0xff]
        %v4291 = vld [vmem:[%s1 + $0x38] sm:$0xff]
        %v4292 = vld [vmem:[%s1 + $0x40] sm:$0xff]
        %v4293 = vld [vmem:[%s1 + $0x48] sm:$0xff]
        %v4294 = vld [vmem:[%s1 + $0x50] sm:$0xff]
        %v4295 = vld [vmem:[%s1 + $0x58] sm:$0xff]
        %v4296 = vld [vmem:[%s1 + $0x60] sm:$0xff]
        %v4297 = vld [vmem:[%s1 + $0x68] sm:$0xff]
        %v4298 = vld [vmem:[%s1 + $0x70] sm:$0xff]
        %v4299 = vld [vmem:[%s1 + $0x78] sm:$0xff]
        %v4300 = vld [vmem:[%s1 + $0x80] sm:$0xff]
        %v4301 = vld [vmem:[%s1 + $0x88] sm:$0xff]
        %v4302 = vld [vmem:[%s1 + $0x90] sm:$0xff]
        %v4303 = vld [vmem:[%s1 + $0x98] sm:$0xff]
        %v4304 = vld [vmem:[%s1 + $0xa0] sm:$0xff]
        %v4305 = vld [vmem:[%s1 + $0xa8] sm:$0xff]
        %v4306 = vld [vmem:[%s1 + $0xb0] sm:$0xff]
        %v4307 = vld [vmem:[%s1 + $0xb8] sm:$0xff]
        %v4308 = vld [vmem:[%s1 + $0xc0] sm:$0xff]
        %v4309 = vld [vmem:[%s1 + $0xc8] sm:$0xff]
        %v4310 = vld [vmem:[%s1 + $0xd0] sm:$0xff]
        %v4311 = vld [vmem:[%s1 + $0xd8] sm:$0xff]
        %v4312 = vld [vmem:[%s1 + $0xe0] sm:$0xff]
        %v4313 = vld [vmem:[%s1 + $0xe8] sm:$0xff]
        %v4314 = vld [vmem:[%s1 + $0xf0] sm:$0xff]
        %v4315 = vld [vmem:[%s1 + $0xf8] sm:$0xff]
        %v4316 = vld [vmem:[%s1 + $0x100] sm:$0xff]
        %v4317 = vld [vmem:[%s1 + $0x108] sm:$0xff]
        %v4318 = vld [vmem:[%s1 + $0x110] sm:$0xff]
        %v4319 = vld [vmem:[%s1 + $0x118] sm:$0xff]
        %4321 = vset.pattern.permute.xlu0 0
        %4322 = vperm.xlu0 %4321, %v4284
        %v4323 = vpop.permute.xlu0 %4322
        %4326 = vset.pattern.permute.xlu0 0
        %4327 = vperm.xlu0 %4326, %v4285
        %v4328 = vpop.permute.xlu0 %4327
        %4331 = vset.pattern.permute.xlu0 0
        %4332 = vperm.xlu0 %4331, %v4286
        %v4333 = vpop.permute.xlu0 %4332
        %4336 = vset.pattern.permute.xlu0 0
        %4337 = vperm.xlu0 %4336, %v4287
        %v4338 = vpop.permute.xlu0 %4337
        %4341 = vset.pattern.permute.xlu0 0
        %4342 = vperm.xlu0 %4341, %v4288
        %v4343 = vpop.permute.xlu0 %4342
        %4346 = vset.pattern.permute.xlu0 0
        %4347 = vperm.xlu0 %4346, %v4289
        %v4348 = vpop.permute.xlu0 %4347
        %4351 = vset.pattern.permute.xlu0 0
        %4352 = vperm.xlu0 %4351, %v4290
        %v4353 = vpop.permute.xlu0 %4352
        %4356 = vset.pattern.permute.xlu0 0
        %4357 = vperm.xlu0 %4356, %v4291
        %v4358 = vpop.permute.xlu0 %4357
        %4361 = vset.pattern.permute.xlu0 0
        %4362 = vperm.xlu0 %4361, %v4292
        %v4363 = vpop.permute.xlu0 %4362
        %4366 = vset.pattern.permute.xlu0 0
        %4367 = vperm.xlu0 %4366, %v4293
        %v4368 = vpop.permute.xlu0 %4367
        %4371 = vset.pattern.permute.xlu0 0
        %4372 = vperm.xlu0 %4371, %v4294
        %v4373 = vpop.permute.xlu0 %4372
        %4376 = vset.pattern.permute.xlu0 0
        %4377 = vperm.xlu0 %4376, %v4295
        %v4378 = vpop.permute.xlu0 %4377
        %4381 = vset.pattern.permute.xlu0 0
        %4382 = vperm.xlu0 %4381, %v4296
        %v4383 = vpop.permute.xlu0 %4382
        %4386 = vset.pattern.permute.xlu0 0
        %4387 = vperm.xlu0 %4386, %v4297
        %v4388 = vpop.permute.xlu0 %4387
        %4391 = vset.pattern.permute.xlu0 0
        %4392 = vperm.xlu0 %4391, %v4298
        %v4393 = vpop.permute.xlu0 %4392
        %4396 = vset.pattern.permute.xlu0 0
        %4397 = vperm.xlu0 %4396, %v4299
        %v4398 = vpop.permute.xlu0 %4397
        %4401 = vset.pattern.permute.xlu0 0
        %4402 = vperm.xlu0 %4401, %v4300
        %v4403 = vpop.permute.xlu0 %4402
        %4406 = vset.pattern.permute.xlu0 0
        %4407 = vperm.xlu0 %4406, %v4301
        %v4408 = vpop.permute.xlu0 %4407
        %4411 = vset.pattern.permute.xlu0 0
        %4412 = vperm.xlu0 %4411, %v4302
        %v4413 = vpop.permute.xlu0 %4412
        %4416 = vset.pattern.permute.xlu0 0
        %4417 = vperm.xlu0 %4416, %v4303
        %v4418 = vpop.permute.xlu0 %4417
        %4421 = vset.pattern.permute.xlu0 0
        %4422 = vperm.xlu0 %4421, %v4304
        %v4423 = vpop.permute.xlu0 %4422
        %4426 = vset.pattern.permute.xlu0 0
        %4427 = vperm.xlu0 %4426, %v4305
        %v4428 = vpop.permute.xlu0 %4427
        %4431 = vset.pattern.permute.xlu0 0
        %4432 = vperm.xlu0 %4431, %v4306
        %v4433 = vpop.permute.xlu0 %4432
        %4436 = vset.pattern.permute.xlu0 0
        %4437 = vperm.xlu0 %4436, %v4307
        %v4438 = vpop.permute.xlu0 %4437
        %4441 = vset.pattern.permute.xlu0 0
        %4442 = vperm.xlu0 %4441, %v4308
        %v4443 = vpop.permute.xlu0 %4442
        %4446 = vset.pattern.permute.xlu0 0
        %4447 = vperm.xlu0 %4446, %v4309
        %v4448 = vpop.permute.xlu0 %4447
        %4451 = vset.pattern.permute.xlu0 0
        %4452 = vperm.xlu0 %4451, %v4310
        %v4453 = vpop.permute.xlu0 %4452
        %4456 = vset.pattern.permute.xlu0 0
        %4457 = vperm.xlu0 %4456, %v4311
        %v4458 = vpop.permute.xlu0 %4457
        %4461 = vset.pattern.permute.xlu0 0
        %4462 = vperm.xlu0 %4461, %v4312
        %v4463 = vpop.permute.xlu0 %4462
        %4466 = vset.pattern.permute.xlu0 0
        %4467 = vperm.xlu0 %4466, %v4313
        %v4468 = vpop.permute.xlu0 %4467
        %4471 = vset.pattern.permute.xlu0 0
        %4472 = vperm.xlu0 %4471, %v4314
        %v4473 = vpop.permute.xlu0 %4472
        %4476 = vset.pattern.permute.xlu0 0
        %4477 = vperm.xlu0 %4476, %v4315
        %v4478 = vpop.permute.xlu0 %4477
        %4481 = vset.pattern.permute.xlu0 0
        %4482 = vperm.xlu0 %4481, %v4316
        %v4483 = vpop.permute.xlu0 %4482
        %4486 = vset.pattern.permute.xlu0 0
        %4487 = vperm.xlu0 %4486, %v4317
        %v4488 = vpop.permute.xlu0 %4487
        %4491 = vset.pattern.permute.xlu0 0
        %4492 = vperm.xlu0 %4491, %v4318
        %v4493 = vpop.permute.xlu0 %4492
        %4496 = vset.pattern.permute.xlu0 0
        %4497 = vperm.xlu0 %4496, %v4319
        %v4498 = vpop.permute.xlu0 %4497
        %v4500 = vmul.f32 %v4248, %v4323
        %v4501 = vmul.f32 %v4249, %v4328
        %v4502 = vmul.f32 %v4250, %v4333
        %v4503 = vmul.f32 %v4251, %v4338
        %v4504 = vmul.f32 %v4252, %v4343
        %v4505 = vmul.f32 %v4253, %v4348
        %v4506 = vmul.f32 %v4254, %v4353
        %v4507 = vmul.f32 %v4255, %v4358
        %v4508 = vmul.f32 %v4256, %v4363
        %v4509 = vmul.f32 %v4257, %v4368
        %v4510 = vmul.f32 %v4258, %v4373
        %v4511 = vmul.f32 %v4259, %v4378
        %v4512 = vmul.f32 %v4260, %v4383
        %v4513 = vmul.f32 %v4261, %v4388
        %v4514 = vmul.f32 %v4262, %v4393
        %v4515 = vmul.f32 %v4263, %v4398
        %v4516 = vmul.f32 %v4264, %v4403
        %v4517 = vmul.f32 %v4265, %v4408
        %v4518 = vmul.f32 %v4266, %v4413
        %v4519 = vmul.f32 %v4267, %v4418
        %v4520 = vmul.f32 %v4268, %v4423
        %v4521 = vmul.f32 %v4269, %v4428
        %v4522 = vmul.f32 %v4270, %v4433
        %v4523 = vmul.f32 %v4271, %v4438
        %v4524 = vmul.f32 %v4272, %v4443
        %v4525 = vmul.f32 %v4273, %v4448
        %v4526 = vmul.f32 %v4274, %v4453
        %v4527 = vmul.f32 %v4275, %v4458
        %v4528 = vmul.f32 %v4276, %v4463
        %v4529 = vmul.f32 %v4277, %v4468
        %v4530 = vmul.f32 %v4278, %v4473
        %v4531 = vmul.f32 %v4279, %v4478
        %v4532 = vmul.f32 %v4280, %v4483
        %v4533 = vmul.f32 %v4281, %v4488
        %v4534 = vmul.f32 %v4282, %v4493
        %v4535 = vmul.f32 %v4283, %v4498
        %4536 = vst [vmem:[#allocation3] sm:$0xff] 0.0
        %4537 = vst [vmem:[#allocation3 + $0x8] sm:$0xff] 0.0
        %4538 = vst [vmem:[#allocation3 + $0x10] sm:$0xff] 0.0
        %4539 = vst [vmem:[#allocation3 + $0x18] sm:$0xff] 0.0
        %4540 = vst [vmem:[#allocation3 + $0x20] sm:$0xff] 0.0
        %4541 = vst [vmem:[#allocation3 + $0x28] sm:$0xff] 0.0
        %4542 = vst [vmem:[#allocation3 + $0x30] sm:$0xff] 0.0
        %4543 = vst [vmem:[#allocation3 + $0x38] sm:$0xff] 0.0
        %4544 = vst [vmem:[#allocation3 + $0x40] sm:$0xff] 0.0
        %4545 = vst [vmem:[#allocation3 + $0x48] sm:$0xff] 0.0
        %4546 = vst [vmem:[#allocation3 + $0x50] sm:$0xff] 0.0
        %4547 = vst [vmem:[#allocation3 + $0x58] sm:$0xff] 0.0
        %4548 = vst [vmem:[#allocation3 + $0x60] sm:$0xff] 0.0
        %4549 = vst [vmem:[#allocation3 + $0x68] sm:$0xff] 0.0
        %4550 = vst [vmem:[#allocation3 + $0x70] sm:$0xff] 0.0
        %4551 = vst [vmem:[#allocation3 + $0x78] sm:$0xff] 0.0
        %4552 = vst [vmem:[#allocation3 + $0x80] sm:$0xff] 0.0
        %4553 = vst [vmem:[#allocation3 + $0x88] sm:$0xff] 0.0
        %4554 = vst [vmem:[#allocation3 + $0x90] sm:$0xff] 0.0
        %4555 = vst [vmem:[#allocation3 + $0x98] sm:$0xff] 0.0
        %4556 = vst [vmem:[#allocation3 + $0xa0] sm:$0xff] 0.0
        %4557 = vst [vmem:[#allocation3 + $0xa8] sm:$0xff] 0.0
        %4558 = vst [vmem:[#allocation3 + $0xb0] sm:$0xff] 0.0
        %4559 = vst [vmem:[#allocation3 + $0xb8] sm:$0xff] 0.0
        %4560 = vst [vmem:[#allocation3 + $0xc0] sm:$0xff] 0.0
        %4561 = vst [vmem:[#allocation3 + $0xc8] sm:$0xff] 0.0
        %4562 = vst [vmem:[#allocation3 + $0xd0] sm:$0xff] 0.0
        %4563 = vst [vmem:[#allocation3 + $0xd8] sm:$0xff] 0.0
        %4564 = vst [vmem:[#allocation3 + $0xe0] sm:$0xff] 0.0
        %4565 = vst [vmem:[#allocation3 + $0xe8] sm:$0xff] 0.0
        %4566 = vst [vmem:[#allocation3 + $0xf0] sm:$0xff] 0.0
        %4567 = vst [vmem:[#allocation3 + $0xf8] sm:$0xff] 0.0
        %4568 = vst [vmem:[#allocation3 + $0x100] sm:$0xff] 0.0
        %4569 = vst [vmem:[#allocation3 + $0x108] sm:$0xff] 0.0
        %4570 = vst [vmem:[#allocation3 + $0x110] sm:$0xff] 0.0
        %4571 = vst [vmem:[#allocation3 + $0x118] sm:$0xff] 0.0
        %4572 = vst [vmem:[#allocation3 + $0x120] sm:$0xff] 0.0
        %4573 = vst [vmem:[#allocation3 + $0x128] sm:$0xff] 0.0
        %4574 = vst [vmem:[#allocation3 + $0x130] sm:$0xff] 0.0
        %4575 = vst [vmem:[#allocation3 + $0x138] sm:$0xff] 0.0
        %4576 = vst [vmem:[#allocation3 + $0x140] sm:$0xff] 0.0
        %4577 = vst [vmem:[#allocation3 + $0x148] sm:$0xff] 0.0
        %4578 = vst [vmem:[#allocation3 + $0x150] sm:$0xff] 0.0
        %4579 = vst [vmem:[#allocation3 + $0x158] sm:$0x7] 0.0
        %4580 = vst [vmem:[#allocation3 + $0x18] sm:$0xff] %v4500
        %4581 = vst [vmem:[#allocation3 + $0x20] sm:$0xff] %v4501
        %4582 = vst [vmem:[#allocation3 + $0x28] sm:$0xff] %v4502
        %4583 = vst [vmem:[#allocation3 + $0x30] sm:$0xff] %v4503
        %4584 = vst [vmem:[#allocation3 + $0x38] sm:$0xff] %v4504
        %4585 = vst [vmem:[#allocation3 + $0x40] sm:$0xff] %v4505
        %4586 = vst [vmem:[#allocation3 + $0x48] sm:$0xff] %v4506
        %4587 = vst [vmem:[#allocation3 + $0x50] sm:$0xff] %v4507
        %4588 = vst [vmem:[#allocation3 + $0x58] sm:$0xff] %v4508
        %4589 = vst [vmem:[#allocation3 + $0x60] sm:$0xff] %v4509
        %4590 = vst [vmem:[#allocation3 + $0x68] sm:$0xff] %v4510
        %4591 = vst [vmem:[#allocation3 + $0x70] sm:$0xff] %v4511
        %4592 = vst [vmem:[#allocation3 + $0x78] sm:$0xff] %v4512
        %4593 = vst [vmem:[#allocation3 + $0x80] sm:$0xff] %v4513
        %4594 = vst [vmem:[#allocation3 + $0x88] sm:$0xff] %v4514
        %4595 = vst [vmem:[#allocation3 + $0x90] sm:$0xff] %v4515
        %4596 = vst [vmem:[#allocation3 + $0x98] sm:$0xff] %v4516
        %4597 = vst [vmem:[#allocation3 + $0xa0] sm:$0xff] %v4517
        %4598 = vst [vmem:[#allocation3 + $0xa8] sm:$0xff] %v4518
        %4599 = vst [vmem:[#allocation3 + $0xb0] sm:$0xff] %v4519
        %4600 = vst [vmem:[#allocation3 + $0xb8] sm:$0xff] %v4520
        %4601 = vst [vmem:[#allocation3 + $0xc0] sm:$0xff] %v4521
        %4602 = vst [vmem:[#allocation3 + $0xc8] sm:$0xff] %v4522
        %4603 = vst [vmem:[#allocation3 + $0xd0] sm:$0xff] %v4523
        %4604 = vst [vmem:[#allocation3 + $0xd8] sm:$0xff] %v4524
        %4605 = vst [vmem:[#allocation3 + $0xe0] sm:$0xff] %v4525
        %4606 = vst [vmem:[#allocation3 + $0xe8] sm:$0xff] %v4526
        %4607 = vst [vmem:[#allocation3 + $0xf0] sm:$0xff] %v4527
        %4608 = vst [vmem:[#allocation3 + $0xf8] sm:$0xff] %v4528
        %4609 = vst [vmem:[#allocation3 + $0x100] sm:$0xff] %v4529
        %4610 = vst [vmem:[#allocation3 + $0x108] sm:$0xff] %v4530
        %4611 = vst [vmem:[#allocation3 + $0x110] sm:$0xff] %v4531
        %4612 = vst [vmem:[#allocation3 + $0x118] sm:$0xff] %v4532
        %4613 = vst [vmem:[#allocation3 + $0x120] sm:$0xff] %v4533
        %4614 = vst [vmem:[#allocation3 + $0x128] sm:$0xff] %v4534
        %4615 = vst [vmem:[#allocation3 + $0x130] sm:$0xff] %v4535
        %v4616 = vld [vmem:[#allocation3 + $0x5] sm:$0xff]
        %v4617 = vld [vmem:[#allocation3 + $0xd] sm:$0xff]
        %v4618 = vld [vmem:[#allocation3 + $0x15] sm:$0xff]
        %v4619 = vld [vmem:[#allocation3 + $0x1d] sm:$0xff]
        %v4620 = vld [vmem:[#allocation3 + $0x25] sm:$0xff]
        %v4621 = vld [vmem:[#allocation3 + $0x2d] sm:$0xff]
        %v4622 = vld [vmem:[#allocation3 + $0x35] sm:$0xff]
        %v4623 = vld [vmem:[#allocation3 + $0x3d] sm:$0xff]
        %v4624 = vld [vmem:[#allocation3 + $0x45] sm:$0xff]
        %v4625 = vld [vmem:[#allocation3 + $0x4d] sm:$0xff]
        %v4626 = vld [vmem:[#allocation3 + $0x55] sm:$0xff]
        %v4627 = vld [vmem:[#allocation3 + $0x5d] sm:$0xff]
        %v4628 = vld [vmem:[#allocation3 + $0x65] sm:$0xff]
        %v4629 = vld [vmem:[#allocation3 + $0x6d] sm:$0xff]
        %v4630 = vld [vmem:[#allocation3 + $0x75] sm:$0xff]
        %v4631 = vld [vmem:[#allocation3 + $0x7d] sm:$0xff]
        %v4632 = vld [vmem:[#allocation3 + $0x85] sm:$0xff]
        %v4633 = vld [vmem:[#allocation3 + $0x8d] sm:$0xff]
        %v4634 = vld [vmem:[#allocation3 + $0x95] sm:$0xff]
        %v4635 = vld [vmem:[#allocation3 + $0x9d] sm:$0xff]
        %v4636 = vld [vmem:[#allocation3 + $0xa5] sm:$0xff]
        %v4637 = vld [vmem:[#allocation3 + $0xad] sm:$0xff]
        %v4638 = vld [vmem:[#allocation3 + $0xb5] sm:$0xff]
        %v4639 = vld [vmem:[#allocation3 + $0xbd] sm:$0xff]
        %v4640 = vld [vmem:[#allocation3 + $0xc5] sm:$0xff]
        %v4641 = vld [vmem:[#allocation3 + $0xcd] sm:$0xff]
        %v4642 = vld [vmem:[#allocation3 + $0xd5] sm:$0xff]
        %v4643 = vld [vmem:[#allocation3 + $0xdd] sm:$0xff]
        %v4644 = vld [vmem:[#allocation3 + $0xe5] sm:$0xff]
        %v4645 = vld [vmem:[#allocation3 + $0xed] sm:$0xff]
        %v4646 = vld [vmem:[#allocation3 + $0xf5] sm:$0xff]
        %v4647 = vld [vmem:[#allocation3 + $0xfd] sm:$0xff]
        %v4648 = vld [vmem:[#allocation3 + $0x105] sm:$0xff]
        %v4649 = vld [vmem:[#allocation3 + $0x10d] sm:$0xff]
        %v4650 = vld [vmem:[#allocation3 + $0x115] sm:$0xff]
        %v4651 = vld [vmem:[#allocation3 + $0x11d] sm:$0xff]
        %v4652 = vld [vmem:[#allocation4] sm:$0xff]
        %v4653 = vld [vmem:[#allocation4 + $0x8] sm:$0xff]
        %v4654 = vld [vmem:[#allocation4 + $0x10] sm:$0xff]
        %v4655 = vld [vmem:[#allocation4 + $0x18] sm:$0xff]
        %v4656 = vld [vmem:[#allocation4 + $0x20] sm:$0xff]
        %v4657 = vld [vmem:[#allocation4 + $0x28] sm:$0xff]
        %v4658 = vld [vmem:[#allocation4 + $0x30] sm:$0xff]
        %v4659 = vld [vmem:[#allocation4 + $0x38] sm:$0xff]
        %v4660 = vld [vmem:[#allocation4 + $0x40] sm:$0xff]
        %v4661 = vld [vmem:[#allocation4 + $0x48] sm:$0xff]
        %v4662 = vld [vmem:[#allocation4 + $0x50] sm:$0xff]
        %v4663 = vld [vmem:[#allocation4 + $0x58] sm:$0xff]
        %v4664 = vld [vmem:[#allocation4 + $0x60] sm:$0xff]
        %v4665 = vld [vmem:[#allocation4 + $0x68] sm:$0xff]
        %v4666 = vld [vmem:[#allocation4 + $0x70] sm:$0xff]
        %v4667 = vld [vmem:[#allocation4 + $0x78] sm:$0xff]
        %v4668 = vld [vmem:[#allocation3 + $0x6] sm:$0xff]
        %v4669 = vld [vmem:[#allocation3 + $0xe] sm:$0xff]
        %v4670 = vld [vmem:[#allocation3 + $0x16] sm:$0xff]
        %v4671 = vld [vmem:[#allocation3 + $0x1e] sm:$0xff]
        %v4672 = vld [vmem:[#allocation3 + $0x26] sm:$0xff]
        %v4673 = vld [vmem:[#allocation3 + $0x2e] sm:$0xff]
        %v4674 = vld [vmem:[#allocation3 + $0x36] sm:$0xff]
        %v4675 = vld [vmem:[#allocation3 + $0x3e] sm:$0xff]
        %v4676 = vld [vmem:[#allocation3 + $0x46] sm:$0xff]
        %v4677 = vld [vmem:[#allocation3 + $0x4e] sm:$0xff]
        %v4678 = vld [vmem:[#allocation3 + $0x56] sm:$0xff]
        %v4679 = vld [vmem:[#allocation3 + $0x5e] sm:$0xff]
        %v4680 = vld [vmem:[#allocation3 + $0x66] sm:$0xff]
        %v4681 = vld [vmem:[#allocation3 + $0x6e] sm:$0xff]
        %v4682 = vld [vmem:[#allocation3 + $0x76] sm:$0xff]
        %v4683 = vld [vmem:[#allocation3 + $0x7e] sm:$0xff]
        %v4684 = vld [vmem:[#allocation3 + $0x86] sm:$0xff]
        %v4685 = vld [vmem:[#allocation3 + $0x8e] sm:$0xff]
        %v4686 = vld [vmem:[#allocation3 + $0x96] sm:$0xff]
        %v4687 = vld [vmem:[#allocation3 + $0x9e] sm:$0xff]
        %v4688 = vld [vmem:[#allocation3 + $0xa6] sm:$0xff]
        %v4689 = vld [vmem:[#allocation3 + $0xae] sm:$0xff]
        %v4690 = vld [vmem:[#allocation3 + $0xb6] sm:$0xff]
        %v4691 = vld [vmem:[#allocation3 + $0xbe] sm:$0xff]
        %v4692 = vld [vmem:[#allocation3 + $0xc6] sm:$0xff]
        %v4693 = vld [vmem:[#allocation3 + $0xce] sm:$0xff]
        %v4694 = vld [vmem:[#allocation3 + $0xd6] sm:$0xff]
        %v4695 = vld [vmem:[#allocation3 + $0xde] sm:$0xff]
        %v4696 = vld [vmem:[#allocation3 + $0xe6] sm:$0xff]
        %v4697 = vld [vmem:[#allocation3 + $0xee] sm:$0xff]
        %v4698 = vld [vmem:[#allocation3 + $0xf6] sm:$0xff]
        %v4699 = vld [vmem:[#allocation3 + $0xfe] sm:$0xff]
        %v4700 = vld [vmem:[#allocation3 + $0x106] sm:$0xff]
        %v4701 = vld [vmem:[#allocation3 + $0x10e] sm:$0xff]
        %v4702 = vld [vmem:[#allocation3 + $0x116] sm:$0xff]
        %v4703 = vld [vmem:[#allocation3 + $0x11e] sm:$0xff]
        %s4704 = scalar_lea.vmem [#allocation4], 128
        %v4705 = vld [vmem:[%s4704] sm:$0xff]
        %v4706 = vld [vmem:[%s4704 + $0x8] sm:$0xff]
        %v4707 = vld [vmem:[%s4704 + $0x10] sm:$0xff]
        %v4708 = vld [vmem:[%s4704 + $0x18] sm:$0xff]
        %v4709 = vld [vmem:[%s4704 + $0x20] sm:$0xff]
        %v4710 = vld [vmem:[%s4704 + $0x28] sm:$0xff]
        %v4711 = vld [vmem:[%s4704 + $0x30] sm:$0xff]
        %v4712 = vld [vmem:[%s4704 + $0x38] sm:$0xff]
        %v4713 = vld [vmem:[%s4704 + $0x40] sm:$0xff]
        %v4714 = vld [vmem:[%s4704 + $0x48] sm:$0xff]
        %v4715 = vld [vmem:[%s4704 + $0x50] sm:$0xff]
        %v4716 = vld [vmem:[%s4704 + $0x58] sm:$0xff]
        %v4717 = vld [vmem:[%s4704 + $0x60] sm:$0xff]
        %v4718 = vld [vmem:[%s4704 + $0x68] sm:$0xff]
        %v4719 = vld [vmem:[%s4704 + $0x70] sm:$0xff]
        %v4720 = vld [vmem:[%s4704 + $0x78] sm:$0xff]
        %4721 = vmatprep.subr.mxu0 0.0
        %4722 = vmatpush1.msra.mxu0 %v4705
        %4723 = vmatprep.subr.mxu0 0.0
        %4724 = vmatpush1.msra.mxu0 %v4706
        %4725 = vmatprep.subr.mxu0 0.0
        %4726 = vmatpush1.msra.mxu0 %v4707
        %4727 = vmatprep.subr.mxu0 0.0
        %4728 = vmatpush1.msra.mxu0 %v4708
        %4729 = vmatprep.subr.mxu0 0.0
        %4730 = vmatpush1.msra.mxu0 %v4709
        %4731 = vmatprep.subr.mxu0 0.0
        %4732 = vmatpush1.msra.mxu0 %v4710
        %4733 = vmatprep.subr.mxu0 0.0
        %4734 = vmatpush1.msra.mxu0 %v4711
        %4735 = vmatprep.subr.mxu0 0.0
        %4736 = vmatpush1.msra.mxu0 %v4712
        %4737 = vmatprep.subr.mxu0 0.0
        %4738 = vmatpush1.msra.mxu0 %v4713
        %4739 = vmatprep.subr.mxu0 0.0
        %4740 = vmatpush1.msra.mxu0 %v4714
        %4741 = vmatprep.subr.mxu0 0.0
        %4742 = vmatpush1.msra.mxu0 %v4715
        %4743 = vmatprep.subr.mxu0 0.0
        %4744 = vmatpush1.msra.mxu0 %v4716
        %4745 = vmatprep.subr.mxu0 0.0
        %4746 = vmatpush1.msra.mxu0 %v4717
        %4747 = vmatprep.subr.mxu0 0.0
        %4748 = vmatpush1.msra.mxu0 %v4718
        %4749 = vmatprep.subr.mxu0 0.0
        %4750 = vmatpush1.msra.mxu0 %v4719
        %4751 = vmatprep.subr.mxu0 0.0
        %4752 = vmatpush1.msra.mxu0 %v4720
        %4753 = vmatprep.subr.mxu0 0.0
        %4754 = vmatpush1.msra.mxu0 0.0
        %4755 = vmatprep.subr.mxu0 0.0
        %4756 = vmatpush1.msra.mxu0 0.0
        %4757 = vmatprep.subr.mxu0 0.0
        %4758 = vmatpush1.msra.mxu0 0.0
        %4759 = vmatprep.subr.mxu0 0.0
        %4760 = vmatpush1.msra.mxu0 0.0
        %4761 = vmatprep.subr.mxu0 0.0
        %4762 = vmatpush1.msra.mxu0 0.0
        %4763 = vmatprep.subr.mxu0 0.0
        %4764 = vmatpush1.msra.mxu0 0.0
        %4765 = vmatprep.subr.mxu0 0.0
        %4766 = vmatpush1.msra.mxu0 0.0
        %4767 = vmatprep.subr.mxu0 0.0
        %4768 = vmatpush1.msra.mxu0 0.0
        %4769 = vmatprep.subr.mxu0 0.0
        %4770 = vmatpush1.msra.mxu0 0.0
        %4771 = vmatprep.subr.mxu0 0.0
        %4772 = vmatpush1.msra.mxu0 0.0
        %4773 = vmatprep.subr.mxu0 0.0
        %4774 = vmatpush1.msra.mxu0 0.0
        %4775 = vmatprep.subr.mxu0 0.0
        %4776 = vmatpush1.msra.mxu0 0.0
        %4777 = vmatprep.subr.mxu0 0.0
        %4778 = vmatpush1.msra.mxu0 0.0
        %4779 = vmatprep.subr.mxu0 0.0
        %4780 = vmatpush1.msra.mxu0 0.0
        %4781 = vmatprep.subr.mxu0 0.0
        %4782 = vmatpush1.msra.mxu0 0.0
        %4783 = vmatprep.subr.mxu0 0.0
        %4784 = vmatpush1.msra.mxu0 0.0
        %4785 = vmatprep.mubr.f32.mxu0 0.0
        %4786 = vmatmul.mubr.f32.gmra.mrb[0].mxu0 %v4668
        %v4787 = vpop.f32.mrb[0].mxu0
        %v4788 = vadd.f32 0.0, %v4787
        %v4789 = vpop.f32.mrb[0].mxu0
        %4790 = vmatprep.mubr.f32.mxu0 0.0
        %4791 = vmatmul.mubr.f32.gmra.mrb[0].mxu0 %v4669
        %v4792 = vpop.f32.mrb[0].mxu0
        %v4793 = vadd.f32 0.0, %v4792
        %v4794 = vpop.f32.mrb[0].mxu0
        %4795 = vmatprep.mubr.f32.mxu0 0.0
        %4796 = vmatmul.mubr.f32.gmra.mrb[0].mxu0 %v4670
        %v4797 = vpop.f32.mrb[0].mxu0
        %v4798 = vadd.f32 0.0, %v4797
        %v4799 = vpop.f32.mrb[0].mxu0
        %4800 = vmatprep.mubr.f32.mxu0 0.0
        %4801 = vmatmul.mubr.f32.gmra.mrb[0].mxu0 %v4671
        %v4802 = vpop.f32.mrb[0].mxu0
        %v4803 = vadd.f32 0.0, %v4802
        %v4804 = vpop.f32.mrb[0].mxu0
        %4805 = vmatprep.mubr.f32.mxu0 0.0
        %4806 = vmatmul.mubr.f32.gmra.mrb[0].mxu0 %v4672
        %v4807 = vpop.f32.mrb[0].mxu0
        %v4808 = vadd.f32 0.0, %v4807
        %v4809 = vpop.f32.mrb[0].mxu0
        %4810 = vmatprep.mubr.f32.mxu0 0.0
        %4811 = vmatmul.mubr.f32.gmra.mrb[0].mxu0 %v4673
        %v4812 = vpop.f32.mrb[0].mxu0
        %v4813 = vadd.f32 0.0, %v4812
        %v4814 = vpop.f32.mrb[0].mxu0
        %4815 = vmatprep.mubr.f32.mxu0 0.0
        %4816 = vmatmul.mubr.f32.gmra.mrb[0].mxu0 %v4674
        %v4817 = vpop.f32.mrb[0].mxu0
        %v4818 = vadd.f32 0.0, %v4817
        %v4819 = vpop.f32.mrb[0].mxu0
        %4820 = vmatprep.mubr.f32.mxu0 0.0
        %4821 = vmatmul.mubr.f32.gmra.mrb[0].mxu0 %v4675
        %v4822 = vpop.f32.mrb[0].mxu0
        %v4823 = vadd.f32 0.0, %v4822
        %v4824 = vpop.f32.mrb[0].mxu0
        %4825 = vmatprep.mubr.f32.mxu0 0.0
        %4826 = vmatmul.mubr.f32.gmra.mrb[0].mxu0 %v4676
        %v4827 = vpop.f32.mrb[0].mxu0
        %v4828 = vadd.f32 0.0, %v4827
        %v4829 = vpop.f32.mrb[0].mxu0
        %4830 = vmatprep.mubr.f32.mxu0 0.0
        %4831 = vmatmul.mubr.f32.gmra.mrb[0].mxu0 %v4677
        %v4832 = vpop.f32.mrb[0].mxu0
        %v4833 = vadd.f32 0.0, %v4832
        %v4834 = vpop.f32.mrb[0].mxu0
        %4835 = vmatprep.mubr.f32.mxu0 0.0
        %4836 = vmatmul.mubr.f32.gmra.mrb[0].mxu0 %v4678
        %v4837 = vpop.f32.mrb[0].mxu0
        %v4838 = vadd.f32 0.0, %v4837
        %v4839 = vpop.f32.mrb[0].mxu0
        %4840 = vmatprep.mubr.f32.mxu0 0.0
        %4841 = vmatmul.mubr.f32.gmra.mrb[0].mxu0 %v4679
        %v4842 = vpop.f32.mrb[0].mxu0
        %v4843 = vadd.f32 0.0, %v4842
        %v4844 = vpop.f32.mrb[0].mxu0
        %4845 = vmatprep.mubr.f32.mxu0 0.0
        %4846 = vmatmul.mubr.f32.gmra.mrb[0].mxu0 %v4680
        %v4847 = vpop.f32.mrb[0].mxu0
        %v4848 = vadd.f32 0.0, %v4847
        %v4849 = vpop.f32.mrb[0].mxu0
        %4850 = vmatprep.mubr.f32.mxu0 0.0
        %4851 = vmatmul.mubr.f32.gmra.mrb[0].mxu0 %v4681
        %v4852 = vpop.f32.mrb[0].mxu0
        %v4853 = vadd.f32 0.0, %v4852
        %v4854 = vpop.f32.mrb[0].mxu0
        %4855 = vmatprep.mubr.f32.mxu0 0.0
        %4856 = vmatmul.mubr.f32.gmra.mrb[0].mxu0 %v4682
        %v4857 = vpop.f32.mrb[0].mxu0
        %v4858 = vadd.f32 0.0, %v4857
        %v4859 = vpop.f32.mrb[0].mxu0
        %4860 = vmatprep.mubr.f32.mxu0 0.0
        %4861 = vmatmul.mubr.f32.gmra.mrb[0].mxu0 %v4683
        %v4862 = vpop.f32.mrb[0].mxu0
        %v4863 = vadd.f32 0.0, %v4862
        %v4864 = vpop.f32.mrb[0].mxu0
        %4865 = vmatprep.mubr.f32.mxu0 0.0
        %4866 = vmatmul.mubr.f32.gmra.mrb[0].mxu0 %v4684
        %v4867 = vpop.f32.mrb[0].mxu0
        %v4868 = vadd.f32 0.0, %v4867
        %v4869 = vpop.f32.mrb[0].mxu0
        %4870 = vmatprep.mubr.f32.mxu0 0.0
        %4871 = vmatmul.mubr.f32.gmra.mrb[0].mxu0 %v4685
        %v4872 = vpop.f32.mrb[0].mxu0
        %v4873 = vadd.f32 0.0, %v4872
        %v4874 = vpop.f32.mrb[0].mxu0
        %4875 = vmatprep.mubr.f32.mxu0 0.0
        %4876 = vmatmul.mubr.f32.gmra.mrb[0].mxu0 %v4686
        %v4877 = vpop.f32.mrb[0].mxu0
        %v4878 = vadd.f32 0.0, %v4877
        %v4879 = vpop.f32.mrb[0].mxu0
        %4880 = vmatprep.mubr.f32.mxu0 0.0
        %4881 = vmatmul.mubr.f32.gmra.mrb[0].mxu0 %v4687
        %v4882 = vpop.f32.mrb[0].mxu0
        %v4883 = vadd.f32 0.0, %v4882
        %v4884 = vpop.f32.mrb[0].mxu0
        %4885 = vmatprep.mubr.f32.mxu0 0.0
        %4886 = vmatmul.mubr.f32.gmra.mrb[0].mxu0 %v4688
        %v4887 = vpop.f32.mrb[0].mxu0
        %v4888 = vadd.f32 0.0, %v4887
        %v4889 = vpop.f32.mrb[0].mxu0
        %4890 = vmatprep.mubr.f32.mxu0 0.0
        %4891 = vmatmul.mubr.f32.gmra.mrb[0].mxu0 %v4689
        %v4892 = vpop.f32.mrb[0].mxu0
        %v4893 = vadd.f32 0.0, %v4892
        %v4894 = vpop.f32.mrb[0].mxu0
        %4895 = vmatprep.mubr.f32.mxu0 0.0
        %4896 = vmatmul.mubr.f32.gmra.mrb[0].mxu0 %v4690
        %v4897 = vpop.f32.mrb[0].mxu0
        %v4898 = vadd.f32 0.0, %v4897
        %v4899 = vpop.f32.mrb[0].mxu0
        %4900 = vmatprep.mubr.f32.mxu0 0.0
        %4901 = vmatmul.mubr.f32.gmra.mrb[0].mxu0 %v4691
        %v4902 = vpop.f32.mrb[0].mxu0
        %v4903 = vadd.f32 0.0, %v4902
        %v4904 = vpop.f32.mrb[0].mxu0
        %4905 = vmatprep.mubr.f32.mxu0 0.0
        %4906 = vmatmul.mubr.f32.gmra.mrb[0].mxu0 %v4692
        %v4907 = vpop.f32.mrb[0].mxu0
        %v4908 = vadd.f32 0.0, %v4907
        %v4909 = vpop.f32.mrb[0].mxu0
        %4910 = vmatprep.mubr.f32.mxu0 0.0
        %4911 = vmatmul.mubr.f32.gmra.mrb[0].mxu0 %v4693
        %v4912 = vpop.f32.mrb[0].mxu0
        %v4913 = vadd.f32 0.0, %v4912
        %v4914 = vpop.f32.mrb[0].mxu0
        %4915 = vmatprep.mubr.f32.mxu0 0.0
        %4916 = vmatmul.mubr.f32.gmra.mrb[0].mxu0 %v4694
        %v4917 = vpop.f32.mrb[0].mxu0
        %v4918 = vadd.f32 0.0, %v4917
        %v4919 = vpop.f32.mrb[0].mxu0
        %4920 = vmatprep.mubr.f32.mxu0 0.0
        %4921 = vmatmul.mubr.f32.gmra.mrb[0].mxu0 %v4695
        %v4922 = vpop.f32.mrb[0].mxu0
        %v4923 = vadd.f32 0.0, %v4922
        %v4924 = vpop.f32.mrb[0].mxu0
        %4925 = vmatprep.mubr.f32.mxu0 0.0
        %4926 = vmatmul.mubr.f32.gmra.mrb[0].mxu0 %v4696
        %v4927 = vpop.f32.mrb[0].mxu0
        %v4928 = vadd.f32 0.0, %v4927
        %v4929 = vpop.f32.mrb[0].mxu0
        %4930 = vmatprep.mubr.f32.mxu0 0.0
        %4931 = vmatmul.mubr.f32.gmra.mrb[0].mxu0 %v4697
        %v4932 = vpop.f32.mrb[0].mxu0
        %v4933 = vadd.f32 0.0, %v4932
        %v4934 = vpop.f32.mrb[0].mxu0
        %4935 = vmatprep.mubr.f32.mxu0 0.0
        %4936 = vmatmul.mubr.f32.gmra.mrb[0].mxu0 %v4698
        %v4937 = vpop.f32.mrb[0].mxu0
        %v4938 = vadd.f32 0.0, %v4937
        %v4939 = vpop.f32.mrb[0].mxu0
        %4940 = vmatprep.mubr.f32.mxu0 0.0
        %4941 = vmatmul.mubr.f32.gmra.mrb[0].mxu0 %v4699
        %v4942 = vpop.f32.mrb[0].mxu0
        %v4943 = vadd.f32 0.0, %v4942
        %v4944 = vpop.f32.mrb[0].mxu0
        %4945 = vmatprep.mubr.f32.mxu0 0.0
        %4946 = vmatmul.mubr.f32.gmra.mrb[0].mxu0 %v4700
        %v4947 = vpop.f32.mrb[0].mxu0
        %v4948 = vadd.f32 0.0, %v4947
        %v4949 = vpop.f32.mrb[0].mxu0
        %4950 = vmatprep.mubr.f32.mxu0 0.0
        %4951 = vmatmul.mubr.f32.gmra.mrb[0].mxu0 %v4701
        %v4952 = vpop.f32.mrb[0].mxu0
        %v4953 = vadd.f32 0.0, %v4952
        %v4954 = vpop.f32.mrb[0].mxu0
        %4955 = vmatprep.mubr.f32.mxu0 0.0
        %4956 = vmatmul.mubr.f32.gmra.mrb[0].mxu0 %v4702
        %v4957 = vpop.f32.mrb[0].mxu0
        %v4958 = vadd.f32 0.0, %v4957
        %v4959 = vpop.f32.mrb[0].mxu0
        %4960 = vmatprep.mubr.f32.mxu0 0.0
        %4961 = vmatmul.mubr.f32.gmra.mrb[0].mxu0 %v4703
        %v4962 = vpop.f32.mrb[0].mxu0
        %v4963 = vadd.f32 0.0, %v4962
        %v4964 = vpop.f32.mrb[0].mxu0
        %4965 = vdwg.mxu0
        %4966 = vmatprep.subr.mxu0 0.0
        %4967 = vmatpush1.msra.mxu0 %v4652
        %4968 = vmatprep.subr.mxu0 0.0
        %4969 = vmatpush1.msra.mxu0 %v4653
        %4970 = vmatprep.subr.mxu0 0.0
        %4971 = vmatpush1.msra.mxu0 %v4654
        %4972 = vmatprep.subr.mxu0 0.0
        %4973 = vmatpush1.msra.mxu0 %v4655
        %4974 = vmatprep.subr.mxu0 0.0
        %4975 = vmatpush1.msra.mxu0 %v4656
        %4976 = vmatprep.subr.mxu0 0.0
        %4977 = vmatpush1.msra.mxu0 %v4657
        %4978 = vmatprep.subr.mxu0 0.0
        %4979 = vmatpush1.msra.mxu0 %v4658
        %4980 = vmatprep.subr.mxu0 0.0
        %4981 = vmatpush1.msra.mxu0 %v4659
        %4982 = vmatprep.subr.mxu0 0.0
        %4983 = vmatpush1.msra.mxu0 %v4660
        %4984 = vmatprep.subr.mxu0 0.0
        %4985 = vmatpush1.msra.mxu0 %v4661
        %4986 = vmatprep.subr.mxu0 0.0
        %4987 = vmatpush1.msra.mxu0 %v4662
        %4988 = vmatprep.subr.mxu0 0.0
        %4989 = vmatpush1.msra.mxu0 %v4663
        %4990 = vmatprep.subr.mxu0 0.0
        %4991 = vmatpush1.msra.mxu0 %v4664
        %4992 = vmatprep.subr.mxu0 0.0
        %4993 = vmatpush1.msra.mxu0 %v4665
        %4994 = vmatprep.subr.mxu0 0.0
        %4995 = vmatpush1.msra.mxu0 %v4666
        %4996 = vmatprep.subr.mxu0 0.0
        %4997 = vmatpush1.msra.mxu0 %v4667
        %4998 = vmatprep.subr.mxu0 0.0
        %4999 = vmatpush1.msra.mxu0 0.0
        %5000 = vmatprep.subr.mxu0 0.0
        %5001 = vmatpush1.msra.mxu0 0.0
        %5002 = vmatprep.subr.mxu0 0.0
        %5003 = vmatpush1.msra.mxu0 0.0
        %5004 = vmatprep.subr.mxu0 0.0
        %5005 = vmatpush1.msra.mxu0 0.0
        %5006 = vmatprep.subr.mxu0 0.0
        %5007 = vmatpush1.msra.mxu0 0.0
        %5008 = vmatprep.subr.mxu0 0.0
        %5009 = vmatpush1.msra.mxu0 0.0
        %5010 = vmatprep.subr.mxu0 0.0
        %5011 = vmatpush1.msra.mxu0 0.0
        %5012 = vmatprep.subr.mxu0 0.0
        %5013 = vmatpush1.msra.mxu0 0.0
        %5014 = vmatprep.subr.mxu0 0.0
        %5015 = vmatpush1.msra.mxu0 0.0
        %5016 = vmatprep.subr.mxu0 0.0
        %5017 = vmatpush1.msra.mxu0 0.0
        %5018 = vmatprep.subr.mxu0 0.0
        %5019 = vmatpush1.msra.mxu0 0.0
        %5020 = vmatprep.subr.mxu0 0.0
        %5021 = vmatpush1.msra.mxu0 0.0
        %5022 = vmatprep.subr.mxu0 0.0
        %5023 = vmatpush1.msra.mxu0 0.0
        %5024 = vmatprep.subr.mxu0 0.0
        %5025 = vmatpush1.msra.mxu0 0.0
        %5026 = vmatprep.subr.mxu0 0.0
        %5027 = vmatpush1.msra.mxu0 0.0
        %5028 = vmatprep.subr.mxu0 0.0
        %5029 = vmatpush1.msra.mxu0 0.0
        %5030 = vmatprep.mubr.f32.mxu0 0.0
        %5031 = vmatmul.mubr.f32.gmra.mrb[0].mxu0 %v4616
        %v5032 = vpop.f32.mrb[0].mxu0
        %v5033 = vadd.f32 %v4788, %v5032
        %v5034 = vpop.f32.mrb[0].mxu0
        %5035 = vmatprep.mubr.f32.mxu0 0.0
        %5036 = vmatmul.mubr.f32.gmra.mrb[0].mxu0 %v4617
        %v5037 = vpop.f32.mrb[0].mxu0
        %v5038 = vadd.f32 %v4793, %v5037
        %v5039 = vpop.f32.mrb[0].mxu0
        %5040 = vmatprep.mubr.f32.mxu0 0.0
        %5041 = vmatmul.mubr.f32.gmra.mrb[0].mxu0 %v4618
        %v5042 = vpop.f32.mrb[0].mxu0
        %v5043 = vadd.f32 %v4798, %v5042
        %v5044 = vpop.f32.mrb[0].mxu0
        %5045 = vmatprep.mubr.f32.mxu0 0.0
        %5046 = vmatmul.mubr.f32.gmra.mrb[0].mxu0 %v4619
        %v5047 = vpop.f32.mrb[0].mxu0
        %v5048 = vadd.f32 %v4803, %v5047
        %v5049 = vpop.f32.mrb[0].mxu0
        %5050 = vmatprep.mubr.f32.mxu0 0.0
        %5051 = vmatmul.mubr.f32.gmra.mrb[0].mxu0 %v4620
        %v5052 = vpop.f32.mrb[0].mxu0
        %v5053 = vadd.f32 %v4808, %v5052
        %v5054 = vpop.f32.mrb[0].mxu0
        %5055 = vmatprep.mubr.f32.mxu0 0.0
        %5056 = vmatmul.mubr.f32.gmra.mrb[0].mxu0 %v4621
        %v5057 = vpop.f32.mrb[0].mxu0
        %v5058 = vadd.f32 %v4813, %v5057
        %v5059 = vpop.f32.mrb[0].mxu0
        %5060 = vmatprep.mubr.f32.mxu0 0.0
        %5061 = vmatmul.mubr.f32.gmra.mrb[0].mxu0 %v4622
        %v5062 = vpop.f32.mrb[0].mxu0
        %v5063 = vadd.f32 %v4818, %v5062
        %v5064 = vpop.f32.mrb[0].mxu0
        %5065 = vmatprep.mubr.f32.mxu0 0.0
        %5066 = vmatmul.mubr.f32.gmra.mrb[0].mxu0 %v4623
        %v5067 = vpop.f32.mrb[0].mxu0
        %v5068 = vadd.f32 %v4823, %v5067
        %v5069 = vpop.f32.mrb[0].mxu0
        %5070 = vmatprep.mubr.f32.mxu0 0.0
        %5071 = vmatmul.mubr.f32.gmra.mrb[0].mxu0 %v4624
        %v5072 = vpop.f32.mrb[0].mxu0
        %v5073 = vadd.f32 %v4828, %v5072
        %v5074 = vpop.f32.mrb[0].mxu0
        %5075 = vmatprep.mubr.f32.mxu0 0.0
        %5076 = vmatmul.mubr.f32.gmra.mrb[0].mxu0 %v4625
        %v5077 = vpop.f32.mrb[0].mxu0
        %v5078 = vadd.f32 %v4833, %v5077
        %v5079 = vpop.f32.mrb[0].mxu0
        %5080 = vmatprep.mubr.f32.mxu0 0.0
        %5081 = vmatmul.mubr.f32.gmra.mrb[0].mxu0 %v4626
        %v5082 = vpop.f32.mrb[0].mxu0
        %v5083 = vadd.f32 %v4838, %v5082
        %v5084 = vpop.f32.mrb[0].mxu0
        %5085 = vmatprep.mubr.f32.mxu0 0.0
        %5086 = vmatmul.mubr.f32.gmra.mrb[0].mxu0 %v4627
        %v5087 = vpop.f32.mrb[0].mxu0
        %v5088 = vadd.f32 %v4843, %v5087
        %v5089 = vpop.f32.mrb[0].mxu0
        %5090 = vmatprep.mubr.f32.mxu0 0.0
        %5091 = vmatmul.mubr.f32.gmra.mrb[0].mxu0 %v4628
        %v5092 = vpop.f32.mrb[0].mxu0
        %v5093 = vadd.f32 %v4848, %v5092
        %v5094 = vpop.f32.mrb[0].mxu0
        %5095 = vmatprep.mubr.f32.mxu0 0.0
        %5096 = vmatmul.mubr.f32.gmra.mrb[0].mxu0 %v4629
        %v5097 = vpop.f32.mrb[0].mxu0
        %v5098 = vadd.f32 %v4853, %v5097
        %v5099 = vpop.f32.mrb[0].mxu0
        %5100 = vmatprep.mubr.f32.mxu0 0.0
        %5101 = vmatmul.mubr.f32.gmra.mrb[0].mxu0 %v4630
        %v5102 = vpop.f32.mrb[0].mxu0
        %v5103 = vadd.f32 %v4858, %v5102
        %v5104 = vpop.f32.mrb[0].mxu0
        %5105 = vmatprep.mubr.f32.mxu0 0.0
        %5106 = vmatmul.mubr.f32.gmra.mrb[0].mxu0 %v4631
        %v5107 = vpop.f32.mrb[0].mxu0
        %v5108 = vadd.f32 %v4863, %v5107
        %v5109 = vpop.f32.mrb[0].mxu0
        %5110 = vmatprep.mubr.f32.mxu0 0.0
        %5111 = vmatmul.mubr.f32.gmra.mrb[0].mxu0 %v4632
        %v5112 = vpop.f32.mrb[0].mxu0
        %v5113 = vadd.f32 %v4868, %v5112
        %v5114 = vpop.f32.mrb[0].mxu0
        %5115 = vmatprep.mubr.f32.mxu0 0.0
        %5116 = vmatmul.mubr.f32.gmra.mrb[0].mxu0 %v4633
        %v5117 = vpop.f32.mrb[0].mxu0
        %v5118 = vadd.f32 %v4873, %v5117
        %v5119 = vpop.f32.mrb[0].mxu0
        %5120 = vmatprep.mubr.f32.mxu0 0.0
        %5121 = vmatmul.mubr.f32.gmra.mrb[0].mxu0 %v4634
        %v5122 = vpop.f32.mrb[0].mxu0
        %v5123 = vadd.f32 %v4878, %v5122
        %v5124 = vpop.f32.mrb[0].mxu0
        %5125 = vmatprep.mubr.f32.mxu0 0.0
        %5126 = vmatmul.mubr.f32.gmra.mrb[0].mxu0 %v4635
        %v5127 = vpop.f32.mrb[0].mxu0
        %v5128 = vadd.f32 %v4883, %v5127
        %v5129 = vpop.f32.mrb[0].mxu0
        %5130 = vmatprep.mubr.f32.mxu0 0.0
        %5131 = vmatmul.mubr.f32.gmra.mrb[0].mxu0 %v4636
        %v5132 = vpop.f32.mrb[0].mxu0
        %v5133 = vadd.f32 %v4888, %v5132
        %v5134 = vpop.f32.mrb[0].mxu0
        %5135 = vmatprep.mubr.f32.mxu0 0.0
        %5136 = vmatmul.mubr.f32.gmra.mrb[0].mxu0 %v4637
        %v5137 = vpop.f32.mrb[0].mxu0
        %v5138 = vadd.f32 %v4893, %v5137
        %v5139 = vpop.f32.mrb[0].mxu0
        %5140 = vmatprep.mubr.f32.mxu0 0.0
        %5141 = vmatmul.mubr.f32.gmra.mrb[0].mxu0 %v4638
        %v5142 = vpop.f32.mrb[0].mxu0
        %v5143 = vadd.f32 %v4898, %v5142
        %v5144 = vpop.f32.mrb[0].mxu0
        %5145 = vmatprep.mubr.f32.mxu0 0.0
        %5146 = vmatmul.mubr.f32.gmra.mrb[0].mxu0 %v4639
        %v5147 = vpop.f32.mrb[0].mxu0
        %v5148 = vadd.f32 %v4903, %v5147
        %v5149 = vpop.f32.mrb[0].mxu0
        %5150 = vmatprep.mubr.f32.mxu0 0.0
        %5151 = vmatmul.mubr.f32.gmra.mrb[0].mxu0 %v4640
        %v5152 = vpop.f32.mrb[0].mxu0
        %v5153 = vadd.f32 %v4908, %v5152
        %v5154 = vpop.f32.mrb[0].mxu0
        %5155 = vmatprep.mubr.f32.mxu0 0.0
        %5156 = vmatmul.mubr.f32.gmra.mrb[0].mxu0 %v4641
        %v5157 = vpop.f32.mrb[0].mxu0
        %v5158 = vadd.f32 %v4913, %v5157
        %v5159 = vpop.f32.mrb[0].mxu0
        %5160 = vmatprep.mubr.f32.mxu0 0.0
        %5161 = vmatmul.mubr.f32.gmra.mrb[0].mxu0 %v4642
        %v5162 = vpop.f32.mrb[0].mxu0
        %v5163 = vadd.f32 %v4918, %v5162
        %v5164 = vpop.f32.mrb[0].mxu0
        %5165 = vmatprep.mubr.f32.mxu0 0.0
        %5166 = vmatmul.mubr.f32.gmra.mrb[0].mxu0 %v4643
        %v5167 = vpop.f32.mrb[0].mxu0
        %v5168 = vadd.f32 %v4923, %v5167
        %v5169 = vpop.f32.mrb[0].mxu0
        %5170 = vmatprep.mubr.f32.mxu0 0.0
        %5171 = vmatmul.mubr.f32.gmra.mrb[0].mxu0 %v4644
        %v5172 = vpop.f32.mrb[0].mxu0
        %v5173 = vadd.f32 %v4928, %v5172
        %v5174 = vpop.f32.mrb[0].mxu0
        %5175 = vmatprep.mubr.f32.mxu0 0.0
        %5176 = vmatmul.mubr.f32.gmra.mrb[0].mxu0 %v4645
        %v5177 = vpop.f32.mrb[0].mxu0
        %v5178 = vadd.f32 %v4933, %v5177
        %v5179 = vpop.f32.mrb[0].mxu0
        %5180 = vmatprep.mubr.f32.mxu0 0.0
        %5181 = vmatmul.mubr.f32.gmra.mrb[0].mxu0 %v4646
        %v5182 = vpop.f32.mrb[0].mxu0
        %v5183 = vadd.f32 %v4938, %v5182
        %v5184 = vpop.f32.mrb[0].mxu0
        %5185 = vmatprep.mubr.f32.mxu0 0.0
        %5186 = vmatmul.mubr.f32.gmra.mrb[0].mxu0 %v4647
        %v5187 = vpop.f32.mrb[0].mxu0
        %v5188 = vadd.f32 %v4943, %v5187
        %v5189 = vpop.f32.mrb[0].mxu0
        %5190 = vmatprep.mubr.f32.mxu0 0.0
        %5191 = vmatmul.mubr.f32.gmra.mrb[0].mxu0 %v4648
        %v5192 = vpop.f32.mrb[0].mxu0
        %v5193 = vadd.f32 %v4948, %v5192
        %v5194 = vpop.f32.mrb[0].mxu0
        %5195 = vmatprep.mubr.f32.mxu0 0.0
        %5196 = vmatmul.mubr.f32.gmra.mrb[0].mxu0 %v4649
        %v5197 = vpop.f32.mrb[0].mxu0
        %v5198 = vadd.f32 %v4953, %v5197
        %v5199 = vpop.f32.mrb[0].mxu0
        %5200 = vmatprep.mubr.f32.mxu0 0.0
        %5201 = vmatmul.mubr.f32.gmra.mrb[0].mxu0 %v4650
        %v5202 = vpop.f32.mrb[0].mxu0
        %v5203 = vadd.f32 %v4958, %v5202
        %v5204 = vpop.f32.mrb[0].mxu0
        %5205 = vmatprep.mubr.f32.mxu0 0.0
        %5206 = vmatmul.mubr.f32.gmra.mrb[0].mxu0 %v4651
        %v5207 = vpop.f32.mrb[0].mxu0
        %v5208 = vadd.f32 %v4963, %v5207
        %v5209 = vpop.f32.mrb[0].mxu0
        %5210 = vdwg.mxu0
        %v5211 = vld [vmem:[#allocation3 + $0x7] sm:$0xff]
        %v5212 = vld [vmem:[#allocation3 + $0xf] sm:$0xff]
        %v5213 = vld [vmem:[#allocation3 + $0x17] sm:$0xff]
        %v5214 = vld [vmem:[#allocation3 + $0x1f] sm:$0xff]
        %v5215 = vld [vmem:[#allocation3 + $0x27] sm:$0xff]
        %v5216 = vld [vmem:[#allocation3 + $0x2f] sm:$0xff]
        %v5217 = vld [vmem:[#allocation3 + $0x37] sm:$0xff]
        %v5218 = vld [vmem:[#allocation3 + $0x3f] sm:$0xff]
        %v5219 = vld [vmem:[#allocation3 + $0x47] sm:$0xff]
        %v5220 = vld [vmem:[#allocation3 + $0x4f] sm:$0xff]
        %v5221 = vld [vmem:[#allocation3 + $0x57] sm:$0xff]
        %v5222 = vld [vmem:[#allocation3 + $0x5f] sm:$0xff]
        %v5223 = vld [vmem:[#allocation3 + $0x67] sm:$0xff]
        %v5224 = vld [vmem:[#allocation3 + $0x6f] sm:$0xff]
        %v5225 = vld [vmem:[#allocation3 + $0x77] sm:$0xff]
        %v5226 = vld [vmem:[#allocation3 + $0x7f] sm:$0xff]
        %v5227 = vld [vmem:[#allocation3 + $0x87] sm:$0xff]
        %v5228 = vld [vmem:[#allocation3 + $0x8f] sm:$0xff]
        %v5229 = vld [vmem:[#allocation3 + $0x97] sm:$0xff]
        %v5230 = vld [vmem:[#allocation3 + $0x9f] sm:$0xff]
        %v5231 = vld [vmem:[#allocation3 + $0xa7] sm:$0xff]
        %v5232 = vld [vmem:[#allocation3 + $0xaf] sm:$0xff]
        %v5233 = vld [vmem:[#allocation3 + $0xb7] sm:$0xff]
        %v5234 = vld [vmem:[#allocation3 + $0xbf] sm:$0xff]
        %v5235 = vld [vmem:[#allocation3 + $0xc7] sm:$0xff]
        %v5236 = vld [vmem:[#allocation3 + $0xcf] sm:$0xff]
        %v5237 = vld [vmem:[#allocation3 + $0xd7] sm:$0xff]
        %v5238 = vld [vmem:[#allocation3 + $0xdf] sm:$0xff]
        %v5239 = vld [vmem:[#allocation3 + $0xe7] sm:$0xff]
        %v5240 = vld [vmem:[#allocation3 + $0xef] sm:$0xff]
        %v5241 = vld [vmem:[#allocation3 + $0xf7] sm:$0xff]
        %v5242 = vld [vmem:[#allocation3 + $0xff] sm:$0xff]
        %v5243 = vld [vmem:[#allocation3 + $0x107] sm:$0xff]
        %v5244 = vld [vmem:[#allocation3 + $0x10f] sm:$0xff]
        %v5245 = vld [vmem:[#allocation3 + $0x117] sm:$0xff]
        %v5246 = vld [vmem:[#allocation3 + $0x11f] sm:$0xff]
        %s5247 = scalar_lea.vmem [#allocation4], 256
        %v5248 = vld [vmem:[%s5247] sm:$0xff]
        %v5249 = vld [vmem:[%s5247 + $0x8] sm:$0xff]
        %v5250 = vld [vmem:[%s5247 + $0x10] sm:$0xff]
        %v5251 = vld [vmem:[%s5247 + $0x18] sm:$0xff]
        %v5252 = vld [vmem:[%s5247 + $0x20] sm:$0xff]
        %v5253 = vld [vmem:[%s5247 + $0x28] sm:$0xff]
        %v5254 = vld [vmem:[%s5247 + $0x30] sm:$0xff]
        %v5255 = vld [vmem:[%s5247 + $0x38] sm:$0xff]
        %v5256 = vld [vmem:[%s5247 + $0x40] sm:$0xff]
        %v5257 = vld [vmem:[%s5247 + $0x48] sm:$0xff]
        %v5258 = vld [vmem:[%s5247 + $0x50] sm:$0xff]
        %v5259 = vld [vmem:[%s5247 + $0x58] sm:$0xff]
        %v5260 = vld [vmem:[%s5247 + $0x60] sm:$0xff]
        %v5261 = vld [vmem:[%s5247 + $0x68] sm:$0xff]
        %v5262 = vld [vmem:[%s5247 + $0x70] sm:$0xff]
        %v5263 = vld [vmem:[%s5247 + $0x78] sm:$0xff]
        %5264 = vmatprep.subr.mxu0 0.0
        %5265 = vmatpush1.msra.mxu0 %v5248
        %5266 = vmatprep.subr.mxu0 0.0
        %5267 = vmatpush1.msra.mxu0 %v5249
        %5268 = vmatprep.subr.mxu0 0.0
        %5269 = vmatpush1.msra.mxu0 %v5250
        %5270 = vmatprep.subr.mxu0 0.0
        %5271 = vmatpush1.msra.mxu0 %v5251
        %5272 = vmatprep.subr.mxu0 0.0
        %5273 = vmatpush1.msra.mxu0 %v5252
        %5274 = vmatprep.subr.mxu0 0.0
        %5275 = vmatpush1.msra.mxu0 %v5253
        %5276 = vmatprep.subr.mxu0 0.0
        %5277 = vmatpush1.msra.mxu0 %v5254
        %5278 = vmatprep.subr.mxu0 0.0
        %5279 = vmatpush1.msra.mxu0 %v5255
        %5280 = vmatprep.subr.mxu0 0.0
        %5281 = vmatpush1.msra.mxu0 %v5256
        %5282 = vmatprep.subr.mxu0 0.0
        %5283 = vmatpush1.msra.mxu0 %v5257
        %5284 = vmatprep.subr.mxu0 0.0
        %5285 = vmatpush1.msra.mxu0 %v5258
        %5286 = vmatprep.subr.mxu0 0.0
        %5287 = vmatpush1.msra.mxu0 %v5259
        %5288 = vmatprep.subr.mxu0 0.0
        %5289 = vmatpush1.msra.mxu0 %v5260
        %5290 = vmatprep.subr.mxu0 0.0
        %5291 = vmatpush1.msra.mxu0 %v5261
        %5292 = vmatprep.subr.mxu0 0.0
        %5293 = vmatpush1.msra.mxu0 %v5262
        %5294 = vmatprep.subr.mxu0 0.0
        %5295 = vmatpush1.msra.mxu0 %v5263
        %5296 = vmatprep.subr.mxu0 0.0
        %5297 = vmatpush1.msra.mxu0 0.0
        %5298 = vmatprep.subr.mxu0 0.0
        %5299 = vmatpush1.msra.mxu0 0.0
        %5300 = vmatprep.subr.mxu0 0.0
        %5301 = vmatpush1.msra.mxu0 0.0
        %5302 = vmatprep.subr.mxu0 0.0
        %5303 = vmatpush1.msra.mxu0 0.0
        %5304 = vmatprep.subr.mxu0 0.0
        %5305 = vmatpush1.msra.mxu0 0.0
        %5306 = vmatprep.subr.mxu0 0.0
        %5307 = vmatpush1.msra.mxu0 0.0
        %5308 = vmatprep.subr.mxu0 0.0
        %5309 = vmatpush1.msra.mxu0 0.0
        %5310 = vmatprep.subr.mxu0 0.0
        %5311 = vmatpush1.msra.mxu0 0.0
        %5312 = vmatprep.subr.mxu0 0.0
        %5313 = vmatpush1.msra.mxu0 0.0
        %5314 = vmatprep.subr.mxu0 0.0
        %5315 = vmatpush1.msra.mxu0 0.0
        %5316 = vmatprep.subr.mxu0 0.0
        %5317 = vmatpush1.msra.mxu0 0.0
        %5318 = vmatprep.subr.mxu0 0.0
        %5319 = vmatpush1.msra.mxu0 0.0
        %5320 = vmatprep.subr.mxu0 0.0
        %5321 = vmatpush1.msra.mxu0 0.0
        %5322 = vmatprep.subr.mxu0 0.0
        %5323 = vmatpush1.msra.mxu0 0.0
        %5324 = vmatprep.subr.mxu0 0.0
        %5325 = vmatpush1.msra.mxu0 0.0
        %5326 = vmatprep.subr.mxu0 0.0
        %5327 = vmatpush1.msra.mxu0 0.0
        %5328 = vmatprep.mubr.f32.mxu0 0.0
        %5329 = vmatmul.mubr.f32.gmra.mrb[0].mxu0 %v5211
        %v5330 = vpop.f32.mrb[0].mxu0
        %v5331 = vadd.f32 0.0, %v5330
        %v5332 = vpop.f32.mrb[0].mxu0
        %5333 = vmatprep.mubr.f32.mxu0 0.0
        %5334 = vmatmul.mubr.f32.gmra.mrb[0].mxu0 %v5212
        %v5335 = vpop.f32.mrb[0].mxu0
        %v5336 = vadd.f32 0.0, %v5335
        %v5337 = vpop.f32.mrb[0].mxu0
        %5338 = vmatprep.mubr.f32.mxu0 0.0
        %5339 = vmatmul.mubr.f32.gmra.mrb[0].mxu0 %v5213
        %v5340 = vpop.f32.mrb[0].mxu0
        %v5341 = vadd.f32 0.0, %v5340
        %v5342 = vpop.f32.mrb[0].mxu0
        %5343 = vmatprep.mubr.f32.mxu0 0.0
        %5344 = vmatmul.mubr.f32.gmra.mrb[0].mxu0 %v5214
        %v5345 = vpop.f32.mrb[0].mxu0
        %v5346 = vadd.f32 0.0, %v5345
        %v5347 = vpop.f32.mrb[0].mxu0
        %5348 = vmatprep.mubr.f32.mxu0 0.0
        %5349 = vmatmul.mubr.f32.gmra.mrb[0].mxu0 %v5215
        %v5350 = vpop.f32.mrb[0].mxu0
        %v5351 = vadd.f32 0.0, %v5350
        %v5352 = vpop.f32.mrb[0].mxu0
        %5353 = vmatprep.mubr.f32.mxu0 0.0
        %5354 = vmatmul.mubr.f32.gmra.mrb[0].mxu0 %v5216
        %v5355 = vpop.f32.mrb[0].mxu0
        %v5356 = vadd.f32 0.0, %v5355
        %v5357 = vpop.f32.mrb[0].mxu0
        %5358 = vmatprep.mubr.f32.mxu0 0.0
        %5359 = vmatmul.mubr.f32.gmra.mrb[0].mxu0 %v5217
        %v5360 = vpop.f32.mrb[0].mxu0
        %v5361 = vadd.f32 0.0, %v5360
        %v5362 = vpop.f32.mrb[0].mxu0
        %5363 = vmatprep.mubr.f32.mxu0 0.0
        %5364 = vmatmul.mubr.f32.gmra.mrb[0].mxu0 %v5218
        %v5365 = vpop.f32.mrb[0].mxu0
        %v5366 = vadd.f32 0.0, %v5365
        %v5367 = vpop.f32.mrb[0].mxu0
        %5368 = vmatprep.mubr.f32.mxu0 0.0
        %5369 = vmatmul.mubr.f32.gmra.mrb[0].mxu0 %v5219
        %v5370 = vpop.f32.mrb[0].mxu0
        %v5371 = vadd.f32 0.0, %v5370
        %v5372 = vpop.f32.mrb[0].mxu0
        %5373 = vmatprep.mubr.f32.mxu0 0.0
        %5374 = vmatmul.mubr.f32.gmra.mrb[0].mxu0 %v5220
        %v5375 = vpop.f32.mrb[0].mxu0
        %v5376 = vadd.f32 0.0, %v5375
        %v5377 = vpop.f32.mrb[0].mxu0
        %5378 = vmatprep.mubr.f32.mxu0 0.0
        %5379 = vmatmul.mubr.f32.gmra.mrb[0].mxu0 %v5221
        %v5380 = vpop.f32.mrb[0].mxu0
        %v5381 = vadd.f32 0.0, %v5380
        %v5382 = vpop.f32.mrb[0].mxu0
        %5383 = vmatprep.mubr.f32.mxu0 0.0
        %5384 = vmatmul.mubr.f32.gmra.mrb[0].mxu0 %v5222
        %v5385 = vpop.f32.mrb[0].mxu0
        %v5386 = vadd.f32 0.0, %v5385
        %v5387 = vpop.f32.mrb[0].mxu0
        %5388 = vmatprep.mubr.f32.mxu0 0.0
        %5389 = vmatmul.mubr.f32.gmra.mrb[0].mxu0 %v5223
        %v5390 = vpop.f32.mrb[0].mxu0
        %v5391 = vadd.f32 0.0, %v5390
        %v5392 = vpop.f32.mrb[0].mxu0
        %5393 = vmatprep.mubr.f32.mxu0 0.0
        %5394 = vmatmul.mubr.f32.gmra.mrb[0].mxu0 %v5224
        %v5395 = vpop.f32.mrb[0].mxu0
        %v5396 = vadd.f32 0.0, %v5395
        %v5397 = vpop.f32.mrb[0].mxu0
        %5398 = vmatprep.mubr.f32.mxu0 0.0
        %5399 = vmatmul.mubr.f32.gmra.mrb[0].mxu0 %v5225
        %v5400 = vpop.f32.mrb[0].mxu0
        %v5401 = vadd.f32 0.0, %v5400
        %v5402 = vpop.f32.mrb[0].mxu0
        %5403 = vmatprep.mubr.f32.mxu0 0.0
        %5404 = vmatmul.mubr.f32.gmra.mrb[0].mxu0 %v5226
        %v5405 = vpop.f32.mrb[0].mxu0
        %v5406 = vadd.f32 0.0, %v5405
        %v5407 = vpop.f32.mrb[0].mxu0
        %5408 = vmatprep.mubr.f32.mxu0 0.0
        %5409 = vmatmul.mubr.f32.gmra.mrb[0].mxu0 %v5227
        %v5410 = vpop.f32.mrb[0].mxu0
        %v5411 = vadd.f32 0.0, %v5410
        %v5412 = vpop.f32.mrb[0].mxu0
        %5413 = vmatprep.mubr.f32.mxu0 0.0
        %5414 = vmatmul.mubr.f32.gmra.mrb[0].mxu0 %v5228
        %v5415 = vpop.f32.mrb[0].mxu0
        %v5416 = vadd.f32 0.0, %v5415
        %v5417 = vpop.f32.mrb[0].mxu0
        %5418 = vmatprep.mubr.f32.mxu0 0.0
        %5419 = vmatmul.mubr.f32.gmra.mrb[0].mxu0 %v5229
        %v5420 = vpop.f32.mrb[0].mxu0
        %v5421 = vadd.f32 0.0, %v5420
        %v5422 = vpop.f32.mrb[0].mxu0
        %5423 = vmatprep.mubr.f32.mxu0 0.0
        %5424 = vmatmul.mubr.f32.gmra.mrb[0].mxu0 %v5230
        %v5425 = vpop.f32.mrb[0].mxu0
        %v5426 = vadd.f32 0.0, %v5425
        %v5427 = vpop.f32.mrb[0].mxu0
        %5428 = vmatprep.mubr.f32.mxu0 0.0
        %5429 = vmatmul.mubr.f32.gmra.mrb[0].mxu0 %v5231
        %v5430 = vpop.f32.mrb[0].mxu0
        %v5431 = vadd.f32 0.0, %v5430
        %v5432 = vpop.f32.mrb[0].mxu0
        %5433 = vmatprep.mubr.f32.mxu0 0.0
        %5434 = vmatmul.mubr.f32.gmra.mrb[0].mxu0 %v5232
        %v5435 = vpop.f32.mrb[0].mxu0
        %v5436 = vadd.f32 0.0, %v5435
        %v5437 = vpop.f32.mrb[0].mxu0
        %5438 = vmatprep.mubr.f32.mxu0 0.0
        %5439 = vmatmul.mubr.f32.gmra.mrb[0].mxu0 %v5233
        %v5440 = vpop.f32.mrb[0].mxu0
        %v5441 = vadd.f32 0.0, %v5440
        %v5442 = vpop.f32.mrb[0].mxu0
        %5443 = vmatprep.mubr.f32.mxu0 0.0
        %5444 = vmatmul.mubr.f32.gmra.mrb[0].mxu0 %v5234
        %v5445 = vpop.f32.mrb[0].mxu0
        %v5446 = vadd.f32 0.0, %v5445
        %v5447 = vpop.f32.mrb[0].mxu0
        %5448 = vmatprep.mubr.f32.mxu0 0.0
        %5449 = vmatmul.mubr.f32.gmra.mrb[0].mxu0 %v5235
        %v5450 = vpop.f32.mrb[0].mxu0
        %v5451 = vadd.f32 0.0, %v5450
        %v5452 = vpop.f32.mrb[0].mxu0
        %5453 = vmatprep.mubr.f32.mxu0 0.0
        %5454 = vmatmul.mubr.f32.gmra.mrb[0].mxu0 %v5236
        %v5455 = vpop.f32.mrb[0].mxu0
        %v5456 = vadd.f32 0.0, %v5455
        %v5457 = vpop.f32.mrb[0].mxu0
        %5458 = vmatprep.mubr.f32.mxu0 0.0
        %5459 = vmatmul.mubr.f32.gmra.mrb[0].mxu0 %v5237
        %v5460 = vpop.f32.mrb[0].mxu0
        %v5461 = vadd.f32 0.0, %v5460
        %v5462 = vpop.f32.mrb[0].mxu0
        %5463 = vmatprep.mubr.f32.mxu0 0.0
        %5464 = vmatmul.mubr.f32.gmra.mrb[0].mxu0 %v5238
        %v5465 = vpop.f32.mrb[0].mxu0
        %v5466 = vadd.f32 0.0, %v5465
        %v5467 = vpop.f32.mrb[0].mxu0
        %5468 = vmatprep.mubr.f32.mxu0 0.0
        %5469 = vmatmul.mubr.f32.gmra.mrb[0].mxu0 %v5239
        %v5470 = vpop.f32.mrb[0].mxu0
        %v5471 = vadd.f32 0.0, %v5470
        %v5472 = vpop.f32.mrb[0].mxu0
        %5473 = vmatprep.mubr.f32.mxu0 0.0
        %5474 = vmatmul.mubr.f32.gmra.mrb[0].mxu0 %v5240
        %v5475 = vpop.f32.mrb[0].mxu0
        %v5476 = vadd.f32 0.0, %v5475
        %v5477 = vpop.f32.mrb[0].mxu0
        %5478 = vmatprep.mubr.f32.mxu0 0.0
        %5479 = vmatmul.mubr.f32.gmra.mrb[0].mxu0 %v5241
        %v5480 = vpop.f32.mrb[0].mxu0
        %v5481 = vadd.f32 0.0, %v5480
        %v5482 = vpop.f32.mrb[0].mxu0
        %5483 = vmatprep.mubr.f32.mxu0 0.0
        %5484 = vmatmul.mubr.f32.gmra.mrb[0].mxu0 %v5242
        %v5485 = vpop.f32.mrb[0].mxu0
        %v5486 = vadd.f32 0.0, %v5485
        %v5487 = vpop.f32.mrb[0].mxu0
        %5488 = vmatprep.mubr.f32.mxu0 0.0
        %5489 = vmatmul.mubr.f32.gmra.mrb[0].mxu0 %v5243
        %v5490 = vpop.f32.mrb[0].mxu0
        %v5491 = vadd.f32 0.0, %v5490
        %v5492 = vpop.f32.mrb[0].mxu0
        %5493 = vmatprep.mubr.f32.mxu0 0.0
        %5494 = vmatmul.mubr.f32.gmra.mrb[0].mxu0 %v5244
        %v5495 = vpop.f32.mrb[0].mxu0
        %v5496 = vadd.f32 0.0, %v5495
        %v5497 = vpop.f32.mrb[0].mxu0
        %5498 = vmatprep.mubr.f32.mxu0 0.0
        %5499 = vmatmul.mubr.f32.gmra.mrb[0].mxu0 %v5245
        %v5500 = vpop.f32.mrb[0].mxu0
        %v5501 = vadd.f32 0.0, %v5500
        %v5502 = vpop.f32.mrb[0].mxu0
        %5503 = vmatprep.mubr.f32.mxu0 0.0
        %5504 = vmatmul.mubr.f32.gmra.mrb[0].mxu0 %v5246
        %v5505 = vpop.f32.mrb[0].mxu0
        %v5506 = vadd.f32 0.0, %v5505
        %v5507 = vpop.f32.mrb[0].mxu0
        %5508 = vdwg.mxu0
        %v5509 = vadd.f32 %v5033, %v5331
        %v5510 = vadd.f32 %v5038, %v5336
        %v5511 = vadd.f32 %v5043, %v5341
        %v5512 = vadd.f32 %v5048, %v5346
        %v5513 = vadd.f32 %v5053, %v5351
        %v5514 = vadd.f32 %v5058, %v5356
        %v5515 = vadd.f32 %v5063, %v5361
        %v5516 = vadd.f32 %v5068, %v5366
        %v5517 = vadd.f32 %v5073, %v5371
        %v5518 = vadd.f32 %v5078, %v5376
        %v5519 = vadd.f32 %v5083, %v5381
        %v5520 = vadd.f32 %v5088, %v5386
        %v5521 = vadd.f32 %v5093, %v5391
        %v5522 = vadd.f32 %v5098, %v5396
        %v5523 = vadd.f32 %v5103, %v5401
        %v5524 = vadd.f32 %v5108, %v5406
        %v5525 = vadd.f32 %v5113, %v5411
        %v5526 = vadd.f32 %v5118, %v5416
        %v5527 = vadd.f32 %v5123, %v5421
        %v5528 = vadd.f32 %v5128, %v5426
        %v5529 = vadd.f32 %v5133, %v5431
        %v5530 = vadd.f32 %v5138, %v5436
        %v5531 = vadd.f32 %v5143, %v5441
        %v5532 = vadd.f32 %v5148, %v5446
        %v5533 = vadd.f32 %v5153, %v5451
        %v5534 = vadd.f32 %v5158, %v5456
        %v5535 = vadd.f32 %v5163, %v5461
        %v5536 = vadd.f32 %v5168, %v5466
        %v5537 = vadd.f32 %v5173, %v5471
        %v5538 = vadd.f32 %v5178, %v5476
        %v5539 = vadd.f32 %v5183, %v5481
        %v5540 = vadd.f32 %v5188, %v5486
        %v5541 = vadd.f32 %v5193, %v5491
        %v5542 = vadd.f32 %v5198, %v5496
        %v5543 = vadd.f32 %v5203, %v5501
        %v5544 = vadd.f32 %v5208, %v5506
        %v5545 = vld [vmem:[#allocation3 + $0x17] sm:$0xff]
        %v5546 = vld [vmem:[#allocation3 + $0x1f] sm:$0xff]
        %v5547 = vld [vmem:[#allocation3 + $0x27] sm:$0xff]
        %v5548 = vld [vmem:[#allocation3 + $0x2f] sm:$0xff]
        %v5549 = vld [vmem:[#allocation3 + $0x37] sm:$0xff]
        %v5550 = vld [vmem:[#allocation3 + $0x3f] sm:$0xff]
        %v5551 = vld [vmem:[#allocation3 + $0x47] sm:$0xff]
        %v5552 = vld [vmem:[#allocation3 + $0x4f] sm:$0xff]
        %v5553 = vld [vmem:[#allocation3 + $0x57] sm:$0xff]
        %v5554 = vld [vmem:[#allocation3 + $0x5f] sm:$0xff]
        %v5555 = vld [vmem:[#allocation3 + $0x67] sm:$0xff]
        %v5556 = vld [vmem:[#allocation3 + $0x6f] sm:$0xff]
        %v5557 = vld [vmem:[#allocation3 + $0x77] sm:$0xff]
        %v5558 = vld [vmem:[#allocation3 + $0x7f] sm:$0xff]
        %v5559 = vld [vmem:[#allocation3 + $0x87] sm:$0xff]
        %v5560 = vld [vmem:[#allocation3 + $0x8f] sm:$0xff]
        %v5561 = vld [vmem:[#allocation3 + $0x97] sm:$0xff]
        %v5562 = vld [vmem:[#allocation3 + $0x9f] sm:$0xff]
        %v5563 = vld [vmem:[#allocation3 + $0xa7] sm:$0xff]
        %v5564 = vld [vmem:[#allocation3 + $0xaf] sm:$0xff]
        %v5565 = vld [vmem:[#allocation3 + $0xb7] sm:$0xff]
        %v5566 = vld [vmem:[#allocation3 + $0xbf] sm:$0xff]
        %v5567 = vld [vmem:[#allocation3 + $0xc7] sm:$0xff]
        %v5568 = vld [vmem:[#allocation3 + $0xcf] sm:$0xff]
        %v5569 = vld [vmem:[#allocation3 + $0xd7] sm:$0xff]
        %v5570 = vld [vmem:[#allocation3 + $0xdf] sm:$0xff]
        %v5571 = vld [vmem:[#allocation3 + $0xe7] sm:$0xff]
        %v5572 = vld [vmem:[#allocation3 + $0xef] sm:$0xff]
        %v5573 = vld [vmem:[#allocation3 + $0xf7] sm:$0xff]
        %v5574 = vld [vmem:[#allocation3 + $0xff] sm:$0xff]
        %v5575 = vld [vmem:[#allocation3 + $0x107] sm:$0xff]
        %v5576 = vld [vmem:[#allocation3 + $0x10f] sm:$0xff]
        %v5577 = vld [vmem:[#allocation3 + $0x117] sm:$0xff]
        %v5578 = vld [vmem:[#allocation3 + $0x11f] sm:$0xff]
        %v5579 = vld [vmem:[#allocation3 + $0x127] sm:$0xff]
        %v5580 = vld [vmem:[#allocation3 + $0x12f] sm:$0xff]
        %s5581 = scalar_lea.vmem [#allocation4], 384
        %v5582 = vld [vmem:[%s5581] sm:$0xff]
        %v5583 = vld [vmem:[%s5581 + $0x8] sm:$0xff]
        %v5584 = vld [vmem:[%s5581 + $0x10] sm:$0xff]
        %v5585 = vld [vmem:[%s5581 + $0x18] sm:$0xff]
        %v5586 = vld [vmem:[%s5581 + $0x20] sm:$0xff]
        %v5587 = vld [vmem:[%s5581 + $0x28] sm:$0xff]
        %v5588 = vld [vmem:[%s5581 + $0x30] sm:$0xff]
        %v5589 = vld [vmem:[%s5581 + $0x38] sm:$0xff]
        %v5590 = vld [vmem:[%s5581 + $0x40] sm:$0xff]
        %v5591 = vld [vmem:[%s5581 + $0x48] sm:$0xff]
        %v5592 = vld [vmem:[%s5581 + $0x50] sm:$0xff]
        %v5593 = vld [vmem:[%s5581 + $0x58] sm:$0xff]
        %v5594 = vld [vmem:[%s5581 + $0x60] sm:$0xff]
        %v5595 = vld [vmem:[%s5581 + $0x68] sm:$0xff]
        %v5596 = vld [vmem:[%s5581 + $0x70] sm:$0xff]
        %v5597 = vld [vmem:[%s5581 + $0x78] sm:$0xff]
        %5598 = vmatprep.subr.mxu0 0.0
        %5599 = vmatpush1.msra.mxu0 %v5582
        %5600 = vmatprep.subr.mxu0 0.0
        %5601 = vmatpush1.msra.mxu0 %v5583
        %5602 = vmatprep.subr.mxu0 0.0
        %5603 = vmatpush1.msra.mxu0 %v5584
        %5604 = vmatprep.subr.mxu0 0.0
        %5605 = vmatpush1.msra.mxu0 %v5585
        %5606 = vmatprep.subr.mxu0 0.0
        %5607 = vmatpush1.msra.mxu0 %v5586
        %5608 = vmatprep.subr.mxu0 0.0
        %5609 = vmatpush1.msra.mxu0 %v5587
        %5610 = vmatprep.subr.mxu0 0.0
        %5611 = vmatpush1.msra.mxu0 %v5588
        %5612 = vmatprep.subr.mxu0 0.0
        %5613 = vmatpush1.msra.mxu0 %v5589
        %5614 = vmatprep.subr.mxu0 0.0
        %5615 = vmatpush1.msra.mxu0 %v5590
        %5616 = vmatprep.subr.mxu0 0.0
        %5617 = vmatpush1.msra.mxu0 %v5591
        %5618 = vmatprep.subr.mxu0 0.0
        %5619 = vmatpush1.msra.mxu0 %v5592
        %5620 = vmatprep.subr.mxu0 0.0
        %5621 = vmatpush1.msra.mxu0 %v5593
        %5622 = vmatprep.subr.mxu0 0.0
        %5623 = vmatpush1.msra.mxu0 %v5594
        %5624 = vmatprep.subr.mxu0 0.0
        %5625 = vmatpush1.msra.mxu0 %v5595
        %5626 = vmatprep.subr.mxu0 0.0
        %5627 = vmatpush1.msra.mxu0 %v5596
        %5628 = vmatprep.subr.mxu0 0.0
        %5629 = vmatpush1.msra.mxu0 %v5597
        %5630 = vmatprep.subr.mxu0 0.0
        %5631 = vmatpush1.msra.mxu0 0.0
        %5632 = vmatprep.subr.mxu0 0.0
        %5633 = vmatpush1.msra.mxu0 0.0
        %5634 = vmatprep.subr.mxu0 0.0
        %5635 = vmatpush1.msra.mxu0 0.0
        %5636 = vmatprep.subr.mxu0 0.0
        %5637 = vmatpush1.msra.mxu0 0.0
        %5638 = vmatprep.subr.mxu0 0.0
        %5639 = vmatpush1.msra.mxu0 0.0
        %5640 = vmatprep.subr.mxu0 0.0
        %5641 = vmatpush1.msra.mxu0 0.0
        %5642 = vmatprep.subr.mxu0 0.0
        %5643 = vmatpush1.msra.mxu0 0.0
        %5644 = vmatprep.subr.mxu0 0.0
        %5645 = vmatpush1.msra.mxu0 0.0
        %5646 = vmatprep.subr.mxu0 0.0
        %5647 = vmatpush1.msra.mxu0 0.0
        %5648 = vmatprep.subr.mxu0 0.0
        %5649 = vmatpush1.msra.mxu0 0.0
        %5650 = vmatprep.subr.mxu0 0.0
        %5651 = vmatpush1.msra.mxu0 0.0
        %5652 = vmatprep.subr.mxu0 0.0
        %5653 = vmatpush1.msra.mxu0 0.0
        %5654 = vmatprep.subr.mxu0 0.0
        %5655 = vmatpush1.msra.mxu0 0.0
        %5656 = vmatprep.subr.mxu0 0.0
        %5657 = vmatpush1.msra.mxu0 0.0
        %5658 = vmatprep.subr.mxu0 0.0
        %5659 = vmatpush1.msra.mxu0 0.0
        %5660 = vmatprep.subr.mxu0 0.0
        %5661 = vmatpush1.msra.mxu0 0.0
        %5662 = vmatprep.mubr.f32.mxu0 0.0
        %5663 = vmatmul.mubr.f32.gmra.mrb[0].mxu0 %v5545
        %v5664 = vpop.f32.mrb[0].mxu0
        %v5665 = vadd.f32 0.0, %v5664
        %v5666 = vpop.f32.mrb[0].mxu0
        %5667 = vmatprep.mubr.f32.mxu0 0.0
        %5668 = vmatmul.mubr.f32.gmra.mrb[0].mxu0 %v5546
        %v5669 = vpop.f32.mrb[0].mxu0
        %v5670 = vadd.f32 0.0, %v5669
        %v5671 = vpop.f32.mrb[0].mxu0
        %5672 = vmatprep.mubr.f32.mxu0 0.0
        %5673 = vmatmul.mubr.f32.gmra.mrb[0].mxu0 %v5547
        %v5674 = vpop.f32.mrb[0].mxu0
        %v5675 = vadd.f32 0.0, %v5674
        %v5676 = vpop.f32.mrb[0].mxu0
        %5677 = vmatprep.mubr.f32.mxu0 0.0
        %5678 = vmatmul.mubr.f32.gmra.mrb[0].mxu0 %v5548
        %v5679 = vpop.f32.mrb[0].mxu0
        %v5680 = vadd.f32 0.0, %v5679
        %v5681 = vpop.f32.mrb[0].mxu0
        %5682 = vmatprep.mubr.f32.mxu0 0.0
        %5683 = vmatmul.mubr.f32.gmra.mrb[0].mxu0 %v5549
        %v5684 = vpop.f32.mrb[0].mxu0
        %v5685 = vadd.f32 0.0, %v5684
        %v5686 = vpop.f32.mrb[0].mxu0
        %5687 = vmatprep.mubr.f32.mxu0 0.0
        %5688 = vmatmul.mubr.f32.gmra.mrb[0].mxu0 %v5550
        %v5689 = vpop.f32.mrb[0].mxu0
        %v5690 = vadd.f32 0.0, %v5689
        %v5691 = vpop.f32.mrb[0].mxu0
        %5692 = vmatprep.mubr.f32.mxu0 0.0
        %5693 = vmatmul.mubr.f32.gmra.mrb[0].mxu0 %v5551
        %v5694 = vpop.f32.mrb[0].mxu0
        %v5695 = vadd.f32 0.0, %v5694
        %v5696 = vpop.f32.mrb[0].mxu0
        %5697 = vmatprep.mubr.f32.mxu0 0.0
        %5698 = vmatmul.mubr.f32.gmra.mrb[0].mxu0 %v5552
        %v5699 = vpop.f32.mrb[0].mxu0
        %v5700 = vadd.f32 0.0, %v5699
        %v5701 = vpop.f32.mrb[0].mxu0
        %5702 = vmatprep.mubr.f32.mxu0 0.0
        %5703 = vmatmul.mubr.f32.gmra.mrb[0].mxu0 %v5553
        %v5704 = vpop.f32.mrb[0].mxu0
        %v5705 = vadd.f32 0.0, %v5704
        %v5706 = vpop.f32.mrb[0].mxu0
        %5707 = vmatprep.mubr.f32.mxu0 0.0
        %5708 = vmatmul.mubr.f32.gmra.mrb[0].mxu0 %v5554
        %v5709 = vpop.f32.mrb[0].mxu0
        %v5710 = vadd.f32 0.0, %v5709
        %v5711 = vpop.f32.mrb[0].mxu0
        %5712 = vmatprep.mubr.f32.mxu0 0.0
        %5713 = vmatmul.mubr.f32.gmra.mrb[0].mxu0 %v5555
        %v5714 = vpop.f32.mrb[0].mxu0
        %v5715 = vadd.f32 0.0, %v5714
        %v5716 = vpop.f32.mrb[0].mxu0
        %5717 = vmatprep.mubr.f32.mxu0 0.0
        %5718 = vmatmul.mubr.f32.gmra.mrb[0].mxu0 %v5556
        %v5719 = vpop.f32.mrb[0].mxu0
        %v5720 = vadd.f32 0.0, %v5719
        %v5721 = vpop.f32.mrb[0].mxu0
        %5722 = vmatprep.mubr.f32.mxu0 0.0
        %5723 = vmatmul.mubr.f32.gmra.mrb[0].mxu0 %v5557
        %v5724 = vpop.f32.mrb[0].mxu0
        %v5725 = vadd.f32 0.0, %v5724
        %v5726 = vpop.f32.mrb[0].mxu0
        %5727 = vmatprep.mubr.f32.mxu0 0.0
        %5728 = vmatmul.mubr.f32.gmra.mrb[0].mxu0 %v5558
        %v5729 = vpop.f32.mrb[0].mxu0
        %v5730 = vadd.f32 0.0, %v5729
        %v5731 = vpop.f32.mrb[0].mxu0
        %5732 = vmatprep.mubr.f32.mxu0 0.0
        %5733 = vmatmul.mubr.f32.gmra.mrb[0].mxu0 %v5559
        %v5734 = vpop.f32.mrb[0].mxu0
        %v5735 = vadd.f32 0.0, %v5734
        %v5736 = vpop.f32.mrb[0].mxu0
        %5737 = vmatprep.mubr.f32.mxu0 0.0
        %5738 = vmatmul.mubr.f32.gmra.mrb[0].mxu0 %v5560
        %v5739 = vpop.f32.mrb[0].mxu0
        %v5740 = vadd.f32 0.0, %v5739
        %v5741 = vpop.f32.mrb[0].mxu0
        %5742 = vmatprep.mubr.f32.mxu0 0.0
        %5743 = vmatmul.mubr.f32.gmra.mrb[0].mxu0 %v5561
        %v5744 = vpop.f32.mrb[0].mxu0
        %v5745 = vadd.f32 0.0, %v5744
        %v5746 = vpop.f32.mrb[0].mxu0
        %5747 = vmatprep.mubr.f32.mxu0 0.0
        %5748 = vmatmul.mubr.f32.gmra.mrb[0].mxu0 %v5562
        %v5749 = vpop.f32.mrb[0].mxu0
        %v5750 = vadd.f32 0.0, %v5749
        %v5751 = vpop.f32.mrb[0].mxu0
        %5752 = vmatprep.mubr.f32.mxu0 0.0
        %5753 = vmatmul.mubr.f32.gmra.mrb[0].mxu0 %v5563
        %v5754 = vpop.f32.mrb[0].mxu0
        %v5755 = vadd.f32 0.0, %v5754
        %v5756 = vpop.f32.mrb[0].mxu0
        %5757 = vmatprep.mubr.f32.mxu0 0.0
        %5758 = vmatmul.mubr.f32.gmra.mrb[0].mxu0 %v5564
        %v5759 = vpop.f32.mrb[0].mxu0
        %v5760 = vadd.f32 0.0, %v5759
        %v5761 = vpop.f32.mrb[0].mxu0
        %5762 = vmatprep.mubr.f32.mxu0 0.0
        %5763 = vmatmul.mubr.f32.gmra.mrb[0].mxu0 %v5565
        %v5764 = vpop.f32.mrb[0].mxu0
        %v5765 = vadd.f32 0.0, %v5764
        %v5766 = vpop.f32.mrb[0].mxu0
        %5767 = vmatprep.mubr.f32.mxu0 0.0
        %5768 = vmatmul.mubr.f32.gmra.mrb[0].mxu0 %v5566
        %v5769 = vpop.f32.mrb[0].mxu0
        %v5770 = vadd.f32 0.0, %v5769
        %v5771 = vpop.f32.mrb[0].mxu0
        %5772 = vmatprep.mubr.f32.mxu0 0.0
        %5773 = vmatmul.mubr.f32.gmra.mrb[0].mxu0 %v5567
        %v5774 = vpop.f32.mrb[0].mxu0
        %v5775 = vadd.f32 0.0, %v5774
        %v5776 = vpop.f32.mrb[0].mxu0
        %5777 = vmatprep.mubr.f32.mxu0 0.0
        %5778 = vmatmul.mubr.f32.gmra.mrb[0].mxu0 %v5568
        %v5779 = vpop.f32.mrb[0].mxu0
        %v5780 = vadd.f32 0.0, %v5779
        %v5781 = vpop.f32.mrb[0].mxu0
        %5782 = vmatprep.mubr.f32.mxu0 0.0
        %5783 = vmatmul.mubr.f32.gmra.mrb[0].mxu0 %v5569
        %v5784 = vpop.f32.mrb[0].mxu0
        %v5785 = vadd.f32 0.0, %v5784
        %v5786 = vpop.f32.mrb[0].mxu0
        %5787 = vmatprep.mubr.f32.mxu0 0.0
        %5788 = vmatmul.mubr.f32.gmra.mrb[0].mxu0 %v5570
        %v5789 = vpop.f32.mrb[0].mxu0
        %v5790 = vadd.f32 0.0, %v5789
        %v5791 = vpop.f32.mrb[0].mxu0
        %5792 = vmatprep.mubr.f32.mxu0 0.0
        %5793 = vmatmul.mubr.f32.gmra.mrb[0].mxu0 %v5571
        %v5794 = vpop.f32.mrb[0].mxu0
        %v5795 = vadd.f32 0.0, %v5794
        %v5796 = vpop.f32.mrb[0].mxu0
        %5797 = vmatprep.mubr.f32.mxu0 0.0
        %5798 = vmatmul.mubr.f32.gmra.mrb[0].mxu0 %v5572
        %v5799 = vpop.f32.mrb[0].mxu0
        %v5800 = vadd.f32 0.0, %v5799
        %v5801 = vpop.f32.mrb[0].mxu0
        %5802 = vmatprep.mubr.f32.mxu0 0.0
        %5803 = vmatmul.mubr.f32.gmra.mrb[0].mxu0 %v5573
        %v5804 = vpop.f32.mrb[0].mxu0
        %v5805 = vadd.f32 0.0, %v5804
        %v5806 = vpop.f32.mrb[0].mxu0
        %5807 = vmatprep.mubr.f32.mxu0 0.0
        %5808 = vmatmul.mubr.f32.gmra.mrb[0].mxu0 %v5574
        %v5809 = vpop.f32.mrb[0].mxu0
        %v5810 = vadd.f32 0.0, %v5809
        %v5811 = vpop.f32.mrb[0].mxu0
        %5812 = vmatprep.mubr.f32.mxu0 0.0
        %5813 = vmatmul.mubr.f32.gmra.mrb[0].mxu0 %v5575
        %v5814 = vpop.f32.mrb[0].mxu0
        %v5815 = vadd.f32 0.0, %v5814
        %v5816 = vpop.f32.mrb[0].mxu0
        %5817 = vmatprep.mubr.f32.mxu0 0.0
        %5818 = vmatmul.mubr.f32.gmra.mrb[0].mxu0 %v5576
        %v5819 = vpop.f32.mrb[0].mxu0
        %v5820 = vadd.f32 0.0, %v5819
        %v5821 = vpop.f32.mrb[0].mxu0
        %5822 = vmatprep.mubr.f32.mxu0 0.0
        %5823 = vmatmul.mubr.f32.gmra.mrb[0].mxu0 %v5577
        %v5824 = vpop.f32.mrb[0].mxu0
        %v5825 = vadd.f32 0.0, %v5824
        %v5826 = vpop.f32.mrb[0].mxu0
        %5827 = vmatprep.mubr.f32.mxu0 0.0
        %5828 = vmatmul.mubr.f32.gmra.mrb[0].mxu0 %v5578
        %v5829 = vpop.f32.mrb[0].mxu0
        %v5830 = vadd.f32 0.0, %v5829
        %v5831 = vpop.f32.mrb[0].mxu0
        %5832 = vmatprep.mubr.f32.mxu0 0.0
        %5833 = vmatmul.mubr.f32.gmra.mrb[0].mxu0 %v5579
        %v5834 = vpop.f32.mrb[0].mxu0
        %v5835 = vadd.f32 0.0, %v5834
        %v5836 = vpop.f32.mrb[0].mxu0
        %5837 = vmatprep.mubr.f32.mxu0 0.0
        %5838 = vmatmul.mubr.f32.gmra.mrb[0].mxu0 %v5580
        %v5839 = vpop.f32.mrb[0].mxu0
        %v5840 = vadd.f32 0.0, %v5839
        %v5841 = vpop.f32.mrb[0].mxu0
        %5842 = vdwg.mxu0
        %v5843 = vadd.f32 %v5509, %v5665
        %v5844 = vadd.f32 %v5510, %v5670
        %v5845 = vadd.f32 %v5511, %v5675
        %v5846 = vadd.f32 %v5512, %v5680
        %v5847 = vadd.f32 %v5513, %v5685
        %v5848 = vadd.f32 %v5514, %v5690
        %v5849 = vadd.f32 %v5515, %v5695
        %v5850 = vadd.f32 %v5516, %v5700
        %v5851 = vadd.f32 %v5517, %v5705
        %v5852 = vadd.f32 %v5518, %v5710
        %v5853 = vadd.f32 %v5519, %v5715
        %v5854 = vadd.f32 %v5520, %v5720
        %v5855 = vadd.f32 %v5521, %v5725
        %v5856 = vadd.f32 %v5522, %v5730
        %v5857 = vadd.f32 %v5523, %v5735
        %v5858 = vadd.f32 %v5524, %v5740
        %v5859 = vadd.f32 %v5525, %v5745
        %v5860 = vadd.f32 %v5526, %v5750
        %v5861 = vadd.f32 %v5527, %v5755
        %v5862 = vadd.f32 %v5528, %v5760
        %v5863 = vadd.f32 %v5529, %v5765
        %v5864 = vadd.f32 %v5530, %v5770
        %v5865 = vadd.f32 %v5531, %v5775
        %v5866 = vadd.f32 %v5532, %v5780
        %v5867 = vadd.f32 %v5533, %v5785
        %v5868 = vadd.f32 %v5534, %v5790
        %v5869 = vadd.f32 %v5535, %v5795
        %v5870 = vadd.f32 %v5536, %v5800
        %v5871 = vadd.f32 %v5537, %v5805
        %v5872 = vadd.f32 %v5538, %v5810
        %v5873 = vadd.f32 %v5539, %v5815
        %v5874 = vadd.f32 %v5540, %v5820
        %v5875 = vadd.f32 %v5541, %v5825
        %v5876 = vadd.f32 %v5542, %v5830
        %v5877 = vadd.f32 %v5543, %v5835
        %v5878 = vadd.f32 %v5544, %v5840
        %v5879 = vld [vmem:[#allocation3 + $0x18] sm:$0xff]
        %v5880 = vld [vmem:[#allocation3 + $0x20] sm:$0xff]
        %v5881 = vld [vmem:[#allocation3 + $0x28] sm:$0xff]
        %v5882 = vld [vmem:[#allocation3 + $0x30] sm:$0xff]
        %v5883 = vld [vmem:[#allocation3 + $0x38] sm:$0xff]
        %v5884 = vld [vmem:[#allocation3 + $0x40] sm:$0xff]
        %v5885 = vld [vmem:[#allocation3 + $0x48] sm:$0xff]
        %v5886 = vld [vmem:[#allocation3 + $0x50] sm:$0xff]
        %v5887 = vld [vmem:[#allocation3 + $0x58] sm:$0xff]
        %v5888 = vld [vmem:[#allocation3 + $0x60] sm:$0xff]
        %v5889 = vld [vmem:[#allocation3 + $0x68] sm:$0xff]
        %v5890 = vld [vmem:[#allocation3 + $0x70] sm:$0xff]
        %v5891 = vld [vmem:[#allocation3 + $0x78] sm:$0xff]
        %v5892 = vld [vmem:[#allocation3 + $0x80] sm:$0xff]
        %v5893 = vld [vmem:[#allocation3 + $0x88] sm:$0xff]
        %v5894 = vld [vmem:[#allocation3 + $0x90] sm:$0xff]
        %v5895 = vld [vmem:[#allocation3 + $0x98] sm:$0xff]
        %v5896 = vld [vmem:[#allocation3 + $0xa0] sm:$0xff]
        %v5897 = vld [vmem:[#allocation3 + $0xa8] sm:$0xff]
        %v5898 = vld [vmem:[#allocation3 + $0xb0] sm:$0xff]
        %v5899 = vld [vmem:[#allocation3 + $0xb8] sm:$0xff]
        %v5900 = vld [vmem:[#allocation3 + $0xc0] sm:$0xff]
        %v5901 = vld [vmem:[#allocation3 + $0xc8] sm:$0xff]
        %v5902 = vld [vmem:[#allocation3 + $0xd0] sm:$0xff]
        %v5903 = vld [vmem:[#allocation3 + $0xd8] sm:$0xff]
        %v5904 = vld [vmem:[#allocation3 + $0xe0] sm:$0xff]
        %v5905 = vld [vmem:[#allocation3 + $0xe8] sm:$0xff]
        %v5906 = vld [vmem:[#allocation3 + $0xf0] sm:$0xff]
        %v5907 = vld [vmem:[#allocation3 + $0xf8] sm:$0xff]
        %v5908 = vld [vmem:[#allocation3 + $0x100] sm:$0xff]
        %v5909 = vld [vmem:[#allocation3 + $0x108] sm:$0xff]
        %v5910 = vld [vmem:[#allocation3 + $0x110] sm:$0xff]
        %v5911 = vld [vmem:[#allocation3 + $0x118] sm:$0xff]
        %v5912 = vld [vmem:[#allocation3 + $0x120] sm:$0xff]
        %v5913 = vld [vmem:[#allocation3 + $0x128] sm:$0xff]
        %v5914 = vld [vmem:[#allocation3 + $0x130] sm:$0xff]
        %s5915 = scalar_lea.vmem [#allocation4], 512
        %v5916 = vld [vmem:[%s5915] sm:$0xff]
        %v5917 = vld [vmem:[%s5915 + $0x8] sm:$0xff]
        %v5918 = vld [vmem:[%s5915 + $0x10] sm:$0xff]
        %v5919 = vld [vmem:[%s5915 + $0x18] sm:$0xff]
        %v5920 = vld [vmem:[%s5915 + $0x20] sm:$0xff]
        %v5921 = vld [vmem:[%s5915 + $0x28] sm:$0xff]
        %v5922 = vld [vmem:[%s5915 + $0x30] sm:$0xff]
        %v5923 = vld [vmem:[%s5915 + $0x38] sm:$0xff]
        %v5924 = vld [vmem:[%s5915 + $0x40] sm:$0xff]
        %v5925 = vld [vmem:[%s5915 + $0x48] sm:$0xff]
        %v5926 = vld [vmem:[%s5915 + $0x50] sm:$0xff]
        %v5927 = vld [vmem:[%s5915 + $0x58] sm:$0xff]
        %v5928 = vld [vmem:[%s5915 + $0x60] sm:$0xff]
        %v5929 = vld [vmem:[%s5915 + $0x68] sm:$0xff]
        %v5930 = vld [vmem:[%s5915 + $0x70] sm:$0xff]
        %v5931 = vld [vmem:[%s5915 + $0x78] sm:$0xff]
        %5932 = vmatprep.subr.mxu0 0.0
        %5933 = vmatpush1.msra.mxu0 %v5916
        %5934 = vmatprep.subr.mxu0 0.0
        %5935 = vmatpush1.msra.mxu0 %v5917
        %5936 = vmatprep.subr.mxu0 0.0
        %5937 = vmatpush1.msra.mxu0 %v5918
        %5938 = vmatprep.subr.mxu0 0.0
        %5939 = vmatpush1.msra.mxu0 %v5919
        %5940 = vmatprep.subr.mxu0 0.0
        %5941 = vmatpush1.msra.mxu0 %v5920
        %5942 = vmatprep.subr.mxu0 0.0
        %5943 = vmatpush1.msra.mxu0 %v5921
        %5944 = vmatprep.subr.mxu0 0.0
        %5945 = vmatpush1.msra.mxu0 %v5922
        %5946 = vmatprep.subr.mxu0 0.0
        %5947 = vmatpush1.msra.mxu0 %v5923
        %5948 = vmatprep.subr.mxu0 0.0
        %5949 = vmatpush1.msra.mxu0 %v5924
        %5950 = vmatprep.subr.mxu0 0.0
        %5951 = vmatpush1.msra.mxu0 %v5925
        %5952 = vmatprep.subr.mxu0 0.0
        %5953 = vmatpush1.msra.mxu0 %v5926
        %5954 = vmatprep.subr.mxu0 0.0
        %5955 = vmatpush1.msra.mxu0 %v5927
        %5956 = vmatprep.subr.mxu0 0.0
        %5957 = vmatpush1.msra.mxu0 %v5928
        %5958 = vmatprep.subr.mxu0 0.0
        %5959 = vmatpush1.msra.mxu0 %v5929
        %5960 = vmatprep.subr.mxu0 0.0
        %5961 = vmatpush1.msra.mxu0 %v5930
        %5962 = vmatprep.subr.mxu0 0.0
        %5963 = vmatpush1.msra.mxu0 %v5931
        %5964 = vmatprep.subr.mxu0 0.0
        %5965 = vmatpush1.msra.mxu0 0.0
        %5966 = vmatprep.subr.mxu0 0.0
        %5967 = vmatpush1.msra.mxu0 0.0
        %5968 = vmatprep.subr.mxu0 0.0
        %5969 = vmatpush1.msra.mxu0 0.0
        %5970 = vmatprep.subr.mxu0 0.0
        %5971 = vmatpush1.msra.mxu0 0.0
        %5972 = vmatprep.subr.mxu0 0.0
        %5973 = vmatpush1.msra.mxu0 0.0
        %5974 = vmatprep.subr.mxu0 0.0
        %5975 = vmatpush1.msra.mxu0 0.0
        %5976 = vmatprep.subr.mxu0 0.0
        %5977 = vmatpush1.msra.mxu0 0.0
        %5978 = vmatprep.subr.mxu0 0.0
        %5979 = vmatpush1.msra.mxu0 0.0
        %5980 = vmatprep.subr.mxu0 0.0
        %5981 = vmatpush1.msra.mxu0 0.0
        %5982 = vmatprep.subr.mxu0 0.0
        %5983 = vmatpush1.msra.mxu0 0.0
        %5984 = vmatprep.subr.mxu0 0.0
        %5985 = vmatpush1.msra.mxu0 0.0
        %5986 = vmatprep.subr.mxu0 0.0
        %5987 = vmatpush1.msra.mxu0 0.0
        %5988 = vmatprep.subr.mxu0 0.0
        %5989 = vmatpush1.msra.mxu0 0.0
        %5990 = vmatprep.subr.mxu0 0.0
        %5991 = vmatpush1.msra.mxu0 0.0
        %5992 = vmatprep.subr.mxu0 0.0
        %5993 = vmatpush1.msra.mxu0 0.0
        %5994 = vmatprep.subr.mxu0 0.0
        %5995 = vmatpush1.msra.mxu0 0.0
        %5996 = vmatprep.mubr.f32.mxu0 0.0
        %5997 = vmatmul.mubr.f32.gmra.mrb[0].mxu0 %v5879
        %v5998 = vpop.f32.mrb[0].mxu0
        %v5999 = vadd.f32 0.0, %v5998
        %v6000 = vpop.f32.mrb[0].mxu0
        %6001 = vmatprep.mubr.f32.mxu0 0.0
        %6002 = vmatmul.mubr.f32.gmra.mrb[0].mxu0 %v5880
        %v6003 = vpop.f32.mrb[0].mxu0
        %v6004 = vadd.f32 0.0, %v6003
        %v6005 = vpop.f32.mrb[0].mxu0
        %6006 = vmatprep.mubr.f32.mxu0 0.0
        %6007 = vmatmul.mubr.f32.gmra.mrb[0].mxu0 %v5881
        %v6008 = vpop.f32.mrb[0].mxu0
        %v6009 = vadd.f32 0.0, %v6008
        %v6010 = vpop.f32.mrb[0].mxu0
        %6011 = vmatprep.mubr.f32.mxu0 0.0
        %6012 = vmatmul.mubr.f32.gmra.mrb[0].mxu0 %v5882
        %v6013 = vpop.f32.mrb[0].mxu0
        %v6014 = vadd.f32 0.0, %v6013
        %v6015 = vpop.f32.mrb[0].mxu0
        %6016 = vmatprep.mubr.f32.mxu0 0.0
        %6017 = vmatmul.mubr.f32.gmra.mrb[0].mxu0 %v5883
        %v6018 = vpop.f32.mrb[0].mxu0
        %v6019 = vadd.f32 0.0, %v6018
        %v6020 = vpop.f32.mrb[0].mxu0
        %6021 = vmatprep.mubr.f32.mxu0 0.0
        %6022 = vmatmul.mubr.f32.gmra.mrb[0].mxu0 %v5884
        %v6023 = vpop.f32.mrb[0].mxu0
        %v6024 = vadd.f32 0.0, %v6023
        %v6025 = vpop.f32.mrb[0].mxu0
        %6026 = vmatprep.mubr.f32.mxu0 0.0
        %6027 = vmatmul.mubr.f32.gmra.mrb[0].mxu0 %v5885
        %v6028 = vpop.f32.mrb[0].mxu0
        %v6029 = vadd.f32 0.0, %v6028
        %v6030 = vpop.f32.mrb[0].mxu0
        %6031 = vmatprep.mubr.f32.mxu0 0.0
        %6032 = vmatmul.mubr.f32.gmra.mrb[0].mxu0 %v5886
        %v6033 = vpop.f32.mrb[0].mxu0
        %v6034 = vadd.f32 0.0, %v6033
        %v6035 = vpop.f32.mrb[0].mxu0
        %6036 = vmatprep.mubr.f32.mxu0 0.0
        %6037 = vmatmul.mubr.f32.gmra.mrb[0].mxu0 %v5887
        %v6038 = vpop.f32.mrb[0].mxu0
        %v6039 = vadd.f32 0.0, %v6038
        %v6040 = vpop.f32.mrb[0].mxu0
        %6041 = vmatprep.mubr.f32.mxu0 0.0
        %6042 = vmatmul.mubr.f32.gmra.mrb[0].mxu0 %v5888
        %v6043 = vpop.f32.mrb[0].mxu0
        %v6044 = vadd.f32 0.0, %v6043
        %v6045 = vpop.f32.mrb[0].mxu0
        %6046 = vmatprep.mubr.f32.mxu0 0.0
        %6047 = vmatmul.mubr.f32.gmra.mrb[0].mxu0 %v5889
        %v6048 = vpop.f32.mrb[0].mxu0
        %v6049 = vadd.f32 0.0, %v6048
        %v6050 = vpop.f32.mrb[0].mxu0
        %6051 = vmatprep.mubr.f32.mxu0 0.0
        %6052 = vmatmul.mubr.f32.gmra.mrb[0].mxu0 %v5890
        %v6053 = vpop.f32.mrb[0].mxu0
        %v6054 = vadd.f32 0.0, %v6053
        %v6055 = vpop.f32.mrb[0].mxu0
        %6056 = vmatprep.mubr.f32.mxu0 0.0
        %6057 = vmatmul.mubr.f32.gmra.mrb[0].mxu0 %v5891
        %v6058 = vpop.f32.mrb[0].mxu0
        %v6059 = vadd.f32 0.0, %v6058
        %v6060 = vpop.f32.mrb[0].mxu0
        %6061 = vmatprep.mubr.f32.mxu0 0.0
        %6062 = vmatmul.mubr.f32.gmra.mrb[0].mxu0 %v5892
        %v6063 = vpop.f32.mrb[0].mxu0
        %v6064 = vadd.f32 0.0, %v6063
        %v6065 = vpop.f32.mrb[0].mxu0
        %6066 = vmatprep.mubr.f32.mxu0 0.0
        %6067 = vmatmul.mubr.f32.gmra.mrb[0].mxu0 %v5893
        %v6068 = vpop.f32.mrb[0].mxu0
        %v6069 = vadd.f32 0.0, %v6068
        %v6070 = vpop.f32.mrb[0].mxu0
        %6071 = vmatprep.mubr.f32.mxu0 0.0
        %6072 = vmatmul.mubr.f32.gmra.mrb[0].mxu0 %v5894
        %v6073 = vpop.f32.mrb[0].mxu0
        %v6074 = vadd.f32 0.0, %v6073
        %v6075 = vpop.f32.mrb[0].mxu0
        %6076 = vmatprep.mubr.f32.mxu0 0.0
        %6077 = vmatmul.mubr.f32.gmra.mrb[0].mxu0 %v5895
        %v6078 = vpop.f32.mrb[0].mxu0
        %v6079 = vadd.f32 0.0, %v6078
        %v6080 = vpop.f32.mrb[0].mxu0
        %6081 = vmatprep.mubr.f32.mxu0 0.0
        %6082 = vmatmul.mubr.f32.gmra.mrb[0].mxu0 %v5896
        %v6083 = vpop.f32.mrb[0].mxu0
        %v6084 = vadd.f32 0.0, %v6083
        %v6085 = vpop.f32.mrb[0].mxu0
        %6086 = vmatprep.mubr.f32.mxu0 0.0
        %6087 = vmatmul.mubr.f32.gmra.mrb[0].mxu0 %v5897
        %v6088 = vpop.f32.mrb[0].mxu0
        %v6089 = vadd.f32 0.0, %v6088
        %v6090 = vpop.f32.mrb[0].mxu0
        %6091 = vmatprep.mubr.f32.mxu0 0.0
        %6092 = vmatmul.mubr.f32.gmra.mrb[0].mxu0 %v5898
        %v6093 = vpop.f32.mrb[0].mxu0
        %v6094 = vadd.f32 0.0, %v6093
        %v6095 = vpop.f32.mrb[0].mxu0
        %6096 = vmatprep.mubr.f32.mxu0 0.0
        %6097 = vmatmul.mubr.f32.gmra.mrb[0].mxu0 %v5899
        %v6098 = vpop.f32.mrb[0].mxu0
        %v6099 = vadd.f32 0.0, %v6098
        %v6100 = vpop.f32.mrb[0].mxu0
        %6101 = vmatprep.mubr.f32.mxu0 0.0
        %6102 = vmatmul.mubr.f32.gmra.mrb[0].mxu0 %v5900
        %v6103 = vpop.f32.mrb[0].mxu0
        %v6104 = vadd.f32 0.0, %v6103
        %v6105 = vpop.f32.mrb[0].mxu0
        %6106 = vmatprep.mubr.f32.mxu0 0.0
        %6107 = vmatmul.mubr.f32.gmra.mrb[0].mxu0 %v5901
        %v6108 = vpop.f32.mrb[0].mxu0
        %v6109 = vadd.f32 0.0, %v6108
        %v6110 = vpop.f32.mrb[0].mxu0
        %6111 = vmatprep.mubr.f32.mxu0 0.0
        %6112 = vmatmul.mubr.f32.gmra.mrb[0].mxu0 %v5902
        %v6113 = vpop.f32.mrb[0].mxu0
        %v6114 = vadd.f32 0.0, %v6113
        %v6115 = vpop.f32.mrb[0].mxu0
        %6116 = vmatprep.mubr.f32.mxu0 0.0
        %6117 = vmatmul.mubr.f32.gmra.mrb[0].mxu0 %v5903
        %v6118 = vpop.f32.mrb[0].mxu0
        %v6119 = vadd.f32 0.0, %v6118
        %v6120 = vpop.f32.mrb[0].mxu0
        %6121 = vmatprep.mubr.f32.mxu0 0.0
        %6122 = vmatmul.mubr.f32.gmra.mrb[0].mxu0 %v5904
        %v6123 = vpop.f32.mrb[0].mxu0
        %v6124 = vadd.f32 0.0, %v6123
        %v6125 = vpop.f32.mrb[0].mxu0
        %6126 = vmatprep.mubr.f32.mxu0 0.0
        %6127 = vmatmul.mubr.f32.gmra.mrb[0].mxu0 %v5905
        %v6128 = vpop.f32.mrb[0].mxu0
        %v6129 = vadd.f32 0.0, %v6128
        %v6130 = vpop.f32.mrb[0].mxu0
        %6131 = vmatprep.mubr.f32.mxu0 0.0
        %6132 = vmatmul.mubr.f32.gmra.mrb[0].mxu0 %v5906
        %v6133 = vpop.f32.mrb[0].mxu0
        %v6134 = vadd.f32 0.0, %v6133
        %v6135 = vpop.f32.mrb[0].mxu0
        %6136 = vmatprep.mubr.f32.mxu0 0.0
        %6137 = vmatmul.mubr.f32.gmra.mrb[0].mxu0 %v5907
        %v6138 = vpop.f32.mrb[0].mxu0
        %v6139 = vadd.f32 0.0, %v6138
        %v6140 = vpop.f32.mrb[0].mxu0
        %6141 = vmatprep.mubr.f32.mxu0 0.0
        %6142 = vmatmul.mubr.f32.gmra.mrb[0].mxu0 %v5908
        %v6143 = vpop.f32.mrb[0].mxu0
        %v6144 = vadd.f32 0.0, %v6143
        %v6145 = vpop.f32.mrb[0].mxu0
        %6146 = vmatprep.mubr.f32.mxu0 0.0
        %6147 = vmatmul.mubr.f32.gmra.mrb[0].mxu0 %v5909
        %v6148 = vpop.f32.mrb[0].mxu0
        %v6149 = vadd.f32 0.0, %v6148
        %v6150 = vpop.f32.mrb[0].mxu0
        %6151 = vmatprep.mubr.f32.mxu0 0.0
        %6152 = vmatmul.mubr.f32.gmra.mrb[0].mxu0 %v5910
        %v6153 = vpop.f32.mrb[0].mxu0
        %v6154 = vadd.f32 0.0, %v6153
        %v6155 = vpop.f32.mrb[0].mxu0
        %6156 = vmatprep.mubr.f32.mxu0 0.0
        %6157 = vmatmul.mubr.f32.gmra.mrb[0].mxu0 %v5911
        %v6158 = vpop.f32.mrb[0].mxu0
        %v6159 = vadd.f32 0.0, %v6158
        %v6160 = vpop.f32.mrb[0].mxu0
        %6161 = vmatprep.mubr.f32.mxu0 0.0
        %6162 = vmatmul.mubr.f32.gmra.mrb[0].mxu0 %v5912
        %v6163 = vpop.f32.mrb[0].mxu0
        %v6164 = vadd.f32 0.0, %v6163
        %v6165 = vpop.f32.mrb[0].mxu0
        %6166 = vmatprep.mubr.f32.mxu0 0.0
        %6167 = vmatmul.mubr.f32.gmra.mrb[0].mxu0 %v5913
        %v6168 = vpop.f32.mrb[0].mxu0
        %v6169 = vadd.f32 0.0, %v6168
        %v6170 = vpop.f32.mrb[0].mxu0
        %6171 = vmatprep.mubr.f32.mxu0 0.0
        %6172 = vmatmul.mubr.f32.gmra.mrb[0].mxu0 %v5914
        %v6173 = vpop.f32.mrb[0].mxu0
        %v6174 = vadd.f32 0.0, %v6173
        %v6175 = vpop.f32.mrb[0].mxu0
        %6176 = vdwg.mxu0
        %v6177 = vadd.f32 %v5843, %v5999
        %v6178 = vadd.f32 %v5844, %v6004
        %v6179 = vadd.f32 %v5845, %v6009
        %v6180 = vadd.f32 %v5846, %v6014
        %v6181 = vadd.f32 %v5847, %v6019
        %v6182 = vadd.f32 %v5848, %v6024
        %v6183 = vadd.f32 %v5849, %v6029
        %v6184 = vadd.f32 %v5850, %v6034
        %v6185 = vadd.f32 %v5851, %v6039
        %v6186 = vadd.f32 %v5852, %v6044
        %v6187 = vadd.f32 %v5853, %v6049
        %v6188 = vadd.f32 %v5854, %v6054
        %v6189 = vadd.f32 %v5855, %v6059
        %v6190 = vadd.f32 %v5856, %v6064
        %v6191 = vadd.f32 %v5857, %v6069
        %v6192 = vadd.f32 %v5858, %v6074
        %v6193 = vadd.f32 %v5859, %v6079
        %v6194 = vadd.f32 %v5860, %v6084
        %v6195 = vadd.f32 %v5861, %v6089
        %v6196 = vadd.f32 %v5862, %v6094
        %v6197 = vadd.f32 %v5863, %v6099
        %v6198 = vadd.f32 %v5864, %v6104
        %v6199 = vadd.f32 %v5865, %v6109
        %v6200 = vadd.f32 %v5866, %v6114
        %v6201 = vadd.f32 %v5867, %v6119
        %v6202 = vadd.f32 %v5868, %v6124
        %v6203 = vadd.f32 %v5869, %v6129
        %v6204 = vadd.f32 %v5870, %v6134
        %v6205 = vadd.f32 %v5871, %v6139
        %v6206 = vadd.f32 %v5872, %v6144
        %v6207 = vadd.f32 %v5873, %v6149
        %v6208 = vadd.f32 %v5874, %v6154
        %v6209 = vadd.f32 %v5875, %v6159
        %v6210 = vadd.f32 %v5876, %v6164
        %v6211 = vadd.f32 %v5877, %v6169
        %v6212 = vadd.f32 %v5878, %v6174
        %v6213 = vld [vmem:[#allocation3 + $0x19] sm:$0xff]
        %v6214 = vld [vmem:[#allocation3 + $0x21] sm:$0xff]
        %v6215 = vld [vmem:[#allocation3 + $0x29] sm:$0xff]
        %v6216 = vld [vmem:[#allocation3 + $0x31] sm:$0xff]
        %v6217 = vld [vmem:[#allocation3 + $0x39] sm:$0xff]
        %v6218 = vld [vmem:[#allocation3 + $0x41] sm:$0xff]
        %v6219 = vld [vmem:[#allocation3 + $0x49] sm:$0xff]
        %v6220 = vld [vmem:[#allocation3 + $0x51] sm:$0xff]
        %v6221 = vld [vmem:[#allocation3 + $0x59] sm:$0xff]
        %v6222 = vld [vmem:[#allocation3 + $0x61] sm:$0xff]
        %v6223 = vld [vmem:[#allocation3 + $0x69] sm:$0xff]
        %v6224 = vld [vmem:[#allocation3 + $0x71] sm:$0xff]
        %v6225 = vld [vmem:[#allocation3 + $0x79] sm:$0xff]
        %v6226 = vld [vmem:[#allocation3 + $0x81] sm:$0xff]
        %v6227 = vld [vmem:[#allocation3 + $0x89] sm:$0xff]
        %v6228 = vld [vmem:[#allocation3 + $0x91] sm:$0xff]
        %v6229 = vld [vmem:[#allocation3 + $0x99] sm:$0xff]
        %v6230 = vld [vmem:[#allocation3 + $0xa1] sm:$0xff]
        %v6231 = vld [vmem:[#allocation3 + $0xa9] sm:$0xff]
        %v6232 = vld [vmem:[#allocation3 + $0xb1] sm:$0xff]
        %v6233 = vld [vmem:[#allocation3 + $0xb9] sm:$0xff]
        %v6234 = vld [vmem:[#allocation3 + $0xc1] sm:$0xff]
        %v6235 = vld [vmem:[#allocation3 + $0xc9] sm:$0xff]
        %v6236 = vld [vmem:[#allocation3 + $0xd1] sm:$0xff]
        %v6237 = vld [vmem:[#allocation3 + $0xd9] sm:$0xff]
        %v6238 = vld [vmem:[#allocation3 + $0xe1] sm:$0xff]
        %v6239 = vld [vmem:[#allocation3 + $0xe9] sm:$0xff]
        %v6240 = vld [vmem:[#allocation3 + $0xf1] sm:$0xff]
        %v6241 = vld [vmem:[#allocation3 + $0xf9] sm:$0xff]
        %v6242 = vld [vmem:[#allocation3 + $0x101] sm:$0xff]
        %v6243 = vld [vmem:[#allocation3 + $0x109] sm:$0xff]
        %v6244 = vld [vmem:[#allocation3 + $0x111] sm:$0xff]
        %v6245 = vld [vmem:[#allocation3 + $0x119] sm:$0xff]
        %v6246 = vld [vmem:[#allocation3 + $0x121] sm:$0xff]
        %v6247 = vld [vmem:[#allocation3 + $0x129] sm:$0xff]
        %v6248 = vld [vmem:[#allocation3 + $0x131] sm:$0xff]
        %s6249 = scalar_lea.vmem [#allocation4], 640
        %v6250 = vld [vmem:[%s6249] sm:$0xff]
        %v6251 = vld [vmem:[%s6249 + $0x8] sm:$0xff]
        %v6252 = vld [vmem:[%s6249 + $0x10] sm:$0xff]
        %v6253 = vld [vmem:[%s6249 + $0x18] sm:$0xff]
        %v6254 = vld [vmem:[%s6249 + $0x20] sm:$0xff]
        %v6255 = vld [vmem:[%s6249 + $0x28] sm:$0xff]
        %v6256 = vld [vmem:[%s6249 + $0x30] sm:$0xff]
        %v6257 = vld [vmem:[%s6249 + $0x38] sm:$0xff]
        %v6258 = vld [vmem:[%s6249 + $0x40] sm:$0xff]
        %v6259 = vld [vmem:[%s6249 + $0x48] sm:$0xff]
        %v6260 = vld [vmem:[%s6249 + $0x50] sm:$0xff]
        %v6261 = vld [vmem:[%s6249 + $0x58] sm:$0xff]
        %v6262 = vld [vmem:[%s6249 + $0x60] sm:$0xff]
        %v6263 = vld [vmem:[%s6249 + $0x68] sm:$0xff]
        %v6264 = vld [vmem:[%s6249 + $0x70] sm:$0xff]
        %v6265 = vld [vmem:[%s6249 + $0x78] sm:$0xff]
        %6266 = vmatprep.subr.mxu0 0.0
        %6267 = vmatpush1.msra.mxu0 %v6250
        %6268 = vmatprep.subr.mxu0 0.0
        %6269 = vmatpush1.msra.mxu0 %v6251
        %6270 = vmatprep.subr.mxu0 0.0
        %6271 = vmatpush1.msra.mxu0 %v6252
        %6272 = vmatprep.subr.mxu0 0.0
        %6273 = vmatpush1.msra.mxu0 %v6253
        %6274 = vmatprep.subr.mxu0 0.0
        %6275 = vmatpush1.msra.mxu0 %v6254
        %6276 = vmatprep.subr.mxu0 0.0
        %6277 = vmatpush1.msra.mxu0 %v6255
        %6278 = vmatprep.subr.mxu0 0.0
        %6279 = vmatpush1.msra.mxu0 %v6256
        %6280 = vmatprep.subr.mxu0 0.0
        %6281 = vmatpush1.msra.mxu0 %v6257
        %6282 = vmatprep.subr.mxu0 0.0
        %6283 = vmatpush1.msra.mxu0 %v6258
        %6284 = vmatprep.subr.mxu0 0.0
        %6285 = vmatpush1.msra.mxu0 %v6259
        %6286 = vmatprep.subr.mxu0 0.0
        %6287 = vmatpush1.msra.mxu0 %v6260
        %6288 = vmatprep.subr.mxu0 0.0
        %6289 = vmatpush1.msra.mxu0 %v6261
        %6290 = vmatprep.subr.mxu0 0.0
        %6291 = vmatpush1.msra.mxu0 %v6262
        %6292 = vmatprep.subr.mxu0 0.0
        %6293 = vmatpush1.msra.mxu0 %v6263
        %6294 = vmatprep.subr.mxu0 0.0
        %6295 = vmatpush1.msra.mxu0 %v6264
        %6296 = vmatprep.subr.mxu0 0.0
        %6297 = vmatpush1.msra.mxu0 %v6265
        %6298 = vmatprep.subr.mxu0 0.0
        %6299 = vmatpush1.msra.mxu0 0.0
        %6300 = vmatprep.subr.mxu0 0.0
        %6301 = vmatpush1.msra.mxu0 0.0
        %6302 = vmatprep.subr.mxu0 0.0
        %6303 = vmatpush1.msra.mxu0 0.0
        %6304 = vmatprep.subr.mxu0 0.0
        %6305 = vmatpush1.msra.mxu0 0.0
        %6306 = vmatprep.subr.mxu0 0.0
        %6307 = vmatpush1.msra.mxu0 0.0
        %6308 = vmatprep.subr.mxu0 0.0
        %6309 = vmatpush1.msra.mxu0 0.0
        %6310 = vmatprep.subr.mxu0 0.0
        %6311 = vmatpush1.msra.mxu0 0.0
        %6312 = vmatprep.subr.mxu0 0.0
        %6313 = vmatpush1.msra.mxu0 0.0
        %6314 = vmatprep.subr.mxu0 0.0
        %6315 = vmatpush1.msra.mxu0 0.0
        %6316 = vmatprep.subr.mxu0 0.0
        %6317 = vmatpush1.msra.mxu0 0.0
        %6318 = vmatprep.subr.mxu0 0.0
        %6319 = vmatpush1.msra.mxu0 0.0
        %6320 = vmatprep.subr.mxu0 0.0
        %6321 = vmatpush1.msra.mxu0 0.0
        %6322 = vmatprep.subr.mxu0 0.0
        %6323 = vmatpush1.msra.mxu0 0.0
        %6324 = vmatprep.subr.mxu0 0.0
        %6325 = vmatpush1.msra.mxu0 0.0
        %6326 = vmatprep.subr.mxu0 0.0
        %6327 = vmatpush1.msra.mxu0 0.0
        %6328 = vmatprep.subr.mxu0 0.0
        %6329 = vmatpush1.msra.mxu0 0.0
        %6330 = vmatprep.mubr.f32.mxu0 0.0
        %6331 = vmatmul.mubr.f32.gmra.mrb[0].mxu0 %v6213
        %v6332 = vpop.f32.mrb[0].mxu0
        %v6333 = vadd.f32 0.0, %v6332
        %v6334 = vpop.f32.mrb[0].mxu0
        %6335 = vmatprep.mubr.f32.mxu0 0.0
        %6336 = vmatmul.mubr.f32.gmra.mrb[0].mxu0 %v6214
        %v6337 = vpop.f32.mrb[0].mxu0
        %v6338 = vadd.f32 0.0, %v6337
        %v6339 = vpop.f32.mrb[0].mxu0
        %6340 = vmatprep.mubr.f32.mxu0 0.0
        %6341 = vmatmul.mubr.f32.gmra.mrb[0].mxu0 %v6215
        %v6342 = vpop.f32.mrb[0].mxu0
        %v6343 = vadd.f32 0.0, %v6342
        %v6344 = vpop.f32.mrb[0].mxu0
        %6345 = vmatprep.mubr.f32.mxu0 0.0
        %6346 = vmatmul.mubr.f32.gmra.mrb[0].mxu0 %v6216
        %v6347 = vpop.f32.mrb[0].mxu0
        %v6348 = vadd.f32 0.0, %v6347
        %v6349 = vpop.f32.mrb[0].mxu0
        %6350 = vmatprep.mubr.f32.mxu0 0.0
        %6351 = vmatmul.mubr.f32.gmra.mrb[0].mxu0 %v6217
        %v6352 = vpop.f32.mrb[0].mxu0
        %v6353 = vadd.f32 0.0, %v6352
        %v6354 = vpop.f32.mrb[0].mxu0
        %6355 = vmatprep.mubr.f32.mxu0 0.0
        %6356 = vmatmul.mubr.f32.gmra.mrb[0].mxu0 %v6218
        %v6357 = vpop.f32.mrb[0].mxu0
        %v6358 = vadd.f32 0.0, %v6357
        %v6359 = vpop.f32.mrb[0].mxu0
        %6360 = vmatprep.mubr.f32.mxu0 0.0
        %6361 = vmatmul.mubr.f32.gmra.mrb[0].mxu0 %v6219
        %v6362 = vpop.f32.mrb[0].mxu0
        %v6363 = vadd.f32 0.0, %v6362
        %v6364 = vpop.f32.mrb[0].mxu0
        %6365 = vmatprep.mubr.f32.mxu0 0.0
        %6366 = vmatmul.mubr.f32.gmra.mrb[0].mxu0 %v6220
        %v6367 = vpop.f32.mrb[0].mxu0
        %v6368 = vadd.f32 0.0, %v6367
        %v6369 = vpop.f32.mrb[0].mxu0
        %6370 = vmatprep.mubr.f32.mxu0 0.0
        %6371 = vmatmul.mubr.f32.gmra.mrb[0].mxu0 %v6221
        %v6372 = vpop.f32.mrb[0].mxu0
        %v6373 = vadd.f32 0.0, %v6372
        %v6374 = vpop.f32.mrb[0].mxu0
        %6375 = vmatprep.mubr.f32.mxu0 0.0
        %6376 = vmatmul.mubr.f32.gmra.mrb[0].mxu0 %v6222
        %v6377 = vpop.f32.mrb[0].mxu0
        %v6378 = vadd.f32 0.0, %v6377
        %v6379 = vpop.f32.mrb[0].mxu0
        %6380 = vmatprep.mubr.f32.mxu0 0.0
        %6381 = vmatmul.mubr.f32.gmra.mrb[0].mxu0 %v6223
        %v6382 = vpop.f32.mrb[0].mxu0
        %v6383 = vadd.f32 0.0, %v6382
        %v6384 = vpop.f32.mrb[0].mxu0
        %6385 = vmatprep.mubr.f32.mxu0 0.0
        %6386 = vmatmul.mubr.f32.gmra.mrb[0].mxu0 %v6224
        %v6387 = vpop.f32.mrb[0].mxu0
        %v6388 = vadd.f32 0.0, %v6387
        %v6389 = vpop.f32.mrb[0].mxu0
        %6390 = vmatprep.mubr.f32.mxu0 0.0
        %6391 = vmatmul.mubr.f32.gmra.mrb[0].mxu0 %v6225
        %v6392 = vpop.f32.mrb[0].mxu0
        %v6393 = vadd.f32 0.0, %v6392
        %v6394 = vpop.f32.mrb[0].mxu0
        %6395 = vmatprep.mubr.f32.mxu0 0.0
        %6396 = vmatmul.mubr.f32.gmra.mrb[0].mxu0 %v6226
        %v6397 = vpop.f32.mrb[0].mxu0
        %v6398 = vadd.f32 0.0, %v6397
        %v6399 = vpop.f32.mrb[0].mxu0
        %6400 = vmatprep.mubr.f32.mxu0 0.0
        %6401 = vmatmul.mubr.f32.gmra.mrb[0].mxu0 %v6227
        %v6402 = vpop.f32.mrb[0].mxu0
        %v6403 = vadd.f32 0.0, %v6402
        %v6404 = vpop.f32.mrb[0].mxu0
        %6405 = vmatprep.mubr.f32.mxu0 0.0
        %6406 = vmatmul.mubr.f32.gmra.mrb[0].mxu0 %v6228
        %v6407 = vpop.f32.mrb[0].mxu0
        %v6408 = vadd.f32 0.0, %v6407
        %v6409 = vpop.f32.mrb[0].mxu0
        %6410 = vmatprep.mubr.f32.mxu0 0.0
        %6411 = vmatmul.mubr.f32.gmra.mrb[0].mxu0 %v6229
        %v6412 = vpop.f32.mrb[0].mxu0
        %v6413 = vadd.f32 0.0, %v6412
        %v6414 = vpop.f32.mrb[0].mxu0
        %6415 = vmatprep.mubr.f32.mxu0 0.0
        %6416 = vmatmul.mubr.f32.gmra.mrb[0].mxu0 %v6230
        %v6417 = vpop.f32.mrb[0].mxu0
        %v6418 = vadd.f32 0.0, %v6417
        %v6419 = vpop.f32.mrb[0].mxu0
        %6420 = vmatprep.mubr.f32.mxu0 0.0
        %6421 = vmatmul.mubr.f32.gmra.mrb[0].mxu0 %v6231
        %v6422 = vpop.f32.mrb[0].mxu0
        %v6423 = vadd.f32 0.0, %v6422
        %v6424 = vpop.f32.mrb[0].mxu0
        %6425 = vmatprep.mubr.f32.mxu0 0.0
        %6426 = vmatmul.mubr.f32.gmra.mrb[0].mxu0 %v6232
        %v6427 = vpop.f32.mrb[0].mxu0
        %v6428 = vadd.f32 0.0, %v6427
        %v6429 = vpop.f32.mrb[0].mxu0
        %6430 = vmatprep.mubr.f32.mxu0 0.0
        %6431 = vmatmul.mubr.f32.gmra.mrb[0].mxu0 %v6233
        %v6432 = vpop.f32.mrb[0].mxu0
        %v6433 = vadd.f32 0.0, %v6432
        %v6434 = vpop.f32.mrb[0].mxu0
        %6435 = vmatprep.mubr.f32.mxu0 0.0
        %6436 = vmatmul.mubr.f32.gmra.mrb[0].mxu0 %v6234
        %v6437 = vpop.f32.mrb[0].mxu0
        %v6438 = vadd.f32 0.0, %v6437
        %v6439 = vpop.f32.mrb[0].mxu0
        %6440 = vmatprep.mubr.f32.mxu0 0.0
        %6441 = vmatmul.mubr.f32.gmra.mrb[0].mxu0 %v6235
        %v6442 = vpop.f32.mrb[0].mxu0
        %v6443 = vadd.f32 0.0, %v6442
        %v6444 = vpop.f32.mrb[0].mxu0
        %6445 = vmatprep.mubr.f32.mxu0 0.0
        %6446 = vmatmul.mubr.f32.gmra.mrb[0].mxu0 %v6236
        %v6447 = vpop.f32.mrb[0].mxu0
        %v6448 = vadd.f32 0.0, %v6447
        %v6449 = vpop.f32.mrb[0].mxu0
        %6450 = vmatprep.mubr.f32.mxu0 0.0
        %6451 = vmatmul.mubr.f32.gmra.mrb[0].mxu0 %v6237
        %v6452 = vpop.f32.mrb[0].mxu0
        %v6453 = vadd.f32 0.0, %v6452
        %v6454 = vpop.f32.mrb[0].mxu0
        %6455 = vmatprep.mubr.f32.mxu0 0.0
        %6456 = vmatmul.mubr.f32.gmra.mrb[0].mxu0 %v6238
        %v6457 = vpop.f32.mrb[0].mxu0
        %v6458 = vadd.f32 0.0, %v6457
        %v6459 = vpop.f32.mrb[0].mxu0
        %6460 = vmatprep.mubr.f32.mxu0 0.0
        %6461 = vmatmul.mubr.f32.gmra.mrb[0].mxu0 %v6239
        %v6462 = vpop.f32.mrb[0].mxu0
        %v6463 = vadd.f32 0.0, %v6462
        %v6464 = vpop.f32.mrb[0].mxu0
        %6465 = vmatprep.mubr.f32.mxu0 0.0
        %6466 = vmatmul.mubr.f32.gmra.mrb[0].mxu0 %v6240
        %v6467 = vpop.f32.mrb[0].mxu0
        %v6468 = vadd.f32 0.0, %v6467
        %v6469 = vpop.f32.mrb[0].mxu0
        %6470 = vmatprep.mubr.f32.mxu0 0.0
        %6471 = vmatmul.mubr.f32.gmra.mrb[0].mxu0 %v6241
        %v6472 = vpop.f32.mrb[0].mxu0
        %v6473 = vadd.f32 0.0, %v6472
        %v6474 = vpop.f32.mrb[0].mxu0
        %6475 = vmatprep.mubr.f32.mxu0 0.0
        %6476 = vmatmul.mubr.f32.gmra.mrb[0].mxu0 %v6242
        %v6477 = vpop.f32.mrb[0].mxu0
        %v6478 = vadd.f32 0.0, %v6477
        %v6479 = vpop.f32.mrb[0].mxu0
        %6480 = vmatprep.mubr.f32.mxu0 0.0
        %6481 = vmatmul.mubr.f32.gmra.mrb[0].mxu0 %v6243
        %v6482 = vpop.f32.mrb[0].mxu0
        %v6483 = vadd.f32 0.0, %v6482
        %v6484 = vpop.f32.mrb[0].mxu0
        %6485 = vmatprep.mubr.f32.mxu0 0.0
        %6486 = vmatmul.mubr.f32.gmra.mrb[0].mxu0 %v6244
        %v6487 = vpop.f32.mrb[0].mxu0
        %v6488 = vadd.f32 0.0, %v6487
        %v6489 = vpop.f32.mrb[0].mxu0
        %6490 = vmatprep.mubr.f32.mxu0 0.0
        %6491 = vmatmul.mubr.f32.gmra.mrb[0].mxu0 %v6245
        %v6492 = vpop.f32.mrb[0].mxu0
        %v6493 = vadd.f32 0.0, %v6492
        %v6494 = vpop.f32.mrb[0].mxu0
        %6495 = vmatprep.mubr.f32.mxu0 0.0
        %6496 = vmatmul.mubr.f32.gmra.mrb[0].mxu0 %v6246
        %v6497 = vpop.f32.mrb[0].mxu0
        %v6498 = vadd.f32 0.0, %v6497
        %v6499 = vpop.f32.mrb[0].mxu0
        %6500 = vmatprep.mubr.f32.mxu0 0.0
        %6501 = vmatmul.mubr.f32.gmra.mrb[0].mxu0 %v6247
        %v6502 = vpop.f32.mrb[0].mxu0
        %v6503 = vadd.f32 0.0, %v6502
        %v6504 = vpop.f32.mrb[0].mxu0
        %6505 = vmatprep.mubr.f32.mxu0 0.0
        %6506 = vmatmul.mubr.f32.gmra.mrb[0].mxu0 %v6248
        %v6507 = vpop.f32.mrb[0].mxu0
        %v6508 = vadd.f32 0.0, %v6507
        %v6509 = vpop.f32.mrb[0].mxu0
        %6510 = vdwg.mxu0
        %v6511 = vadd.f32 %v6177, %v6333
        %v6512 = vadd.f32 %v6178, %v6338
        %v6513 = vadd.f32 %v6179, %v6343
        %v6514 = vadd.f32 %v6180, %v6348
        %v6515 = vadd.f32 %v6181, %v6353
        %v6516 = vadd.f32 %v6182, %v6358
        %v6517 = vadd.f32 %v6183, %v6363
        %v6518 = vadd.f32 %v6184, %v6368
        %v6519 = vadd.f32 %v6185, %v6373
        %v6520 = vadd.f32 %v6186, %v6378
        %v6521 = vadd.f32 %v6187, %v6383
        %v6522 = vadd.f32 %v6188, %v6388
        %v6523 = vadd.f32 %v6189, %v6393
        %v6524 = vadd.f32 %v6190, %v6398
        %v6525 = vadd.f32 %v6191, %v6403
        %v6526 = vadd.f32 %v6192, %v6408
        %v6527 = vadd.f32 %v6193, %v6413
        %v6528 = vadd.f32 %v6194, %v6418
        %v6529 = vadd.f32 %v6195, %v6423
        %v6530 = vadd.f32 %v6196, %v6428
        %v6531 = vadd.f32 %v6197, %v6433
        %v6532 = vadd.f32 %v6198, %v6438
        %v6533 = vadd.f32 %v6199, %v6443
        %v6534 = vadd.f32 %v6200, %v6448
        %v6535 = vadd.f32 %v6201, %v6453
        %v6536 = vadd.f32 %v6202, %v6458
        %v6537 = vadd.f32 %v6203, %v6463
        %v6538 = vadd.f32 %v6204, %v6468
        %v6539 = vadd.f32 %v6205, %v6473
        %v6540 = vadd.f32 %v6206, %v6478
        %v6541 = vadd.f32 %v6207, %v6483
        %v6542 = vadd.f32 %v6208, %v6488
        %v6543 = vadd.f32 %v6209, %v6493
        %v6544 = vadd.f32 %v6210, %v6498
        %v6545 = vadd.f32 %v6211, %v6503
        %v6546 = vadd.f32 %v6212, %v6508
        %v6547 = vld [vmem:[#allocation3 + $0x29] sm:$0xff]
        %v6548 = vld [vmem:[#allocation3 + $0x31] sm:$0xff]
        %v6549 = vld [vmem:[#allocation3 + $0x39] sm:$0xff]
        %v6550 = vld [vmem:[#allocation3 + $0x41] sm:$0xff]
        %v6551 = vld [vmem:[#allocation3 + $0x49] sm:$0xff]
        %v6552 = vld [vmem:[#allocation3 + $0x51] sm:$0xff]
        %v6553 = vld [vmem:[#allocation3 + $0x59] sm:$0xff]
        %v6554 = vld [vmem:[#allocation3 + $0x61] sm:$0xff]
        %v6555 = vld [vmem:[#allocation3 + $0x69] sm:$0xff]
        %v6556 = vld [vmem:[#allocation3 + $0x71] sm:$0xff]
        %v6557 = vld [vmem:[#allocation3 + $0x79] sm:$0xff]
        %v6558 = vld [vmem:[#allocation3 + $0x81] sm:$0xff]
        %v6559 = vld [vmem:[#allocation3 + $0x89] sm:$0xff]
        %v6560 = vld [vmem:[#allocation3 + $0x91] sm:$0xff]
        %v6561 = vld [vmem:[#allocation3 + $0x99] sm:$0xff]
        %v6562 = vld [vmem:[#allocation3 + $0xa1] sm:$0xff]
        %v6563 = vld [vmem:[#allocation3 + $0xa9] sm:$0xff]
        %v6564 = vld [vmem:[#allocation3 + $0xb1] sm:$0xff]
        %v6565 = vld [vmem:[#allocation3 + $0xb9] sm:$0xff]
        %v6566 = vld [vmem:[#allocation3 + $0xc1] sm:$0xff]
        %v6567 = vld [vmem:[#allocation3 + $0xc9] sm:$0xff]
        %v6568 = vld [vmem:[#allocation3 + $0xd1] sm:$0xff]
        %v6569 = vld [vmem:[#allocation3 + $0xd9] sm:$0xff]
        %v6570 = vld [vmem:[#allocation3 + $0xe1] sm:$0xff]
        %v6571 = vld [vmem:[#allocation3 + $0xe9] sm:$0xff]
        %v6572 = vld [vmem:[#allocation3 + $0xf1] sm:$0xff]
        %v6573 = vld [vmem:[#allocation3 + $0xf9] sm:$0xff]
        %v6574 = vld [vmem:[#allocation3 + $0x101] sm:$0xff]
        %v6575 = vld [vmem:[#allocation3 + $0x109] sm:$0xff]
        %v6576 = vld [vmem:[#allocation3 + $0x111] sm:$0xff]
        %v6577 = vld [vmem:[#allocation3 + $0x119] sm:$0xff]
        %v6578 = vld [vmem:[#allocation3 + $0x121] sm:$0xff]
        %v6579 = vld [vmem:[#allocation3 + $0x129] sm:$0xff]
        %v6580 = vld [vmem:[#allocation3 + $0x131] sm:$0xff]
        %v6581 = vld [vmem:[#allocation3 + $0x139] sm:$0xff]
        %v6582 = vld [vmem:[#allocation3 + $0x141] sm:$0xff]
        %s6583 = scalar_lea.vmem [#allocation4], 768
        %v6584 = vld [vmem:[%s6583] sm:$0xff]
        %v6585 = vld [vmem:[%s6583 + $0x8] sm:$0xff]
        %v6586 = vld [vmem:[%s6583 + $0x10] sm:$0xff]
        %v6587 = vld [vmem:[%s6583 + $0x18] sm:$0xff]
        %v6588 = vld [vmem:[%s6583 + $0x20] sm:$0xff]
        %v6589 = vld [vmem:[%s6583 + $0x28] sm:$0xff]
        %v6590 = vld [vmem:[%s6583 + $0x30] sm:$0xff]
        %v6591 = vld [vmem:[%s6583 + $0x38] sm:$0xff]
        %v6592 = vld [vmem:[%s6583 + $0x40] sm:$0xff]
        %v6593 = vld [vmem:[%s6583 + $0x48] sm:$0xff]
        %v6594 = vld [vmem:[%s6583 + $0x50] sm:$0xff]
        %v6595 = vld [vmem:[%s6583 + $0x58] sm:$0xff]
        %v6596 = vld [vmem:[%s6583 + $0x60] sm:$0xff]
        %v6597 = vld [vmem:[%s6583 + $0x68] sm:$0xff]
        %v6598 = vld [vmem:[%s6583 + $0x70] sm:$0xff]
        %v6599 = vld [vmem:[%s6583 + $0x78] sm:$0xff]
        %6600 = vmatprep.subr.mxu0 0.0
        %6601 = vmatpush1.msra.mxu0 %v6584
        %6602 = vmatprep.subr.mxu0 0.0
        %6603 = vmatpush1.msra.mxu0 %v6585
        %6604 = vmatprep.subr.mxu0 0.0
        %6605 = vmatpush1.msra.mxu0 %v6586
        %6606 = vmatprep.subr.mxu0 0.0
        %6607 = vmatpush1.msra.mxu0 %v6587
        %6608 = vmatprep.subr.mxu0 0.0
        %6609 = vmatpush1.msra.mxu0 %v6588
        %6610 = vmatprep.subr.mxu0 0.0
        %6611 = vmatpush1.msra.mxu0 %v6589
        %6612 = vmatprep.subr.mxu0 0.0
        %6613 = vmatpush1.msra.mxu0 %v6590
        %6614 = vmatprep.subr.mxu0 0.0
        %6615 = vmatpush1.msra.mxu0 %v6591
        %6616 = vmatprep.subr.mxu0 0.0
        %6617 = vmatpush1.msra.mxu0 %v6592
        %6618 = vmatprep.subr.mxu0 0.0
        %6619 = vmatpush1.msra.mxu0 %v6593
        %6620 = vmatprep.subr.mxu0 0.0
        %6621 = vmatpush1.msra.mxu0 %v6594
        %6622 = vmatprep.subr.mxu0 0.0
        %6623 = vmatpush1.msra.mxu0 %v6595
        %6624 = vmatprep.subr.mxu0 0.0
        %6625 = vmatpush1.msra.mxu0 %v6596
        %6626 = vmatprep.subr.mxu0 0.0
        %6627 = vmatpush1.msra.mxu0 %v6597
        %6628 = vmatprep.subr.mxu0 0.0
        %6629 = vmatpush1.msra.mxu0 %v6598
        %6630 = vmatprep.subr.mxu0 0.0
        %6631 = vmatpush1.msra.mxu0 %v6599
        %6632 = vmatprep.subr.mxu0 0.0
        %6633 = vmatpush1.msra.mxu0 0.0
        %6634 = vmatprep.subr.mxu0 0.0
        %6635 = vmatpush1.msra.mxu0 0.0
        %6636 = vmatprep.subr.mxu0 0.0
        %6637 = vmatpush1.msra.mxu0 0.0
        %6638 = vmatprep.subr.mxu0 0.0
        %6639 = vmatpush1.msra.mxu0 0.0
        %6640 = vmatprep.subr.mxu0 0.0
        %6641 = vmatpush1.msra.mxu0 0.0
        %6642 = vmatprep.subr.mxu0 0.0
        %6643 = vmatpush1.msra.mxu0 0.0
        %6644 = vmatprep.subr.mxu0 0.0
        %6645 = vmatpush1.msra.mxu0 0.0
        %6646 = vmatprep.subr.mxu0 0.0
        %6647 = vmatpush1.msra.mxu0 0.0
        %6648 = vmatprep.subr.mxu0 0.0
        %6649 = vmatpush1.msra.mxu0 0.0
        %6650 = vmatprep.subr.mxu0 0.0
        %6651 = vmatpush1.msra.mxu0 0.0
        %6652 = vmatprep.subr.mxu0 0.0
        %6653 = vmatpush1.msra.mxu0 0.0
        %6654 = vmatprep.subr.mxu0 0.0
        %6655 = vmatpush1.msra.mxu0 0.0
        %6656 = vmatprep.subr.mxu0 0.0
        %6657 = vmatpush1.msra.mxu0 0.0
        %6658 = vmatprep.subr.mxu0 0.0
        %6659 = vmatpush1.msra.mxu0 0.0
        %6660 = vmatprep.subr.mxu0 0.0
        %6661 = vmatpush1.msra.mxu0 0.0
        %6662 = vmatprep.subr.mxu0 0.0
        %6663 = vmatpush1.msra.mxu0 0.0
        %6664 = vmatprep.mubr.f32.mxu0 0.0
        %6665 = vmatmul.mubr.f32.gmra.mrb[0].mxu0 %v6547
        %v6666 = vpop.f32.mrb[0].mxu0
        %v6667 = vadd.f32 0.0, %v6666
        %v6668 = vpop.f32.mrb[0].mxu0
        %6669 = vmatprep.mubr.f32.mxu0 0.0
        %6670 = vmatmul.mubr.f32.gmra.mrb[0].mxu0 %v6548
        %v6671 = vpop.f32.mrb[0].mxu0
        %v6672 = vadd.f32 0.0, %v6671
        %v6673 = vpop.f32.mrb[0].mxu0
        %6674 = vmatprep.mubr.f32.mxu0 0.0
        %6675 = vmatmul.mubr.f32.gmra.mrb[0].mxu0 %v6549
        %v6676 = vpop.f32.mrb[0].mxu0
        %v6677 = vadd.f32 0.0, %v6676
        %v6678 = vpop.f32.mrb[0].mxu0
        %6679 = vmatprep.mubr.f32.mxu0 0.0
        %6680 = vmatmul.mubr.f32.gmra.mrb[0].mxu0 %v6550
        %v6681 = vpop.f32.mrb[0].mxu0
        %v6682 = vadd.f32 0.0, %v6681
        %v6683 = vpop.f32.mrb[0].mxu0
        %6684 = vmatprep.mubr.f32.mxu0 0.0
        %6685 = vmatmul.mubr.f32.gmra.mrb[0].mxu0 %v6551
        %v6686 = vpop.f32.mrb[0].mxu0
        %v6687 = vadd.f32 0.0, %v6686
        %v6688 = vpop.f32.mrb[0].mxu0
        %6689 = vmatprep.mubr.f32.mxu0 0.0
        %6690 = vmatmul.mubr.f32.gmra.mrb[0].mxu0 %v6552
        %v6691 = vpop.f32.mrb[0].mxu0
        %v6692 = vadd.f32 0.0, %v6691
        %v6693 = vpop.f32.mrb[0].mxu0
        %6694 = vmatprep.mubr.f32.mxu0 0.0
        %6695 = vmatmul.mubr.f32.gmra.mrb[0].mxu0 %v6553
        %v6696 = vpop.f32.mrb[0].mxu0
        %v6697 = vadd.f32 0.0, %v6696
        %v6698 = vpop.f32.mrb[0].mxu0
        %6699 = vmatprep.mubr.f32.mxu0 0.0
        %6700 = vmatmul.mubr.f32.gmra.mrb[0].mxu0 %v6554
        %v6701 = vpop.f32.mrb[0].mxu0
        %v6702 = vadd.f32 0.0, %v6701
        %v6703 = vpop.f32.mrb[0].mxu0
        %6704 = vmatprep.mubr.f32.mxu0 0.0
        %6705 = vmatmul.mubr.f32.gmra.mrb[0].mxu0 %v6555
        %v6706 = vpop.f32.mrb[0].mxu0
        %v6707 = vadd.f32 0.0, %v6706
        %v6708 = vpop.f32.mrb[0].mxu0
        %6709 = vmatprep.mubr.f32.mxu0 0.0
        %6710 = vmatmul.mubr.f32.gmra.mrb[0].mxu0 %v6556
        %v6711 = vpop.f32.mrb[0].mxu0
        %v6712 = vadd.f32 0.0, %v6711
        %v6713 = vpop.f32.mrb[0].mxu0
        %6714 = vmatprep.mubr.f32.mxu0 0.0
        %6715 = vmatmul.mubr.f32.gmra.mrb[0].mxu0 %v6557
        %v6716 = vpop.f32.mrb[0].mxu0
        %v6717 = vadd.f32 0.0, %v6716
        %v6718 = vpop.f32.mrb[0].mxu0
        %6719 = vmatprep.mubr.f32.mxu0 0.0
        %6720 = vmatmul.mubr.f32.gmra.mrb[0].mxu0 %v6558
        %v6721 = vpop.f32.mrb[0].mxu0
        %v6722 = vadd.f32 0.0, %v6721
        %v6723 = vpop.f32.mrb[0].mxu0
        %6724 = vmatprep.mubr.f32.mxu0 0.0
        %6725 = vmatmul.mubr.f32.gmra.mrb[0].mxu0 %v6559
        %v6726 = vpop.f32.mrb[0].mxu0
        %v6727 = vadd.f32 0.0, %v6726
        %v6728 = vpop.f32.mrb[0].mxu0
        %6729 = vmatprep.mubr.f32.mxu0 0.0
        %6730 = vmatmul.mubr.f32.gmra.mrb[0].mxu0 %v6560
        %v6731 = vpop.f32.mrb[0].mxu0
        %v6732 = vadd.f32 0.0, %v6731
        %v6733 = vpop.f32.mrb[0].mxu0
        %6734 = vmatprep.mubr.f32.mxu0 0.0
        %6735 = vmatmul.mubr.f32.gmra.mrb[0].mxu0 %v6561
        %v6736 = vpop.f32.mrb[0].mxu0
        %v6737 = vadd.f32 0.0, %v6736
        %v6738 = vpop.f32.mrb[0].mxu0
        %6739 = vmatprep.mubr.f32.mxu0 0.0
        %6740 = vmatmul.mubr.f32.gmra.mrb[0].mxu0 %v6562
        %v6741 = vpop.f32.mrb[0].mxu0
        %v6742 = vadd.f32 0.0, %v6741
        %v6743 = vpop.f32.mrb[0].mxu0
        %6744 = vmatprep.mubr.f32.mxu0 0.0
        %6745 = vmatmul.mubr.f32.gmra.mrb[0].mxu0 %v6563
        %v6746 = vpop.f32.mrb[0].mxu0
        %v6747 = vadd.f32 0.0, %v6746
        %v6748 = vpop.f32.mrb[0].mxu0
        %6749 = vmatprep.mubr.f32.mxu0 0.0
        %6750 = vmatmul.mubr.f32.gmra.mrb[0].mxu0 %v6564
        %v6751 = vpop.f32.mrb[0].mxu0
        %v6752 = vadd.f32 0.0, %v6751
        %v6753 = vpop.f32.mrb[0].mxu0
        %6754 = vmatprep.mubr.f32.mxu0 0.0
        %6755 = vmatmul.mubr.f32.gmra.mrb[0].mxu0 %v6565
        %v6756 = vpop.f32.mrb[0].mxu0
        %v6757 = vadd.f32 0.0, %v6756
        %v6758 = vpop.f32.mrb[0].mxu0
        %6759 = vmatprep.mubr.f32.mxu0 0.0
        %6760 = vmatmul.mubr.f32.gmra.mrb[0].mxu0 %v6566
        %v6761 = vpop.f32.mrb[0].mxu0
        %v6762 = vadd.f32 0.0, %v6761
        %v6763 = vpop.f32.mrb[0].mxu0
        %6764 = vmatprep.mubr.f32.mxu0 0.0
        %6765 = vmatmul.mubr.f32.gmra.mrb[0].mxu0 %v6567
        %v6766 = vpop.f32.mrb[0].mxu0
        %v6767 = vadd.f32 0.0, %v6766
        %v6768 = vpop.f32.mrb[0].mxu0
        %6769 = vmatprep.mubr.f32.mxu0 0.0
        %6770 = vmatmul.mubr.f32.gmra.mrb[0].mxu0 %v6568
        %v6771 = vpop.f32.mrb[0].mxu0
        %v6772 = vadd.f32 0.0, %v6771
        %v6773 = vpop.f32.mrb[0].mxu0
        %6774 = vmatprep.mubr.f32.mxu0 0.0
        %6775 = vmatmul.mubr.f32.gmra.mrb[0].mxu0 %v6569
        %v6776 = vpop.f32.mrb[0].mxu0
        %v6777 = vadd.f32 0.0, %v6776
        %v6778 = vpop.f32.mrb[0].mxu0
        %6779 = vmatprep.mubr.f32.mxu0 0.0
        %6780 = vmatmul.mubr.f32.gmra.mrb[0].mxu0 %v6570
        %v6781 = vpop.f32.mrb[0].mxu0
        %v6782 = vadd.f32 0.0, %v6781
        %v6783 = vpop.f32.mrb[0].mxu0
        %6784 = vmatprep.mubr.f32.mxu0 0.0
        %6785 = vmatmul.mubr.f32.gmra.mrb[0].mxu0 %v6571
        %v6786 = vpop.f32.mrb[0].mxu0
        %v6787 = vadd.f32 0.0, %v6786
        %v6788 = vpop.f32.mrb[0].mxu0
        %6789 = vmatprep.mubr.f32.mxu0 0.0
        %6790 = vmatmul.mubr.f32.gmra.mrb[0].mxu0 %v6572
        %v6791 = vpop.f32.mrb[0].mxu0
        %v6792 = vadd.f32 0.0, %v6791
        %v6793 = vpop.f32.mrb[0].mxu0
        %6794 = vmatprep.mubr.f32.mxu0 0.0
        %6795 = vmatmul.mubr.f32.gmra.mrb[0].mxu0 %v6573
        %v6796 = vpop.f32.mrb[0].mxu0
        %v6797 = vadd.f32 0.0, %v6796
        %v6798 = vpop.f32.mrb[0].mxu0
        %6799 = vmatprep.mubr.f32.mxu0 0.0
        %6800 = vmatmul.mubr.f32.gmra.mrb[0].mxu0 %v6574
        %v6801 = vpop.f32.mrb[0].mxu0
        %v6802 = vadd.f32 0.0, %v6801
        %v6803 = vpop.f32.mrb[0].mxu0
        %6804 = vmatprep.mubr.f32.mxu0 0.0
        %6805 = vmatmul.mubr.f32.gmra.mrb[0].mxu0 %v6575
        %v6806 = vpop.f32.mrb[0].mxu0
        %v6807 = vadd.f32 0.0, %v6806
        %v6808 = vpop.f32.mrb[0].mxu0
        %6809 = vmatprep.mubr.f32.mxu0 0.0
        %6810 = vmatmul.mubr.f32.gmra.mrb[0].mxu0 %v6576
        %v6811 = vpop.f32.mrb[0].mxu0
        %v6812 = vadd.f32 0.0, %v6811
        %v6813 = vpop.f32.mrb[0].mxu0
        %6814 = vmatprep.mubr.f32.mxu0 0.0
        %6815 = vmatmul.mubr.f32.gmra.mrb[0].mxu0 %v6577
        %v6816 = vpop.f32.mrb[0].mxu0
        %v6817 = vadd.f32 0.0, %v6816
        %v6818 = vpop.f32.mrb[0].mxu0
        %6819 = vmatprep.mubr.f32.mxu0 0.0
        %6820 = vmatmul.mubr.f32.gmra.mrb[0].mxu0 %v6578
        %v6821 = vpop.f32.mrb[0].mxu0
        %v6822 = vadd.f32 0.0, %v6821
        %v6823 = vpop.f32.mrb[0].mxu0
        %6824 = vmatprep.mubr.f32.mxu0 0.0
        %6825 = vmatmul.mubr.f32.gmra.mrb[0].mxu0 %v6579
        %v6826 = vpop.f32.mrb[0].mxu0
        %v6827 = vadd.f32 0.0, %v6826
        %v6828 = vpop.f32.mrb[0].mxu0
        %6829 = vmatprep.mubr.f32.mxu0 0.0
        %6830 = vmatmul.mubr.f32.gmra.mrb[0].mxu0 %v6580
        %v6831 = vpop.f32.mrb[0].mxu0
        %v6832 = vadd.f32 0.0, %v6831
        %v6833 = vpop.f32.mrb[0].mxu0
        %6834 = vmatprep.mubr.f32.mxu0 0.0
        %6835 = vmatmul.mubr.f32.gmra.mrb[0].mxu0 %v6581
        %v6836 = vpop.f32.mrb[0].mxu0
        %v6837 = vadd.f32 0.0, %v6836
        %v6838 = vpop.f32.mrb[0].mxu0
        %6839 = vmatprep.mubr.f32.mxu0 0.0
        %6840 = vmatmul.mubr.f32.gmra.mrb[0].mxu0 %v6582
        %v6841 = vpop.f32.mrb[0].mxu0
        %v6842 = vadd.f32 0.0, %v6841
        %v6843 = vpop.f32.mrb[0].mxu0
        %6844 = vdwg.mxu0
        %v6845 = vadd.f32 %v6511, %v6667
        %v6846 = vadd.f32 %v6512, %v6672
        %v6847 = vadd.f32 %v6513, %v6677
        %v6848 = vadd.f32 %v6514, %v6682
        %v6849 = vadd.f32 %v6515, %v6687
        %v6850 = vadd.f32 %v6516, %v6692
        %v6851 = vadd.f32 %v6517, %v6697
        %v6852 = vadd.f32 %v6518, %v6702
        %v6853 = vadd.f32 %v6519, %v6707
        %v6854 = vadd.f32 %v6520, %v6712
        %v6855 = vadd.f32 %v6521, %v6717
        %v6856 = vadd.f32 %v6522, %v6722
        %v6857 = vadd.f32 %v6523, %v6727
        %v6858 = vadd.f32 %v6524, %v6732
        %v6859 = vadd.f32 %v6525, %v6737
        %v6860 = vadd.f32 %v6526, %v6742
        %v6861 = vadd.f32 %v6527, %v6747
        %v6862 = vadd.f32 %v6528, %v6752
        %v6863 = vadd.f32 %v6529, %v6757
        %v6864 = vadd.f32 %v6530, %v6762
        %v6865 = vadd.f32 %v6531, %v6767
        %v6866 = vadd.f32 %v6532, %v6772
        %v6867 = vadd.f32 %v6533, %v6777
        %v6868 = vadd.f32 %v6534, %v6782
        %v6869 = vadd.f32 %v6535, %v6787
        %v6870 = vadd.f32 %v6536, %v6792
        %v6871 = vadd.f32 %v6537, %v6797
        %v6872 = vadd.f32 %v6538, %v6802
        %v6873 = vadd.f32 %v6539, %v6807
        %v6874 = vadd.f32 %v6540, %v6812
        %v6875 = vadd.f32 %v6541, %v6817
        %v6876 = vadd.f32 %v6542, %v6822
        %v6877 = vadd.f32 %v6543, %v6827
        %v6878 = vadd.f32 %v6544, %v6832
        %v6879 = vadd.f32 %v6545, %v6837
        %v6880 = vadd.f32 %v6546, %v6842
        %v6881 = vld [vmem:[#allocation3 + $0x2a] sm:$0xff]
        %v6882 = vld [vmem:[#allocation3 + $0x32] sm:$0xff]
        %v6883 = vld [vmem:[#allocation3 + $0x3a] sm:$0xff]
        %v6884 = vld [vmem:[#allocation3 + $0x42] sm:$0xff]
        %v6885 = vld [vmem:[#allocation3 + $0x4a] sm:$0xff]
        %v6886 = vld [vmem:[#allocation3 + $0x52] sm:$0xff]
        %v6887 = vld [vmem:[#allocation3 + $0x5a] sm:$0xff]
        %v6888 = vld [vmem:[#allocation3 + $0x62] sm:$0xff]
        %v6889 = vld [vmem:[#allocation3 + $0x6a] sm:$0xff]
        %v6890 = vld [vmem:[#allocation3 + $0x72] sm:$0xff]
        %v6891 = vld [vmem:[#allocation3 + $0x7a] sm:$0xff]
        %v6892 = vld [vmem:[#allocation3 + $0x82] sm:$0xff]
        %v6893 = vld [vmem:[#allocation3 + $0x8a] sm:$0xff]
        %v6894 = vld [vmem:[#allocation3 + $0x92] sm:$0xff]
        %v6895 = vld [vmem:[#allocation3 + $0x9a] sm:$0xff]
        %v6896 = vld [vmem:[#allocation3 + $0xa2] sm:$0xff]
        %v6897 = vld [vmem:[#allocation3 + $0xaa] sm:$0xff]
        %v6898 = vld [vmem:[#allocation3 + $0xb2] sm:$0xff]
        %v6899 = vld [vmem:[#allocation3 + $0xba] sm:$0xff]
        %v6900 = vld [vmem:[#allocation3 + $0xc2] sm:$0xff]
        %v6901 = vld [vmem:[#allocation3 + $0xca] sm:$0xff]
        %v6902 = vld [vmem:[#allocation3 + $0xd2] sm:$0xff]
        %v6903 = vld [vmem:[#allocation3 + $0xda] sm:$0xff]
        %v6904 = vld [vmem:[#allocation3 + $0xe2] sm:$0xff]
        %v6905 = vld [vmem:[#allocation3 + $0xea] sm:$0xff]
        %v6906 = vld [vmem:[#allocation3 + $0xf2] sm:$0xff]
        %v6907 = vld [vmem:[#allocation3 + $0xfa] sm:$0xff]
        %v6908 = vld [vmem:[#allocation3 + $0x102] sm:$0xff]
        %v6909 = vld [vmem:[#allocation3 + $0x10a] sm:$0xff]
        %v6910 = vld [vmem:[#allocation3 + $0x112] sm:$0xff]
        %v6911 = vld [vmem:[#allocation3 + $0x11a] sm:$0xff]
        %v6912 = vld [vmem:[#allocation3 + $0x122] sm:$0xff]
        %v6913 = vld [vmem:[#allocation3 + $0x12a] sm:$0xff]
        %v6914 = vld [vmem:[#allocation3 + $0x132] sm:$0xff]
        %v6915 = vld [vmem:[#allocation3 + $0x13a] sm:$0xff]
        %v6916 = vld [vmem:[#allocation3 + $0x142] sm:$0xff]
        %s6917 = scalar_lea.vmem [#allocation4], 896
        %v6918 = vld [vmem:[%s6917] sm:$0xff]
        %v6919 = vld [vmem:[%s6917 + $0x8] sm:$0xff]
        %v6920 = vld [vmem:[%s6917 + $0x10] sm:$0xff]
        %v6921 = vld [vmem:[%s6917 + $0x18] sm:$0xff]
        %v6922 = vld [vmem:[%s6917 + $0x20] sm:$0xff]
        %v6923 = vld [vmem:[%s6917 + $0x28] sm:$0xff]
        %v6924 = vld [vmem:[%s6917 + $0x30] sm:$0xff]
        %v6925 = vld [vmem:[%s6917 + $0x38] sm:$0xff]
        %v6926 = vld [vmem:[%s6917 + $0x40] sm:$0xff]
        %v6927 = vld [vmem:[%s6917 + $0x48] sm:$0xff]
        %v6928 = vld [vmem:[%s6917 + $0x50] sm:$0xff]
        %v6929 = vld [vmem:[%s6917 + $0x58] sm:$0xff]
        %v6930 = vld [vmem:[%s6917 + $0x60] sm:$0xff]
        %v6931 = vld [vmem:[%s6917 + $0x68] sm:$0xff]
        %v6932 = vld [vmem:[%s6917 + $0x70] sm:$0xff]
        %v6933 = vld [vmem:[%s6917 + $0x78] sm:$0xff]
        %6934 = vmatprep.subr.mxu0 0.0
        %6935 = vmatpush1.msra.mxu0 %v6918
        %6936 = vmatprep.subr.mxu0 0.0
        %6937 = vmatpush1.msra.mxu0 %v6919
        %6938 = vmatprep.subr.mxu0 0.0
        %6939 = vmatpush1.msra.mxu0 %v6920
        %6940 = vmatprep.subr.mxu0 0.0
        %6941 = vmatpush1.msra.mxu0 %v6921
        %6942 = vmatprep.subr.mxu0 0.0
        %6943 = vmatpush1.msra.mxu0 %v6922
        %6944 = vmatprep.subr.mxu0 0.0
        %6945 = vmatpush1.msra.mxu0 %v6923
        %6946 = vmatprep.subr.mxu0 0.0
        %6947 = vmatpush1.msra.mxu0 %v6924
        %6948 = vmatprep.subr.mxu0 0.0
        %6949 = vmatpush1.msra.mxu0 %v6925
        %6950 = vmatprep.subr.mxu0 0.0
        %6951 = vmatpush1.msra.mxu0 %v6926
        %6952 = vmatprep.subr.mxu0 0.0
        %6953 = vmatpush1.msra.mxu0 %v6927
        %6954 = vmatprep.subr.mxu0 0.0
        %6955 = vmatpush1.msra.mxu0 %v6928
        %6956 = vmatprep.subr.mxu0 0.0
        %6957 = vmatpush1.msra.mxu0 %v6929
        %6958 = vmatprep.subr.mxu0 0.0
        %6959 = vmatpush1.msra.mxu0 %v6930
        %6960 = vmatprep.subr.mxu0 0.0
        %6961 = vmatpush1.msra.mxu0 %v6931
        %6962 = vmatprep.subr.mxu0 0.0
        %6963 = vmatpush1.msra.mxu0 %v6932
        %6964 = vmatprep.subr.mxu0 0.0
        %6965 = vmatpush1.msra.mxu0 %v6933
        %6966 = vmatprep.subr.mxu0 0.0
        %6967 = vmatpush1.msra.mxu0 0.0
        %6968 = vmatprep.subr.mxu0 0.0
        %6969 = vmatpush1.msra.mxu0 0.0
        %6970 = vmatprep.subr.mxu0 0.0
        %6971 = vmatpush1.msra.mxu0 0.0
        %6972 = vmatprep.subr.mxu0 0.0
        %6973 = vmatpush1.msra.mxu0 0.0
        %6974 = vmatprep.subr.mxu0 0.0
        %6975 = vmatpush1.msra.mxu0 0.0
        %6976 = vmatprep.subr.mxu0 0.0
        %6977 = vmatpush1.msra.mxu0 0.0
        %6978 = vmatprep.subr.mxu0 0.0
        %6979 = vmatpush1.msra.mxu0 0.0
        %6980 = vmatprep.subr.mxu0 0.0
        %6981 = vmatpush1.msra.mxu0 0.0
        %6982 = vmatprep.subr.mxu0 0.0
        %6983 = vmatpush1.msra.mxu0 0.0
        %6984 = vmatprep.subr.mxu0 0.0
        %6985 = vmatpush1.msra.mxu0 0.0
        %6986 = vmatprep.subr.mxu0 0.0
        %6987 = vmatpush1.msra.mxu0 0.0
        %6988 = vmatprep.subr.mxu0 0.0
        %6989 = vmatpush1.msra.mxu0 0.0
        %6990 = vmatprep.subr.mxu0 0.0
        %6991 = vmatpush1.msra.mxu0 0.0
        %6992 = vmatprep.subr.mxu0 0.0
        %6993 = vmatpush1.msra.mxu0 0.0
        %6994 = vmatprep.subr.mxu0 0.0
        %6995 = vmatpush1.msra.mxu0 0.0
        %6996 = vmatprep.subr.mxu0 0.0
        %6997 = vmatpush1.msra.mxu0 0.0
        %6998 = vmatprep.mubr.f32.mxu0 0.0
        %6999 = vmatmul.mubr.f32.gmra.mrb[0].mxu0 %v6881
        %v7000 = vpop.f32.mrb[0].mxu0
        %v7001 = vadd.f32 0.0, %v7000
        %v7002 = vpop.f32.mrb[0].mxu0
        %7003 = vmatprep.mubr.f32.mxu0 0.0
        %7004 = vmatmul.mubr.f32.gmra.mrb[0].mxu0 %v6882
        %v7005 = vpop.f32.mrb[0].mxu0
        %v7006 = vadd.f32 0.0, %v7005
        %v7007 = vpop.f32.mrb[0].mxu0
        %7008 = vmatprep.mubr.f32.mxu0 0.0
        %7009 = vmatmul.mubr.f32.gmra.mrb[0].mxu0 %v6883
        %v7010 = vpop.f32.mrb[0].mxu0
        %v7011 = vadd.f32 0.0, %v7010
        %v7012 = vpop.f32.mrb[0].mxu0
        %7013 = vmatprep.mubr.f32.mxu0 0.0
        %7014 = vmatmul.mubr.f32.gmra.mrb[0].mxu0 %v6884
        %v7015 = vpop.f32.mrb[0].mxu0
        %v7016 = vadd.f32 0.0, %v7015
        %v7017 = vpop.f32.mrb[0].mxu0
        %7018 = vmatprep.mubr.f32.mxu0 0.0
        %7019 = vmatmul.mubr.f32.gmra.mrb[0].mxu0 %v6885
        %v7020 = vpop.f32.mrb[0].mxu0
        %v7021 = vadd.f32 0.0, %v7020
        %v7022 = vpop.f32.mrb[0].mxu0
        %7023 = vmatprep.mubr.f32.mxu0 0.0
        %7024 = vmatmul.mubr.f32.gmra.mrb[0].mxu0 %v6886
        %v7025 = vpop.f32.mrb[0].mxu0
        %v7026 = vadd.f32 0.0, %v7025
        %v7027 = vpop.f32.mrb[0].mxu0
        %7028 = vmatprep.mubr.f32.mxu0 0.0
        %7029 = vmatmul.mubr.f32.gmra.mrb[0].mxu0 %v6887
        %v7030 = vpop.f32.mrb[0].mxu0
        %v7031 = vadd.f32 0.0, %v7030
        %v7032 = vpop.f32.mrb[0].mxu0
        %7033 = vmatprep.mubr.f32.mxu0 0.0
        %7034 = vmatmul.mubr.f32.gmra.mrb[0].mxu0 %v6888
        %v7035 = vpop.f32.mrb[0].mxu0
        %v7036 = vadd.f32 0.0, %v7035
        %v7037 = vpop.f32.mrb[0].mxu0
        %7038 = vmatprep.mubr.f32.mxu0 0.0
        %7039 = vmatmul.mubr.f32.gmra.mrb[0].mxu0 %v6889
        %v7040 = vpop.f32.mrb[0].mxu0
        %v7041 = vadd.f32 0.0, %v7040
        %v7042 = vpop.f32.mrb[0].mxu0
        %7043 = vmatprep.mubr.f32.mxu0 0.0
        %7044 = vmatmul.mubr.f32.gmra.mrb[0].mxu0 %v6890
        %v7045 = vpop.f32.mrb[0].mxu0
        %v7046 = vadd.f32 0.0, %v7045
        %v7047 = vpop.f32.mrb[0].mxu0
        %7048 = vmatprep.mubr.f32.mxu0 0.0
        %7049 = vmatmul.mubr.f32.gmra.mrb[0].mxu0 %v6891
        %v7050 = vpop.f32.mrb[0].mxu0
        %v7051 = vadd.f32 0.0, %v7050
        %v7052 = vpop.f32.mrb[0].mxu0
        %7053 = vmatprep.mubr.f32.mxu0 0.0
        %7054 = vmatmul.mubr.f32.gmra.mrb[0].mxu0 %v6892
        %v7055 = vpop.f32.mrb[0].mxu0
        %v7056 = vadd.f32 0.0, %v7055
        %v7057 = vpop.f32.mrb[0].mxu0
        %7058 = vmatprep.mubr.f32.mxu0 0.0
        %7059 = vmatmul.mubr.f32.gmra.mrb[0].mxu0 %v6893
        %v7060 = vpop.f32.mrb[0].mxu0
        %v7061 = vadd.f32 0.0, %v7060
        %v7062 = vpop.f32.mrb[0].mxu0
        %7063 = vmatprep.mubr.f32.mxu0 0.0
        %7064 = vmatmul.mubr.f32.gmra.mrb[0].mxu0 %v6894
        %v7065 = vpop.f32.mrb[0].mxu0
        %v7066 = vadd.f32 0.0, %v7065
        %v7067 = vpop.f32.mrb[0].mxu0
        %7068 = vmatprep.mubr.f32.mxu0 0.0
        %7069 = vmatmul.mubr.f32.gmra.mrb[0].mxu0 %v6895
        %v7070 = vpop.f32.mrb[0].mxu0
        %v7071 = vadd.f32 0.0, %v7070
        %v7072 = vpop.f32.mrb[0].mxu0
        %7073 = vmatprep.mubr.f32.mxu0 0.0
        %7074 = vmatmul.mubr.f32.gmra.mrb[0].mxu0 %v6896
        %v7075 = vpop.f32.mrb[0].mxu0
        %v7076 = vadd.f32 0.0, %v7075
        %v7077 = vpop.f32.mrb[0].mxu0
        %7078 = vmatprep.mubr.f32.mxu0 0.0
        %7079 = vmatmul.mubr.f32.gmra.mrb[0].mxu0 %v6897
        %v7080 = vpop.f32.mrb[0].mxu0
        %v7081 = vadd.f32 0.0, %v7080
        %v7082 = vpop.f32.mrb[0].mxu0
        %7083 = vmatprep.mubr.f32.mxu0 0.0
        %7084 = vmatmul.mubr.f32.gmra.mrb[0].mxu0 %v6898
        %v7085 = vpop.f32.mrb[0].mxu0
        %v7086 = vadd.f32 0.0, %v7085
        %v7087 = vpop.f32.mrb[0].mxu0
        %7088 = vmatprep.mubr.f32.mxu0 0.0
        %7089 = vmatmul.mubr.f32.gmra.mrb[0].mxu0 %v6899
        %v7090 = vpop.f32.mrb[0].mxu0
        %v7091 = vadd.f32 0.0, %v7090
        %v7092 = vpop.f32.mrb[0].mxu0
        %7093 = vmatprep.mubr.f32.mxu0 0.0
        %7094 = vmatmul.mubr.f32.gmra.mrb[0].mxu0 %v6900
        %v7095 = vpop.f32.mrb[0].mxu0
        %v7096 = vadd.f32 0.0, %v7095
        %v7097 = vpop.f32.mrb[0].mxu0
        %7098 = vmatprep.mubr.f32.mxu0 0.0
        %7099 = vmatmul.mubr.f32.gmra.mrb[0].mxu0 %v6901
        %v7100 = vpop.f32.mrb[0].mxu0
        %v7101 = vadd.f32 0.0, %v7100
        %v7102 = vpop.f32.mrb[0].mxu0
        %7103 = vmatprep.mubr.f32.mxu0 0.0
        %7104 = vmatmul.mubr.f32.gmra.mrb[0].mxu0 %v6902
        %v7105 = vpop.f32.mrb[0].mxu0
        %v7106 = vadd.f32 0.0, %v7105
        %v7107 = vpop.f32.mrb[0].mxu0
        %7108 = vmatprep.mubr.f32.mxu0 0.0
        %7109 = vmatmul.mubr.f32.gmra.mrb[0].mxu0 %v6903
        %v7110 = vpop.f32.mrb[0].mxu0
        %v7111 = vadd.f32 0.0, %v7110
        %v7112 = vpop.f32.mrb[0].mxu0
        %7113 = vmatprep.mubr.f32.mxu0 0.0
        %7114 = vmatmul.mubr.f32.gmra.mrb[0].mxu0 %v6904
        %v7115 = vpop.f32.mrb[0].mxu0
        %v7116 = vadd.f32 0.0, %v7115
        %v7117 = vpop.f32.mrb[0].mxu0
        %7118 = vmatprep.mubr.f32.mxu0 0.0
        %7119 = vmatmul.mubr.f32.gmra.mrb[0].mxu0 %v6905
        %v7120 = vpop.f32.mrb[0].mxu0
        %v7121 = vadd.f32 0.0, %v7120
        %v7122 = vpop.f32.mrb[0].mxu0
        %7123 = vmatprep.mubr.f32.mxu0 0.0
        %7124 = vmatmul.mubr.f32.gmra.mrb[0].mxu0 %v6906
        %v7125 = vpop.f32.mrb[0].mxu0
        %v7126 = vadd.f32 0.0, %v7125
        %v7127 = vpop.f32.mrb[0].mxu0
        %7128 = vmatprep.mubr.f32.mxu0 0.0
        %7129 = vmatmul.mubr.f32.gmra.mrb[0].mxu0 %v6907
        %v7130 = vpop.f32.mrb[0].mxu0
        %v7131 = vadd.f32 0.0, %v7130
        %v7132 = vpop.f32.mrb[0].mxu0
        %7133 = vmatprep.mubr.f32.mxu0 0.0
        %7134 = vmatmul.mubr.f32.gmra.mrb[0].mxu0 %v6908
        %v7135 = vpop.f32.mrb[0].mxu0
        %v7136 = vadd.f32 0.0, %v7135
        %v7137 = vpop.f32.mrb[0].mxu0
        %7138 = vmatprep.mubr.f32.mxu0 0.0
        %7139 = vmatmul.mubr.f32.gmra.mrb[0].mxu0 %v6909
        %v7140 = vpop.f32.mrb[0].mxu0
        %v7141 = vadd.f32 0.0, %v7140
        %v7142 = vpop.f32.mrb[0].mxu0
        %7143 = vmatprep.mubr.f32.mxu0 0.0
        %7144 = vmatmul.mubr.f32.gmra.mrb[0].mxu0 %v6910
        %v7145 = vpop.f32.mrb[0].mxu0
        %v7146 = vadd.f32 0.0, %v7145
        %v7147 = vpop.f32.mrb[0].mxu0
        %7148 = vmatprep.mubr.f32.mxu0 0.0
        %7149 = vmatmul.mubr.f32.gmra.mrb[0].mxu0 %v6911
        %v7150 = vpop.f32.mrb[0].mxu0
        %v7151 = vadd.f32 0.0, %v7150
        %v7152 = vpop.f32.mrb[0].mxu0
        %7153 = vmatprep.mubr.f32.mxu0 0.0
        %7154 = vmatmul.mubr.f32.gmra.mrb[0].mxu0 %v6912
        %v7155 = vpop.f32.mrb[0].mxu0
        %v7156 = vadd.f32 0.0, %v7155
        %v7157 = vpop.f32.mrb[0].mxu0
        %7158 = vmatprep.mubr.f32.mxu0 0.0
        %7159 = vmatmul.mubr.f32.gmra.mrb[0].mxu0 %v6913
        %v7160 = vpop.f32.mrb[0].mxu0
        %v7161 = vadd.f32 0.0, %v7160
        %v7162 = vpop.f32.mrb[0].mxu0
        %7163 = vmatprep.mubr.f32.mxu0 0.0
        %7164 = vmatmul.mubr.f32.gmra.mrb[0].mxu0 %v6914
        %v7165 = vpop.f32.mrb[0].mxu0
        %v7166 = vadd.f32 0.0, %v7165
        %v7167 = vpop.f32.mrb[0].mxu0
        %7168 = vmatprep.mubr.f32.mxu0 0.0
        %7169 = vmatmul.mubr.f32.gmra.mrb[0].mxu0 %v6915
        %v7170 = vpop.f32.mrb[0].mxu0
        %v7171 = vadd.f32 0.0, %v7170
        %v7172 = vpop.f32.mrb[0].mxu0
        %7173 = vmatprep.mubr.f32.mxu0 0.0
        %7174 = vmatmul.mubr.f32.gmra.mrb[0].mxu0 %v6916
        %v7175 = vpop.f32.mrb[0].mxu0
        %v7176 = vadd.f32 0.0, %v7175
        %v7177 = vpop.f32.mrb[0].mxu0
        %7178 = vdwg.mxu0
        %v7179 = vadd.f32 %v6845, %v7001
        %v7180 = vadd.f32 %v6846, %v7006
        %v7181 = vadd.f32 %v6847, %v7011
        %v7182 = vadd.f32 %v6848, %v7016
        %v7183 = vadd.f32 %v6849, %v7021
        %v7184 = vadd.f32 %v6850, %v7026
        %v7185 = vadd.f32 %v6851, %v7031
        %v7186 = vadd.f32 %v6852, %v7036
        %v7187 = vadd.f32 %v6853, %v7041
        %v7188 = vadd.f32 %v6854, %v7046
        %v7189 = vadd.f32 %v6855, %v7051
        %v7190 = vadd.f32 %v6856, %v7056
        %v7191 = vadd.f32 %v6857, %v7061
        %v7192 = vadd.f32 %v6858, %v7066
        %v7193 = vadd.f32 %v6859, %v7071
        %v7194 = vadd.f32 %v6860, %v7076
        %v7195 = vadd.f32 %v6861, %v7081
        %v7196 = vadd.f32 %v6862, %v7086
        %v7197 = vadd.f32 %v6863, %v7091
        %v7198 = vadd.f32 %v6864, %v7096
        %v7199 = vadd.f32 %v6865, %v7101
        %v7200 = vadd.f32 %v6866, %v7106
        %v7201 = vadd.f32 %v6867, %v7111
        %v7202 = vadd.f32 %v6868, %v7116
        %v7203 = vadd.f32 %v6869, %v7121
        %v7204 = vadd.f32 %v6870, %v7126
        %v7205 = vadd.f32 %v6871, %v7131
        %v7206 = vadd.f32 %v6872, %v7136
        %v7207 = vadd.f32 %v6873, %v7141
        %v7208 = vadd.f32 %v6874, %v7146
        %v7209 = vadd.f32 %v6875, %v7151
        %v7210 = vadd.f32 %v6876, %v7156
        %v7211 = vadd.f32 %v6877, %v7161
        %v7212 = vadd.f32 %v6878, %v7166
        %v7213 = vadd.f32 %v6879, %v7171
        %v7214 = vadd.f32 %v6880, %v7176
        %v7215 = vld [vmem:[#allocation3 + $0x2b] sm:$0xff]
        %v7216 = vld [vmem:[#allocation3 + $0x33] sm:$0xff]
        %v7217 = vld [vmem:[#allocation3 + $0x3b] sm:$0xff]
        %v7218 = vld [vmem:[#allocation3 + $0x43] sm:$0xff]
        %v7219 = vld [vmem:[#allocation3 + $0x4b] sm:$0xff]
        %v7220 = vld [vmem:[#allocation3 + $0x53] sm:$0xff]
        %v7221 = vld [vmem:[#allocation3 + $0x5b] sm:$0xff]
        %v7222 = vld [vmem:[#allocation3 + $0x63] sm:$0xff]
        %v7223 = vld [vmem:[#allocation3 + $0x6b] sm:$0xff]
        %v7224 = vld [vmem:[#allocation3 + $0x73] sm:$0xff]
        %v7225 = vld [vmem:[#allocation3 + $0x7b] sm:$0xff]
        %v7226 = vld [vmem:[#allocation3 + $0x83] sm:$0xff]
        %v7227 = vld [vmem:[#allocation3 + $0x8b] sm:$0xff]
        %v7228 = vld [vmem:[#allocation3 + $0x93] sm:$0xff]
        %v7229 = vld [vmem:[#allocation3 + $0x9b] sm:$0xff]
        %v7230 = vld [vmem:[#allocation3 + $0xa3] sm:$0xff]
        %v7231 = vld [vmem:[#allocation3 + $0xab] sm:$0xff]
        %v7232 = vld [vmem:[#allocation3 + $0xb3] sm:$0xff]
        %v7233 = vld [vmem:[#allocation3 + $0xbb] sm:$0xff]
        %v7234 = vld [vmem:[#allocation3 + $0xc3] sm:$0xff]
        %v7235 = vld [vmem:[#allocation3 + $0xcb] sm:$0xff]
        %v7236 = vld [vmem:[#allocation3 + $0xd3] sm:$0xff]
        %v7237 = vld [vmem:[#allocation3 + $0xdb] sm:$0xff]
        %v7238 = vld [vmem:[#allocation3 + $0xe3] sm:$0xff]
        %v7239 = vld [vmem:[#allocation3 + $0xeb] sm:$0xff]
        %v7240 = vld [vmem:[#allocation3 + $0xf3] sm:$0xff]
        %v7241 = vld [vmem:[#allocation3 + $0xfb] sm:$0xff]
        %v7242 = vld [vmem:[#allocation3 + $0x103] sm:$0xff]
        %v7243 = vld [vmem:[#allocation3 + $0x10b] sm:$0xff]
        %v7244 = vld [vmem:[#allocation3 + $0x113] sm:$0xff]
        %v7245 = vld [vmem:[#allocation3 + $0x11b] sm:$0xff]
        %v7246 = vld [vmem:[#allocation3 + $0x123] sm:$0xff]
        %v7247 = vld [vmem:[#allocation3 + $0x12b] sm:$0xff]
        %v7248 = vld [vmem:[#allocation3 + $0x133] sm:$0xff]
        %v7249 = vld [vmem:[#allocation3 + $0x13b] sm:$0xff]
        %v7250 = vld [vmem:[#allocation3 + $0x143] sm:$0xff]
        %s7251 = scalar_lea.vmem [#allocation4], 1024
        %v7252 = vld [vmem:[%s7251] sm:$0xff]
        %v7253 = vld [vmem:[%s7251 + $0x8] sm:$0xff]
        %v7254 = vld [vmem:[%s7251 + $0x10] sm:$0xff]
        %v7255 = vld [vmem:[%s7251 + $0x18] sm:$0xff]
        %v7256 = vld [vmem:[%s7251 + $0x20] sm:$0xff]
        %v7257 = vld [vmem:[%s7251 + $0x28] sm:$0xff]
        %v7258 = vld [vmem:[%s7251 + $0x30] sm:$0xff]
        %v7259 = vld [vmem:[%s7251 + $0x38] sm:$0xff]
        %v7260 = vld [vmem:[%s7251 + $0x40] sm:$0xff]
        %v7261 = vld [vmem:[%s7251 + $0x48] sm:$0xff]
        %v7262 = vld [vmem:[%s7251 + $0x50] sm:$0xff]
        %v7263 = vld [vmem:[%s7251 + $0x58] sm:$0xff]
        %v7264 = vld [vmem:[%s7251 + $0x60] sm:$0xff]
        %v7265 = vld [vmem:[%s7251 + $0x68] sm:$0xff]
        %v7266 = vld [vmem:[%s7251 + $0x70] sm:$0xff]
        %v7267 = vld [vmem:[%s7251 + $0x78] sm:$0xff]
        %7268 = vmatprep.subr.mxu0 0.0
        %7269 = vmatpush1.msra.mxu0 %v7252
        %7270 = vmatprep.subr.mxu0 0.0
        %7271 = vmatpush1.msra.mxu0 %v7253
        %7272 = vmatprep.subr.mxu0 0.0
        %7273 = vmatpush1.msra.mxu0 %v7254
        %7274 = vmatprep.subr.mxu0 0.0
        %7275 = vmatpush1.msra.mxu0 %v7255
        %7276 = vmatprep.subr.mxu0 0.0
        %7277 = vmatpush1.msra.mxu0 %v7256
        %7278 = vmatprep.subr.mxu0 0.0
        %7279 = vmatpush1.msra.mxu0 %v7257
        %7280 = vmatprep.subr.mxu0 0.0
        %7281 = vmatpush1.msra.mxu0 %v7258
        %7282 = vmatprep.subr.mxu0 0.0
        %7283 = vmatpush1.msra.mxu0 %v7259
        %7284 = vmatprep.subr.mxu0 0.0
        %7285 = vmatpush1.msra.mxu0 %v7260
        %7286 = vmatprep.subr.mxu0 0.0
        %7287 = vmatpush1.msra.mxu0 %v7261
        %7288 = vmatprep.subr.mxu0 0.0
        %7289 = vmatpush1.msra.mxu0 %v7262
        %7290 = vmatprep.subr.mxu0 0.0
        %7291 = vmatpush1.msra.mxu0 %v7263
        %7292 = vmatprep.subr.mxu0 0.0
        %7293 = vmatpush1.msra.mxu0 %v7264
        %7294 = vmatprep.subr.mxu0 0.0
        %7295 = vmatpush1.msra.mxu0 %v7265
        %7296 = vmatprep.subr.mxu0 0.0
        %7297 = vmatpush1.msra.mxu0 %v7266
        %7298 = vmatprep.subr.mxu0 0.0
        %7299 = vmatpush1.msra.mxu0 %v7267
        %7300 = vmatprep.subr.mxu0 0.0
        %7301 = vmatpush1.msra.mxu0 0.0
        %7302 = vmatprep.subr.mxu0 0.0
        %7303 = vmatpush1.msra.mxu0 0.0
        %7304 = vmatprep.subr.mxu0 0.0
        %7305 = vmatpush1.msra.mxu0 0.0
        %7306 = vmatprep.subr.mxu0 0.0
        %7307 = vmatpush1.msra.mxu0 0.0
        %7308 = vmatprep.subr.mxu0 0.0
        %7309 = vmatpush1.msra.mxu0 0.0
        %7310 = vmatprep.subr.mxu0 0.0
        %7311 = vmatpush1.msra.mxu0 0.0
        %7312 = vmatprep.subr.mxu0 0.0
        %7313 = vmatpush1.msra.mxu0 0.0
        %7314 = vmatprep.subr.mxu0 0.0
        %7315 = vmatpush1.msra.mxu0 0.0
        %7316 = vmatprep.subr.mxu0 0.0
        %7317 = vmatpush1.msra.mxu0 0.0
        %7318 = vmatprep.subr.mxu0 0.0
        %7319 = vmatpush1.msra.mxu0 0.0
        %7320 = vmatprep.subr.mxu0 0.0
        %7321 = vmatpush1.msra.mxu0 0.0
        %7322 = vmatprep.subr.mxu0 0.0
        %7323 = vmatpush1.msra.mxu0 0.0
        %7324 = vmatprep.subr.mxu0 0.0
        %7325 = vmatpush1.msra.mxu0 0.0
        %7326 = vmatprep.subr.mxu0 0.0
        %7327 = vmatpush1.msra.mxu0 0.0
        %7328 = vmatprep.subr.mxu0 0.0
        %7329 = vmatpush1.msra.mxu0 0.0
        %7330 = vmatprep.subr.mxu0 0.0
        %7331 = vmatpush1.msra.mxu0 0.0
        %7332 = vmatprep.mubr.f32.mxu0 0.0
        %7333 = vmatmul.mubr.f32.gmra.mrb[0].mxu0 %v7215
        %v7334 = vpop.f32.mrb[0].mxu0
        %v7335 = vadd.f32 0.0, %v7334
        %v7336 = vpop.f32.mrb[0].mxu0
        %7337 = vmatprep.mubr.f32.mxu0 0.0
        %7338 = vmatmul.mubr.f32.gmra.mrb[0].mxu0 %v7216
        %v7339 = vpop.f32.mrb[0].mxu0
        %v7340 = vadd.f32 0.0, %v7339
        %v7341 = vpop.f32.mrb[0].mxu0
        %7342 = vmatprep.mubr.f32.mxu0 0.0
        %7343 = vmatmul.mubr.f32.gmra.mrb[0].mxu0 %v7217
        %v7344 = vpop.f32.mrb[0].mxu0
        %v7345 = vadd.f32 0.0, %v7344
        %v7346 = vpop.f32.mrb[0].mxu0
        %7347 = vmatprep.mubr.f32.mxu0 0.0
        %7348 = vmatmul.mubr.f32.gmra.mrb[0].mxu0 %v7218
        %v7349 = vpop.f32.mrb[0].mxu0
        %v7350 = vadd.f32 0.0, %v7349
        %v7351 = vpop.f32.mrb[0].mxu0
        %7352 = vmatprep.mubr.f32.mxu0 0.0
        %7353 = vmatmul.mubr.f32.gmra.mrb[0].mxu0 %v7219
        %v7354 = vpop.f32.mrb[0].mxu0
        %v7355 = vadd.f32 0.0, %v7354
        %v7356 = vpop.f32.mrb[0].mxu0
        %7357 = vmatprep.mubr.f32.mxu0 0.0
        %7358 = vmatmul.mubr.f32.gmra.mrb[0].mxu0 %v7220
        %v7359 = vpop.f32.mrb[0].mxu0
        %v7360 = vadd.f32 0.0, %v7359
        %v7361 = vpop.f32.mrb[0].mxu0
        %7362 = vmatprep.mubr.f32.mxu0 0.0
        %7363 = vmatmul.mubr.f32.gmra.mrb[0].mxu0 %v7221
        %v7364 = vpop.f32.mrb[0].mxu0
        %v7365 = vadd.f32 0.0, %v7364
        %v7366 = vpop.f32.mrb[0].mxu0
        %7367 = vmatprep.mubr.f32.mxu0 0.0
        %7368 = vmatmul.mubr.f32.gmra.mrb[0].mxu0 %v7222
        %v7369 = vpop.f32.mrb[0].mxu0
        %v7370 = vadd.f32 0.0, %v7369
        %v7371 = vpop.f32.mrb[0].mxu0
        %7372 = vmatprep.mubr.f32.mxu0 0.0
        %7373 = vmatmul.mubr.f32.gmra.mrb[0].mxu0 %v7223
        %v7374 = vpop.f32.mrb[0].mxu0
        %v7375 = vadd.f32 0.0, %v7374
        %v7376 = vpop.f32.mrb[0].mxu0
        %7377 = vmatprep.mubr.f32.mxu0 0.0
        %7378 = vmatmul.mubr.f32.gmra.mrb[0].mxu0 %v7224
        %v7379 = vpop.f32.mrb[0].mxu0
        %v7380 = vadd.f32 0.0, %v7379
        %v7381 = vpop.f32.mrb[0].mxu0
        %7382 = vmatprep.mubr.f32.mxu0 0.0
        %7383 = vmatmul.mubr.f32.gmra.mrb[0].mxu0 %v7225
        %v7384 = vpop.f32.mrb[0].mxu0
        %v7385 = vadd.f32 0.0, %v7384
        %v7386 = vpop.f32.mrb[0].mxu0
        %7387 = vmatprep.mubr.f32.mxu0 0.0
        %7388 = vmatmul.mubr.f32.gmra.mrb[0].mxu0 %v7226
        %v7389 = vpop.f32.mrb[0].mxu0
        %v7390 = vadd.f32 0.0, %v7389
        %v7391 = vpop.f32.mrb[0].mxu0
        %7392 = vmatprep.mubr.f32.mxu0 0.0
        %7393 = vmatmul.mubr.f32.gmra.mrb[0].mxu0 %v7227
        %v7394 = vpop.f32.mrb[0].mxu0
        %v7395 = vadd.f32 0.0, %v7394
        %v7396 = vpop.f32.mrb[0].mxu0
        %7397 = vmatprep.mubr.f32.mxu0 0.0
        %7398 = vmatmul.mubr.f32.gmra.mrb[0].mxu0 %v7228
        %v7399 = vpop.f32.mrb[0].mxu0
        %v7400 = vadd.f32 0.0, %v7399
        %v7401 = vpop.f32.mrb[0].mxu0
        %7402 = vmatprep.mubr.f32.mxu0 0.0
        %7403 = vmatmul.mubr.f32.gmra.mrb[0].mxu0 %v7229
        %v7404 = vpop.f32.mrb[0].mxu0
        %v7405 = vadd.f32 0.0, %v7404
        %v7406 = vpop.f32.mrb[0].mxu0
        %7407 = vmatprep.mubr.f32.mxu0 0.0
        %7408 = vmatmul.mubr.f32.gmra.mrb[0].mxu0 %v7230
        %v7409 = vpop.f32.mrb[0].mxu0
        %v7410 = vadd.f32 0.0, %v7409
        %v7411 = vpop.f32.mrb[0].mxu0
        %7412 = vmatprep.mubr.f32.mxu0 0.0
        %7413 = vmatmul.mubr.f32.gmra.mrb[0].mxu0 %v7231
        %v7414 = vpop.f32.mrb[0].mxu0
        %v7415 = vadd.f32 0.0, %v7414
        %v7416 = vpop.f32.mrb[0].mxu0
        %7417 = vmatprep.mubr.f32.mxu0 0.0
        %7418 = vmatmul.mubr.f32.gmra.mrb[0].mxu0 %v7232
        %v7419 = vpop.f32.mrb[0].mxu0
        %v7420 = vadd.f32 0.0, %v7419
        %v7421 = vpop.f32.mrb[0].mxu0
        %7422 = vmatprep.mubr.f32.mxu0 0.0
        %7423 = vmatmul.mubr.f32.gmra.mrb[0].mxu0 %v7233
        %v7424 = vpop.f32.mrb[0].mxu0
        %v7425 = vadd.f32 0.0, %v7424
        %v7426 = vpop.f32.mrb[0].mxu0
        %7427 = vmatprep.mubr.f32.mxu0 0.0
        %7428 = vmatmul.mubr.f32.gmra.mrb[0].mxu0 %v7234
        %v7429 = vpop.f32.mrb[0].mxu0
        %v7430 = vadd.f32 0.0, %v7429
        %v7431 = vpop.f32.mrb[0].mxu0
        %7432 = vmatprep.mubr.f32.mxu0 0.0
        %7433 = vmatmul.mubr.f32.gmra.mrb[0].mxu0 %v7235
        %v7434 = vpop.f32.mrb[0].mxu0
        %v7435 = vadd.f32 0.0, %v7434
        %v7436 = vpop.f32.mrb[0].mxu0
        %7437 = vmatprep.mubr.f32.mxu0 0.0
        %7438 = vmatmul.mubr.f32.gmra.mrb[0].mxu0 %v7236
        %v7439 = vpop.f32.mrb[0].mxu0
        %v7440 = vadd.f32 0.0, %v7439
        %v7441 = vpop.f32.mrb[0].mxu0
        %7442 = vmatprep.mubr.f32.mxu0 0.0
        %7443 = vmatmul.mubr.f32.gmra.mrb[0].mxu0 %v7237
        %v7444 = vpop.f32.mrb[0].mxu0
        %v7445 = vadd.f32 0.0, %v7444
        %v7446 = vpop.f32.mrb[0].mxu0
        %7447 = vmatprep.mubr.f32.mxu0 0.0
        %7448 = vmatmul.mubr.f32.gmra.mrb[0].mxu0 %v7238
        %v7449 = vpop.f32.mrb[0].mxu0
        %v7450 = vadd.f32 0.0, %v7449
        %v7451 = vpop.f32.mrb[0].mxu0
        %7452 = vmatprep.mubr.f32.mxu0 0.0
        %7453 = vmatmul.mubr.f32.gmra.mrb[0].mxu0 %v7239
        %v7454 = vpop.f32.mrb[0].mxu0
        %v7455 = vadd.f32 0.0, %v7454
        %v7456 = vpop.f32.mrb[0].mxu0
        %7457 = vmatprep.mubr.f32.mxu0 0.0
        %7458 = vmatmul.mubr.f32.gmra.mrb[0].mxu0 %v7240
        %v7459 = vpop.f32.mrb[0].mxu0
        %v7460 = vadd.f32 0.0, %v7459
        %v7461 = vpop.f32.mrb[0].mxu0
        %7462 = vmatprep.mubr.f32.mxu0 0.0
        %7463 = vmatmul.mubr.f32.gmra.mrb[0].mxu0 %v7241
        %v7464 = vpop.f32.mrb[0].mxu0
        %v7465 = vadd.f32 0.0, %v7464
        %v7466 = vpop.f32.mrb[0].mxu0
        %7467 = vmatprep.mubr.f32.mxu0 0.0
        %7468 = vmatmul.mubr.f32.gmra.mrb[0].mxu0 %v7242
        %v7469 = vpop.f32.mrb[0].mxu0
        %v7470 = vadd.f32 0.0, %v7469
        %v7471 = vpop.f32.mrb[0].mxu0
        %7472 = vmatprep.mubr.f32.mxu0 0.0
        %7473 = vmatmul.mubr.f32.gmra.mrb[0].mxu0 %v7243
        %v7474 = vpop.f32.mrb[0].mxu0
        %v7475 = vadd.f32 0.0, %v7474
        %v7476 = vpop.f32.mrb[0].mxu0
        %7477 = vmatprep.mubr.f32.mxu0 0.0
        %7478 = vmatmul.mubr.f32.gmra.mrb[0].mxu0 %v7244
        %v7479 = vpop.f32.mrb[0].mxu0
        %v7480 = vadd.f32 0.0, %v7479
        %v7481 = vpop.f32.mrb[0].mxu0
        %7482 = vmatprep.mubr.f32.mxu0 0.0
        %7483 = vmatmul.mubr.f32.gmra.mrb[0].mxu0 %v7245
        %v7484 = vpop.f32.mrb[0].mxu0
        %v7485 = vadd.f32 0.0, %v7484
        %v7486 = vpop.f32.mrb[0].mxu0
        %7487 = vmatprep.mubr.f32.mxu0 0.0
        %7488 = vmatmul.mubr.f32.gmra.mrb[0].mxu0 %v7246
        %v7489 = vpop.f32.mrb[0].mxu0
        %v7490 = vadd.f32 0.0, %v7489
        %v7491 = vpop.f32.mrb[0].mxu0
        %7492 = vmatprep.mubr.f32.mxu0 0.0
        %7493 = vmatmul.mubr.f32.gmra.mrb[0].mxu0 %v7247
        %v7494 = vpop.f32.mrb[0].mxu0
        %v7495 = vadd.f32 0.0, %v7494
        %v7496 = vpop.f32.mrb[0].mxu0
        %7497 = vmatprep.mubr.f32.mxu0 0.0
        %7498 = vmatmul.mubr.f32.gmra.mrb[0].mxu0 %v7248
        %v7499 = vpop.f32.mrb[0].mxu0
        %v7500 = vadd.f32 0.0, %v7499
        %v7501 = vpop.f32.mrb[0].mxu0
        %7502 = vmatprep.mubr.f32.mxu0 0.0
        %7503 = vmatmul.mubr.f32.gmra.mrb[0].mxu0 %v7249
        %v7504 = vpop.f32.mrb[0].mxu0
        %v7505 = vadd.f32 0.0, %v7504
        %v7506 = vpop.f32.mrb[0].mxu0
        %7507 = vmatprep.mubr.f32.mxu0 0.0
        %7508 = vmatmul.mubr.f32.gmra.mrb[0].mxu0 %v7250
        %v7509 = vpop.f32.mrb[0].mxu0
        %v7510 = vadd.f32 0.0, %v7509
        %v7511 = vpop.f32.mrb[0].mxu0
        %7512 = vdwg.mxu0
        %v7513 = vadd.f32 %v7179, %v7335
        %v7514 = vadd.f32 %v7180, %v7340
        %v7515 = vadd.f32 %v7181, %v7345
        %v7516 = vadd.f32 %v7182, %v7350
        %v7517 = vadd.f32 %v7183, %v7355
        %v7518 = vadd.f32 %v7184, %v7360
        %v7519 = vadd.f32 %v7185, %v7365
        %v7520 = vadd.f32 %v7186, %v7370
        %v7521 = vadd.f32 %v7187, %v7375
        %v7522 = vadd.f32 %v7188, %v7380
        %v7523 = vadd.f32 %v7189, %v7385
        %v7524 = vadd.f32 %v7190, %v7390
        %v7525 = vadd.f32 %v7191, %v7395
        %v7526 = vadd.f32 %v7192, %v7400
        %v7527 = vadd.f32 %v7193, %v7405
        %v7528 = vadd.f32 %v7194, %v7410
        %v7529 = vadd.f32 %v7195, %v7415
        %v7530 = vadd.f32 %v7196, %v7420
        %v7531 = vadd.f32 %v7197, %v7425
        %v7532 = vadd.f32 %v7198, %v7430
        %v7533 = vadd.f32 %v7199, %v7435
        %v7534 = vadd.f32 %v7200, %v7440
        %v7535 = vadd.f32 %v7201, %v7445
        %v7536 = vadd.f32 %v7202, %v7450
        %v7537 = vadd.f32 %v7203, %v7455
        %v7538 = vadd.f32 %v7204, %v7460
        %v7539 = vadd.f32 %v7205, %v7465
        %v7540 = vadd.f32 %v7206, %v7470
        %v7541 = vadd.f32 %v7207, %v7475
        %v7542 = vadd.f32 %v7208, %v7480
        %v7543 = vadd.f32 %v7209, %v7485
        %v7544 = vadd.f32 %v7210, %v7490
        %v7545 = vadd.f32 %v7211, %v7495
        %v7546 = vadd.f32 %v7212, %v7500
        %v7547 = vadd.f32 %v7213, %v7505
        %v7548 = vadd.f32 %v7214, %v7510
        %v7549 = vld [vmem:[%s6] sm:$0x1]
        %v7551 = vlaneseq
        %v7552 = vshrl.u32 %v7551, 7
        %v7553 = vsub.s32 0, %v7552
        %v7554 = vrot.slane %v7549, %v7553
        %v7556 = vadd.f32 %v7513, %v7554
        %v7557 = vadd.f32 %v7514, %v7554
        %v7558 = vadd.f32 %v7515, %v7554
        %v7559 = vadd.f32 %v7516, %v7554
        %v7560 = vadd.f32 %v7517, %v7554
        %v7561 = vadd.f32 %v7518, %v7554
        %v7562 = vadd.f32 %v7519, %v7554
        %v7563 = vadd.f32 %v7520, %v7554
        %v7564 = vadd.f32 %v7521, %v7554
        %v7565 = vadd.f32 %v7522, %v7554
        %v7566 = vadd.f32 %v7523, %v7554
        %v7567 = vadd.f32 %v7524, %v7554
        %v7568 = vadd.f32 %v7525, %v7554
        %v7569 = vadd.f32 %v7526, %v7554
        %v7570 = vadd.f32 %v7527, %v7554
        %v7571 = vadd.f32 %v7528, %v7554
        %v7572 = vadd.f32 %v7529, %v7554
        %v7573 = vadd.f32 %v7530, %v7554
        %v7574 = vadd.f32 %v7531, %v7554
        %v7575 = vadd.f32 %v7532, %v7554
        %v7576 = vadd.f32 %v7533, %v7554
        %v7577 = vadd.f32 %v7534, %v7554
        %v7578 = vadd.f32 %v7535, %v7554
        %v7579 = vadd.f32 %v7536, %v7554
        %v7580 = vadd.f32 %v7537, %v7554
        %v7581 = vadd.f32 %v7538, %v7554
        %v7582 = vadd.f32 %v7539, %v7554
        %v7583 = vadd.f32 %v7540, %v7554
        %v7584 = vadd.f32 %v7541, %v7554
        %v7585 = vadd.f32 %v7542, %v7554
        %v7586 = vadd.f32 %v7543, %v7554
        %v7587 = vadd.f32 %v7544, %v7554
        %v7588 = vadd.f32 %v7545, %v7554
        %v7589 = vadd.f32 %v7546, %v7554
        %v7590 = vadd.f32 %v7547, %v7554
        %v7591 = vadd.f32 %v7548, %v7554
        %v7592 = vmax.f32 %v7556, 0.0
        %v7593 = vmax.f32 %v7557, 0.0
        %v7594 = vmax.f32 %v7558, 0.0
        %v7595 = vmax.f32 %v7559, 0.0
        %v7596 = vmax.f32 %v7560, 0.0
        %v7597 = vmax.f32 %v7561, 0.0
        %v7598 = vmax.f32 %v7562, 0.0
        %v7599 = vmax.f32 %v7563, 0.0
        %v7600 = vmax.f32 %v7564, 0.0
        %v7601 = vmax.f32 %v7565, 0.0
        %v7602 = vmax.f32 %v7566, 0.0
        %v7603 = vmax.f32 %v7567, 0.0
        %v7604 = vmax.f32 %v7568, 0.0
        %v7605 = vmax.f32 %v7569, 0.0
        %v7606 = vmax.f32 %v7570, 0.0
        %v7607 = vmax.f32 %v7571, 0.0
        %v7608 = vmax.f32 %v7572, 0.0
        %v7609 = vmax.f32 %v7573, 0.0
        %v7610 = vmax.f32 %v7574, 0.0
        %v7611 = vmax.f32 %v7575, 0.0
        %v7612 = vmax.f32 %v7576, 0.0
        %v7613 = vmax.f32 %v7577, 0.0
        %v7614 = vmax.f32 %v7578, 0.0
        %v7615 = vmax.f32 %v7579, 0.0
        %v7616 = vmax.f32 %v7580, 0.0
        %v7617 = vmax.f32 %v7581, 0.0
        %v7618 = vmax.f32 %v7582, 0.0
        %v7619 = vmax.f32 %v7583, 0.0
        %v7620 = vmax.f32 %v7584, 0.0
        %v7621 = vmax.f32 %v7585, 0.0
        %v7622 = vmax.f32 %v7586, 0.0
        %v7623 = vmax.f32 %v7587, 0.0
        %v7624 = vmax.f32 %v7588, 0.0
        %v7625 = vmax.f32 %v7589, 0.0
        %v7626 = vmax.f32 %v7590, 0.0
        %v7627 = vmax.f32 %v7591, 0.0
        %v7628 = vld [vmem:[#allocation2 + $0x13] sm:$0xff]
        %v7629 = vld [vmem:[#allocation2 + $0x1b] sm:$0xff]
        %v7630 = vld [vmem:[#allocation2 + $0x23] sm:$0xff]
        %v7631 = vld [vmem:[#allocation2 + $0x2b] sm:$0xff]
        %v7632 = vld [vmem:[#allocation2 + $0x33] sm:$0xff]
        %v7633 = vld [vmem:[#allocation2 + $0x3b] sm:$0xff]
        %v7634 = vld [vmem:[#allocation2 + $0x43] sm:$0xff]
        %v7635 = vld [vmem:[#allocation2 + $0x4b] sm:$0xff]
        %v7636 = vld [vmem:[#allocation2 + $0x53] sm:$0xff]
        %v7637 = vld [vmem:[#allocation2 + $0x5b] sm:$0xff]
        %v7638 = vld [vmem:[#allocation2 + $0x63] sm:$0xff]
        %v7639 = vld [vmem:[#allocation2 + $0x6b] sm:$0xff]
        %v7640 = vld [vmem:[#allocation2 + $0x73] sm:$0xff]
        %v7641 = vld [vmem:[#allocation2 + $0x7b] sm:$0xff]
        %v7642 = vld [vmem:[#allocation2 + $0x83] sm:$0xff]
        %v7643 = vld [vmem:[#allocation2 + $0x8b] sm:$0xff]
        %v7644 = vld [vmem:[#allocation2 + $0x93] sm:$0xff]
        %v7645 = vld [vmem:[#allocation2 + $0x9b] sm:$0xff]
        %v7646 = vld [vmem:[#allocation2 + $0xa3] sm:$0xff]
        %v7647 = vld [vmem:[#allocation2 + $0xab] sm:$0xff]
        %v7648 = vld [vmem:[#allocation2 + $0xb3] sm:$0xff]
        %v7649 = vld [vmem:[#allocation2 + $0xbb] sm:$0xff]
        %v7650 = vld [vmem:[#allocation2 + $0xc3] sm:$0xff]
        %v7651 = vld [vmem:[#allocation2 + $0xcb] sm:$0xff]
        %v7652 = vld [vmem:[#allocation2 + $0xd3] sm:$0xff]
        %v7653 = vld [vmem:[#allocation2 + $0xdb] sm:$0xff]
        %v7654 = vld [vmem:[#allocation2 + $0xe3] sm:$0xff]
        %v7655 = vld [vmem:[#allocation2 + $0xeb] sm:$0xff]
        %v7656 = vld [vmem:[#allocation2 + $0xf3] sm:$0xff]
        %v7657 = vld [vmem:[#allocation2 + $0xfb] sm:$0xff]
        %v7658 = vld [vmem:[#allocation2 + $0x103] sm:$0xff]
        %v7659 = vld [vmem:[#allocation2 + $0x10b] sm:$0xff]
        %v7660 = vld [vmem:[#allocation2 + $0x113] sm:$0xff]
        %v7661 = vld [vmem:[#allocation2 + $0x11b] sm:$0xff]
        %v7662 = vld [vmem:[#allocation2 + $0x123] sm:$0xff]
        %v7663 = vld [vmem:[#allocation2 + $0x12b] sm:$0xff]
        %v7664 = vld [vmem:[%s4] sm:$0xf]
        %v7665 = vld [vmem:[%s7] sm:$0x1]
        %v7667 = vlaneseq
        %v7668 = vshrl.u32 %v7667, 7
        %v7669 = vsub.s32 0, %v7668
        %v7670 = vrot.slane %v7665, %v7669
        %v7673 = vsel %vm362, %v7628, 0
        %v7676 = vsel %vm362, %v7629, 0
        %v7679 = vsel %vm362, %v7630, 0
        %v7682 = vsel %vm362, %v7631, 0
        %v7685 = vsel %vm362, %v7632, 0
        %v7688 = vsel %vm362, %v7633, 0
        %v7691 = vsel %vm362, %v7634, 0
        %v7694 = vsel %vm362, %v7635, 0
        %v7697 = vsel %vm362, %v7636, 0
        %v7700 = vsel %vm362, %v7637, 0
        %v7703 = vsel %vm362, %v7638, 0
        %v7706 = vsel %vm362, %v7639, 0
        %v7709 = vsel %vm362, %v7640, 0
        %v7712 = vsel %vm362, %v7641, 0
        %v7715 = vsel %vm362, %v7642, 0
        %v7718 = vsel %vm362, %v7643, 0
        %v7721 = vsel %vm362, %v7644, 0
        %v7724 = vsel %vm362, %v7645, 0
        %v7727 = vsel %vm362, %v7646, 0
        %v7730 = vsel %vm362, %v7647, 0
        %v7733 = vsel %vm362, %v7648, 0
        %v7736 = vsel %vm362, %v7649, 0
        %v7739 = vsel %vm362, %v7650, 0
        %v7742 = vsel %vm362, %v7651, 0
        %v7745 = vsel %vm362, %v7652, 0
        %v7748 = vsel %vm362, %v7653, 0
        %v7751 = vsel %vm362, %v7654, 0
        %v7754 = vsel %vm362, %v7655, 0
        %v7757 = vsel %vm362, %v7656, 0
        %v7760 = vsel %vm362, %v7657, 0
        %v7763 = vsel %vm362, %v7658, 0
        %v7766 = vsel %vm362, %v7659, 0
        %v7769 = vsel %vm362, %v7660, 0
        %v7772 = vsel %vm362, %v7661, 0
        %v7775 = vsel %vm362, %v7662, 0
        %v7778 = vsel %vm362, %v7663, 0
        %v7781 = vsel %vm590, %v7664, 0
        %7783 = vmatprep.subr.mxu0 0.0
        %7784 = vmatpush1.msra.mxu0 %v7781
        %7785 = vmatprep.subr.mxu0 0.0
        %7786 = vmatpush1.msra.mxu0 0.0
        %7787 = vmatprep.subr.mxu0 0.0
        %7788 = vmatpush1.msra.mxu0 0.0
        %7789 = vmatprep.subr.mxu0 0.0
        %7790 = vmatpush1.msra.mxu0 0.0
        %7791 = vmatprep.subr.mxu0 0.0
        %7792 = vmatpush1.msra.mxu0 0.0
        %7793 = vmatprep.subr.mxu0 0.0
        %7794 = vmatpush1.msra.mxu0 0.0
        %7795 = vmatprep.subr.mxu0 0.0
        %7796 = vmatpush1.msra.mxu0 0.0
        %7797 = vmatprep.subr.mxu0 0.0
        %7798 = vmatpush1.msra.mxu0 0.0
        %7799 = vmatprep.subr.mxu0 0.0
        %7800 = vmatpush1.msra.mxu0 0.0
        %7801 = vmatprep.subr.mxu0 0.0
        %7802 = vmatpush1.msra.mxu0 0.0
        %7803 = vmatprep.subr.mxu0 0.0
        %7804 = vmatpush1.msra.mxu0 0.0
        %7805 = vmatprep.subr.mxu0 0.0
        %7806 = vmatpush1.msra.mxu0 0.0
        %7807 = vmatprep.subr.mxu0 0.0
        %7808 = vmatpush1.msra.mxu0 0.0
        %7809 = vmatprep.subr.mxu0 0.0
        %7810 = vmatpush1.msra.mxu0 0.0
        %7811 = vmatprep.subr.mxu0 0.0
        %7812 = vmatpush1.msra.mxu0 0.0
        %7813 = vmatprep.subr.mxu0 0.0
        %7814 = vmatpush1.msra.mxu0 0.0
        %7815 = vmatprep.subr.mxu0 0.0
        %7816 = vmatpush1.msra.mxu0 0.0
        %7817 = vmatprep.subr.mxu0 0.0
        %7818 = vmatpush1.msra.mxu0 0.0
        %7819 = vmatprep.subr.mxu0 0.0
        %7820 = vmatpush1.msra.mxu0 0.0
        %7821 = vmatprep.subr.mxu0 0.0
        %7822 = vmatpush1.msra.mxu0 0.0
        %7823 = vmatprep.subr.mxu0 0.0
        %7824 = vmatpush1.msra.mxu0 0.0
        %7825 = vmatprep.subr.mxu0 0.0
        %7826 = vmatpush1.msra.mxu0 0.0
        %7827 = vmatprep.subr.mxu0 0.0
        %7828 = vmatpush1.msra.mxu0 0.0
        %7829 = vmatprep.subr.mxu0 0.0
        %7830 = vmatpush1.msra.mxu0 0.0
        %7831 = vmatprep.subr.mxu0 0.0
        %7832 = vmatpush1.msra.mxu0 0.0
        %7833 = vmatprep.subr.mxu0 0.0
        %7834 = vmatpush1.msra.mxu0 0.0
        %7835 = vmatprep.subr.mxu0 0.0
        %7836 = vmatpush1.msra.mxu0 0.0
        %7837 = vmatprep.subr.mxu0 0.0
        %7838 = vmatpush1.msra.mxu0 0.0
        %7839 = vmatprep.subr.mxu0 0.0
        %7840 = vmatpush1.msra.mxu0 0.0
        %7841 = vmatprep.subr.mxu0 0.0
        %7842 = vmatpush1.msra.mxu0 0.0
        %7843 = vmatprep.subr.mxu0 0.0
        %7844 = vmatpush1.msra.mxu0 0.0
        %7845 = vmatprep.subr.mxu0 0.0
        %7846 = vmatpush1.msra.mxu0 0.0
        %7847 = vmatprep.mubr.f32.mxu0 0.0
        %7848 = vmatmul.mubr.f32.gmra.mrb[0].mxu0 %v7673
        %v7849 = vpop.f32.mrb[0].mxu0
        %v7850 = vadd.f32 %v7670, %v7849
        %v7851 = vpop.f32.mrb[0].mxu0
        %7852 = vmatprep.mubr.f32.mxu0 0.0
        %7853 = vmatmul.mubr.f32.gmra.mrb[0].mxu0 %v7676
        %v7854 = vpop.f32.mrb[0].mxu0
        %v7855 = vadd.f32 %v7670, %v7854
        %v7856 = vpop.f32.mrb[0].mxu0
        %7857 = vmatprep.mubr.f32.mxu0 0.0
        %7858 = vmatmul.mubr.f32.gmra.mrb[0].mxu0 %v7679
        %v7859 = vpop.f32.mrb[0].mxu0
        %v7860 = vadd.f32 %v7670, %v7859
        %v7861 = vpop.f32.mrb[0].mxu0
        %7862 = vmatprep.mubr.f32.mxu0 0.0
        %7863 = vmatmul.mubr.f32.gmra.mrb[0].mxu0 %v7682
        %v7864 = vpop.f32.mrb[0].mxu0
        %v7865 = vadd.f32 %v7670, %v7864
        %v7866 = vpop.f32.mrb[0].mxu0
        %7867 = vmatprep.mubr.f32.mxu0 0.0
        %7868 = vmatmul.mubr.f32.gmra.mrb[0].mxu0 %v7685
        %v7869 = vpop.f32.mrb[0].mxu0
        %v7870 = vadd.f32 %v7670, %v7869
        %v7871 = vpop.f32.mrb[0].mxu0
        %7872 = vmatprep.mubr.f32.mxu0 0.0
        %7873 = vmatmul.mubr.f32.gmra.mrb[0].mxu0 %v7688
        %v7874 = vpop.f32.mrb[0].mxu0
        %v7875 = vadd.f32 %v7670, %v7874
        %v7876 = vpop.f32.mrb[0].mxu0
        %7877 = vmatprep.mubr.f32.mxu0 0.0
        %7878 = vmatmul.mubr.f32.gmra.mrb[0].mxu0 %v7691
        %v7879 = vpop.f32.mrb[0].mxu0
        %v7880 = vadd.f32 %v7670, %v7879
        %v7881 = vpop.f32.mrb[0].mxu0
        %7882 = vmatprep.mubr.f32.mxu0 0.0
        %7883 = vmatmul.mubr.f32.gmra.mrb[0].mxu0 %v7694
        %v7884 = vpop.f32.mrb[0].mxu0
        %v7885 = vadd.f32 %v7670, %v7884
        %v7886 = vpop.f32.mrb[0].mxu0
        %7887 = vmatprep.mubr.f32.mxu0 0.0
        %7888 = vmatmul.mubr.f32.gmra.mrb[0].mxu0 %v7697
        %v7889 = vpop.f32.mrb[0].mxu0
        %v7890 = vadd.f32 %v7670, %v7889
        %v7891 = vpop.f32.mrb[0].mxu0
        %7892 = vmatprep.mubr.f32.mxu0 0.0
        %7893 = vmatmul.mubr.f32.gmra.mrb[0].mxu0 %v7700
        %v7894 = vpop.f32.mrb[0].mxu0
        %v7895 = vadd.f32 %v7670, %v7894
        %v7896 = vpop.f32.mrb[0].mxu0
        %7897 = vmatprep.mubr.f32.mxu0 0.0
        %7898 = vmatmul.mubr.f32.gmra.mrb[0].mxu0 %v7703
        %v7899 = vpop.f32.mrb[0].mxu0
        %v7900 = vadd.f32 %v7670, %v7899
        %v7901 = vpop.f32.mrb[0].mxu0
        %7902 = vmatprep.mubr.f32.mxu0 0.0
        %7903 = vmatmul.mubr.f32.gmra.mrb[0].mxu0 %v7706
        %v7904 = vpop.f32.mrb[0].mxu0
        %v7905 = vadd.f32 %v7670, %v7904
        %v7906 = vpop.f32.mrb[0].mxu0
        %7907 = vmatprep.mubr.f32.mxu0 0.0
        %7908 = vmatmul.mubr.f32.gmra.mrb[0].mxu0 %v7709
        %v7909 = vpop.f32.mrb[0].mxu0
        %v7910 = vadd.f32 %v7670, %v7909
        %v7911 = vpop.f32.mrb[0].mxu0
        %7912 = vmatprep.mubr.f32.mxu0 0.0
        %7913 = vmatmul.mubr.f32.gmra.mrb[0].mxu0 %v7712
        %v7914 = vpop.f32.mrb[0].mxu0
        %v7915 = vadd.f32 %v7670, %v7914
        %v7916 = vpop.f32.mrb[0].mxu0
        %7917 = vmatprep.mubr.f32.mxu0 0.0
        %7918 = vmatmul.mubr.f32.gmra.mrb[0].mxu0 %v7715
        %v7919 = vpop.f32.mrb[0].mxu0
        %v7920 = vadd.f32 %v7670, %v7919
        %v7921 = vpop.f32.mrb[0].mxu0
        %7922 = vmatprep.mubr.f32.mxu0 0.0
        %7923 = vmatmul.mubr.f32.gmra.mrb[0].mxu0 %v7718
        %v7924 = vpop.f32.mrb[0].mxu0
        %v7925 = vadd.f32 %v7670, %v7924
        %v7926 = vpop.f32.mrb[0].mxu0
        %7927 = vmatprep.mubr.f32.mxu0 0.0
        %7928 = vmatmul.mubr.f32.gmra.mrb[0].mxu0 %v7721
        %v7929 = vpop.f32.mrb[0].mxu0
        %v7930 = vadd.f32 %v7670, %v7929
        %v7931 = vpop.f32.mrb[0].mxu0
        %7932 = vmatprep.mubr.f32.mxu0 0.0
        %7933 = vmatmul.mubr.f32.gmra.mrb[0].mxu0 %v7724
        %v7934 = vpop.f32.mrb[0].mxu0
        %v7935 = vadd.f32 %v7670, %v7934
        %v7936 = vpop.f32.mrb[0].mxu0
        %7937 = vmatprep.mubr.f32.mxu0 0.0
        %7938 = vmatmul.mubr.f32.gmra.mrb[0].mxu0 %v7727
        %v7939 = vpop.f32.mrb[0].mxu0
        %v7940 = vadd.f32 %v7670, %v7939
        %v7941 = vpop.f32.mrb[0].mxu0
        %7942 = vmatprep.mubr.f32.mxu0 0.0
        %7943 = vmatmul.mubr.f32.gmra.mrb[0].mxu0 %v7730
        %v7944 = vpop.f32.mrb[0].mxu0
        %v7945 = vadd.f32 %v7670, %v7944
        %v7946 = vpop.f32.mrb[0].mxu0
        %7947 = vmatprep.mubr.f32.mxu0 0.0
        %7948 = vmatmul.mubr.f32.gmra.mrb[0].mxu0 %v7733
        %v7949 = vpop.f32.mrb[0].mxu0
        %v7950 = vadd.f32 %v7670, %v7949
        %v7951 = vpop.f32.mrb[0].mxu0
        %7952 = vmatprep.mubr.f32.mxu0 0.0
        %7953 = vmatmul.mubr.f32.gmra.mrb[0].mxu0 %v7736
        %v7954 = vpop.f32.mrb[0].mxu0
        %v7955 = vadd.f32 %v7670, %v7954
        %v7956 = vpop.f32.mrb[0].mxu0
        %7957 = vmatprep.mubr.f32.mxu0 0.0
        %7958 = vmatmul.mubr.f32.gmra.mrb[0].mxu0 %v7739
        %v7959 = vpop.f32.mrb[0].mxu0
        %v7960 = vadd.f32 %v7670, %v7959
        %v7961 = vpop.f32.mrb[0].mxu0
        %7962 = vmatprep.mubr.f32.mxu0 0.0
        %7963 = vmatmul.mubr.f32.gmra.mrb[0].mxu0 %v7742
        %v7964 = vpop.f32.mrb[0].mxu0
        %v7965 = vadd.f32 %v7670, %v7964
        %v7966 = vpop.f32.mrb[0].mxu0
        %7967 = vmatprep.mubr.f32.mxu0 0.0
        %7968 = vmatmul.mubr.f32.gmra.mrb[0].mxu0 %v7745
        %v7969 = vpop.f32.mrb[0].mxu0
        %v7970 = vadd.f32 %v7670, %v7969
        %v7971 = vpop.f32.mrb[0].mxu0
        %7972 = vmatprep.mubr.f32.mxu0 0.0
        %7973 = vmatmul.mubr.f32.gmra.mrb[0].mxu0 %v7748
        %v7974 = vpop.f32.mrb[0].mxu0
        %v7975 = vadd.f32 %v7670, %v7974
        %v7976 = vpop.f32.mrb[0].mxu0
        %7977 = vmatprep.mubr.f32.mxu0 0.0
        %7978 = vmatmul.mubr.f32.gmra.mrb[0].mxu0 %v7751
        %v7979 = vpop.f32.mrb[0].mxu0
        %v7980 = vadd.f32 %v7670, %v7979
        %v7981 = vpop.f32.mrb[0].mxu0
        %7982 = vmatprep.mubr.f32.mxu0 0.0
        %7983 = vmatmul.mubr.f32.gmra.mrb[0].mxu0 %v7754
        %v7984 = vpop.f32.mrb[0].mxu0
        %v7985 = vadd.f32 %v7670, %v7984
        %v7986 = vpop.f32.mrb[0].mxu0
        %7987 = vmatprep.mubr.f32.mxu0 0.0
        %7988 = vmatmul.mubr.f32.gmra.mrb[0].mxu0 %v7757
        %v7989 = vpop.f32.mrb[0].mxu0
        %v7990 = vadd.f32 %v7670, %v7989
        %v7991 = vpop.f32.mrb[0].mxu0
        %7992 = vmatprep.mubr.f32.mxu0 0.0
        %7993 = vmatmul.mubr.f32.gmra.mrb[0].mxu0 %v7760
        %v7994 = vpop.f32.mrb[0].mxu0
        %v7995 = vadd.f32 %v7670, %v7994
        %v7996 = vpop.f32.mrb[0].mxu0
        %7997 = vmatprep.mubr.f32.mxu0 0.0
        %7998 = vmatmul.mubr.f32.gmra.mrb[0].mxu0 %v7763
        %v7999 = vpop.f32.mrb[0].mxu0
        %v8000 = vadd.f32 %v7670, %v7999
        %v8001 = vpop.f32.mrb[0].mxu0
        %8002 = vmatprep.mubr.f32.mxu0 0.0
        %8003 = vmatmul.mubr.f32.gmra.mrb[0].mxu0 %v7766
        %v8004 = vpop.f32.mrb[0].mxu0
        %v8005 = vadd.f32 %v7670, %v8004
        %v8006 = vpop.f32.mrb[0].mxu0
        %8007 = vmatprep.mubr.f32.mxu0 0.0
        %8008 = vmatmul.mubr.f32.gmra.mrb[0].mxu0 %v7769
        %v8009 = vpop.f32.mrb[0].mxu0
        %v8010 = vadd.f32 %v7670, %v8009
        %v8011 = vpop.f32.mrb[0].mxu0
        %8012 = vmatprep.mubr.f32.mxu0 0.0
        %8013 = vmatmul.mubr.f32.gmra.mrb[0].mxu0 %v7772
        %v8014 = vpop.f32.mrb[0].mxu0
        %v8015 = vadd.f32 %v7670, %v8014
        %v8016 = vpop.f32.mrb[0].mxu0
        %8017 = vmatprep.mubr.f32.mxu0 0.0
        %8018 = vmatmul.mubr.f32.gmra.mrb[0].mxu0 %v7775
        %v8019 = vpop.f32.mrb[0].mxu0
        %v8020 = vadd.f32 %v7670, %v8019
        %v8021 = vpop.f32.mrb[0].mxu0
        %8022 = vmatprep.mubr.f32.mxu0 0.0
        %8023 = vmatmul.mubr.f32.gmra.mrb[0].mxu0 %v7778
        %v8024 = vpop.f32.mrb[0].mxu0
        %v8025 = vadd.f32 %v7670, %v8024
        %v8026 = vpop.f32.mrb[0].mxu0
        %8027 = vdwg.mxu0
        %v8028 = vadd.f32 %v7592, %v7850
        %v8029 = vadd.f32 %v7593, %v7855
        %v8030 = vadd.f32 %v7594, %v7860
        %v8031 = vadd.f32 %v7595, %v7865
        %v8032 = vadd.f32 %v7596, %v7870
        %v8033 = vadd.f32 %v7597, %v7875
        %v8034 = vadd.f32 %v7598, %v7880
        %v8035 = vadd.f32 %v7599, %v7885
        %v8036 = vadd.f32 %v7600, %v7890
        %v8037 = vadd.f32 %v7601, %v7895
        %v8038 = vadd.f32 %v7602, %v7900
        %v8039 = vadd.f32 %v7603, %v7905
        %v8040 = vadd.f32 %v7604, %v7910
        %v8041 = vadd.f32 %v7605, %v7915
        %v8042 = vadd.f32 %v7606, %v7920
        %v8043 = vadd.f32 %v7607, %v7925
        %v8044 = vadd.f32 %v7608, %v7930
        %v8045 = vadd.f32 %v7609, %v7935
        %v8046 = vadd.f32 %v7610, %v7940
        %v8047 = vadd.f32 %v7611, %v7945
        %v8048 = vadd.f32 %v7612, %v7950
        %v8049 = vadd.f32 %v7613, %v7955
        %v8050 = vadd.f32 %v7614, %v7960
        %v8051 = vadd.f32 %v7615, %v7965
        %v8052 = vadd.f32 %v7616, %v7970
        %v8053 = vadd.f32 %v7617, %v7975
        %v8054 = vadd.f32 %v7618, %v7980
        %v8055 = vadd.f32 %v7619, %v7985
        %v8056 = vadd.f32 %v7620, %v7990
        %v8057 = vadd.f32 %v7621, %v7995
        %v8058 = vadd.f32 %v7622, %v8000
        %v8059 = vadd.f32 %v7623, %v8005
        %v8060 = vadd.f32 %v7624, %v8010
        %v8061 = vadd.f32 %v7625, %v8015
        %v8062 = vadd.f32 %v7626, %v8020
        %v8063 = vadd.f32 %v7627, %v8025
        %v8064 = vmax.f32 %v8028, 0.0
        %v8065 = vmax.f32 %v8029, 0.0
        %v8066 = vmax.f32 %v8030, 0.0
        %v8067 = vmax.f32 %v8031, 0.0
        %v8068 = vmax.f32 %v8032, 0.0
        %v8069 = vmax.f32 %v8033, 0.0
        %v8070 = vmax.f32 %v8034, 0.0
        %v8071 = vmax.f32 %v8035, 0.0
        %v8072 = vmax.f32 %v8036, 0.0
        %v8073 = vmax.f32 %v8037, 0.0
        %v8074 = vmax.f32 %v8038, 0.0
        %v8075 = vmax.f32 %v8039, 0.0
        %v8076 = vmax.f32 %v8040, 0.0
        %v8077 = vmax.f32 %v8041, 0.0
        %v8078 = vmax.f32 %v8042, 0.0
        %v8079 = vmax.f32 %v8043, 0.0
        %v8080 = vmax.f32 %v8044, 0.0
        %v8081 = vmax.f32 %v8045, 0.0
        %v8082 = vmax.f32 %v8046, 0.0
        %v8083 = vmax.f32 %v8047, 0.0
        %v8084 = vmax.f32 %v8048, 0.0
        %v8085 = vmax.f32 %v8049, 0.0
        %v8086 = vmax.f32 %v8050, 0.0
        %v8087 = vmax.f32 %v8051, 0.0
        %v8088 = vmax.f32 %v8052, 0.0
        %v8089 = vmax.f32 %v8053, 0.0
        %v8090 = vmax.f32 %v8054, 0.0
        %v8091 = vmax.f32 %v8055, 0.0
        %v8092 = vmax.f32 %v8056, 0.0
        %v8093 = vmax.f32 %v8057, 0.0
        %v8094 = vmax.f32 %v8058, 0.0
        %v8095 = vmax.f32 %v8059, 0.0
        %v8096 = vmax.f32 %v8060, 0.0
        %v8097 = vmax.f32 %v8061, 0.0
        %v8098 = vmax.f32 %v8062, 0.0
        %v8099 = vmax.f32 %v8063, 0.0
        %8100 = vst [vmem:[%s313] sm:$0xff] %v8064
        %8101 = vst [vmem:[%s313 + $0x8] sm:$0xff] %v8065
        %8102 = vst [vmem:[%s313 + $0x10] sm:$0xff] %v8066
        %8103 = vst [vmem:[%s313 + $0x18] sm:$0xff] %v8067
        %8104 = vst [vmem:[%s313 + $0x20] sm:$0xff] %v8068
        %8105 = vst [vmem:[%s313 + $0x28] sm:$0xff] %v8069
        %8106 = vst [vmem:[%s313 + $0x30] sm:$0xff] %v8070
        %8107 = vst [vmem:[%s313 + $0x38] sm:$0xff] %v8071
        %8108 = vst [vmem:[%s313 + $0x40] sm:$0xff] %v8072
        %8109 = vst [vmem:[%s313 + $0x48] sm:$0xff] %v8073
        %8110 = vst [vmem:[%s313 + $0x50] sm:$0xff] %v8074
        %8111 = vst [vmem:[%s313 + $0x58] sm:$0xff] %v8075
        %8112 = vst [vmem:[%s313 + $0x60] sm:$0xff] %v8076
        %8113 = vst [vmem:[%s313 + $0x68] sm:$0xff] %v8077
        %8114 = vst [vmem:[%s313 + $0x70] sm:$0xff] %v8078
        %8115 = vst [vmem:[%s313 + $0x78] sm:$0xff] %v8079
        %8116 = vst [vmem:[%s313 + $0x80] sm:$0xff] %v8080
        %8117 = vst [vmem:[%s313 + $0x88] sm:$0xff] %v8081
        %8118 = vst [vmem:[%s313 + $0x90] sm:$0xff] %v8082
        %8119 = vst [vmem:[%s313 + $0x98] sm:$0xff] %v8083
        %8120 = vst [vmem:[%s313 + $0xa0] sm:$0xff] %v8084
        %8121 = vst [vmem:[%s313 + $0xa8] sm:$0xff] %v8085
        %8122 = vst [vmem:[%s313 + $0xb0] sm:$0xff] %v8086
        %8123 = vst [vmem:[%s313 + $0xb8] sm:$0xff] %v8087
        %8124 = vst [vmem:[%s313 + $0xc0] sm:$0xff] %v8088
        %8125 = vst [vmem:[%s313 + $0xc8] sm:$0xff] %v8089
        %8126 = vst [vmem:[%s313 + $0xd0] sm:$0xff] %v8090
        %8127 = vst [vmem:[%s313 + $0xd8] sm:$0xff] %v8091
        %8128 = vst [vmem:[%s313 + $0xe0] sm:$0xff] %v8092
        %8129 = vst [vmem:[%s313 + $0xe8] sm:$0xff] %v8093
        %8130 = vst [vmem:[%s313 + $0xf0] sm:$0xff] %v8094
        %8131 = vst [vmem:[%s313 + $0xf8] sm:$0xff] %v8095
        %8132 = vst [vmem:[%s313 + $0x100] sm:$0xff] %v8096
        %8133 = vst [vmem:[%s313 + $0x108] sm:$0xff] %v8097
        %8134 = vst [vmem:[%s313 + $0x110] sm:$0xff] %v8098
        %8135 = vst [vmem:[%s313 + $0x118] sm:$0xff] %v8099
        %s8136 = sand.u32 %s204, 1
        %s8137 = scalar_lea.sflag [#allocation6], %s8136
        %s8138 = sand.u32 %s204, 1
        %s8139 = smul.addr %s8138, 288
        %s8140 = scalar_lea.vmem [#allocation7], %s8139
        // Predicated region
        $region57: #{tpu_custom_call.1} parent=51 // pred_check
          %p8141 = pneg %p214
        $region58: #{tpu_custom_call.1} parent=51 // pred_check_branch
          %8143 = sbr.rel (%p8141) target = $region60
        $region59: #{tpu_custom_call.1} parent=51 // pred_region
          %s8145 = ssub.s32 4608, 4608
          %8146 = vsyncadd %s8137, %s8145
          %s8147 = smul.addr %s23, 36
          %s8148 = smul.addr %s8147, 128
          %s8149 = scalar_lea.hbm %s8, %s8148
          %s8150 = sshll.u32 %s8140, 4
          %s8151 = int_to_ptr.vmem [resolvable:$true] %s8150
          %8156 = dma.vmem_to_hbm [thread:$0]  %s8151, 4608, %s8149, %s8137, 128, 128, 8
        $region60: #{tpu_custom_call.1} parent=51 // pred_fallthru
          _
      $region52: #{tpu_custom_call.1} parent=5 // pred_fallthru
        _
      %p8157 = scmp.le.s32.totalorder 2, %s18
      // Predicated region
      $region61: #{tpu_custom_call.1} parent=5 // pred_check
        %p8158 = pneg %p8157
      $region62: #{tpu_custom_call.1} parent=5 // pred_check_branch
        %8160 = sbr.rel (%p8158) target = $region64
      $region63: #{tpu_custom_call.1} parent=5 // pred_region
        %s8161 = ssub.s32 %s18, 2
        // Predicated region
        $region65: #{tpu_custom_call.1} parent=63 // pred_check
          %p8162 = pneg %p220
        $region66: #{tpu_custom_call.1} parent=63 // pred_check_branch
          %8164 = sbr.rel (%p8162) target = $region68
        $region67: #{tpu_custom_call.1} parent=63 // pred_region
          %s8165 = sand.u32 %s205, 1
          %s8166 = scalar_lea.sflag [#allocation6], %s8165
          %s8167 = sand.u32 %s205, 1
          %s8168 = smul.addr %s8167, 288
          %s8169 = scalar_lea.vmem [#allocation7], %s8168
          %8170 = dma.done %s8166, 4608
        $region68: #{tpu_custom_call.1} parent=63 // pred_fallthru
          _
      $region64: #{tpu_custom_call.1} parent=5 // pred_fallthru
        _
    $region6: #{tpu_custom_call.1} parent=1 // loop_footer
      %s22 = sadd.s32 1, %s18
    $region7: #{tpu_custom_call.1} parent=1 // loop_footer_branch
      %17 = sbr.rel target = $region3
    $region8: #{tpu_custom_call.1} parent=1 // loop_exit
      _
    %8171 = vsyncpa [#allocation5], 1
    %s8172 = scalar_lea.sflag [#allocation5], 1
    %8173 = vsyncpa %s8172, 1
    %8174 = vsyncpa [#allocation6], 1
    %s8175 = scalar_lea.sflag [#allocation6], 1
    %8176 = vsyncpa %s8175, 1

</llo_original>
